<compile_context>
chip_gen: v6e
topology: v6e:2x2x1
jax: 0.10.0
libtpu: 0.0.40
codegen_flags: <defaults>
</compile_context>

<pallas_src>
import functools

import jax
import jax.numpy as jnp
from jax import lax
from jax.experimental import pallas as pl
from jax.experimental.pallas import tpu as pltpu

_PMAX = 6  # largest effective padding / dilation in the net (conv2d5)


def _make_kernel(B, H, W, G, L, cin_pad, c1, cbr, cout, eps):
    """Build the fused kernel body. All geometry is baked in as Python ints."""
    HW = H * W
    BL = B * L
    pad_top = _PMAX
    # Flat offset (relative to the canvas region start) of each batch's valid
    # HxW block.  It is contiguous because no horizontal padding is stored.
    valid_off = [b * L + pad_top * W for b in range(B)]
    n_valid = float(B * HW)
    w_pow2 = (W & (W - 1)) == 0

    def build_patch(xfull, dil, cin):
        # xfull: (cin, Ltot) canvas value (zeros outside valid rows).
        # Returns the im2col patch (9*cin, BL); tap order is (kh, kw, cin).
        col = lax.broadcasted_iota(jnp.int32, (cin, BL), 1)
        col = (col & (W - 1)) if w_pow2 else (col % W)
        parts = []
        for kh in range(3):
            dr = (kh - 1) * dil
            for kw in range(3):
                dc = (kw - 1) * dil
                start = G + dr * W + dc
                win = xfull[:, start:start + BL]
                # Horizontal zero padding: reads that would cross a row edge
                # (and therefore wrapped in the flat layout) are masked to 0.
                if dc > 0:
                    win = jnp.where(col < (W - dc), win, 0.0)
                elif dc < 0:
                    win = jnp.where(col >= (-dc), win, 0.0)
                parts.append(win)
        return jnp.concatenate(parts, axis=0)

    def matmul(w, p):
        return jnp.dot(w, p, preferred_element_type=jnp.float32,
                       precision=lax.Precision.HIGHEST)

    def kernel(x_ref, w1_ref, b1_ref, g1_ref, be1_ref,
               wbr_ref, bbr_ref, g2_ref, be2_ref,
               w3_ref, b3_ref, o_ref,
               buf_in, buf_a, buf_b):
        # Valid-position mask over the canvas region [0, B*L).
        pos = lax.broadcasted_iota(jnp.int32, (1, BL), 1)
        vmask = functools.reduce(
            jnp.logical_or,
            [(pos >= off) & (pos < off + HW) for off in valid_off])

        def bn_relu_mask(y, g_ref, be_ref):
            # y: (C, BL) pre-activation (garbage outside the valid region).
            yv = jnp.where(vmask, y, 0.0)
            mean = jnp.sum(yv, axis=1, keepdims=True) * (1.0 / n_valid)
            d = jnp.where(vmask, y - mean, 0.0)
            var = jnp.sum(d * d, axis=1, keepdims=True) * (1.0 / n_valid)
            inv = lax.rsqrt(var + eps)
            out = d * inv * g_ref[...] + be_ref[...]
            return jnp.where(vmask, jnp.maximum(out, 0.0), 0.0)

        # Zero the canvases: margins + vertical padding rows must stay zero.
        buf_in[...] = jnp.zeros(buf_in.shape, jnp.float32)
        buf_a[...] = jnp.zeros(buf_a.shape, jnp.float32)
        buf_b[...] = jnp.zeros(buf_b.shape, jnp.float32)

        # Place the input (already channel-flattened to (B, cin_pad, H*W)).
        for b in range(B):
            s = G + valid_off[b]
            buf_in[:, s:s + HW] = x_ref[b]

        # ---- conv1 (3x3, pad=1) -> BN1 -> ReLU -----------------------------
        p1 = build_patch(buf_in[...], 1, cin_pad)
        y1 = matmul(w1_ref[...], p1) + b1_ref[...]
        buf_a[:, G:G + BL] = bn_relu_mask(y1, g1_ref, be1_ref)

        # ---- dilated branch (d=2 || d=6) as one block-diagonal matmul ------
        xa = buf_a[...]
        pbr = jnp.concatenate(
            [build_patch(xa, 2, c1), build_patch(xa, 6, c1)], axis=0)
        ybr = matmul(wbr_ref[...], pbr) + bbr_ref[...]
        buf_b[:, G:G + BL] = bn_relu_mask(ybr, g2_ref, be2_ref)

        # ---- conv3 (3x3, pad=1) -> log-softmax over channels (sublanes) ----
        p3 = build_patch(buf_b[...], 1, cbr)
        y3 = matmul(w3_ref[...], p3) + b3_ref[...]
        y3 = jnp.where(vmask, y3, 0.0)
        m = jnp.max(y3, axis=0, keepdims=True)
        lse = jnp.log(jnp.sum(jnp.exp(y3 - m), axis=0, keepdims=True))
        logp = y3 - m - lse                                   # (cout, BL)

        # Lane-dense (cout, H*W) block per batch element.
        for b in range(B):
            off = valid_off[b]
            o_ref[b] = logp[:, off:off + HW]

    return kernel


def three_layer_semseg_net(x, params):
    """Forward pass of ThreeLayerSemSegNet.

    x:      (B, Cin, H, W) float32 (NCHW, PyTorch convention)
    params: (w1, b1, g1, be1, w2d1, b2d1, w2d5, b2d5, g2, be2, w3, b3)
            conv weights in OIHW layout, BN gammas/betas of length 8.
    returns (B, Cout, H, W) float32 log-probabilities over channels.
    """
    (w1, b1, g1, be1, w2d1, b2d1, w2d5, b2d5, g2, be2, w3, b3) = params
    B, cin, H, W = x.shape
    c1 = w1.shape[0]                      # 8
    cbr = w2d1.shape[0] + w2d5.shape[0]   # 4 + 4 = 8
    cout = w3.shape[0]
    eps = 1e-5
    HW = H * W

    # ---- canvas geometry ---------------------------------------------------
    Hc = H + 2 * _PMAX
    L = Hc * W
    Lr = ((L + 127) // 128) * 128         # lane-align per-batch canvas
    if Lr % W == 0:
        L = Lr
    margin = _PMAX * W + _PMAX            # largest |flat shift| of any tap
    G = ((margin + 127) // 128) * 128     # aligned global margin
    Ltot = G + B * L + G

    # Pad input channels up to a sublane multiple so all patch pieces are
    # 8-row aligned (tiny: 4->8 channels on an 8 KiB tensor).
    cin_pad = max(8, ((cin + 7) // 8) * 8)

    def wm(w):  # (Co, Ci, 3, 3) -> (Co, 9*Ci), tap order (kh, kw, ci)
        co, ci = w.shape[0], w.shape[1]
        return jnp.transpose(w, (0, 2, 3, 1)).reshape(co, 9 * ci)

    w1p = jnp.pad(w1, ((0, 0), (0, cin_pad - cin), (0, 0), (0, 0)))
    w1m = wm(w1p)                                          # (c1, 9*cin_pad)
    wd2m, wd6m = wm(w2d1), wm(w2d5)                        # (4, 72) each
    zb = jnp.zeros_like(wd2m)
    wbrm = jnp.concatenate(                                # (8, 144) block-diag
        [jnp.concatenate([wd2m, zb], axis=1),
         jnp.concatenate([zb, wd6m], axis=1)], axis=0)
    w3m = wm(w3)                                           # (cout, 9*cbr)

    col = lambda v: v.reshape(-1, 1)
    bbr = jnp.concatenate([b2d1, b2d5]).reshape(-1, 1)

    x_flat = jnp.pad(x.reshape(B, cin, HW),
                     ((0, 0), (0, cin_pad - cin), (0, 0)))

    kernel = _make_kernel(B, H, W, G, L, cin_pad, c1, cbr, cout, eps)

    def full_spec(shape):
        n = len(shape)
        return pl.BlockSpec(shape, lambda i, n=n: (0,) * n)

    in_specs = [
        full_spec((B, cin_pad, HW)),
        full_spec(w1m.shape), full_spec((c1, 1)),
        full_spec((c1, 1)), full_spec((c1, 1)),
        full_spec(wbrm.shape), full_spec((cbr, 1)),
        full_spec((cbr, 1)), full_spec((cbr, 1)),
        full_spec(w3m.shape), full_spec((cout, 1)),
    ]

    out = pl.pallas_call(
        kernel,
        out_shape=jax.ShapeDtypeStruct((B, cout, HW), jnp.float32),
        grid=(1,),
        in_specs=in_specs,
        out_specs=full_spec((B, cout, HW)),
        scratch_shapes=[
            pltpu.VMEM((cin_pad, Ltot), jnp.float32),
            pltpu.VMEM((c1, Ltot), jnp.float32),
            pltpu.VMEM((cbr, Ltot), jnp.float32),
        ],
        compiler_params=pltpu.CompilerParams(
            dimension_semantics=("arbitrary",)),
    )(x_flat, w1m, col(b1), col(g1), col(be1),
      wbrm, bbr, col(g2), col(be2), w3m, col(b3))

    return out.reshape(B, cout, H, W)


def _reference(x, params):
    """Pure-JAX reference matching the PyTorch module's forward."""
    (w1, b1, g1, be1, w2d1, b2d1, w2d5, b2d5, g2, be2, w3, b3) = params
    eps = 1e-5

    def conv(x, w, b, dil, pad):
        y = lax.conv_general_dilated(
            x, w, window_strides=(1, 1),
            padding=((pad, pad), (pad, pad)),
            rhs_dilation=(dil, dil),
            dimension_numbers=("NCHW", "OIHW", "NCHW"),
            precision=lax.Precision.HIGHEST)
        return y + b.reshape(1, -1, 1, 1)

    def bn(x, g, be):
        # BatchNorm2d(track_running_stats=False): always batch stats, biased var.
        mean = jnp.mean(x, axis=(0, 2, 3), keepdims=True)
        var = jnp.mean((x - mean) ** 2, axis=(0, 2, 3), keepdims=True)
        xn = (x - mean) * lax.rsqrt(var + eps)
        return xn * g.reshape(1, -1, 1, 1) + be.reshape(1, -1, 1, 1)

    y = conv(x, w1, b1, 1, 1)
    y = jnp.maximum(bn(y, g1, be1), 0.0)
    y1 = conv(y, w2d1, b2d1, 2, 2)
    y2 = conv(y, w2d5, b2d5, 6, 6)
    y = jnp.concatenate([y1, y2], axis=1)
    y = jnp.maximum(bn(y, g2, be2), 0.0)
    y = conv(y, w3, b3, 1, 1)
    return jax.nn.log_softmax(y, axis=1)


if __name__ == "__main__":
    # ThreeLayerSemSegNet(in_channel=4, out_channel=8), batch=2, 16x16 images.
    B, Cin, Cout, H, W = 2, 4, 8, 16, 16
    C1, Cb = 8, 4

    key = jax.random.PRNGKey(0)
    ks = jax.random.split(key, 13)
    x = jax.random.normal(ks[0], (B, Cin, H, W), dtype=jnp.float32)
    w1 = jax.random.normal(ks[1], (C1, Cin, 3, 3), jnp.float32) * 0.2
    b1 = jax.random.normal(ks[2], (C1,), jnp.float32) * 0.1
    g1 = 1.0 + 0.1 * jax.random.normal(ks[3], (C1,), jnp.float32)
    be1 = 0.1 * jax.random.normal(ks[4], (C1,), jnp.float32)
    w2d1 = jax.random.normal(ks[5], (Cb, C1, 3, 3), jnp.float32) * 0.2
    b2d1 = jax.random.normal(ks[6], (Cb,), jnp.float32) * 0.1
    w2d5 = jax.random.normal(ks[7], (Cb, C1, 3, 3), jnp.float32) * 0.2
    b2d5 = jax.random.normal(ks[8], (Cb,), jnp.float32) * 0.1
    g2 = 1.0 + 0.1 * jax.random.normal(ks[9], (C1,), jnp.float32)
    be2 = 0.1 * jax.random.normal(ks[10], (C1,), jnp.float32)
    w3 = jax.random.normal(ks[11], (Cout, C1, 3, 3), jnp.float32) * 0.2
    b3 = jax.random.normal(ks[12], (Cout,), jnp.float32) * 0.1

    params = (w1, b1, g1, be1, w2d1, b2d1, w2d5, b2d5, g2, be2, w3, b3)

    out = jax.block_until_ready(three_layer_semseg_net(x, params))
    ref = jax.block_until_ready(_reference(x, params))

    assert out.shape == (B, Cout, H, W)
    assert bool(jnp.all(jnp.isfinite(out)))
    err = float(jnp.max(jnp.abs(out - ref)))
    assert err < 5e-4, f"mismatch vs reference: max abs err = {err}"
    print("KERNEL_OK")
</pallas_src>

<mosaic_0001>
module attributes {stable_mosaic.version = 11 : i64} {
  func.func @kernel(%arg0: i32, %arg1: memref<2x8x256xf32, #tpu.memory_space<vmem>>, %arg2: memref<8x72xf32, #tpu.memory_space<vmem>>, %arg3: memref<8x1xf32, #tpu.memory_space<vmem>>, %arg4: memref<8x1xf32, #tpu.memory_space<vmem>>, %arg5: memref<8x1xf32, #tpu.memory_space<vmem>>, %arg6: memref<8x144xf32, #tpu.memory_space<vmem>>, %arg7: memref<8x1xf32, #tpu.memory_space<vmem>>, %arg8: memref<8x1xf32, #tpu.memory_space<vmem>>, %arg9: memref<8x1xf32, #tpu.memory_space<vmem>>, %arg10: memref<8x72xf32, #tpu.memory_space<vmem>>, %arg11: memref<8x1xf32, #tpu.memory_space<vmem>>, %arg12: memref<2x8x256xf32, #tpu.memory_space<vmem>>, %arg13: memref<8x1280xf32, #tpu.memory_space<vmem>>, %arg14: memref<8x1280xf32, #tpu.memory_space<vmem>>, %arg15: memref<8x1280xf32, #tpu.memory_space<vmem>>) attributes {dimension_semantics = [#tpu.dimension_semantics<arbitrary>], iteration_bounds = array<i64: 1>, scalar_prefetch = 0 : i64, scratch_operands = 3 : i64, tpu.core_type = #tpu.core_type<tc>, window_params = [{pipeline_mode = #tpu.pipeline_mode<synchronous>, transform_indices = @transform_0, window_bounds = array<i64: 2, 8, 256>}, {pipeline_mode = #tpu.pipeline_mode<synchronous>, transform_indices = @transform_1, window_bounds = array<i64: 8, 72>}, {pipeline_mode = #tpu.pipeline_mode<synchronous>, transform_indices = @transform_2, window_bounds = array<i64: 8, 1>}, {pipeline_mode = #tpu.pipeline_mode<synchronous>, transform_indices = @transform_3, window_bounds = array<i64: 8, 1>}, {pipeline_mode = #tpu.pipeline_mode<synchronous>, transform_indices = @transform_4, window_bounds = array<i64: 8, 1>}, {pipeline_mode = #tpu.pipeline_mode<synchronous>, transform_indices = @transform_5, window_bounds = array<i64: 8, 144>}, {pipeline_mode = #tpu.pipeline_mode<synchronous>, transform_indices = @transform_6, window_bounds = array<i64: 8, 1>}, {pipeline_mode = #tpu.pipeline_mode<synchronous>, transform_indices = @transform_7, window_bounds = array<i64: 8, 1>}, {pipeline_mode = #tpu.pipeline_mode<synchronous>, transform_indices = @transform_8, window_bounds = array<i64: 8, 1>}, {pipeline_mode = #tpu.pipeline_mode<synchronous>, transform_indices = @transform_9, window_bounds = array<i64: 8, 72>}, {pipeline_mode = #tpu.pipeline_mode<synchronous>, transform_indices = @transform_10, window_bounds = array<i64: 8, 1>}, {pipeline_mode = #tpu.pipeline_mode<synchronous>, transform_indices = @transform_11, window_bounds = array<i64: 2, 8, 256>}]} {
    %0 = tpu.iota {dimensions = array<i32: 1>} : vector<1x1024xi32>
    %c96_i32 = arith.constant 96 : i32
    %1 = vector.broadcast %c96_i32 : i32 to vector<1x1024xi32>
    %2 = arith.cmpi sge, %0, %1 : vector<1x1024xi32>
    %c352_i32 = arith.constant 352 : i32
    %3 = vector.broadcast %c352_i32 : i32 to vector<1x1024xi32>
    %4 = arith.cmpi slt, %0, %3 : vector<1x1024xi32>
    %5 = arith.andi %2, %4 : vector<1x1024xi1>
    %c608_i32 = arith.constant 608 : i32
    %6 = vector.broadcast %c608_i32 : i32 to vector<1x1024xi32>
    %7 = arith.cmpi sge, %0, %6 : vector<1x1024xi32>
    %c864_i32 = arith.constant 864 : i32
    %8 = vector.broadcast %c864_i32 : i32 to vector<1x1024xi32>
    %9 = arith.cmpi slt, %0, %8 : vector<1x1024xi32>
    %10 = arith.andi %7, %9 : vector<1x1024xi1>
    %11 = arith.ori %5, %10 : vector<1x1024xi1>
    %cst = arith.constant 0.000000e+00 : f32
    %12 = vector.broadcast %cst : f32 to vector<8x1280xf32>
    %c0 = arith.constant 0 : index
    %c0_0 = arith.constant 0 : index
    %13 = vector.load %arg13[%c0, %c0_0] : memref<8x1280xf32, #tpu.memory_space<vmem>>, vector<8x1280xf32>
    tpu.vector_store %arg13[%c0, %c0_0], %12 {strides = array<i32>} : memref<8x1280xf32, #tpu.memory_space<vmem>>, vector<8x1280xf32>,
    %cst_1 = arith.constant 0.000000e+00 : f32
    %14 = vector.broadcast %cst_1 : f32 to vector<8x1280xf32>
    %c0_2 = arith.constant 0 : index
    %c0_3 = arith.constant 0 : index
    %15 = vector.load %arg14[%c0_2, %c0_3] : memref<8x1280xf32, #tpu.memory_space<vmem>>, vector<8x1280xf32>
    tpu.vector_store %arg14[%c0_2, %c0_3], %14 {strides = array<i32>} : memref<8x1280xf32, #tpu.memory_space<vmem>>, vector<8x1280xf32>,
    %cst_4 = arith.constant 0.000000e+00 : f32
    %16 = vector.broadcast %cst_4 : f32 to vector<8x1280xf32>
    %c0_5 = arith.constant 0 : index
    %c0_6 = arith.constant 0 : index
    %17 = vector.load %arg15[%c0_5, %c0_6] : memref<8x1280xf32, #tpu.memory_space<vmem>>, vector<8x1280xf32>
    tpu.vector_store %arg15[%c0_5, %c0_6], %16 {strides = array<i32>} : memref<8x1280xf32, #tpu.memory_space<vmem>>, vector<8x1280xf32>,
    %c0_7 = arith.constant 0 : index
    %c0_8 = arith.constant 0 : index
    %c0_9 = arith.constant 0 : index
    %18 = vector.load %arg1[%c0_7, %c0_8, %c0_9] : memref<2x8x256xf32, #tpu.memory_space<vmem>>, vector<1x8x256xf32>
    %19 = vector.shape_cast %18 : vector<1x8x256xf32> to vector<8x256xf32>
    %c0_10 = arith.constant 0 : index
    %c224 = arith.constant 224 : index
    %20 = vector.load %arg13[%c0_10, %c224] : memref<8x1280xf32, #tpu.memory_space<vmem>>, vector<8x256xf32>
    tpu.vector_store %arg13[%c0_10, %c224], %19 {strides = array<i32>} : memref<8x1280xf32, #tpu.memory_space<vmem>>, vector<8x256xf32>,
    %c1 = arith.constant 1 : index
    %c0_11 = arith.constant 0 : index
    %c0_12 = arith.constant 0 : index
    %21 = vector.load %arg1[%c1, %c0_11, %c0_12] : memref<2x8x256xf32, #tpu.memory_space<vmem>>, vector<1x8x256xf32>
    %22 = vector.shape_cast %21 : vector<1x8x256xf32> to vector<8x256xf32>
    %c0_13 = arith.constant 0 : index
    %c736 = arith.constant 736 : index
    %23 = vector.load %arg13[%c0_13, %c736] : memref<8x1280xf32, #tpu.memory_space<vmem>>, vector<8x256xf32>
    tpu.vector_store %arg13[%c0_13, %c736], %22 {strides = array<i32>} : memref<8x1280xf32, #tpu.memory_space<vmem>>, vector<8x256xf32>,
    %c0_14 = arith.constant 0 : index
    %c0_15 = arith.constant 0 : index
    %24 = vector.load %arg13[%c0_14, %c0_15] : memref<8x1280xf32, #tpu.memory_space<vmem>>, vector<8x1280xf32>
    %25 = tpu.iota {dimensions = array<i32: 1>} : vector<8x1024xi32>
    %c15_i32 = arith.constant 15 : i32
    %26 = vector.broadcast %c15_i32 : i32 to vector<8x1024xi32>
    %27 = arith.andi %25, %26 : vector<8x1024xi32>
    %28 = vector.extract_strided_slice %24 {offsets = [0, 111], sizes = [8, 1024], strides = [1, 1]} : vector<8x1280xf32> to vector<8x1024xf32>
    %c1_i32 = arith.constant 1 : i32
    %29 = vector.broadcast %c1_i32 : i32 to vector<8x1024xi32>
    %30 = arith.cmpi sge, %27, %29 : vector<8x1024xi32>
    %cst_16 = arith.constant 0.000000e+00 : f32
    %31 = vector.broadcast %cst_16 : f32 to vector<8x1024xf32>
    %32 = arith.select %30, %28, %31 : vector<8x1024xi1>, vector<8x1024xf32>
    %33 = vector.extract_strided_slice %24 {offsets = [0, 112], sizes = [8, 1024], strides = [1, 1]} : vector<8x1280xf32> to vector<8x1024xf32>
    %34 = vector.extract_strided_slice %24 {offsets = [0, 113], sizes = [8, 1024], strides = [1, 1]} : vector<8x1280xf32> to vector<8x1024xf32>
    %c15_i32_17 = arith.constant 15 : i32
    %35 = vector.broadcast %c15_i32_17 : i32 to vector<8x1024xi32>
    %36 = arith.cmpi slt, %27, %35 : vector<8x1024xi32>
    %cst_18 = arith.constant 0.000000e+00 : f32
    %37 = vector.broadcast %cst_18 : f32 to vector<8x1024xf32>
    %38 = arith.select %36, %34, %37 : vector<8x1024xi1>, vector<8x1024xf32>
    %39 = vector.extract_strided_slice %24 {offsets = [0, 127], sizes = [8, 1024], strides = [1, 1]} : vector<8x1280xf32> to vector<8x1024xf32>
    %c1_i32_19 = arith.constant 1 : i32
    %40 = vector.broadcast %c1_i32_19 : i32 to vector<8x1024xi32>
    %41 = arith.cmpi sge, %27, %40 : vector<8x1024xi32>
    %cst_20 = arith.constant 0.000000e+00 : f32
    %42 = vector.broadcast %cst_20 : f32 to vector<8x1024xf32>
    %43 = arith.select %41, %39, %42 : vector<8x1024xi1>, vector<8x1024xf32>
    %44 = vector.extract_strided_slice %24 {offsets = [0, 128], sizes = [8, 1024], strides = [1, 1]} : vector<8x1280xf32> to vector<8x1024xf32>
    %45 = vector.extract_strided_slice %24 {offsets = [0, 129], sizes = [8, 1024], strides = [1, 1]} : vector<8x1280xf32> to vector<8x1024xf32>
    %c15_i32_21 = arith.constant 15 : i32
    %46 = vector.broadcast %c15_i32_21 : i32 to vector<8x1024xi32>
    %47 = arith.cmpi slt, %27, %46 : vector<8x1024xi32>
    %cst_22 = arith.constant 0.000000e+00 : f32
    %48 = vector.broadcast %cst_22 : f32 to vector<8x1024xf32>
    %49 = arith.select %47, %45, %48 : vector<8x1024xi1>, vector<8x1024xf32>
    %50 = vector.extract_strided_slice %24 {offsets = [0, 143], sizes = [8, 1024], strides = [1, 1]} : vector<8x1280xf32> to vector<8x1024xf32>
    %c1_i32_23 = arith.constant 1 : i32
    %51 = vector.broadcast %c1_i32_23 : i32 to vector<8x1024xi32>
    %52 = arith.cmpi sge, %27, %51 : vector<8x1024xi32>
    %cst_24 = arith.constant 0.000000e+00 : f32
    %53 = vector.broadcast %cst_24 : f32 to vector<8x1024xf32>
    %54 = arith.select %52, %50, %53 : vector<8x1024xi1>, vector<8x1024xf32>
    %55 = vector.extract_strided_slice %24 {offsets = [0, 144], sizes = [8, 1024], strides = [1, 1]} : vector<8x1280xf32> to vector<8x1024xf32>
    %56 = vector.extract_strided_slice %24 {offsets = [0, 145], sizes = [8, 1024], strides = [1, 1]} : vector<8x1280xf32> to vector<8x1024xf32>
    %c15_i32_25 = arith.constant 15 : i32
    %57 = vector.broadcast %c15_i32_25 : i32 to vector<8x1024xi32>
    %58 = arith.cmpi slt, %27, %57 : vector<8x1024xi32>
    %cst_26 = arith.constant 0.000000e+00 : f32
    %59 = vector.broadcast %cst_26 : f32 to vector<8x1024xf32>
    %60 = arith.select %58, %56, %59 : vector<8x1024xi1>, vector<8x1024xf32>
    %61 = tpu.concatenate %32, %33, %38, %43, %44, %49, %54, %55, %60 in 0 : vector<8x1024xf32>, vector<8x1024xf32>, vector<8x1024xf32>, vector<8x1024xf32>, vector<8x1024xf32>, vector<8x1024xf32>, vector<8x1024xf32>, vector<8x1024xf32>, vector<8x1024xf32> -> vector<72x1024xf32>
    %c0_27 = arith.constant 0 : index
    %c0_28 = arith.constant 0 : index
    %62 = vector.load %arg2[%c0_27, %c0_28] : memref<8x72xf32, #tpu.memory_space<vmem>>, vector<8x72xf32>
    %cst_29 = arith.constant dense<0.000000e+00> : vector<8x1024xf32>
    %63 = tpu.matmul %62, %61, %cst_29 {dimension_numbers = #tpu.dot_dimension_numbers<[1], [0], [0], [1], [0, 0, 1, 1], [], []>, precision = #tpu.contract_precision<fp32>} : vector<8x72xf32>, vector<72x1024xf32>, vector<8x1024xf32> -> vector<8x1024xf32>
    %c0_30 = arith.constant 0 : index
    %c0_31 = arith.constant 0 : index
    %64 = vector.load %arg3[%c0_30, %c0_31] : memref<8x1xf32, #tpu.memory_space<vmem>>, vector<8x1xf32>
    %65 = vector.broadcast %64 : vector<8x1xf32> to vector<8x1024xf32>
    %66 = arith.addf %63, %65 : vector<8x1024xf32>
    %cst_32 = arith.constant 0.000000e+00 : f32
    %67 = vector.shape_cast %11 : vector<1x1024xi1> to vector<1x1024xi1>
    %68 = vector.broadcast %67 : vector<1x1024xi1> to vector<8x1024xi1>
    %69 = vector.broadcast %cst_32 : f32 to vector<8x1024xf32>
    %70 = arith.select %68, %66, %69 : vector<8x1024xi1>, vector<8x1024xf32>
    %cst_33 = arith.constant dense<0.000000e+00> : vector<8xf32>
    %71 = vector.multi_reduction <add>, %70, %cst_33 [1] : vector<8x1024xf32> to vector<8xf32>
    %72 = vector.shape_cast %71 : vector<8xf32> to vector<8x1xf32>
    %cst_34 = arith.constant 0.001953125 : f32
    %73 = vector.broadcast %cst_34 : f32 to vector<8x1xf32>
    %74 = arith.mulf %72, %73 : vector<8x1xf32>
    %75 = vector.broadcast %74 : vector<8x1xf32> to vector<8x1024xf32>
    %76 = arith.subf %66, %75 : vector<8x1024xf32>
    %cst_35 = arith.constant 0.000000e+00 : f32
    %77 = vector.shape_cast %11 : vector<1x1024xi1> to vector<1x1024xi1>
    %78 = vector.broadcast %77 : vector<1x1024xi1> to vector<8x1024xi1>
    %79 = vector.broadcast %cst_35 : f32 to vector<8x1024xf32>
    %80 = arith.select %78, %76, %79 : vector<8x1024xi1>, vector<8x1024xf32>
    %81 = arith.mulf %80, %80 : vector<8x1024xf32>
    %cst_36 = arith.constant dense<0.000000e+00> : vector<8xf32>
    %82 = vector.multi_reduction <add>, %81, %cst_36 [1] : vector<8x1024xf32> to vector<8xf32>
    %83 = vector.shape_cast %82 : vector<8xf32> to vector<8x1xf32>
    %cst_37 = arith.constant 0.001953125 : f32
    %84 = vector.broadcast %cst_37 : f32 to vector<8x1xf32>
    %85 = arith.mulf %83, %84 : vector<8x1xf32>
    %cst_38 = arith.constant 9.99999974E-6 : f32
    %86 = vector.broadcast %cst_38 : f32 to vector<8x1xf32>
    %87 = arith.addf %85, %86 : vector<8x1xf32>
    %88 = math.rsqrt %87 : vector<8x1xf32>
    %89 = vector.broadcast %88 : vector<8x1xf32> to vector<8x1024xf32>
    %90 = arith.mulf %80, %89 : vector<8x1024xf32>
    %c0_39 = arith.constant 0 : index
    %c0_40 = arith.constant 0 : index
    %91 = vector.load %arg4[%c0_39, %c0_40] : memref<8x1xf32, #tpu.memory_space<vmem>>, vector<8x1xf32>
    %92 = vector.broadcast %91 : vector<8x1xf32> to vector<8x1024xf32>
    %93 = arith.mulf %90, %92 : vector<8x1024xf32>
    %c0_41 = arith.constant 0 : index
    %c0_42 = arith.constant 0 : index
    %94 = vector.load %arg5[%c0_41, %c0_42] : memref<8x1xf32, #tpu.memory_space<vmem>>, vector<8x1xf32>
    %95 = vector.broadcast %94 : vector<8x1xf32> to vector<8x1024xf32>
    %96 = arith.addf %93, %95 : vector<8x1024xf32>
    %cst_43 = arith.constant 0.000000e+00 : f32
    %97 = vector.broadcast %cst_43 : f32 to vector<8x1024xf32>
    %98 = arith.maximumf %96, %97 : vector<8x1024xf32>
    %cst_44 = arith.constant 0.000000e+00 : f32
    %99 = vector.shape_cast %11 : vector<1x1024xi1> to vector<1x1024xi1>
    %100 = vector.broadcast %99 : vector<1x1024xi1> to vector<8x1024xi1>
    %101 = vector.broadcast %cst_44 : f32 to vector<8x1024xf32>
    %102 = arith.select %100, %98, %101 : vector<8x1024xi1>, vector<8x1024xf32>
    %c0_45 = arith.constant 0 : index
    %c128 = arith.constant 128 : index
    %103 = vector.load %arg14[%c0_45, %c128] : memref<8x1280xf32, #tpu.memory_space<vmem>>, vector<8x1024xf32>
    tpu.vector_store %arg14[%c0_45, %c128], %102 {strides = array<i32>} : memref<8x1280xf32, #tpu.memory_space<vmem>>, vector<8x1024xf32>,
    %c0_46 = arith.constant 0 : index
    %c0_47 = arith.constant 0 : index
    %104 = vector.load %arg14[%c0_46, %c0_47] : memref<8x1280xf32, #tpu.memory_space<vmem>>, vector<8x1280xf32>
    %105 = tpu.iota {dimensions = array<i32: 1>} : vector<8x1024xi32>
    %c15_i32_48 = arith.constant 15 : i32
    %106 = vector.broadcast %c15_i32_48 : i32 to vector<8x1024xi32>
    %107 = arith.andi %105, %106 : vector<8x1024xi32>
    %108 = vector.extract_strided_slice %104 {offsets = [0, 94], sizes = [8, 1024], strides = [1, 1]} : vector<8x1280xf32> to vector<8x1024xf32>
    %c2_i32 = arith.constant 2 : i32
    %109 = vector.broadcast %c2_i32 : i32 to vector<8x1024xi32>
    %110 = arith.cmpi sge, %107, %109 : vector<8x1024xi32>
    %cst_49 = arith.constant 0.000000e+00 : f32
    %111 = vector.broadcast %cst_49 : f32 to vector<8x1024xf32>
    %112 = arith.select %110, %108, %111 : vector<8x1024xi1>, vector<8x1024xf32>
    %113 = vector.extract_strided_slice %104 {offsets = [0, 96], sizes = [8, 1024], strides = [1, 1]} : vector<8x1280xf32> to vector<8x1024xf32>
    %114 = vector.extract_strided_slice %104 {offsets = [0, 98], sizes = [8, 1024], strides = [1, 1]} : vector<8x1280xf32> to vector<8x1024xf32>
    %c14_i32 = arith.constant 14 : i32
    %115 = vector.broadcast %c14_i32 : i32 to vector<8x1024xi32>
    %116 = arith.cmpi slt, %107, %115 : vector<8x1024xi32>
    %cst_50 = arith.constant 0.000000e+00 : f32
    %117 = vector.broadcast %cst_50 : f32 to vector<8x1024xf32>
    %118 = arith.select %116, %114, %117 : vector<8x1024xi1>, vector<8x1024xf32>
    %119 = vector.extract_strided_slice %104 {offsets = [0, 126], sizes = [8, 1024], strides = [1, 1]} : vector<8x1280xf32> to vector<8x1024xf32>
    %c2_i32_51 = arith.constant 2 : i32
    %120 = vector.broadcast %c2_i32_51 : i32 to vector<8x1024xi32>
    %121 = arith.cmpi sge, %107, %120 : vector<8x1024xi32>
    %cst_52 = arith.constant 0.000000e+00 : f32
    %122 = vector.broadcast %cst_52 : f32 to vector<8x1024xf32>
    %123 = arith.select %121, %119, %122 : vector<8x1024xi1>, vector<8x1024xf32>
    %124 = vector.extract_strided_slice %104 {offsets = [0, 128], sizes = [8, 1024], strides = [1, 1]} : vector<8x1280xf32> to vector<8x1024xf32>
    %125 = vector.extract_strided_slice %104 {offsets = [0, 130], sizes = [8, 1024], strides = [1, 1]} : vector<8x1280xf32> to vector<8x1024xf32>
    %c14_i32_53 = arith.constant 14 : i32
    %126 = vector.broadcast %c14_i32_53 : i32 to vector<8x1024xi32>
    %127 = arith.cmpi slt, %107, %126 : vector<8x1024xi32>
    %cst_54 = arith.constant 0.000000e+00 : f32
    %128 = vector.broadcast %cst_54 : f32 to vector<8x1024xf32>
    %129 = arith.select %127, %125, %128 : vector<8x1024xi1>, vector<8x1024xf32>
    %130 = vector.extract_strided_slice %104 {offsets = [0, 158], sizes = [8, 1024], strides = [1, 1]} : vector<8x1280xf32> to vector<8x1024xf32>
    %c2_i32_55 = arith.constant 2 : i32
    %131 = vector.broadcast %c2_i32_55 : i32 to vector<8x1024xi32>
    %132 = arith.cmpi sge, %107, %131 : vector<8x1024xi32>
    %cst_56 = arith.constant 0.000000e+00 : f32
    %133 = vector.broadcast %cst_56 : f32 to vector<8x1024xf32>
    %134 = arith.select %132, %130, %133 : vector<8x1024xi1>, vector<8x1024xf32>
    %135 = vector.extract_strided_slice %104 {offsets = [0, 160], sizes = [8, 1024], strides = [1, 1]} : vector<8x1280xf32> to vector<8x1024xf32>
    %136 = vector.extract_strided_slice %104 {offsets = [0, 162], sizes = [8, 1024], strides = [1, 1]} : vector<8x1280xf32> to vector<8x1024xf32>
    %c14_i32_57 = arith.constant 14 : i32
    %137 = vector.broadcast %c14_i32_57 : i32 to vector<8x1024xi32>
    %138 = arith.cmpi slt, %107, %137 : vector<8x1024xi32>
    %cst_58 = arith.constant 0.000000e+00 : f32
    %139 = vector.broadcast %cst_58 : f32 to vector<8x1024xf32>
    %140 = arith.select %138, %136, %139 : vector<8x1024xi1>, vector<8x1024xf32>
    %141 = tpu.concatenate %112, %113, %118, %123, %124, %129, %134, %135, %140 in 0 : vector<8x1024xf32>, vector<8x1024xf32>, vector<8x1024xf32>, vector<8x1024xf32>, vector<8x1024xf32>, vector<8x1024xf32>, vector<8x1024xf32>, vector<8x1024xf32>, vector<8x1024xf32> -> vector<72x1024xf32>
    %142 = tpu.iota {dimensions = array<i32: 1>} : vector<8x1024xi32>
    %c15_i32_59 = arith.constant 15 : i32
    %143 = vector.broadcast %c15_i32_59 : i32 to vector<8x1024xi32>
    %144 = arith.andi %142, %143 : vector<8x1024xi32>
    %145 = vector.extract_strided_slice %104 {offsets = [0, 26], sizes = [8, 1024], strides = [1, 1]} : vector<8x1280xf32> to vector<8x1024xf32>
    %c6_i32 = arith.constant 6 : i32
    %146 = vector.broadcast %c6_i32 : i32 to vector<8x1024xi32>
    %147 = arith.cmpi sge, %144, %146 : vector<8x1024xi32>
    %cst_60 = arith.constant 0.000000e+00 : f32
    %148 = vector.broadcast %cst_60 : f32 to vector<8x1024xf32>
    %149 = arith.select %147, %145, %148 : vector<8x1024xi1>, vector<8x1024xf32>
    %150 = vector.extract_strided_slice %104 {offsets = [0, 32], sizes = [8, 1024], strides = [1, 1]} : vector<8x1280xf32> to vector<8x1024xf32>
    %151 = vector.extract_strided_slice %104 {offsets = [0, 38], sizes = [8, 1024], strides = [1, 1]} : vector<8x1280xf32> to vector<8x1024xf32>
    %c10_i32 = arith.constant 10 : i32
    %152 = vector.broadcast %c10_i32 : i32 to vector<8x1024xi32>
    %153 = arith.cmpi slt, %144, %152 : vector<8x1024xi32>
    %cst_61 = arith.constant 0.000000e+00 : f32
    %154 = vector.broadcast %cst_61 : f32 to vector<8x1024xf32>
    %155 = arith.select %153, %151, %154 : vector<8x1024xi1>, vector<8x1024xf32>
    %156 = vector.extract_strided_slice %104 {offsets = [0, 122], sizes = [8, 1024], strides = [1, 1]} : vector<8x1280xf32> to vector<8x1024xf32>
    %c6_i32_62 = arith.constant 6 : i32
    %157 = vector.broadcast %c6_i32_62 : i32 to vector<8x1024xi32>
    %158 = arith.cmpi sge, %144, %157 : vector<8x1024xi32>
    %cst_63 = arith.constant 0.000000e+00 : f32
    %159 = vector.broadcast %cst_63 : f32 to vector<8x1024xf32>
    %160 = arith.select %158, %156, %159 : vector<8x1024xi1>, vector<8x1024xf32>
    %161 = vector.extract_strided_slice %104 {offsets = [0, 128], sizes = [8, 1024], strides = [1, 1]} : vector<8x1280xf32> to vector<8x1024xf32>
    %162 = vector.extract_strided_slice %104 {offsets = [0, 134], sizes = [8, 1024], strides = [1, 1]} : vector<8x1280xf32> to vector<8x1024xf32>
    %c10_i32_64 = arith.constant 10 : i32
    %163 = vector.broadcast %c10_i32_64 : i32 to vector<8x1024xi32>
    %164 = arith.cmpi slt, %144, %163 : vector<8x1024xi32>
    %cst_65 = arith.constant 0.000000e+00 : f32
    %165 = vector.broadcast %cst_65 : f32 to vector<8x1024xf32>
    %166 = arith.select %164, %162, %165 : vector<8x1024xi1>, vector<8x1024xf32>
    %167 = vector.extract_strided_slice %104 {offsets = [0, 218], sizes = [8, 1024], strides = [1, 1]} : vector<8x1280xf32> to vector<8x1024xf32>
    %c6_i32_66 = arith.constant 6 : i32
    %168 = vector.broadcast %c6_i32_66 : i32 to vector<8x1024xi32>
    %169 = arith.cmpi sge, %144, %168 : vector<8x1024xi32>
    %cst_67 = arith.constant 0.000000e+00 : f32
    %170 = vector.broadcast %cst_67 : f32 to vector<8x1024xf32>
    %171 = arith.select %169, %167, %170 : vector<8x1024xi1>, vector<8x1024xf32>
    %172 = vector.extract_strided_slice %104 {offsets = [0, 224], sizes = [8, 1024], strides = [1, 1]} : vector<8x1280xf32> to vector<8x1024xf32>
    %173 = vector.extract_strided_slice %104 {offsets = [0, 230], sizes = [8, 1024], strides = [1, 1]} : vector<8x1280xf32> to vector<8x1024xf32>
    %c10_i32_68 = arith.constant 10 : i32
    %174 = vector.broadcast %c10_i32_68 : i32 to vector<8x1024xi32>
    %175 = arith.cmpi slt, %144, %174 : vector<8x1024xi32>
    %cst_69 = arith.constant 0.000000e+00 : f32
    %176 = vector.broadcast %cst_69 : f32 to vector<8x1024xf32>
    %177 = arith.select %175, %173, %176 : vector<8x1024xi1>, vector<8x1024xf32>
    %178 = tpu.concatenate %149, %150, %155, %160, %161, %166, %171, %172, %177 in 0 : vector<8x1024xf32>, vector<8x1024xf32>, vector<8x1024xf32>, vector<8x1024xf32>, vector<8x1024xf32>, vector<8x1024xf32>, vector<8x1024xf32>, vector<8x1024xf32>, vector<8x1024xf32> -> vector<72x1024xf32>
    %179 = tpu.concatenate %141, %178 in 0 : vector<72x1024xf32>, vector<72x1024xf32> -> vector<144x1024xf32>
    %c0_70 = arith.constant 0 : index
    %c0_71 = arith.constant 0 : index
    %180 = vector.load %arg6[%c0_70, %c0_71] : memref<8x144xf32, #tpu.memory_space<vmem>>, vector<8x144xf32>
    %cst_72 = arith.constant dense<0.000000e+00> : vector<8x1024xf32>
    %181 = tpu.matmul %180, %179, %cst_72 {dimension_numbers = #tpu.dot_dimension_numbers<[1], [0], [0], [1], [0, 0, 1, 1], [], []>, precision = #tpu.contract_precision<fp32>} : vector<8x144xf32>, vector<144x1024xf32>, vector<8x1024xf32> -> vector<8x1024xf32>
    %c0_73 = arith.constant 0 : index
    %c0_74 = arith.constant 0 : index
    %182 = vector.load %arg7[%c0_73, %c0_74] : memref<8x1xf32, #tpu.memory_space<vmem>>, vector<8x1xf32>
    %183 = vector.broadcast %182 : vector<8x1xf32> to vector<8x1024xf32>
    %184 = arith.addf %181, %183 : vector<8x1024xf32>
    %cst_75 = arith.constant 0.000000e+00 : f32
    %185 = vector.shape_cast %11 : vector<1x1024xi1> to vector<1x1024xi1>
    %186 = vector.broadcast %185 : vector<1x1024xi1> to vector<8x1024xi1>
    %187 = vector.broadcast %cst_75 : f32 to vector<8x1024xf32>
    %188 = arith.select %186, %184, %187 : vector<8x1024xi1>, vector<8x1024xf32>
    %cst_76 = arith.constant dense<0.000000e+00> : vector<8xf32>
    %189 = vector.multi_reduction <add>, %188, %cst_76 [1] : vector<8x1024xf32> to vector<8xf32>
    %190 = vector.shape_cast %189 : vector<8xf32> to vector<8x1xf32>
    %cst_77 = arith.constant 0.001953125 : f32
    %191 = vector.broadcast %cst_77 : f32 to vector<8x1xf32>
    %192 = arith.mulf %190, %191 : vector<8x1xf32>
    %193 = vector.broadcast %192 : vector<8x1xf32> to vector<8x1024xf32>
    %194 = arith.subf %184, %193 : vector<8x1024xf32>
    %cst_78 = arith.constant 0.000000e+00 : f32
    %195 = vector.shape_cast %11 : vector<1x1024xi1> to vector<1x1024xi1>
    %196 = vector.broadcast %195 : vector<1x1024xi1> to vector<8x1024xi1>
    %197 = vector.broadcast %cst_78 : f32 to vector<8x1024xf32>
    %198 = arith.select %196, %194, %197 : vector<8x1024xi1>, vector<8x1024xf32>
    %199 = arith.mulf %198, %198 : vector<8x1024xf32>
    %cst_79 = arith.constant dense<0.000000e+00> : vector<8xf32>
    %200 = vector.multi_reduction <add>, %199, %cst_79 [1] : vector<8x1024xf32> to vector<8xf32>
    %201 = vector.shape_cast %200 : vector<8xf32> to vector<8x1xf32>
    %cst_80 = arith.constant 0.001953125 : f32
    %202 = vector.broadcast %cst_80 : f32 to vector<8x1xf32>
    %203 = arith.mulf %201, %202 : vector<8x1xf32>
    %cst_81 = arith.constant 9.99999974E-6 : f32
    %204 = vector.broadcast %cst_81 : f32 to vector<8x1xf32>
    %205 = arith.addf %203, %204 : vector<8x1xf32>
    %206 = math.rsqrt %205 : vector<8x1xf32>
    %207 = vector.broadcast %206 : vector<8x1xf32> to vector<8x1024xf32>
    %208 = arith.mulf %198, %207 : vector<8x1024xf32>
    %c0_82 = arith.constant 0 : index
    %c0_83 = arith.constant 0 : index
    %209 = vector.load %arg8[%c0_82, %c0_83] : memref<8x1xf32, #tpu.memory_space<vmem>>, vector<8x1xf32>
    %210 = vector.broadcast %209 : vector<8x1xf32> to vector<8x1024xf32>
    %211 = arith.mulf %208, %210 : vector<8x1024xf32>
    %c0_84 = arith.constant 0 : index
    %c0_85 = arith.constant 0 : index
    %212 = vector.load %arg9[%c0_84, %c0_85] : memref<8x1xf32, #tpu.memory_space<vmem>>, vector<8x1xf32>
    %213 = vector.broadcast %212 : vector<8x1xf32> to vector<8x1024xf32>
    %214 = arith.addf %211, %213 : vector<8x1024xf32>
    %cst_86 = arith.constant 0.000000e+00 : f32
    %215 = vector.broadcast %cst_86 : f32 to vector<8x1024xf32>
    %216 = arith.maximumf %214, %215 : vector<8x1024xf32>
    %cst_87 = arith.constant 0.000000e+00 : f32
    %217 = vector.shape_cast %11 : vector<1x1024xi1> to vector<1x1024xi1>
    %218 = vector.broadcast %217 : vector<1x1024xi1> to vector<8x1024xi1>
    %219 = vector.broadcast %cst_87 : f32 to vector<8x1024xf32>
    %220 = arith.select %218, %216, %219 : vector<8x1024xi1>, vector<8x1024xf32>
    %c0_88 = arith.constant 0 : index
    %c128_89 = arith.constant 128 : index
    %221 = vector.load %arg15[%c0_88, %c128_89] : memref<8x1280xf32, #tpu.memory_space<vmem>>, vector<8x1024xf32>
    tpu.vector_store %arg15[%c0_88, %c128_89], %220 {strides = array<i32>} : memref<8x1280xf32, #tpu.memory_space<vmem>>, vector<8x1024xf32>,
    %c0_90 = arith.constant 0 : index
    %c0_91 = arith.constant 0 : index
    %222 = vector.load %arg15[%c0_90, %c0_91] : memref<8x1280xf32, #tpu.memory_space<vmem>>, vector<8x1280xf32>
    %223 = tpu.iota {dimensions = array<i32: 1>} : vector<8x1024xi32>
    %c15_i32_92 = arith.constant 15 : i32
    %224 = vector.broadcast %c15_i32_92 : i32 to vector<8x1024xi32>
    %225 = arith.andi %223, %224 : vector<8x1024xi32>
    %226 = vector.extract_strided_slice %222 {offsets = [0, 111], sizes = [8, 1024], strides = [1, 1]} : vector<8x1280xf32> to vector<8x1024xf32>
    %c1_i32_93 = arith.constant 1 : i32
    %227 = vector.broadcast %c1_i32_93 : i32 to vector<8x1024xi32>
    %228 = arith.cmpi sge, %225, %227 : vector<8x1024xi32>
    %cst_94 = arith.constant 0.000000e+00 : f32
    %229 = vector.broadcast %cst_94 : f32 to vector<8x1024xf32>
    %230 = arith.select %228, %226, %229 : vector<8x1024xi1>, vector<8x1024xf32>
    %231 = vector.extract_strided_slice %222 {offsets = [0, 112], sizes = [8, 1024], strides = [1, 1]} : vector<8x1280xf32> to vector<8x1024xf32>
    %232 = vector.extract_strided_slice %222 {offsets = [0, 113], sizes = [8, 1024], strides = [1, 1]} : vector<8x1280xf32> to vector<8x1024xf32>
    %c15_i32_95 = arith.constant 15 : i32
    %233 = vector.broadcast %c15_i32_95 : i32 to vector<8x1024xi32>
    %234 = arith.cmpi slt, %225, %233 : vector<8x1024xi32>
    %cst_96 = arith.constant 0.000000e+00 : f32
    %235 = vector.broadcast %cst_96 : f32 to vector<8x1024xf32>
    %236 = arith.select %234, %232, %235 : vector<8x1024xi1>, vector<8x1024xf32>
    %237 = vector.extract_strided_slice %222 {offsets = [0, 127], sizes = [8, 1024], strides = [1, 1]} : vector<8x1280xf32> to vector<8x1024xf32>
    %c1_i32_97 = arith.constant 1 : i32
    %238 = vector.broadcast %c1_i32_97 : i32 to vector<8x1024xi32>
    %239 = arith.cmpi sge, %225, %238 : vector<8x1024xi32>
    %cst_98 = arith.constant 0.000000e+00 : f32
    %240 = vector.broadcast %cst_98 : f32 to vector<8x1024xf32>
    %241 = arith.select %239, %237, %240 : vector<8x1024xi1>, vector<8x1024xf32>
    %242 = vector.extract_strided_slice %222 {offsets = [0, 128], sizes = [8, 1024], strides = [1, 1]} : vector<8x1280xf32> to vector<8x1024xf32>
    %243 = vector.extract_strided_slice %222 {offsets = [0, 129], sizes = [8, 1024], strides = [1, 1]} : vector<8x1280xf32> to vector<8x1024xf32>
    %c15_i32_99 = arith.constant 15 : i32
    %244 = vector.broadcast %c15_i32_99 : i32 to vector<8x1024xi32>
    %245 = arith.cmpi slt, %225, %244 : vector<8x1024xi32>
    %cst_100 = arith.constant 0.000000e+00 : f32
    %246 = vector.broadcast %cst_100 : f32 to vector<8x1024xf32>
    %247 = arith.select %245, %243, %246 : vector<8x1024xi1>, vector<8x1024xf32>
    %248 = vector.extract_strided_slice %222 {offsets = [0, 143], sizes = [8, 1024], strides = [1, 1]} : vector<8x1280xf32> to vector<8x1024xf32>
    %c1_i32_101 = arith.constant 1 : i32
    %249 = vector.broadcast %c1_i32_101 : i32 to vector<8x1024xi32>
    %250 = arith.cmpi sge, %225, %249 : vector<8x1024xi32>
    %cst_102 = arith.constant 0.000000e+00 : f32
    %251 = vector.broadcast %cst_102 : f32 to vector<8x1024xf32>
    %252 = arith.select %250, %248, %251 : vector<8x1024xi1>, vector<8x1024xf32>
    %253 = vector.extract_strided_slice %222 {offsets = [0, 144], sizes = [8, 1024], strides = [1, 1]} : vector<8x1280xf32> to vector<8x1024xf32>
    %254 = vector.extract_strided_slice %222 {offsets = [0, 145], sizes = [8, 1024], strides = [1, 1]} : vector<8x1280xf32> to vector<8x1024xf32>
    %c15_i32_103 = arith.constant 15 : i32
    %255 = vector.broadcast %c15_i32_103 : i32 to vector<8x1024xi32>
    %256 = arith.cmpi slt, %225, %255 : vector<8x1024xi32>
    %cst_104 = arith.constant 0.000000e+00 : f32
    %257 = vector.broadcast %cst_104 : f32 to vector<8x1024xf32>
    %258 = arith.select %256, %254, %257 : vector<8x1024xi1>, vector<8x1024xf32>
    %259 = tpu.concatenate %230, %231, %236, %241, %242, %247, %252, %253, %258 in 0 : vector<8x1024xf32>, vector<8x1024xf32>, vector<8x1024xf32>, vector<8x1024xf32>, vector<8x1024xf32>, vector<8x1024xf32>, vector<8x1024xf32>, vector<8x1024xf32>, vector<8x1024xf32> -> vector<72x1024xf32>
    %c0_105 = arith.constant 0 : index
    %c0_106 = arith.constant 0 : index
    %260 = vector.load %arg10[%c0_105, %c0_106] : memref<8x72xf32, #tpu.memory_space<vmem>>, vector<8x72xf32>
    %cst_107 = arith.constant dense<0.000000e+00> : vector<8x1024xf32>
    %261 = tpu.matmul %260, %259, %cst_107 {dimension_numbers = #tpu.dot_dimension_numbers<[1], [0], [0], [1], [0, 0, 1, 1], [], []>, precision = #tpu.contract_precision<fp32>} : vector<8x72xf32>, vector<72x1024xf32>, vector<8x1024xf32> -> vector<8x1024xf32>
    %c0_108 = arith.constant 0 : index
    %c0_109 = arith.constant 0 : index
    %262 = vector.load %arg11[%c0_108, %c0_109] : memref<8x1xf32, #tpu.memory_space<vmem>>, vector<8x1xf32>
    %263 = vector.broadcast %262 : vector<8x1xf32> to vector<8x1024xf32>
    %264 = arith.addf %261, %263 : vector<8x1024xf32>
    %cst_110 = arith.constant 0.000000e+00 : f32
    %265 = vector.shape_cast %11 : vector<1x1024xi1> to vector<1x1024xi1>
    %266 = vector.broadcast %265 : vector<1x1024xi1> to vector<8x1024xi1>
    %267 = vector.broadcast %cst_110 : f32 to vector<8x1024xf32>
    %268 = arith.select %266, %264, %267 : vector<8x1024xi1>, vector<8x1024xf32>
    %cst_111 = arith.constant dense<0xFF800000> : vector<1024xf32>
    %269 = vector.multi_reduction <maximumf>, %268, %cst_111 [0] : vector<8x1024xf32> to vector<1024xf32>
    %270 = vector.shape_cast %269 : vector<1024xf32> to vector<1x1024xf32>
    %271 = vector.broadcast %270 : vector<1x1024xf32> to vector<8x1024xf32>
    %272 = arith.subf %268, %271 : vector<8x1024xf32>
    %273 = math.exp %272 : vector<8x1024xf32>
    %cst_112 = arith.constant dense<0.000000e+00> : vector<1024xf32>
    %274 = vector.multi_reduction <add>, %273, %cst_112 [0] : vector<8x1024xf32> to vector<1024xf32>
    %275 = vector.shape_cast %274 : vector<1024xf32> to vector<1x1024xf32>
    %276 = math.log %275 : vector<1x1024xf32>
    %277 = vector.broadcast %270 : vector<1x1024xf32> to vector<8x1024xf32>
    %278 = arith.subf %268, %277 : vector<8x1024xf32>
    %279 = vector.broadcast %276 : vector<1x1024xf32> to vector<8x1024xf32>
    %280 = arith.subf %278, %279 : vector<8x1024xf32>
    %281 = vector.extract_strided_slice %280 {offsets = [0, 96], sizes = [8, 256], strides = [1, 1]} : vector<8x1024xf32> to vector<8x256xf32>
    %c0_113 = arith.constant 0 : index
    %c0_114 = arith.constant 0 : index
    %c0_115 = arith.constant 0 : index
    %282 = vector.load %arg12[%c0_113, %c0_114, %c0_115] : memref<2x8x256xf32, #tpu.memory_space<vmem>>, vector<1x8x256xf32>
    %283 = vector.shape_cast %282 : vector<1x8x256xf32> to vector<8x256xf32>
    %284 = vector.shape_cast %281 : vector<8x256xf32> to vector<1x8x256xf32>
    tpu.vector_store %arg12[%c0_113, %c0_114, %c0_115], %284 {strides = array<i32>} : memref<2x8x256xf32, #tpu.memory_space<vmem>>, vector<1x8x256xf32>,
    %285 = vector.extract_strided_slice %280 {offsets = [0, 608], sizes = [8, 256], strides = [1, 1]} : vector<8x1024xf32> to vector<8x256xf32>
    %c1_116 = arith.constant 1 : index
    %c0_117 = arith.constant 0 : index
    %c0_118 = arith.constant 0 : index
    %286 = vector.load %arg12[%c1_116, %c0_117, %c0_118] : memref<2x8x256xf32, #tpu.memory_space<vmem>>, vector<1x8x256xf32>
    %287 = vector.shape_cast %286 : vector<1x8x256xf32> to vector<8x256xf32>
    %288 = vector.shape_cast %285 : vector<8x256xf32> to vector<1x8x256xf32>
    tpu.vector_store %arg12[%c1_116, %c0_117, %c0_118], %288 {strides = array<i32>} : memref<2x8x256xf32, #tpu.memory_space<vmem>>, vector<1x8x256xf32>,
    return
  }
  func.func @transform_0(%arg0: i32) -> (i32, i32, i32) {
    %c0_i32 = arith.constant 0 : i32
    %c0_i32_0 = arith.constant 0 : i32
    %c0_i32_1 = arith.constant 0 : i32
    %c0_i32_2 = arith.constant 0 : i32
    return %c0_i32, %c0_i32_0, %c0_i32_1 : i32, i32, i32
  }
  func.func @transform_1(%arg0: i32) -> (i32, i32) {
    %c0_i32 = arith.constant 0 : i32
    %c0_i32_0 = arith.constant 0 : i32
    %c0_i32_1 = arith.constant 0 : i32
    return %c0_i32, %c0_i32_0 : i32, i32
  }
  func.func @transform_2(%arg0: i32) -> (i32, i32) {
    %c0_i32 = arith.constant 0 : i32
    %c0_i32_0 = arith.constant 0 : i32
    %c0_i32_1 = arith.constant 0 : i32
    return %c0_i32, %c0_i32_0 : i32, i32
  }
  func.func @transform_3(%arg0: i32) -> (i32, i32) {
    %c0_i32 = arith.constant 0 : i32
    %c0_i32_0 = arith.constant 0 : i32
    %c0_i32_1 = arith.constant 0 : i32
    return %c0_i32, %c0_i32_0 : i32, i32
  }
  func.func @transform_4(%arg0: i32) -> (i32, i32) {
    %c0_i32 = arith.constant 0 : i32
    %c0_i32_0 = arith.constant 0 : i32
    %c0_i32_1 = arith.constant 0 : i32
    return %c0_i32, %c0_i32_0 : i32, i32
  }
  func.func @transform_5(%arg0: i32) -> (i32, i32) {
    %c0_i32 = arith.constant 0 : i32
    %c0_i32_0 = arith.constant 0 : i32
    %c0_i32_1 = arith.constant 0 : i32
    return %c0_i32, %c0_i32_0 : i32, i32
  }
  func.func @transform_6(%arg0: i32) -> (i32, i32) {
    %c0_i32 = arith.constant 0 : i32
    %c0_i32_0 = arith.constant 0 : i32
    %c0_i32_1 = arith.constant 0 : i32
    return %c0_i32, %c0_i32_0 : i32, i32
  }
  func.func @transform_7(%arg0: i32) -> (i32, i32) {
    %c0_i32 = arith.constant 0 : i32
    %c0_i32_0 = arith.constant 0 : i32
    %c0_i32_1 = arith.constant 0 : i32
    return %c0_i32, %c0_i32_0 : i32, i32
  }
  func.func @transform_8(%arg0: i32) -> (i32, i32) {
    %c0_i32 = arith.constant 0 : i32
    %c0_i32_0 = arith.constant 0 : i32
    %c0_i32_1 = arith.constant 0 : i32
    return %c0_i32, %c0_i32_0 : i32, i32
  }
  func.func @transform_9(%arg0: i32) -> (i32, i32) {
    %c0_i32 = arith.constant 0 : i32
    %c0_i32_0 = arith.constant 0 : i32
    %c0_i32_1 = arith.constant 0 : i32
    return %c0_i32, %c0_i32_0 : i32, i32
  }
  func.func @transform_10(%arg0: i32) -> (i32, i32) {
    %c0_i32 = arith.constant 0 : i32
    %c0_i32_0 = arith.constant 0 : i32
    %c0_i32_1 = arith.constant 0 : i32
    return %c0_i32, %c0_i32_0 : i32, i32
  }
  func.func @transform_11(%arg0: i32) -> (i32, i32, i32) {
    %c0_i32 = arith.constant 0 : i32
    %c0_i32_0 = arith.constant 0 : i32
    %c0_i32_1 = arith.constant 0 : i32
    %c0_i32_2 = arith.constant 0 : i32
    return %c0_i32, %c0_i32_0, %c0_i32_1 : i32, i32, i32
  }
}

</mosaic_0001>

<llo_original>
// kernel: tpu_custom_call.1
$region0: #{tpu_custom_call.1}
  #allocation0 [shape = 'u32[]', space=smem, size = 0x4, offset = 0x4, fixed_abs, tag = 'smem constant byte address 0x4 - core index']
  #allocation1 [shape = 'u32[144,128]{1,0:T(1,128)}', space=vmem, size = 0x12000, scoped, tag = 'internal scratch']
  #allocation2 [shape = 'f32[8,1280]{1,0:T(8,128)}', space=vmem, size = 0xa000, scoped, tag = 'scratch operand']
  #allocation3 [shape = 'f32[8,1280]{1,0:T(8,128)}', space=vmem, size = 0xa000, scoped, tag = 'scratch operand']
  #allocation4 [shape = 'f32[8,1280]{1,0:T(8,128)}', space=vmem, size = 0xa000, scoped, tag = 'scratch operand']
  %s0 = inlined_call_operand.vmem [shape: f32[2,8,256], index: 0, kind: input, shape index: {}]
  %s1 = inlined_call_operand.vmem [shape: f32[8,72], index: 1, kind: input, shape index: {}]
  %s2 = inlined_call_operand.vmem [shape: f32[8,1], index: 2, kind: input, shape index: {}]
  %s3 = inlined_call_operand.vmem [shape: f32[8,1], index: 3, kind: input, shape index: {}]
  %s4 = inlined_call_operand.vmem [shape: f32[8,1], index: 4, kind: input, shape index: {}]
  %s5 = inlined_call_operand.vmem [shape: f32[8,144], index: 5, kind: input, shape index: {}]
  %s6 = inlined_call_operand.vmem [shape: f32[8,1], index: 6, kind: input, shape index: {}]
  %s7 = inlined_call_operand.vmem [shape: f32[8,1], index: 7, kind: input, shape index: {}]
  %s8 = inlined_call_operand.vmem [shape: f32[8,1], index: 8, kind: input, shape index: {}]
  %s9 = inlined_call_operand.vmem [shape: f32[8,72], index: 9, kind: input, shape index: {}]
  %s10 = inlined_call_operand.vmem [shape: f32[8,1], index: 10, kind: input, shape index: {}]
  %s11 = inlined_call_operand.hbm [shape: f32[2,8,256], index: 11, kind: output, shape index: {}]
  %s12 = sld [smem:[#allocation0]]
  $region54: #{tpu_custom_call.1} parent=0
    _
  %s14 = ssub.s32 1, %s12
  %s15 = scalar_select 0, %s14, %s12
  $region1: #{tpu_custom_call.1} parent=0
    #allocation5 [shape = 'u8[16384]{0}', space=vmem, size = 0x4000, scoped, tag = 'output window, operand 0, single buffered']
    #allocation6 [shape = 's32[1]{0}', space=sflag, size = 0x4, scoped, tag = 'scoped memory for tpu_custom_call.1']
    %16 = vsyncpa [#allocation6], 0
    // Predicated region
    $region2: #{tpu_custom_call.1} parent=1 // pred_check
      _
    $region3: #{tpu_custom_call.1} parent=1 // pred_check_branch
      %18 = sbr.rel (0) target = $region5
    $region4: #{tpu_custom_call.1} parent=1 // pred_region
      _
    $region5: #{tpu_custom_call.1} parent=1 // pred_fallthru
      _
    // Predicated region
    $region6: #{tpu_custom_call.1} parent=1 // pred_check
      _
    $region7: #{tpu_custom_call.1} parent=1 // pred_check_branch
      %20 = sbr.rel (0) target = $region9
    $region8: #{tpu_custom_call.1} parent=1 // pred_region
      _
    $region9: #{tpu_custom_call.1} parent=1 // pred_fallthru
      _
    // Predicated region
    $region10: #{tpu_custom_call.1} parent=1 // pred_check
      _
    $region11: #{tpu_custom_call.1} parent=1 // pred_check_branch
      %22 = sbr.rel (0) target = $region13
    $region12: #{tpu_custom_call.1} parent=1 // pred_region
      _
    $region13: #{tpu_custom_call.1} parent=1 // pred_fallthru
      _
    // Predicated region
    $region14: #{tpu_custom_call.1} parent=1 // pred_check
      _
    $region15: #{tpu_custom_call.1} parent=1 // pred_check_branch
      %24 = sbr.rel (0) target = $region17
    $region16: #{tpu_custom_call.1} parent=1 // pred_region
      _
    $region17: #{tpu_custom_call.1} parent=1 // pred_fallthru
      _
    // Predicated region
    $region18: #{tpu_custom_call.1} parent=1 // pred_check
      _
    $region19: #{tpu_custom_call.1} parent=1 // pred_check_branch
      %26 = sbr.rel (0) target = $region21
    $region20: #{tpu_custom_call.1} parent=1 // pred_region
      _
    $region21: #{tpu_custom_call.1} parent=1 // pred_fallthru
      _
    // Predicated region
    $region22: #{tpu_custom_call.1} parent=1 // pred_check
      _
    $region23: #{tpu_custom_call.1} parent=1 // pred_check_branch
      %28 = sbr.rel (0) target = $region25
    $region24: #{tpu_custom_call.1} parent=1 // pred_region
      _
    $region25: #{tpu_custom_call.1} parent=1 // pred_fallthru
      _
    // Predicated region
    $region26: #{tpu_custom_call.1} parent=1 // pred_check
      _
    $region27: #{tpu_custom_call.1} parent=1 // pred_check_branch
      %30 = sbr.rel (0) target = $region29
    $region28: #{tpu_custom_call.1} parent=1 // pred_region
      _
    $region29: #{tpu_custom_call.1} parent=1 // pred_fallthru
      _
    // Predicated region
    $region30: #{tpu_custom_call.1} parent=1 // pred_check
      _
    $region31: #{tpu_custom_call.1} parent=1 // pred_check_branch
      %32 = sbr.rel (0) target = $region33
    $region32: #{tpu_custom_call.1} parent=1 // pred_region
      _
    $region33: #{tpu_custom_call.1} parent=1 // pred_fallthru
      _
    // Predicated region
    $region34: #{tpu_custom_call.1} parent=1 // pred_check
      _
    $region35: #{tpu_custom_call.1} parent=1 // pred_check_branch
      %34 = sbr.rel (0) target = $region37
    $region36: #{tpu_custom_call.1} parent=1 // pred_region
      _
    $region37: #{tpu_custom_call.1} parent=1 // pred_fallthru
      _
    // Predicated region
    $region38: #{tpu_custom_call.1} parent=1 // pred_check
      _
    $region39: #{tpu_custom_call.1} parent=1 // pred_check_branch
      %36 = sbr.rel (0) target = $region41
    $region40: #{tpu_custom_call.1} parent=1 // pred_region
      _
    $region41: #{tpu_custom_call.1} parent=1 // pred_fallthru
      _
    // Predicated region
    $region42: #{tpu_custom_call.1} parent=1 // pred_check
      _
    $region43: #{tpu_custom_call.1} parent=1 // pred_check_branch
      %38 = sbr.rel (0) target = $region45
    $region44: #{tpu_custom_call.1} parent=1 // pred_region
      _
    $region45: #{tpu_custom_call.1} parent=1 // pred_fallthru
      _
    %v39 = vlaneseq
    %v40 = vand.u32 %v39, 127
    %v41 = vadd.s32 %v40, 128
    %v42 = vadd.s32 %v40, 256
    %v43 = vadd.s32 %v40, 384
    %v44 = vadd.s32 %v40, 512
    %v45 = vadd.s32 %v40, 640
    %v46 = vadd.s32 %v40, 768
    %v47 = vadd.s32 %v40, 896
    %vm48 = vcmp.ge.s32.totalorder %v40, 96
    %vm49 = vcmp.ge.s32.totalorder %v41, 96
    %vm50 = vcmp.ge.s32.totalorder %v42, 96
    %vm51 = vcmp.ge.s32.totalorder %v43, 96
    %vm52 = vcmp.ge.s32.totalorder %v44, 96
    %vm53 = vcmp.ge.s32.totalorder %v45, 96
    %vm54 = vcmp.ge.s32.totalorder %v46, 96
    %vm55 = vcmp.ge.s32.totalorder %v47, 96
    %vm56 = vcmp.lt.s32.totalorder %v40, 352
    %vm57 = vcmp.lt.s32.totalorder %v41, 352
    %vm58 = vcmp.lt.s32.totalorder %v42, 352
    %vm59 = vcmp.lt.s32.totalorder %v43, 352
    %vm60 = vcmp.lt.s32.totalorder %v44, 352
    %vm61 = vcmp.lt.s32.totalorder %v45, 352
    %vm62 = vcmp.lt.s32.totalorder %v46, 352
    %vm63 = vcmp.lt.s32.totalorder %v47, 352
    %vm64 = vmand %vm48, %vm56
    %vm65 = vmand %vm49, %vm57
    %vm66 = vmand %vm50, %vm58
    %vm67 = vmand %vm51, %vm59
    %vm68 = vmand %vm52, %vm60
    %vm69 = vmand %vm53, %vm61
    %vm70 = vmand %vm54, %vm62
    %vm71 = vmand %vm55, %vm63
    %vm72 = vcmp.ge.s32.totalorder %v40, 608
    %vm73 = vcmp.ge.s32.totalorder %v41, 608
    %vm74 = vcmp.ge.s32.totalorder %v42, 608
    %vm75 = vcmp.ge.s32.totalorder %v43, 608
    %vm76 = vcmp.ge.s32.totalorder %v44, 608
    %vm77 = vcmp.ge.s32.totalorder %v45, 608
    %vm78 = vcmp.ge.s32.totalorder %v46, 608
    %vm79 = vcmp.ge.s32.totalorder %v47, 608
    %vm80 = vcmp.lt.s32.totalorder %v40, 864
    %vm81 = vcmp.lt.s32.totalorder %v41, 864
    %vm82 = vcmp.lt.s32.totalorder %v42, 864
    %vm83 = vcmp.lt.s32.totalorder %v43, 864
    %vm84 = vcmp.lt.s32.totalorder %v44, 864
    %vm85 = vcmp.lt.s32.totalorder %v45, 864
    %vm86 = vcmp.lt.s32.totalorder %v46, 864
    %vm87 = vcmp.lt.s32.totalorder %v47, 864
    %vm88 = vmand %vm72, %vm80
    %vm89 = vmand %vm73, %vm81
    %vm90 = vmand %vm74, %vm82
    %vm91 = vmand %vm75, %vm83
    %vm92 = vmand %vm76, %vm84
    %vm93 = vmand %vm77, %vm85
    %vm94 = vmand %vm78, %vm86
    %vm95 = vmand %vm79, %vm87
    %vm96 = vmor %vm64, %vm88
    %vm97 = vmor %vm65, %vm89
    %vm98 = vmor %vm66, %vm90
    %vm99 = vmor %vm67, %vm91
    %vm100 = vmor %vm68, %vm92
    %vm101 = vmor %vm69, %vm93
    %vm102 = vmor %vm70, %vm94
    %vm103 = vmor %vm71, %vm95
    %104 = vst [vmem:[#allocation2] sm:$0xff] 0.0
    %105 = vst [vmem:[#allocation2 + $0x8] sm:$0xff] 0.0
    %106 = vst [vmem:[#allocation2 + $0x10] sm:$0xff] 0.0
    %107 = vst [vmem:[#allocation2 + $0x18] sm:$0xff] 0.0
    %108 = vst [vmem:[#allocation2 + $0x20] sm:$0xff] 0.0
    %109 = vst [vmem:[#allocation2 + $0x28] sm:$0xff] 0.0
    %110 = vst [vmem:[#allocation2 + $0x30] sm:$0xff] 0.0
    %111 = vst [vmem:[#allocation2 + $0x38] sm:$0xff] 0.0
    %112 = vst [vmem:[#allocation2 + $0x40] sm:$0xff] 0.0
    %113 = vst [vmem:[#allocation2 + $0x48] sm:$0xff] 0.0
    %114 = vst [vmem:[#allocation3] sm:$0xff] 0.0
    %115 = vst [vmem:[#allocation3 + $0x8] sm:$0xff] 0.0
    %116 = vst [vmem:[#allocation3 + $0x10] sm:$0xff] 0.0
    %117 = vst [vmem:[#allocation3 + $0x18] sm:$0xff] 0.0
    %118 = vst [vmem:[#allocation3 + $0x20] sm:$0xff] 0.0
    %119 = vst [vmem:[#allocation3 + $0x28] sm:$0xff] 0.0
    %120 = vst [vmem:[#allocation3 + $0x30] sm:$0xff] 0.0
    %121 = vst [vmem:[#allocation3 + $0x38] sm:$0xff] 0.0
    %122 = vst [vmem:[#allocation3 + $0x40] sm:$0xff] 0.0
    %123 = vst [vmem:[#allocation3 + $0x48] sm:$0xff] 0.0
    %124 = vst [vmem:[#allocation4] sm:$0xff] 0.0
    %125 = vst [vmem:[#allocation4 + $0x8] sm:$0xff] 0.0
    %126 = vst [vmem:[#allocation4 + $0x10] sm:$0xff] 0.0
    %127 = vst [vmem:[#allocation4 + $0x18] sm:$0xff] 0.0
    %128 = vst [vmem:[#allocation4 + $0x20] sm:$0xff] 0.0
    %129 = vst [vmem:[#allocation4 + $0x28] sm:$0xff] 0.0
    %130 = vst [vmem:[#allocation4 + $0x30] sm:$0xff] 0.0
    %131 = vst [vmem:[#allocation4 + $0x38] sm:$0xff] 0.0
    %132 = vst [vmem:[#allocation4 + $0x40] sm:$0xff] 0.0
    %133 = vst [vmem:[#allocation4 + $0x48] sm:$0xff] 0.0
    %v134 = vld [vmem:[%s0] sm:$0xff]
    %v135 = vld [vmem:[%s0 + $0x8] sm:$0xff]
    %138 = vrot.lane.b32.xlu0 %v134, 96
    %v139 = vpop.permute.xlu0 %138
    %140 = vrot.lane.b32.xlu0 %v135, 96
    %v141 = vpop.permute.xlu0 %140
    %vm142 = vcmask 785408
    %v143 = vsel %vm142, %v139, %v141
    %vm147 = vcmask 1048320
    %148 = vst.msk [vmem:[#allocation2 + $0x8] sm:$0xff] %vm147, %v139
    %149 = vst [vmem:[#allocation2 + $0x10] sm:$0xff] %v143
    %150 = vst.msk [vmem:[#allocation2 + $0x18] sm:$0xff] %vm142, %v141
    %s151 = scalar_lea.vmem %s0, 16
    %v152 = vld [vmem:[%s151] sm:$0xff]
    %v153 = vld [vmem:[%s151 + $0x8] sm:$0xff]
    %156 = vrot.lane.b32.xlu0 %v152, 96
    %v157 = vpop.permute.xlu0 %156
    %158 = vrot.lane.b32.xlu0 %v153, 96
    %v159 = vpop.permute.xlu0 %158
    %v160 = vsel %vm142, %v157, %v159
    %164 = vst.msk [vmem:[#allocation2 + $0x28] sm:$0xff] %vm147, %v157
    %165 = vst [vmem:[#allocation2 + $0x30] sm:$0xff] %v160
    %166 = vst.msk [vmem:[#allocation2 + $0x38] sm:$0xff] %vm142, %v159
    %v167 = vld [vmem:[#allocation2] sm:$0xff]
    %v168 = vld [vmem:[#allocation2 + $0x8] sm:$0xff]
    %v169 = vld [vmem:[#allocation2 + $0x10] sm:$0xff]
    %v170 = vld [vmem:[#allocation2 + $0x18] sm:$0xff]
    %v171 = vld [vmem:[#allocation2 + $0x20] sm:$0xff]
    %v172 = vld [vmem:[#allocation2 + $0x28] sm:$0xff]
    %v173 = vld [vmem:[#allocation2 + $0x30] sm:$0xff]
    %v174 = vld [vmem:[#allocation2 + $0x38] sm:$0xff]
    %v175 = vld [vmem:[#allocation2 + $0x40] sm:$0xff]
    %v176 = vld [vmem:[#allocation2 + $0x48] sm:$0xff]
    %v177 = vand.u32 %v40, 15
    %v178 = vand.u32 %v41, 15
    %v179 = vand.u32 %v42, 15
    %v180 = vand.u32 %v43, 15
    %v181 = vand.u32 %v44, 15
    %v182 = vand.u32 %v45, 15
    %v183 = vand.u32 %v46, 15
    %v184 = vand.u32 %v47, 15
    %vm185 = vcmp.ge.s32.totalorder %v177, 1
    %vm186 = vcmp.ge.s32.totalorder %v178, 1
    %vm187 = vcmp.ge.s32.totalorder %v179, 1
    %vm188 = vcmp.ge.s32.totalorder %v180, 1
    %vm189 = vcmp.ge.s32.totalorder %v181, 1
    %vm190 = vcmp.ge.s32.totalorder %v182, 1
    %vm191 = vcmp.ge.s32.totalorder %v183, 1
    %vm192 = vcmp.ge.s32.totalorder %v184, 1
    %202 = vrot.lane.b32.xlu0 %v167, 17
    %v203 = vpop.permute.xlu0 %202
    %204 = vrot.lane.b32.xlu0 %v168, 17
    %v205 = vpop.permute.xlu0 %204
    %206 = vrot.lane.b32.xlu0 %v169, 17
    %v207 = vpop.permute.xlu0 %206
    %208 = vrot.lane.b32.xlu0 %v170, 17
    %v209 = vpop.permute.xlu0 %208
    %210 = vrot.lane.b32.xlu0 %v171, 17
    %v211 = vpop.permute.xlu0 %210
    %212 = vrot.lane.b32.xlu0 %v172, 17
    %v213 = vpop.permute.xlu0 %212
    %214 = vrot.lane.b32.xlu0 %v173, 17
    %v215 = vpop.permute.xlu0 %214
    %216 = vrot.lane.b32.xlu0 %v174, 17
    %v217 = vpop.permute.xlu0 %216
    %218 = vrot.lane.b32.xlu0 %v175, 17
    %v219 = vpop.permute.xlu0 %218
    %vm220 = vcmask 138240
    %v221 = vsel %vm220, %v203, %v205
    %v222 = vsel %vm220, %v205, %v207
    %v223 = vsel %vm220, %v207, %v209
    %v224 = vsel %vm220, %v209, %v211
    %v225 = vsel %vm220, %v211, %v213
    %v226 = vsel %vm220, %v213, %v215
    %v227 = vsel %vm220, %v215, %v217
    %v228 = vsel %vm220, %v217, %v219
    %v237 = vsel %vm185, %v221, 0.0
    %v238 = vsel %vm186, %v222, 0.0
    %v239 = vsel %vm187, %v223, 0.0
    %v240 = vsel %vm188, %v224, 0.0
    %v241 = vsel %vm189, %v225, 0.0
    %v242 = vsel %vm190, %v226, 0.0
    %v243 = vsel %vm191, %v227, 0.0
    %v244 = vsel %vm192, %v228, 0.0
    %vm245 = vcmp.lt.s32.totalorder %v177, 15
    %vm246 = vcmp.lt.s32.totalorder %v178, 15
    %vm247 = vcmp.lt.s32.totalorder %v179, 15
    %vm248 = vcmp.lt.s32.totalorder %v180, 15
    %vm249 = vcmp.lt.s32.totalorder %v181, 15
    %vm250 = vcmp.lt.s32.totalorder %v182, 15
    %vm251 = vcmp.lt.s32.totalorder %v183, 15
    %vm252 = vcmp.lt.s32.totalorder %v184, 15
    %253 = vrot.lane.b32.xlu0 %v167, 15
    %v254 = vpop.permute.xlu0 %253
    %255 = vrot.lane.b32.xlu0 %v168, 15
    %v256 = vpop.permute.xlu0 %255
    %257 = vrot.lane.b32.xlu0 %v169, 15
    %v258 = vpop.permute.xlu0 %257
    %259 = vrot.lane.b32.xlu0 %v170, 15
    %v260 = vpop.permute.xlu0 %259
    %261 = vrot.lane.b32.xlu0 %v171, 15
    %v262 = vpop.permute.xlu0 %261
    %263 = vrot.lane.b32.xlu0 %v172, 15
    %v264 = vpop.permute.xlu0 %263
    %265 = vrot.lane.b32.xlu0 %v173, 15
    %v266 = vpop.permute.xlu0 %265
    %267 = vrot.lane.b32.xlu0 %v174, 15
    %v268 = vpop.permute.xlu0 %267
    %269 = vrot.lane.b32.xlu0 %v175, 15
    %v270 = vpop.permute.xlu0 %269
    %vm271 = vcmask 121856
    %v272 = vsel %vm271, %v254, %v256
    %v273 = vsel %vm271, %v256, %v258
    %v274 = vsel %vm271, %v258, %v260
    %v275 = vsel %vm271, %v260, %v262
    %v276 = vsel %vm271, %v262, %v264
    %v277 = vsel %vm271, %v264, %v266
    %v278 = vsel %vm271, %v266, %v268
    %v279 = vsel %vm271, %v268, %v270
    %v288 = vsel %vm245, %v272, 0.0
    %v289 = vsel %vm246, %v273, 0.0
    %v290 = vsel %vm247, %v274, 0.0
    %v291 = vsel %vm248, %v275, 0.0
    %v292 = vsel %vm249, %v276, 0.0
    %v293 = vsel %vm250, %v277, 0.0
    %v294 = vsel %vm251, %v278, 0.0
    %v295 = vsel %vm252, %v279, 0.0
    %296 = vrot.lane.b32.xlu0 %v167, 1
    %v297 = vpop.permute.xlu0 %296
    %298 = vrot.lane.b32.xlu0 %v168, 1
    %v299 = vpop.permute.xlu0 %298
    %300 = vrot.lane.b32.xlu0 %v169, 1
    %v301 = vpop.permute.xlu0 %300
    %302 = vrot.lane.b32.xlu0 %v170, 1
    %v303 = vpop.permute.xlu0 %302
    %304 = vrot.lane.b32.xlu0 %v171, 1
    %v305 = vpop.permute.xlu0 %304
    %306 = vrot.lane.b32.xlu0 %v172, 1
    %v307 = vpop.permute.xlu0 %306
    %308 = vrot.lane.b32.xlu0 %v173, 1
    %v309 = vpop.permute.xlu0 %308
    %310 = vrot.lane.b32.xlu0 %v174, 1
    %v311 = vpop.permute.xlu0 %310
    %312 = vrot.lane.b32.xlu0 %v175, 1
    %v313 = vpop.permute.xlu0 %312
    %vm314 = vcmask 7168
    %v315 = vsel %vm314, %v297, %v299
    %v316 = vsel %vm314, %v299, %v301
    %v317 = vsel %vm314, %v301, %v303
    %v318 = vsel %vm314, %v303, %v305
    %v319 = vsel %vm314, %v305, %v307
    %v320 = vsel %vm314, %v307, %v309
    %v321 = vsel %vm314, %v309, %v311
    %v322 = vsel %vm314, %v311, %v313
    %v331 = vsel %vm185, %v315, 0.0
    %v332 = vsel %vm186, %v316, 0.0
    %v333 = vsel %vm187, %v317, 0.0
    %v334 = vsel %vm188, %v318, 0.0
    %v335 = vsel %vm189, %v319, 0.0
    %v336 = vsel %vm190, %v320, 0.0
    %v337 = vsel %vm191, %v321, 0.0
    %v338 = vsel %vm192, %v322, 0.0
    %340 = vrot.lane.b32.xlu0 %v168, 127
    %v341 = vpop.permute.xlu0 %340
    %342 = vrot.lane.b32.xlu0 %v169, 127
    %v343 = vpop.permute.xlu0 %342
    %344 = vrot.lane.b32.xlu0 %v170, 127
    %v345 = vpop.permute.xlu0 %344
    %346 = vrot.lane.b32.xlu0 %v171, 127
    %v347 = vpop.permute.xlu0 %346
    %348 = vrot.lane.b32.xlu0 %v172, 127
    %v349 = vpop.permute.xlu0 %348
    %350 = vrot.lane.b32.xlu0 %v173, 127
    %v351 = vpop.permute.xlu0 %350
    %352 = vrot.lane.b32.xlu0 %v174, 127
    %v353 = vpop.permute.xlu0 %352
    %354 = vrot.lane.b32.xlu0 %v175, 127
    %v355 = vpop.permute.xlu0 %354
    %356 = vrot.lane.b32.xlu0 %v176, 127
    %v357 = vpop.permute.xlu0 %356
    %vm358 = vcmask 1039360
    %v359 = vsel %vm358, %v341, %v343
    %v360 = vsel %vm358, %v343, %v345
    %v361 = vsel %vm358, %v345, %v347
    %v362 = vsel %vm358, %v347, %v349
    %v363 = vsel %vm358, %v349, %v351
    %v364 = vsel %vm358, %v351, %v353
    %v365 = vsel %vm358, %v353, %v355
    %v366 = vsel %vm358, %v355, %v357
    %v375 = vsel %vm245, %v359, 0.0
    %v376 = vsel %vm246, %v360, 0.0
    %v377 = vsel %vm247, %v361, 0.0
    %v378 = vsel %vm248, %v362, 0.0
    %v379 = vsel %vm249, %v363, 0.0
    %v380 = vsel %vm250, %v364, 0.0
    %v381 = vsel %vm251, %v365, 0.0
    %v382 = vsel %vm252, %v366, 0.0
    %383 = vrot.lane.b32.xlu0 %v168, 113
    %v384 = vpop.permute.xlu0 %383
    %385 = vrot.lane.b32.xlu0 %v169, 113
    %v386 = vpop.permute.xlu0 %385
    %387 = vrot.lane.b32.xlu0 %v170, 113
    %v388 = vpop.permute.xlu0 %387
    %389 = vrot.lane.b32.xlu0 %v171, 113
    %v390 = vpop.permute.xlu0 %389
    %391 = vrot.lane.b32.xlu0 %v172, 113
    %v392 = vpop.permute.xlu0 %391
    %393 = vrot.lane.b32.xlu0 %v173, 113
    %v394 = vpop.permute.xlu0 %393
    %395 = vrot.lane.b32.xlu0 %v174, 113
    %v396 = vpop.permute.xlu0 %395
    %397 = vrot.lane.b32.xlu0 %v175, 113
    %v398 = vpop.permute.xlu0 %397
    %399 = vrot.lane.b32.xlu0 %v176, 113
    %v400 = vpop.permute.xlu0 %399
    %vm401 = vcmask 924672
    %v402 = vsel %vm401, %v384, %v386
    %v403 = vsel %vm401, %v386, %v388
    %v404 = vsel %vm401, %v388, %v390
    %v405 = vsel %vm401, %v390, %v392
    %v406 = vsel %vm401, %v392, %v394
    %v407 = vsel %vm401, %v394, %v396
    %v408 = vsel %vm401, %v396, %v398
    %v409 = vsel %vm401, %v398, %v400
    %v418 = vsel %vm185, %v402, 0.0
    %v419 = vsel %vm186, %v403, 0.0
    %v420 = vsel %vm187, %v404, 0.0
    %v421 = vsel %vm188, %v405, 0.0
    %v422 = vsel %vm189, %v406, 0.0
    %v423 = vsel %vm190, %v407, 0.0
    %v424 = vsel %vm191, %v408, 0.0
    %v425 = vsel %vm192, %v409, 0.0
    %426 = vrot.lane.b32.xlu0 %v168, 111
    %v427 = vpop.permute.xlu0 %426
    %428 = vrot.lane.b32.xlu0 %v169, 111
    %v429 = vpop.permute.xlu0 %428
    %430 = vrot.lane.b32.xlu0 %v170, 111
    %v431 = vpop.permute.xlu0 %430
    %432 = vrot.lane.b32.xlu0 %v171, 111
    %v433 = vpop.permute.xlu0 %432
    %434 = vrot.lane.b32.xlu0 %v172, 111
    %v435 = vpop.permute.xlu0 %434
    %436 = vrot.lane.b32.xlu0 %v173, 111
    %v437 = vpop.permute.xlu0 %436
    %438 = vrot.lane.b32.xlu0 %v174, 111
    %v439 = vpop.permute.xlu0 %438
    %440 = vrot.lane.b32.xlu0 %v175, 111
    %v441 = vpop.permute.xlu0 %440
    %442 = vrot.lane.b32.xlu0 %v176, 111
    %v443 = vpop.permute.xlu0 %442
    %vm444 = vcmask 908288
    %v445 = vsel %vm444, %v427, %v429
    %v446 = vsel %vm444, %v429, %v431
    %v447 = vsel %vm444, %v431, %v433
    %v448 = vsel %vm444, %v433, %v435
    %v449 = vsel %vm444, %v435, %v437
    %v450 = vsel %vm444, %v437, %v439
    %v451 = vsel %vm444, %v439, %v441
    %v452 = vsel %vm444, %v441, %v443
    %v461 = vsel %vm245, %v445, 0.0
    %v462 = vsel %vm246, %v446, 0.0
    %v463 = vsel %vm247, %v447, 0.0
    %v464 = vsel %vm248, %v448, 0.0
    %v465 = vsel %vm249, %v449, 0.0
    %v466 = vsel %vm250, %v450, 0.0
    %v467 = vsel %vm251, %v451, 0.0
    %v468 = vsel %vm252, %v452, 0.0
    %469 = vrot.lane.b32.xlu0 %v167, 16
    %v470 = vpop.permute.xlu0 %469
    %471 = vrot.lane.b32.xlu0 %v168, 16
    %v472 = vpop.permute.xlu0 %471
    %473 = vrot.lane.b32.xlu0 %v169, 16
    %v474 = vpop.permute.xlu0 %473
    %475 = vrot.lane.b32.xlu0 %v170, 16
    %v476 = vpop.permute.xlu0 %475
    %477 = vrot.lane.b32.xlu0 %v171, 16
    %v478 = vpop.permute.xlu0 %477
    %479 = vrot.lane.b32.xlu0 %v172, 16
    %v480 = vpop.permute.xlu0 %479
    %481 = vrot.lane.b32.xlu0 %v173, 16
    %v482 = vpop.permute.xlu0 %481
    %483 = vrot.lane.b32.xlu0 %v174, 16
    %v484 = vpop.permute.xlu0 %483
    %485 = vrot.lane.b32.xlu0 %v175, 16
    %v486 = vpop.permute.xlu0 %485
    %vm487 = vcmask 130048
    %v488 = vsel %vm487, %v470, %v472
    %v489 = vsel %vm487, %v472, %v474
    %v490 = vsel %vm487, %v474, %v476
    %v491 = vsel %vm487, %v476, %v478
    %v492 = vsel %vm487, %v478, %v480
    %v493 = vsel %vm487, %v480, %v482
    %v494 = vsel %vm487, %v482, %v484
    %v495 = vsel %vm487, %v484, %v486
    %504 = vrot.lane.b32.xlu0 %v168, 112
    %v505 = vpop.permute.xlu0 %504
    %506 = vrot.lane.b32.xlu0 %v169, 112
    %v507 = vpop.permute.xlu0 %506
    %508 = vrot.lane.b32.xlu0 %v170, 112
    %v509 = vpop.permute.xlu0 %508
    %510 = vrot.lane.b32.xlu0 %v171, 112
    %v511 = vpop.permute.xlu0 %510
    %512 = vrot.lane.b32.xlu0 %v172, 112
    %v513 = vpop.permute.xlu0 %512
    %514 = vrot.lane.b32.xlu0 %v173, 112
    %v515 = vpop.permute.xlu0 %514
    %516 = vrot.lane.b32.xlu0 %v174, 112
    %v517 = vpop.permute.xlu0 %516
    %518 = vrot.lane.b32.xlu0 %v175, 112
    %v519 = vpop.permute.xlu0 %518
    %520 = vrot.lane.b32.xlu0 %v176, 112
    %v521 = vpop.permute.xlu0 %520
    %vm522 = vcmask 916480
    %v523 = vsel %vm522, %v505, %v507
    %v524 = vsel %vm522, %v507, %v509
    %v525 = vsel %vm522, %v509, %v511
    %v526 = vsel %vm522, %v511, %v513
    %v527 = vsel %vm522, %v513, %v515
    %v528 = vsel %vm522, %v515, %v517
    %v529 = vsel %vm522, %v517, %v519
    %v530 = vsel %vm522, %v519, %v521
    %v539 = vld [vmem:[%s1] sm:$0xff]
    %v540 = vld [vmem:[%s2] sm:$0xff]
    %542 = vset.pattern.permute.xlu0 0
    %543 = vperm.xlu0 %542, %v540
    %v544 = vpop.permute.xlu0 %543
    %vm546 = vcmask 588800
    %v548 = vsel %vm546, %v539, 0
    %550 = vmatprep.subr.mxu0 0.0
    %551 = vmatpush1.msra.mxu0 0.0
    %552 = vmatprep.subr.mxu0 0.0
    %553 = vmatpush1.msra.mxu0 0.0
    %554 = vmatprep.subr.mxu0 0.0
    %555 = vmatpush1.msra.mxu0 0.0
    %556 = vmatprep.subr.mxu0 0.0
    %557 = vmatpush1.msra.mxu0 0.0
    %558 = vmatprep.subr.mxu0 0.0
    %559 = vmatpush1.msra.mxu0 0.0
    %560 = vmatprep.subr.mxu0 0.0
    %561 = vmatpush1.msra.mxu0 0.0
    %562 = vmatprep.subr.mxu0 0.0
    %563 = vmatpush1.msra.mxu0 0.0
    %v564 = vand.u32 %v462, 4294901760
    %565 = vmatprep.subr.mxu0 %v564
    %v566 = vand.u32 %v461, 4294901760
    %567 = vmatpush1.msra.mxu0 %v566
    %v568 = vand.u32 %v524, 4294901760
    %569 = vmatprep.subr.mxu0 %v568
    %v570 = vand.u32 %v523, 4294901760
    %571 = vmatpush1.msra.mxu0 %v570
    %v572 = vand.u32 %v419, 4294901760
    %573 = vmatprep.subr.mxu0 %v572
    %v574 = vand.u32 %v418, 4294901760
    %575 = vmatpush1.msra.mxu0 %v574
    %v576 = vand.u32 %v376, 4294901760
    %577 = vmatprep.subr.mxu0 %v576
    %v578 = vand.u32 %v375, 4294901760
    %579 = vmatpush1.msra.mxu0 %v578
    %v580 = vand.u32 %v169, 4294901760
    %581 = vmatprep.subr.mxu0 %v580
    %v582 = vand.u32 %v168, 4294901760
    %583 = vmatpush1.msra.mxu0 %v582
    %v584 = vand.u32 %v332, 4294901760
    %585 = vmatprep.subr.mxu0 %v584
    %v586 = vand.u32 %v331, 4294901760
    %587 = vmatpush1.msra.mxu0 %v586
    %v588 = vand.u32 %v289, 4294901760
    %589 = vmatprep.subr.mxu0 %v588
    %v590 = vand.u32 %v288, 4294901760
    %591 = vmatpush1.msra.mxu0 %v590
    %v592 = vand.u32 %v489, 4294901760
    %593 = vmatprep.subr.mxu0 %v592
    %v594 = vand.u32 %v488, 4294901760
    %595 = vmatpush1.msra.mxu0 %v594
    %v596 = vand.u32 %v238, 4294901760
    %597 = vmatprep.subr.mxu0 %v596
    %v598 = vand.u32 %v237, 4294901760
    %599 = vmatpush1.msra.mxu0 %v598
    %600 = vmatprep.subr.mxu0 0.0
    %601 = vmatpush2.msra.mxu0 0.0
    %602 = vmatprep.subr.mxu0 0.0
    %603 = vmatpush2.msra.mxu0 0.0
    %604 = vmatprep.subr.mxu0 0.0
    %605 = vmatpush2.msra.mxu0 0.0
    %606 = vmatprep.subr.mxu0 0.0
    %607 = vmatpush2.msra.mxu0 0.0
    %608 = vmatprep.subr.mxu0 0.0
    %609 = vmatpush2.msra.mxu0 0.0
    %610 = vmatprep.subr.mxu0 0.0
    %611 = vmatpush2.msra.mxu0 0.0
    %612 = vmatprep.subr.mxu0 0.0
    %613 = vmatpush2.msra.mxu0 0.0
    %614 = vmatprep.subr.mxu0 0.0
    %615 = vmatpush2.msra.mxu0 0.0
    %616 = vmatprep.subr.mxu0 0.0
    %617 = vmatpush2.msra.mxu0 0.0
    %618 = vmatprep.subr.mxu0 0.0
    %619 = vmatpush2.msra.mxu0 0.0
    %620 = vmatprep.subr.mxu0 0.0
    %621 = vmatpush2.msra.mxu0 0.0
    %622 = vmatprep.subr.mxu0 0.0
    %623 = vmatpush2.msra.mxu0 0.0
    %624 = vmatprep.subr.mxu0 0.0
    %625 = vmatpush2.msra.mxu0 0.0
    %626 = vmatprep.subr.mxu0 0.0
    %627 = vmatpush2.msra.mxu0 0.0
    %628 = vmatprep.subr.mxu0 0.0
    %629 = vmatpush2.msra.mxu0 0.0
    %630 = vmatprep.subr.mxu0 0.0
    %631 = vmatpush2.msra.mxu0 0.0
    %632 = vmatprep.mubr.f32.mxu0 0.0
    %v633 = vand.u32 %v548, 4294901760
    %v634 = vsub.f32 %v548, %v633
    %v635 = vand.u32 %v634, 4294901760
    %v636 = vsub.f32 %v634, %v635
    %v637 = vand.u32 %v636, 4294901760
    %638 = vmatmul.mubr.f32.gmra.mxu0 %v637
    %v639 = vpop.f32.mrf.mxu0
    %v640 = vadd.f32 %v544, %v639
    %v641 = vpop.f32.mrf.mxu0
    %v642 = vadd.f32 %v544, %v641
    %643 = vdwg.mxu0
    %644 = vmatprep.subr.mxu0 0.0
    %645 = vmatpush1.msra.mxu0 0.0
    %646 = vmatprep.subr.mxu0 0.0
    %647 = vmatpush1.msra.mxu0 0.0
    %648 = vmatprep.subr.mxu0 0.0
    %649 = vmatpush1.msra.mxu0 0.0
    %650 = vmatprep.subr.mxu0 0.0
    %651 = vmatpush1.msra.mxu0 0.0
    %652 = vmatprep.subr.mxu0 0.0
    %653 = vmatpush1.msra.mxu0 0.0
    %654 = vmatprep.subr.mxu0 0.0
    %655 = vmatpush1.msra.mxu0 0.0
    %656 = vmatprep.subr.mxu0 0.0
    %657 = vmatpush1.msra.mxu0 0.0
    %v658 = vand.u32 %v462, 4294901760
    %v659 = vsub.f32 %v462, %v658
    %v660 = vand.u32 %v659, 4294901760
    %v661 = vsub.f32 %v659, %v660
    %v662 = vand.u32 %v661, 4294901760
    %663 = vmatprep.subr.mxu0 %v662
    %v664 = vand.u32 %v461, 4294901760
    %v665 = vsub.f32 %v461, %v664
    %v666 = vand.u32 %v665, 4294901760
    %v667 = vsub.f32 %v665, %v666
    %v668 = vand.u32 %v667, 4294901760
    %669 = vmatpush1.msra.mxu0 %v668
    %v670 = vand.u32 %v524, 4294901760
    %v671 = vsub.f32 %v524, %v670
    %v672 = vand.u32 %v671, 4294901760
    %v673 = vsub.f32 %v671, %v672
    %v674 = vand.u32 %v673, 4294901760
    %675 = vmatprep.subr.mxu0 %v674
    %v676 = vand.u32 %v523, 4294901760
    %v677 = vsub.f32 %v523, %v676
    %v678 = vand.u32 %v677, 4294901760
    %v679 = vsub.f32 %v677, %v678
    %v680 = vand.u32 %v679, 4294901760
    %681 = vmatpush1.msra.mxu0 %v680
    %v682 = vand.u32 %v419, 4294901760
    %v683 = vsub.f32 %v419, %v682
    %v684 = vand.u32 %v683, 4294901760
    %v685 = vsub.f32 %v683, %v684
    %v686 = vand.u32 %v685, 4294901760
    %687 = vmatprep.subr.mxu0 %v686
    %v688 = vand.u32 %v418, 4294901760
    %v689 = vsub.f32 %v418, %v688
    %v690 = vand.u32 %v689, 4294901760
    %v691 = vsub.f32 %v689, %v690
    %v692 = vand.u32 %v691, 4294901760
    %693 = vmatpush1.msra.mxu0 %v692
    %v694 = vand.u32 %v376, 4294901760
    %v695 = vsub.f32 %v376, %v694
    %v696 = vand.u32 %v695, 4294901760
    %v697 = vsub.f32 %v695, %v696
    %v698 = vand.u32 %v697, 4294901760
    %699 = vmatprep.subr.mxu0 %v698
    %v700 = vand.u32 %v375, 4294901760
    %v701 = vsub.f32 %v375, %v700
    %v702 = vand.u32 %v701, 4294901760
    %v703 = vsub.f32 %v701, %v702
    %v704 = vand.u32 %v703, 4294901760
    %705 = vmatpush1.msra.mxu0 %v704
    %v706 = vand.u32 %v169, 4294901760
    %v707 = vsub.f32 %v169, %v706
    %v708 = vand.u32 %v707, 4294901760
    %v709 = vsub.f32 %v707, %v708
    %v710 = vand.u32 %v709, 4294901760
    %711 = vmatprep.subr.mxu0 %v710
    %v712 = vand.u32 %v168, 4294901760
    %v713 = vsub.f32 %v168, %v712
    %v714 = vand.u32 %v713, 4294901760
    %v715 = vsub.f32 %v713, %v714
    %v716 = vand.u32 %v715, 4294901760
    %717 = vmatpush1.msra.mxu0 %v716
    %v718 = vand.u32 %v332, 4294901760
    %v719 = vsub.f32 %v332, %v718
    %v720 = vand.u32 %v719, 4294901760
    %v721 = vsub.f32 %v719, %v720
    %v722 = vand.u32 %v721, 4294901760
    %723 = vmatprep.subr.mxu0 %v722
    %v724 = vand.u32 %v331, 4294901760
    %v725 = vsub.f32 %v331, %v724
    %v726 = vand.u32 %v725, 4294901760
    %v727 = vsub.f32 %v725, %v726
    %v728 = vand.u32 %v727, 4294901760
    %729 = vmatpush1.msra.mxu0 %v728
    %v730 = vand.u32 %v289, 4294901760
    %v731 = vsub.f32 %v289, %v730
    %v732 = vand.u32 %v731, 4294901760
    %v733 = vsub.f32 %v731, %v732
    %v734 = vand.u32 %v733, 4294901760
    %735 = vmatprep.subr.mxu0 %v734
    %v736 = vand.u32 %v288, 4294901760
    %v737 = vsub.f32 %v288, %v736
    %v738 = vand.u32 %v737, 4294901760
    %v739 = vsub.f32 %v737, %v738
    %v740 = vand.u32 %v739, 4294901760
    %741 = vmatpush1.msra.mxu0 %v740
    %v742 = vand.u32 %v489, 4294901760
    %v743 = vsub.f32 %v489, %v742
    %v744 = vand.u32 %v743, 4294901760
    %v745 = vsub.f32 %v743, %v744
    %v746 = vand.u32 %v745, 4294901760
    %747 = vmatprep.subr.mxu0 %v746
    %v748 = vand.u32 %v488, 4294901760
    %v749 = vsub.f32 %v488, %v748
    %v750 = vand.u32 %v749, 4294901760
    %v751 = vsub.f32 %v749, %v750
    %v752 = vand.u32 %v751, 4294901760
    %753 = vmatpush1.msra.mxu0 %v752
    %v754 = vand.u32 %v238, 4294901760
    %v755 = vsub.f32 %v238, %v754
    %v756 = vand.u32 %v755, 4294901760
    %v757 = vsub.f32 %v755, %v756
    %v758 = vand.u32 %v757, 4294901760
    %759 = vmatprep.subr.mxu0 %v758
    %v760 = vand.u32 %v237, 4294901760
    %v761 = vsub.f32 %v237, %v760
    %v762 = vand.u32 %v761, 4294901760
    %v763 = vsub.f32 %v761, %v762
    %v764 = vand.u32 %v763, 4294901760
    %765 = vmatpush1.msra.mxu0 %v764
    %766 = vmatprep.subr.mxu0 0.0
    %767 = vmatpush2.msra.mxu0 0.0
    %768 = vmatprep.subr.mxu0 0.0
    %769 = vmatpush2.msra.mxu0 0.0
    %770 = vmatprep.subr.mxu0 0.0
    %771 = vmatpush2.msra.mxu0 0.0
    %772 = vmatprep.subr.mxu0 0.0
    %773 = vmatpush2.msra.mxu0 0.0
    %774 = vmatprep.subr.mxu0 0.0
    %775 = vmatpush2.msra.mxu0 0.0
    %776 = vmatprep.subr.mxu0 0.0
    %777 = vmatpush2.msra.mxu0 0.0
    %778 = vmatprep.subr.mxu0 0.0
    %779 = vmatpush2.msra.mxu0 0.0
    %780 = vmatprep.subr.mxu0 0.0
    %781 = vmatpush2.msra.mxu0 0.0
    %782 = vmatprep.subr.mxu0 0.0
    %783 = vmatpush2.msra.mxu0 0.0
    %784 = vmatprep.subr.mxu0 0.0
    %785 = vmatpush2.msra.mxu0 0.0
    %786 = vmatprep.subr.mxu0 0.0
    %787 = vmatpush2.msra.mxu0 0.0
    %788 = vmatprep.subr.mxu0 0.0
    %789 = vmatpush2.msra.mxu0 0.0
    %790 = vmatprep.subr.mxu0 0.0
    %791 = vmatpush2.msra.mxu0 0.0
    %792 = vmatprep.subr.mxu0 0.0
    %793 = vmatpush2.msra.mxu0 0.0
    %794 = vmatprep.subr.mxu0 0.0
    %795 = vmatpush2.msra.mxu0 0.0
    %796 = vmatprep.subr.mxu0 0.0
    %797 = vmatpush2.msra.mxu0 0.0
    %798 = vmatprep.mubr.f32.mxu0 0.0
    %v799 = vand.u32 %v548, 4294901760
    %800 = vmatmul.mubr.f32.gmra.mxu0 %v799
    %v801 = vpop.f32.mrf.mxu0
    %v802 = vadd.f32 %v640, %v801
    %v803 = vpop.f32.mrf.mxu0
    %v804 = vadd.f32 %v642, %v803
    %805 = vdwg.mxu0
    %806 = vmatprep.subr.mxu0 0.0
    %807 = vmatpush1.msra.mxu0 0.0
    %808 = vmatprep.subr.mxu0 0.0
    %809 = vmatpush1.msra.mxu0 0.0
    %810 = vmatprep.subr.mxu0 0.0
    %811 = vmatpush1.msra.mxu0 0.0
    %812 = vmatprep.subr.mxu0 0.0
    %813 = vmatpush1.msra.mxu0 0.0
    %814 = vmatprep.subr.mxu0 0.0
    %815 = vmatpush1.msra.mxu0 0.0
    %816 = vmatprep.subr.mxu0 0.0
    %817 = vmatpush1.msra.mxu0 0.0
    %818 = vmatprep.subr.mxu0 0.0
    %819 = vmatpush1.msra.mxu0 0.0
    %v820 = vand.u32 %v462, 4294901760
    %v821 = vsub.f32 %v462, %v820
    %822 = vmatprep.subr.mxu0 %v821
    %v823 = vand.u32 %v461, 4294901760
    %v824 = vsub.f32 %v461, %v823
    %825 = vmatpush1.msra.mxu0 %v824
    %v826 = vand.u32 %v524, 4294901760
    %v827 = vsub.f32 %v524, %v826
    %828 = vmatprep.subr.mxu0 %v827
    %v829 = vand.u32 %v523, 4294901760
    %v830 = vsub.f32 %v523, %v829
    %831 = vmatpush1.msra.mxu0 %v830
    %v832 = vand.u32 %v419, 4294901760
    %v833 = vsub.f32 %v419, %v832
    %834 = vmatprep.subr.mxu0 %v833
    %v835 = vand.u32 %v418, 4294901760
    %v836 = vsub.f32 %v418, %v835
    %837 = vmatpush1.msra.mxu0 %v836
    %v838 = vand.u32 %v376, 4294901760
    %v839 = vsub.f32 %v376, %v838
    %840 = vmatprep.subr.mxu0 %v839
    %v841 = vand.u32 %v375, 4294901760
    %v842 = vsub.f32 %v375, %v841
    %843 = vmatpush1.msra.mxu0 %v842
    %v844 = vand.u32 %v169, 4294901760
    %v845 = vsub.f32 %v169, %v844
    %846 = vmatprep.subr.mxu0 %v845
    %v847 = vand.u32 %v168, 4294901760
    %v848 = vsub.f32 %v168, %v847
    %849 = vmatpush1.msra.mxu0 %v848
    %v850 = vand.u32 %v332, 4294901760
    %v851 = vsub.f32 %v332, %v850
    %852 = vmatprep.subr.mxu0 %v851
    %v853 = vand.u32 %v331, 4294901760
    %v854 = vsub.f32 %v331, %v853
    %855 = vmatpush1.msra.mxu0 %v854
    %v856 = vand.u32 %v289, 4294901760
    %v857 = vsub.f32 %v289, %v856
    %858 = vmatprep.subr.mxu0 %v857
    %v859 = vand.u32 %v288, 4294901760
    %v860 = vsub.f32 %v288, %v859
    %861 = vmatpush1.msra.mxu0 %v860
    %v862 = vand.u32 %v489, 4294901760
    %v863 = vsub.f32 %v489, %v862
    %864 = vmatprep.subr.mxu0 %v863
    %v865 = vand.u32 %v488, 4294901760
    %v866 = vsub.f32 %v488, %v865
    %867 = vmatpush1.msra.mxu0 %v866
    %v868 = vand.u32 %v238, 4294901760
    %v869 = vsub.f32 %v238, %v868
    %870 = vmatprep.subr.mxu0 %v869
    %v871 = vand.u32 %v237, 4294901760
    %v872 = vsub.f32 %v237, %v871
    %873 = vmatpush1.msra.mxu0 %v872
    %874 = vmatprep.subr.mxu0 0.0
    %875 = vmatpush2.msra.mxu0 0.0
    %876 = vmatprep.subr.mxu0 0.0
    %877 = vmatpush2.msra.mxu0 0.0
    %878 = vmatprep.subr.mxu0 0.0
    %879 = vmatpush2.msra.mxu0 0.0
    %880 = vmatprep.subr.mxu0 0.0
    %881 = vmatpush2.msra.mxu0 0.0
    %882 = vmatprep.subr.mxu0 0.0
    %883 = vmatpush2.msra.mxu0 0.0
    %884 = vmatprep.subr.mxu0 0.0
    %885 = vmatpush2.msra.mxu0 0.0
    %886 = vmatprep.subr.mxu0 0.0
    %887 = vmatpush2.msra.mxu0 0.0
    %888 = vmatprep.subr.mxu0 0.0
    %889 = vmatpush2.msra.mxu0 0.0
    %890 = vmatprep.subr.mxu0 0.0
    %891 = vmatpush2.msra.mxu0 0.0
    %892 = vmatprep.subr.mxu0 0.0
    %893 = vmatpush2.msra.mxu0 0.0
    %894 = vmatprep.subr.mxu0 0.0
    %895 = vmatpush2.msra.mxu0 0.0
    %896 = vmatprep.subr.mxu0 0.0
    %897 = vmatpush2.msra.mxu0 0.0
    %898 = vmatprep.subr.mxu0 0.0
    %899 = vmatpush2.msra.mxu0 0.0
    %900 = vmatprep.subr.mxu0 0.0
    %901 = vmatpush2.msra.mxu0 0.0
    %902 = vmatprep.subr.mxu0 0.0
    %903 = vmatpush2.msra.mxu0 0.0
    %904 = vmatprep.subr.mxu0 0.0
    %905 = vmatpush2.msra.mxu0 0.0
    %906 = vmatprep.mubr.f32.mxu0 0.0
    %v907 = vand.u32 %v548, 4294901760
    %v908 = vsub.f32 %v548, %v907
    %909 = vmatmul.mubr.f32.gmra.mxu0 %v908
    %v910 = vpop.f32.mrf.mxu0
    %v911 = vadd.f32 %v802, %v910
    %v912 = vpop.f32.mrf.mxu0
    %v913 = vadd.f32 %v804, %v912
    %914 = vdwg.mxu0
    %915 = vmatprep.subr.mxu0 0.0
    %916 = vmatpush1.msra.mxu0 0.0
    %917 = vmatprep.subr.mxu0 0.0
    %918 = vmatpush1.msra.mxu0 0.0
    %919 = vmatprep.subr.mxu0 0.0
    %920 = vmatpush1.msra.mxu0 0.0
    %921 = vmatprep.subr.mxu0 0.0
    %922 = vmatpush1.msra.mxu0 0.0
    %923 = vmatprep.subr.mxu0 0.0
    %924 = vmatpush1.msra.mxu0 0.0
    %925 = vmatprep.subr.mxu0 0.0
    %926 = vmatpush1.msra.mxu0 0.0
    %927 = vmatprep.subr.mxu0 0.0
    %928 = vmatpush1.msra.mxu0 0.0
    %v929 = vand.u32 %v462, 4294901760
    %930 = vmatprep.subr.mxu0 %v929
    %v931 = vand.u32 %v461, 4294901760
    %932 = vmatpush1.msra.mxu0 %v931
    %v933 = vand.u32 %v524, 4294901760
    %934 = vmatprep.subr.mxu0 %v933
    %v935 = vand.u32 %v523, 4294901760
    %936 = vmatpush1.msra.mxu0 %v935
    %v937 = vand.u32 %v419, 4294901760
    %938 = vmatprep.subr.mxu0 %v937
    %v939 = vand.u32 %v418, 4294901760
    %940 = vmatpush1.msra.mxu0 %v939
    %v941 = vand.u32 %v376, 4294901760
    %942 = vmatprep.subr.mxu0 %v941
    %v943 = vand.u32 %v375, 4294901760
    %944 = vmatpush1.msra.mxu0 %v943
    %v945 = vand.u32 %v169, 4294901760
    %946 = vmatprep.subr.mxu0 %v945
    %v947 = vand.u32 %v168, 4294901760
    %948 = vmatpush1.msra.mxu0 %v947
    %v949 = vand.u32 %v332, 4294901760
    %950 = vmatprep.subr.mxu0 %v949
    %v951 = vand.u32 %v331, 4294901760
    %952 = vmatpush1.msra.mxu0 %v951
    %v953 = vand.u32 %v289, 4294901760
    %954 = vmatprep.subr.mxu0 %v953
    %v955 = vand.u32 %v288, 4294901760
    %956 = vmatpush1.msra.mxu0 %v955
    %v957 = vand.u32 %v489, 4294901760
    %958 = vmatprep.subr.mxu0 %v957
    %v959 = vand.u32 %v488, 4294901760
    %960 = vmatpush1.msra.mxu0 %v959
    %v961 = vand.u32 %v238, 4294901760
    %962 = vmatprep.subr.mxu0 %v961
    %v963 = vand.u32 %v237, 4294901760
    %964 = vmatpush1.msra.mxu0 %v963
    %965 = vmatprep.subr.mxu0 0.0
    %966 = vmatpush2.msra.mxu0 0.0
    %967 = vmatprep.subr.mxu0 0.0
    %968 = vmatpush2.msra.mxu0 0.0
    %969 = vmatprep.subr.mxu0 0.0
    %970 = vmatpush2.msra.mxu0 0.0
    %971 = vmatprep.subr.mxu0 0.0
    %972 = vmatpush2.msra.mxu0 0.0
    %973 = vmatprep.subr.mxu0 0.0
    %974 = vmatpush2.msra.mxu0 0.0
    %975 = vmatprep.subr.mxu0 0.0
    %976 = vmatpush2.msra.mxu0 0.0
    %977 = vmatprep.subr.mxu0 0.0
    %978 = vmatpush2.msra.mxu0 0.0
    %979 = vmatprep.subr.mxu0 0.0
    %980 = vmatpush2.msra.mxu0 0.0
    %981 = vmatprep.subr.mxu0 0.0
    %982 = vmatpush2.msra.mxu0 0.0
    %983 = vmatprep.subr.mxu0 0.0
    %984 = vmatpush2.msra.mxu0 0.0
    %985 = vmatprep.subr.mxu0 0.0
    %986 = vmatpush2.msra.mxu0 0.0
    %987 = vmatprep.subr.mxu0 0.0
    %988 = vmatpush2.msra.mxu0 0.0
    %989 = vmatprep.subr.mxu0 0.0
    %990 = vmatpush2.msra.mxu0 0.0
    %991 = vmatprep.subr.mxu0 0.0
    %992 = vmatpush2.msra.mxu0 0.0
    %993 = vmatprep.subr.mxu0 0.0
    %994 = vmatpush2.msra.mxu0 0.0
    %995 = vmatprep.subr.mxu0 0.0
    %996 = vmatpush2.msra.mxu0 0.0
    %997 = vmatprep.mubr.f32.mxu0 0.0
    %v998 = vand.u32 %v548, 4294901760
    %v999 = vsub.f32 %v548, %v998
    %v1000 = vand.u32 %v999, 4294901760
    %1001 = vmatmul.mubr.f32.gmra.mxu0 %v1000
    %v1002 = vpop.f32.mrf.mxu0
    %v1003 = vadd.f32 %v911, %v1002
    %v1004 = vpop.f32.mrf.mxu0
    %v1005 = vadd.f32 %v913, %v1004
    %1006 = vdwg.mxu0
    %1007 = vmatprep.subr.mxu0 0.0
    %1008 = vmatpush1.msra.mxu0 0.0
    %1009 = vmatprep.subr.mxu0 0.0
    %1010 = vmatpush1.msra.mxu0 0.0
    %1011 = vmatprep.subr.mxu0 0.0
    %1012 = vmatpush1.msra.mxu0 0.0
    %1013 = vmatprep.subr.mxu0 0.0
    %1014 = vmatpush1.msra.mxu0 0.0
    %1015 = vmatprep.subr.mxu0 0.0
    %1016 = vmatpush1.msra.mxu0 0.0
    %1017 = vmatprep.subr.mxu0 0.0
    %1018 = vmatpush1.msra.mxu0 0.0
    %1019 = vmatprep.subr.mxu0 0.0
    %1020 = vmatpush1.msra.mxu0 0.0
    %v1021 = vand.u32 %v462, 4294901760
    %v1022 = vsub.f32 %v462, %v1021
    %v1023 = vand.u32 %v1022, 4294901760
    %1024 = vmatprep.subr.mxu0 %v1023
    %v1025 = vand.u32 %v461, 4294901760
    %v1026 = vsub.f32 %v461, %v1025
    %v1027 = vand.u32 %v1026, 4294901760
    %1028 = vmatpush1.msra.mxu0 %v1027
    %v1029 = vand.u32 %v524, 4294901760
    %v1030 = vsub.f32 %v524, %v1029
    %v1031 = vand.u32 %v1030, 4294901760
    %1032 = vmatprep.subr.mxu0 %v1031
    %v1033 = vand.u32 %v523, 4294901760
    %v1034 = vsub.f32 %v523, %v1033
    %v1035 = vand.u32 %v1034, 4294901760
    %1036 = vmatpush1.msra.mxu0 %v1035
    %v1037 = vand.u32 %v419, 4294901760
    %v1038 = vsub.f32 %v419, %v1037
    %v1039 = vand.u32 %v1038, 4294901760
    %1040 = vmatprep.subr.mxu0 %v1039
    %v1041 = vand.u32 %v418, 4294901760
    %v1042 = vsub.f32 %v418, %v1041
    %v1043 = vand.u32 %v1042, 4294901760
    %1044 = vmatpush1.msra.mxu0 %v1043
    %v1045 = vand.u32 %v376, 4294901760
    %v1046 = vsub.f32 %v376, %v1045
    %v1047 = vand.u32 %v1046, 4294901760
    %1048 = vmatprep.subr.mxu0 %v1047
    %v1049 = vand.u32 %v375, 4294901760
    %v1050 = vsub.f32 %v375, %v1049
    %v1051 = vand.u32 %v1050, 4294901760
    %1052 = vmatpush1.msra.mxu0 %v1051
    %v1053 = vand.u32 %v169, 4294901760
    %v1054 = vsub.f32 %v169, %v1053
    %v1055 = vand.u32 %v1054, 4294901760
    %1056 = vmatprep.subr.mxu0 %v1055
    %v1057 = vand.u32 %v168, 4294901760
    %v1058 = vsub.f32 %v168, %v1057
    %v1059 = vand.u32 %v1058, 4294901760
    %1060 = vmatpush1.msra.mxu0 %v1059
    %v1061 = vand.u32 %v332, 4294901760
    %v1062 = vsub.f32 %v332, %v1061
    %v1063 = vand.u32 %v1062, 4294901760
    %1064 = vmatprep.subr.mxu0 %v1063
    %v1065 = vand.u32 %v331, 4294901760
    %v1066 = vsub.f32 %v331, %v1065
    %v1067 = vand.u32 %v1066, 4294901760
    %1068 = vmatpush1.msra.mxu0 %v1067
    %v1069 = vand.u32 %v289, 4294901760
    %v1070 = vsub.f32 %v289, %v1069
    %v1071 = vand.u32 %v1070, 4294901760
    %1072 = vmatprep.subr.mxu0 %v1071
    %v1073 = vand.u32 %v288, 4294901760
    %v1074 = vsub.f32 %v288, %v1073
    %v1075 = vand.u32 %v1074, 4294901760
    %1076 = vmatpush1.msra.mxu0 %v1075
    %v1077 = vand.u32 %v489, 4294901760
    %v1078 = vsub.f32 %v489, %v1077
    %v1079 = vand.u32 %v1078, 4294901760
    %1080 = vmatprep.subr.mxu0 %v1079
    %v1081 = vand.u32 %v488, 4294901760
    %v1082 = vsub.f32 %v488, %v1081
    %v1083 = vand.u32 %v1082, 4294901760
    %1084 = vmatpush1.msra.mxu0 %v1083
    %v1085 = vand.u32 %v238, 4294901760
    %v1086 = vsub.f32 %v238, %v1085
    %v1087 = vand.u32 %v1086, 4294901760
    %1088 = vmatprep.subr.mxu0 %v1087
    %v1089 = vand.u32 %v237, 4294901760
    %v1090 = vsub.f32 %v237, %v1089
    %v1091 = vand.u32 %v1090, 4294901760
    %1092 = vmatpush1.msra.mxu0 %v1091
    %1093 = vmatprep.subr.mxu0 0.0
    %1094 = vmatpush2.msra.mxu0 0.0
    %1095 = vmatprep.subr.mxu0 0.0
    %1096 = vmatpush2.msra.mxu0 0.0
    %1097 = vmatprep.subr.mxu0 0.0
    %1098 = vmatpush2.msra.mxu0 0.0
    %1099 = vmatprep.subr.mxu0 0.0
    %1100 = vmatpush2.msra.mxu0 0.0
    %1101 = vmatprep.subr.mxu0 0.0
    %1102 = vmatpush2.msra.mxu0 0.0
    %1103 = vmatprep.subr.mxu0 0.0
    %1104 = vmatpush2.msra.mxu0 0.0
    %1105 = vmatprep.subr.mxu0 0.0
    %1106 = vmatpush2.msra.mxu0 0.0
    %1107 = vmatprep.subr.mxu0 0.0
    %1108 = vmatpush2.msra.mxu0 0.0
    %1109 = vmatprep.subr.mxu0 0.0
    %1110 = vmatpush2.msra.mxu0 0.0
    %1111 = vmatprep.subr.mxu0 0.0
    %1112 = vmatpush2.msra.mxu0 0.0
    %1113 = vmatprep.subr.mxu0 0.0
    %1114 = vmatpush2.msra.mxu0 0.0
    %1115 = vmatprep.subr.mxu0 0.0
    %1116 = vmatpush2.msra.mxu0 0.0
    %1117 = vmatprep.subr.mxu0 0.0
    %1118 = vmatpush2.msra.mxu0 0.0
    %1119 = vmatprep.subr.mxu0 0.0
    %1120 = vmatpush2.msra.mxu0 0.0
    %1121 = vmatprep.subr.mxu0 0.0
    %1122 = vmatpush2.msra.mxu0 0.0
    %1123 = vmatprep.subr.mxu0 0.0
    %1124 = vmatpush2.msra.mxu0 0.0
    %1125 = vmatprep.mubr.f32.mxu0 0.0
    %v1126 = vand.u32 %v548, 4294901760
    %1127 = vmatmul.mubr.f32.gmra.mxu0 %v1126
    %v1128 = vpop.f32.mrf.mxu0
    %v1129 = vadd.f32 %v1003, %v1128
    %v1130 = vpop.f32.mrf.mxu0
    %v1131 = vadd.f32 %v1005, %v1130
    %1132 = vdwg.mxu0
    %1133 = vmatprep.subr.mxu0 0.0
    %1134 = vmatpush1.msra.mxu0 0.0
    %1135 = vmatprep.subr.mxu0 0.0
    %1136 = vmatpush1.msra.mxu0 0.0
    %1137 = vmatprep.subr.mxu0 0.0
    %1138 = vmatpush1.msra.mxu0 0.0
    %1139 = vmatprep.subr.mxu0 0.0
    %1140 = vmatpush1.msra.mxu0 0.0
    %1141 = vmatprep.subr.mxu0 0.0
    %1142 = vmatpush1.msra.mxu0 0.0
    %1143 = vmatprep.subr.mxu0 0.0
    %1144 = vmatpush1.msra.mxu0 0.0
    %1145 = vmatprep.subr.mxu0 0.0
    %1146 = vmatpush1.msra.mxu0 0.0
    %v1147 = vand.u32 %v462, 4294901760
    %1148 = vmatprep.subr.mxu0 %v1147
    %v1149 = vand.u32 %v461, 4294901760
    %1150 = vmatpush1.msra.mxu0 %v1149
    %v1151 = vand.u32 %v524, 4294901760
    %1152 = vmatprep.subr.mxu0 %v1151
    %v1153 = vand.u32 %v523, 4294901760
    %1154 = vmatpush1.msra.mxu0 %v1153
    %v1155 = vand.u32 %v419, 4294901760
    %1156 = vmatprep.subr.mxu0 %v1155
    %v1157 = vand.u32 %v418, 4294901760
    %1158 = vmatpush1.msra.mxu0 %v1157
    %v1159 = vand.u32 %v376, 4294901760
    %1160 = vmatprep.subr.mxu0 %v1159
    %v1161 = vand.u32 %v375, 4294901760
    %1162 = vmatpush1.msra.mxu0 %v1161
    %v1163 = vand.u32 %v169, 4294901760
    %1164 = vmatprep.subr.mxu0 %v1163
    %v1165 = vand.u32 %v168, 4294901760
    %1166 = vmatpush1.msra.mxu0 %v1165
    %v1167 = vand.u32 %v332, 4294901760
    %1168 = vmatprep.subr.mxu0 %v1167
    %v1169 = vand.u32 %v331, 4294901760
    %1170 = vmatpush1.msra.mxu0 %v1169
    %v1171 = vand.u32 %v289, 4294901760
    %1172 = vmatprep.subr.mxu0 %v1171
    %v1173 = vand.u32 %v288, 4294901760
    %1174 = vmatpush1.msra.mxu0 %v1173
    %v1175 = vand.u32 %v489, 4294901760
    %1176 = vmatprep.subr.mxu0 %v1175
    %v1177 = vand.u32 %v488, 4294901760
    %1178 = vmatpush1.msra.mxu0 %v1177
    %v1179 = vand.u32 %v238, 4294901760
    %1180 = vmatprep.subr.mxu0 %v1179
    %v1181 = vand.u32 %v237, 4294901760
    %1182 = vmatpush1.msra.mxu0 %v1181
    %1183 = vmatprep.subr.mxu0 0.0
    %1184 = vmatpush2.msra.mxu0 0.0
    %1185 = vmatprep.subr.mxu0 0.0
    %1186 = vmatpush2.msra.mxu0 0.0
    %1187 = vmatprep.subr.mxu0 0.0
    %1188 = vmatpush2.msra.mxu0 0.0
    %1189 = vmatprep.subr.mxu0 0.0
    %1190 = vmatpush2.msra.mxu0 0.0
    %1191 = vmatprep.subr.mxu0 0.0
    %1192 = vmatpush2.msra.mxu0 0.0
    %1193 = vmatprep.subr.mxu0 0.0
    %1194 = vmatpush2.msra.mxu0 0.0
    %1195 = vmatprep.subr.mxu0 0.0
    %1196 = vmatpush2.msra.mxu0 0.0
    %1197 = vmatprep.subr.mxu0 0.0
    %1198 = vmatpush2.msra.mxu0 0.0
    %1199 = vmatprep.subr.mxu0 0.0
    %1200 = vmatpush2.msra.mxu0 0.0
    %1201 = vmatprep.subr.mxu0 0.0
    %1202 = vmatpush2.msra.mxu0 0.0
    %1203 = vmatprep.subr.mxu0 0.0
    %1204 = vmatpush2.msra.mxu0 0.0
    %1205 = vmatprep.subr.mxu0 0.0
    %1206 = vmatpush2.msra.mxu0 0.0
    %1207 = vmatprep.subr.mxu0 0.0
    %1208 = vmatpush2.msra.mxu0 0.0
    %1209 = vmatprep.subr.mxu0 0.0
    %1210 = vmatpush2.msra.mxu0 0.0
    %1211 = vmatprep.subr.mxu0 0.0
    %1212 = vmatpush2.msra.mxu0 0.0
    %1213 = vmatprep.subr.mxu0 0.0
    %1214 = vmatpush2.msra.mxu0 0.0
    %1215 = vmatprep.mubr.f32.mxu0 0.0
    %v1216 = vand.u32 %v548, 4294901760
    %1217 = vmatmul.mubr.f32.gmra.mxu0 %v1216
    %v1218 = vpop.f32.mrf.mxu0
    %v1219 = vadd.f32 %v1129, %v1218
    %v1220 = vpop.f32.mrf.mxu0
    %v1221 = vadd.f32 %v1131, %v1220
    %1222 = vdwg.mxu0
    %1223 = vmatprep.subr.mxu0 0.0
    %1224 = vmatpush1.msra.mxu0 0.0
    %1225 = vmatprep.subr.mxu0 0.0
    %1226 = vmatpush1.msra.mxu0 0.0
    %1227 = vmatprep.subr.mxu0 0.0
    %1228 = vmatpush1.msra.mxu0 0.0
    %1229 = vmatprep.subr.mxu0 0.0
    %1230 = vmatpush1.msra.mxu0 0.0
    %1231 = vmatprep.subr.mxu0 0.0
    %1232 = vmatpush1.msra.mxu0 0.0
    %1233 = vmatprep.subr.mxu0 0.0
    %1234 = vmatpush1.msra.mxu0 0.0
    %1235 = vmatprep.subr.mxu0 0.0
    %1236 = vmatpush1.msra.mxu0 0.0
    %v1237 = vand.u32 %v464, 4294901760
    %1238 = vmatprep.subr.mxu0 %v1237
    %v1239 = vand.u32 %v463, 4294901760
    %1240 = vmatpush1.msra.mxu0 %v1239
    %v1241 = vand.u32 %v526, 4294901760
    %1242 = vmatprep.subr.mxu0 %v1241
    %v1243 = vand.u32 %v525, 4294901760
    %1244 = vmatpush1.msra.mxu0 %v1243
    %v1245 = vand.u32 %v421, 4294901760
    %1246 = vmatprep.subr.mxu0 %v1245
    %v1247 = vand.u32 %v420, 4294901760
    %1248 = vmatpush1.msra.mxu0 %v1247
    %v1249 = vand.u32 %v378, 4294901760
    %1250 = vmatprep.subr.mxu0 %v1249
    %v1251 = vand.u32 %v377, 4294901760
    %1252 = vmatpush1.msra.mxu0 %v1251
    %v1253 = vand.u32 %v171, 4294901760
    %1254 = vmatprep.subr.mxu0 %v1253
    %v1255 = vand.u32 %v170, 4294901760
    %1256 = vmatpush1.msra.mxu0 %v1255
    %v1257 = vand.u32 %v334, 4294901760
    %1258 = vmatprep.subr.mxu0 %v1257
    %v1259 = vand.u32 %v333, 4294901760
    %1260 = vmatpush1.msra.mxu0 %v1259
    %v1261 = vand.u32 %v291, 4294901760
    %1262 = vmatprep.subr.mxu0 %v1261
    %v1263 = vand.u32 %v290, 4294901760
    %1264 = vmatpush1.msra.mxu0 %v1263
    %v1265 = vand.u32 %v491, 4294901760
    %1266 = vmatprep.subr.mxu0 %v1265
    %v1267 = vand.u32 %v490, 4294901760
    %1268 = vmatpush1.msra.mxu0 %v1267
    %v1269 = vand.u32 %v240, 4294901760
    %1270 = vmatprep.subr.mxu0 %v1269
    %v1271 = vand.u32 %v239, 4294901760
    %1272 = vmatpush1.msra.mxu0 %v1271
    %1273 = vmatprep.subr.mxu0 0.0
    %1274 = vmatpush2.msra.mxu0 0.0
    %1275 = vmatprep.subr.mxu0 0.0
    %1276 = vmatpush2.msra.mxu0 0.0
    %1277 = vmatprep.subr.mxu0 0.0
    %1278 = vmatpush2.msra.mxu0 0.0
    %1279 = vmatprep.subr.mxu0 0.0
    %1280 = vmatpush2.msra.mxu0 0.0
    %1281 = vmatprep.subr.mxu0 0.0
    %1282 = vmatpush2.msra.mxu0 0.0
    %1283 = vmatprep.subr.mxu0 0.0
    %1284 = vmatpush2.msra.mxu0 0.0
    %1285 = vmatprep.subr.mxu0 0.0
    %1286 = vmatpush2.msra.mxu0 0.0
    %1287 = vmatprep.subr.mxu0 0.0
    %1288 = vmatpush2.msra.mxu0 0.0
    %1289 = vmatprep.subr.mxu0 0.0
    %1290 = vmatpush2.msra.mxu0 0.0
    %1291 = vmatprep.subr.mxu0 0.0
    %1292 = vmatpush2.msra.mxu0 0.0
    %1293 = vmatprep.subr.mxu0 0.0
    %1294 = vmatpush2.msra.mxu0 0.0
    %1295 = vmatprep.subr.mxu0 0.0
    %1296 = vmatpush2.msra.mxu0 0.0
    %1297 = vmatprep.subr.mxu0 0.0
    %1298 = vmatpush2.msra.mxu0 0.0
    %1299 = vmatprep.subr.mxu0 0.0
    %1300 = vmatpush2.msra.mxu0 0.0
    %1301 = vmatprep.subr.mxu0 0.0
    %1302 = vmatpush2.msra.mxu0 0.0
    %1303 = vmatprep.subr.mxu0 0.0
    %1304 = vmatpush2.msra.mxu0 0.0
    %1305 = vmatprep.mubr.f32.mxu0 0.0
    %v1306 = vand.u32 %v548, 4294901760
    %v1307 = vsub.f32 %v548, %v1306
    %v1308 = vand.u32 %v1307, 4294901760
    %v1309 = vsub.f32 %v1307, %v1308
    %v1310 = vand.u32 %v1309, 4294901760
    %1311 = vmatmul.mubr.f32.gmra.mxu0 %v1310
    %v1312 = vpop.f32.mrf.mxu0
    %v1313 = vadd.f32 %v544, %v1312
    %v1314 = vpop.f32.mrf.mxu0
    %v1315 = vadd.f32 %v544, %v1314
    %1316 = vdwg.mxu0
    %1317 = vmatprep.subr.mxu0 0.0
    %1318 = vmatpush1.msra.mxu0 0.0
    %1319 = vmatprep.subr.mxu0 0.0
    %1320 = vmatpush1.msra.mxu0 0.0
    %1321 = vmatprep.subr.mxu0 0.0
    %1322 = vmatpush1.msra.mxu0 0.0
    %1323 = vmatprep.subr.mxu0 0.0
    %1324 = vmatpush1.msra.mxu0 0.0
    %1325 = vmatprep.subr.mxu0 0.0
    %1326 = vmatpush1.msra.mxu0 0.0
    %1327 = vmatprep.subr.mxu0 0.0
    %1328 = vmatpush1.msra.mxu0 0.0
    %1329 = vmatprep.subr.mxu0 0.0
    %1330 = vmatpush1.msra.mxu0 0.0
    %v1331 = vand.u32 %v464, 4294901760
    %v1332 = vsub.f32 %v464, %v1331
    %v1333 = vand.u32 %v1332, 4294901760
    %v1334 = vsub.f32 %v1332, %v1333
    %v1335 = vand.u32 %v1334, 4294901760
    %1336 = vmatprep.subr.mxu0 %v1335
    %v1337 = vand.u32 %v463, 4294901760
    %v1338 = vsub.f32 %v463, %v1337
    %v1339 = vand.u32 %v1338, 4294901760
    %v1340 = vsub.f32 %v1338, %v1339
    %v1341 = vand.u32 %v1340, 4294901760
    %1342 = vmatpush1.msra.mxu0 %v1341
    %v1343 = vand.u32 %v526, 4294901760
    %v1344 = vsub.f32 %v526, %v1343
    %v1345 = vand.u32 %v1344, 4294901760
    %v1346 = vsub.f32 %v1344, %v1345
    %v1347 = vand.u32 %v1346, 4294901760
    %1348 = vmatprep.subr.mxu0 %v1347
    %v1349 = vand.u32 %v525, 4294901760
    %v1350 = vsub.f32 %v525, %v1349
    %v1351 = vand.u32 %v1350, 4294901760
    %v1352 = vsub.f32 %v1350, %v1351
    %v1353 = vand.u32 %v1352, 4294901760
    %1354 = vmatpush1.msra.mxu0 %v1353
    %v1355 = vand.u32 %v421, 4294901760
    %v1356 = vsub.f32 %v421, %v1355
    %v1357 = vand.u32 %v1356, 4294901760
    %v1358 = vsub.f32 %v1356, %v1357
    %v1359 = vand.u32 %v1358, 4294901760
    %1360 = vmatprep.subr.mxu0 %v1359
    %v1361 = vand.u32 %v420, 4294901760
    %v1362 = vsub.f32 %v420, %v1361
    %v1363 = vand.u32 %v1362, 4294901760
    %v1364 = vsub.f32 %v1362, %v1363
    %v1365 = vand.u32 %v1364, 4294901760
    %1366 = vmatpush1.msra.mxu0 %v1365
    %v1367 = vand.u32 %v378, 4294901760
    %v1368 = vsub.f32 %v378, %v1367
    %v1369 = vand.u32 %v1368, 4294901760
    %v1370 = vsub.f32 %v1368, %v1369
    %v1371 = vand.u32 %v1370, 4294901760
    %1372 = vmatprep.subr.mxu0 %v1371
    %v1373 = vand.u32 %v377, 4294901760
    %v1374 = vsub.f32 %v377, %v1373
    %v1375 = vand.u32 %v1374, 4294901760
    %v1376 = vsub.f32 %v1374, %v1375
    %v1377 = vand.u32 %v1376, 4294901760
    %1378 = vmatpush1.msra.mxu0 %v1377
    %v1379 = vand.u32 %v171, 4294901760
    %v1380 = vsub.f32 %v171, %v1379
    %v1381 = vand.u32 %v1380, 4294901760
    %v1382 = vsub.f32 %v1380, %v1381
    %v1383 = vand.u32 %v1382, 4294901760
    %1384 = vmatprep.subr.mxu0 %v1383
    %v1385 = vand.u32 %v170, 4294901760
    %v1386 = vsub.f32 %v170, %v1385
    %v1387 = vand.u32 %v1386, 4294901760
    %v1388 = vsub.f32 %v1386, %v1387
    %v1389 = vand.u32 %v1388, 4294901760
    %1390 = vmatpush1.msra.mxu0 %v1389
    %v1391 = vand.u32 %v334, 4294901760
    %v1392 = vsub.f32 %v334, %v1391
    %v1393 = vand.u32 %v1392, 4294901760
    %v1394 = vsub.f32 %v1392, %v1393
    %v1395 = vand.u32 %v1394, 4294901760
    %1396 = vmatprep.subr.mxu0 %v1395
    %v1397 = vand.u32 %v333, 4294901760
    %v1398 = vsub.f32 %v333, %v1397
    %v1399 = vand.u32 %v1398, 4294901760
    %v1400 = vsub.f32 %v1398, %v1399
    %v1401 = vand.u32 %v1400, 4294901760
    %1402 = vmatpush1.msra.mxu0 %v1401
    %v1403 = vand.u32 %v291, 4294901760
    %v1404 = vsub.f32 %v291, %v1403
    %v1405 = vand.u32 %v1404, 4294901760
    %v1406 = vsub.f32 %v1404, %v1405
    %v1407 = vand.u32 %v1406, 4294901760
    %1408 = vmatprep.subr.mxu0 %v1407
    %v1409 = vand.u32 %v290, 4294901760
    %v1410 = vsub.f32 %v290, %v1409
    %v1411 = vand.u32 %v1410, 4294901760
    %v1412 = vsub.f32 %v1410, %v1411
    %v1413 = vand.u32 %v1412, 4294901760
    %1414 = vmatpush1.msra.mxu0 %v1413
    %v1415 = vand.u32 %v491, 4294901760
    %v1416 = vsub.f32 %v491, %v1415
    %v1417 = vand.u32 %v1416, 4294901760
    %v1418 = vsub.f32 %v1416, %v1417
    %v1419 = vand.u32 %v1418, 4294901760
    %1420 = vmatprep.subr.mxu0 %v1419
    %v1421 = vand.u32 %v490, 4294901760
    %v1422 = vsub.f32 %v490, %v1421
    %v1423 = vand.u32 %v1422, 4294901760
    %v1424 = vsub.f32 %v1422, %v1423
    %v1425 = vand.u32 %v1424, 4294901760
    %1426 = vmatpush1.msra.mxu0 %v1425
    %v1427 = vand.u32 %v240, 4294901760
    %v1428 = vsub.f32 %v240, %v1427
    %v1429 = vand.u32 %v1428, 4294901760
    %v1430 = vsub.f32 %v1428, %v1429
    %v1431 = vand.u32 %v1430, 4294901760
    %1432 = vmatprep.subr.mxu0 %v1431
    %v1433 = vand.u32 %v239, 4294901760
    %v1434 = vsub.f32 %v239, %v1433
    %v1435 = vand.u32 %v1434, 4294901760
    %v1436 = vsub.f32 %v1434, %v1435
    %v1437 = vand.u32 %v1436, 4294901760
    %1438 = vmatpush1.msra.mxu0 %v1437
    %1439 = vmatprep.subr.mxu0 0.0
    %1440 = vmatpush2.msra.mxu0 0.0
    %1441 = vmatprep.subr.mxu0 0.0
    %1442 = vmatpush2.msra.mxu0 0.0
    %1443 = vmatprep.subr.mxu0 0.0
    %1444 = vmatpush2.msra.mxu0 0.0
    %1445 = vmatprep.subr.mxu0 0.0
    %1446 = vmatpush2.msra.mxu0 0.0
    %1447 = vmatprep.subr.mxu0 0.0
    %1448 = vmatpush2.msra.mxu0 0.0
    %1449 = vmatprep.subr.mxu0 0.0
    %1450 = vmatpush2.msra.mxu0 0.0
    %1451 = vmatprep.subr.mxu0 0.0
    %1452 = vmatpush2.msra.mxu0 0.0
    %1453 = vmatprep.subr.mxu0 0.0
    %1454 = vmatpush2.msra.mxu0 0.0
    %1455 = vmatprep.subr.mxu0 0.0
    %1456 = vmatpush2.msra.mxu0 0.0
    %1457 = vmatprep.subr.mxu0 0.0
    %1458 = vmatpush2.msra.mxu0 0.0
    %1459 = vmatprep.subr.mxu0 0.0
    %1460 = vmatpush2.msra.mxu0 0.0
    %1461 = vmatprep.subr.mxu0 0.0
    %1462 = vmatpush2.msra.mxu0 0.0
    %1463 = vmatprep.subr.mxu0 0.0
    %1464 = vmatpush2.msra.mxu0 0.0
    %1465 = vmatprep.subr.mxu0 0.0
    %1466 = vmatpush2.msra.mxu0 0.0
    %1467 = vmatprep.subr.mxu0 0.0
    %1468 = vmatpush2.msra.mxu0 0.0
    %1469 = vmatprep.subr.mxu0 0.0
    %1470 = vmatpush2.msra.mxu0 0.0
    %1471 = vmatprep.mubr.f32.mxu0 0.0
    %v1472 = vand.u32 %v548, 4294901760
    %1473 = vmatmul.mubr.f32.gmra.mxu0 %v1472
    %v1474 = vpop.f32.mrf.mxu0
    %v1475 = vadd.f32 %v1313, %v1474
    %v1476 = vpop.f32.mrf.mxu0
    %v1477 = vadd.f32 %v1315, %v1476
    %1478 = vdwg.mxu0
    %1479 = vmatprep.subr.mxu0 0.0
    %1480 = vmatpush1.msra.mxu0 0.0
    %1481 = vmatprep.subr.mxu0 0.0
    %1482 = vmatpush1.msra.mxu0 0.0
    %1483 = vmatprep.subr.mxu0 0.0
    %1484 = vmatpush1.msra.mxu0 0.0
    %1485 = vmatprep.subr.mxu0 0.0
    %1486 = vmatpush1.msra.mxu0 0.0
    %1487 = vmatprep.subr.mxu0 0.0
    %1488 = vmatpush1.msra.mxu0 0.0
    %1489 = vmatprep.subr.mxu0 0.0
    %1490 = vmatpush1.msra.mxu0 0.0
    %1491 = vmatprep.subr.mxu0 0.0
    %1492 = vmatpush1.msra.mxu0 0.0
    %v1493 = vand.u32 %v464, 4294901760
    %v1494 = vsub.f32 %v464, %v1493
    %1495 = vmatprep.subr.mxu0 %v1494
    %v1496 = vand.u32 %v463, 4294901760
    %v1497 = vsub.f32 %v463, %v1496
    %1498 = vmatpush1.msra.mxu0 %v1497
    %v1499 = vand.u32 %v526, 4294901760
    %v1500 = vsub.f32 %v526, %v1499
    %1501 = vmatprep.subr.mxu0 %v1500
    %v1502 = vand.u32 %v525, 4294901760
    %v1503 = vsub.f32 %v525, %v1502
    %1504 = vmatpush1.msra.mxu0 %v1503
    %v1505 = vand.u32 %v421, 4294901760
    %v1506 = vsub.f32 %v421, %v1505
    %1507 = vmatprep.subr.mxu0 %v1506
    %v1508 = vand.u32 %v420, 4294901760
    %v1509 = vsub.f32 %v420, %v1508
    %1510 = vmatpush1.msra.mxu0 %v1509
    %v1511 = vand.u32 %v378, 4294901760
    %v1512 = vsub.f32 %v378, %v1511
    %1513 = vmatprep.subr.mxu0 %v1512
    %v1514 = vand.u32 %v377, 4294901760
    %v1515 = vsub.f32 %v377, %v1514
    %1516 = vmatpush1.msra.mxu0 %v1515
    %v1517 = vand.u32 %v171, 4294901760
    %v1518 = vsub.f32 %v171, %v1517
    %1519 = vmatprep.subr.mxu0 %v1518
    %v1520 = vand.u32 %v170, 4294901760
    %v1521 = vsub.f32 %v170, %v1520
    %1522 = vmatpush1.msra.mxu0 %v1521
    %v1523 = vand.u32 %v334, 4294901760
    %v1524 = vsub.f32 %v334, %v1523
    %1525 = vmatprep.subr.mxu0 %v1524
    %v1526 = vand.u32 %v333, 4294901760
    %v1527 = vsub.f32 %v333, %v1526
    %1528 = vmatpush1.msra.mxu0 %v1527
    %v1529 = vand.u32 %v291, 4294901760
    %v1530 = vsub.f32 %v291, %v1529
    %1531 = vmatprep.subr.mxu0 %v1530
    %v1532 = vand.u32 %v290, 4294901760
    %v1533 = vsub.f32 %v290, %v1532
    %1534 = vmatpush1.msra.mxu0 %v1533
    %v1535 = vand.u32 %v491, 4294901760
    %v1536 = vsub.f32 %v491, %v1535
    %1537 = vmatprep.subr.mxu0 %v1536
    %v1538 = vand.u32 %v490, 4294901760
    %v1539 = vsub.f32 %v490, %v1538
    %1540 = vmatpush1.msra.mxu0 %v1539
    %v1541 = vand.u32 %v240, 4294901760
    %v1542 = vsub.f32 %v240, %v1541
    %1543 = vmatprep.subr.mxu0 %v1542
    %v1544 = vand.u32 %v239, 4294901760
    %v1545 = vsub.f32 %v239, %v1544
    %1546 = vmatpush1.msra.mxu0 %v1545
    %1547 = vmatprep.subr.mxu0 0.0
    %1548 = vmatpush2.msra.mxu0 0.0
    %1549 = vmatprep.subr.mxu0 0.0
    %1550 = vmatpush2.msra.mxu0 0.0
    %1551 = vmatprep.subr.mxu0 0.0
    %1552 = vmatpush2.msra.mxu0 0.0
    %1553 = vmatprep.subr.mxu0 0.0
    %1554 = vmatpush2.msra.mxu0 0.0
    %1555 = vmatprep.subr.mxu0 0.0
    %1556 = vmatpush2.msra.mxu0 0.0
    %1557 = vmatprep.subr.mxu0 0.0
    %1558 = vmatpush2.msra.mxu0 0.0
    %1559 = vmatprep.subr.mxu0 0.0
    %1560 = vmatpush2.msra.mxu0 0.0
    %1561 = vmatprep.subr.mxu0 0.0
    %1562 = vmatpush2.msra.mxu0 0.0
    %1563 = vmatprep.subr.mxu0 0.0
    %1564 = vmatpush2.msra.mxu0 0.0
    %1565 = vmatprep.subr.mxu0 0.0
    %1566 = vmatpush2.msra.mxu0 0.0
    %1567 = vmatprep.subr.mxu0 0.0
    %1568 = vmatpush2.msra.mxu0 0.0
    %1569 = vmatprep.subr.mxu0 0.0
    %1570 = vmatpush2.msra.mxu0 0.0
    %1571 = vmatprep.subr.mxu0 0.0
    %1572 = vmatpush2.msra.mxu0 0.0
    %1573 = vmatprep.subr.mxu0 0.0
    %1574 = vmatpush2.msra.mxu0 0.0
    %1575 = vmatprep.subr.mxu0 0.0
    %1576 = vmatpush2.msra.mxu0 0.0
    %1577 = vmatprep.subr.mxu0 0.0
    %1578 = vmatpush2.msra.mxu0 0.0
    %1579 = vmatprep.mubr.f32.mxu0 0.0
    %v1580 = vand.u32 %v548, 4294901760
    %v1581 = vsub.f32 %v548, %v1580
    %1582 = vmatmul.mubr.f32.gmra.mxu0 %v1581
    %v1583 = vpop.f32.mrf.mxu0
    %v1584 = vadd.f32 %v1475, %v1583
    %v1585 = vpop.f32.mrf.mxu0
    %v1586 = vadd.f32 %v1477, %v1585
    %1587 = vdwg.mxu0
    %1588 = vmatprep.subr.mxu0 0.0
    %1589 = vmatpush1.msra.mxu0 0.0
    %1590 = vmatprep.subr.mxu0 0.0
    %1591 = vmatpush1.msra.mxu0 0.0
    %1592 = vmatprep.subr.mxu0 0.0
    %1593 = vmatpush1.msra.mxu0 0.0
    %1594 = vmatprep.subr.mxu0 0.0
    %1595 = vmatpush1.msra.mxu0 0.0
    %1596 = vmatprep.subr.mxu0 0.0
    %1597 = vmatpush1.msra.mxu0 0.0
    %1598 = vmatprep.subr.mxu0 0.0
    %1599 = vmatpush1.msra.mxu0 0.0
    %1600 = vmatprep.subr.mxu0 0.0
    %1601 = vmatpush1.msra.mxu0 0.0
    %v1602 = vand.u32 %v464, 4294901760
    %1603 = vmatprep.subr.mxu0 %v1602
    %v1604 = vand.u32 %v463, 4294901760
    %1605 = vmatpush1.msra.mxu0 %v1604
    %v1606 = vand.u32 %v526, 4294901760
    %1607 = vmatprep.subr.mxu0 %v1606
    %v1608 = vand.u32 %v525, 4294901760
    %1609 = vmatpush1.msra.mxu0 %v1608
    %v1610 = vand.u32 %v421, 4294901760
    %1611 = vmatprep.subr.mxu0 %v1610
    %v1612 = vand.u32 %v420, 4294901760
    %1613 = vmatpush1.msra.mxu0 %v1612
    %v1614 = vand.u32 %v378, 4294901760
    %1615 = vmatprep.subr.mxu0 %v1614
    %v1616 = vand.u32 %v377, 4294901760
    %1617 = vmatpush1.msra.mxu0 %v1616
    %v1618 = vand.u32 %v171, 4294901760
    %1619 = vmatprep.subr.mxu0 %v1618
    %v1620 = vand.u32 %v170, 4294901760
    %1621 = vmatpush1.msra.mxu0 %v1620
    %v1622 = vand.u32 %v334, 4294901760
    %1623 = vmatprep.subr.mxu0 %v1622
    %v1624 = vand.u32 %v333, 4294901760
    %1625 = vmatpush1.msra.mxu0 %v1624
    %v1626 = vand.u32 %v291, 4294901760
    %1627 = vmatprep.subr.mxu0 %v1626
    %v1628 = vand.u32 %v290, 4294901760
    %1629 = vmatpush1.msra.mxu0 %v1628
    %v1630 = vand.u32 %v491, 4294901760
    %1631 = vmatprep.subr.mxu0 %v1630
    %v1632 = vand.u32 %v490, 4294901760
    %1633 = vmatpush1.msra.mxu0 %v1632
    %v1634 = vand.u32 %v240, 4294901760
    %1635 = vmatprep.subr.mxu0 %v1634
    %v1636 = vand.u32 %v239, 4294901760
    %1637 = vmatpush1.msra.mxu0 %v1636
    %1638 = vmatprep.subr.mxu0 0.0
    %1639 = vmatpush2.msra.mxu0 0.0
    %1640 = vmatprep.subr.mxu0 0.0
    %1641 = vmatpush2.msra.mxu0 0.0
    %1642 = vmatprep.subr.mxu0 0.0
    %1643 = vmatpush2.msra.mxu0 0.0
    %1644 = vmatprep.subr.mxu0 0.0
    %1645 = vmatpush2.msra.mxu0 0.0
    %1646 = vmatprep.subr.mxu0 0.0
    %1647 = vmatpush2.msra.mxu0 0.0
    %1648 = vmatprep.subr.mxu0 0.0
    %1649 = vmatpush2.msra.mxu0 0.0
    %1650 = vmatprep.subr.mxu0 0.0
    %1651 = vmatpush2.msra.mxu0 0.0
    %1652 = vmatprep.subr.mxu0 0.0
    %1653 = vmatpush2.msra.mxu0 0.0
    %1654 = vmatprep.subr.mxu0 0.0
    %1655 = vmatpush2.msra.mxu0 0.0
    %1656 = vmatprep.subr.mxu0 0.0
    %1657 = vmatpush2.msra.mxu0 0.0
    %1658 = vmatprep.subr.mxu0 0.0
    %1659 = vmatpush2.msra.mxu0 0.0
    %1660 = vmatprep.subr.mxu0 0.0
    %1661 = vmatpush2.msra.mxu0 0.0
    %1662 = vmatprep.subr.mxu0 0.0
    %1663 = vmatpush2.msra.mxu0 0.0
    %1664 = vmatprep.subr.mxu0 0.0
    %1665 = vmatpush2.msra.mxu0 0.0
    %1666 = vmatprep.subr.mxu0 0.0
    %1667 = vmatpush2.msra.mxu0 0.0
    %1668 = vmatprep.subr.mxu0 0.0
    %1669 = vmatpush2.msra.mxu0 0.0
    %1670 = vmatprep.mubr.f32.mxu0 0.0
    %v1671 = vand.u32 %v548, 4294901760
    %v1672 = vsub.f32 %v548, %v1671
    %v1673 = vand.u32 %v1672, 4294901760
    %1674 = vmatmul.mubr.f32.gmra.mxu0 %v1673
    %v1675 = vpop.f32.mrf.mxu0
    %v1676 = vadd.f32 %v1584, %v1675
    %v1677 = vpop.f32.mrf.mxu0
    %v1678 = vadd.f32 %v1586, %v1677
    %1679 = vdwg.mxu0
    %1680 = vmatprep.subr.mxu0 0.0
    %1681 = vmatpush1.msra.mxu0 0.0
    %1682 = vmatprep.subr.mxu0 0.0
    %1683 = vmatpush1.msra.mxu0 0.0
    %1684 = vmatprep.subr.mxu0 0.0
    %1685 = vmatpush1.msra.mxu0 0.0
    %1686 = vmatprep.subr.mxu0 0.0
    %1687 = vmatpush1.msra.mxu0 0.0
    %1688 = vmatprep.subr.mxu0 0.0
    %1689 = vmatpush1.msra.mxu0 0.0
    %1690 = vmatprep.subr.mxu0 0.0
    %1691 = vmatpush1.msra.mxu0 0.0
    %1692 = vmatprep.subr.mxu0 0.0
    %1693 = vmatpush1.msra.mxu0 0.0
    %v1694 = vand.u32 %v464, 4294901760
    %v1695 = vsub.f32 %v464, %v1694
    %v1696 = vand.u32 %v1695, 4294901760
    %1697 = vmatprep.subr.mxu0 %v1696
    %v1698 = vand.u32 %v463, 4294901760
    %v1699 = vsub.f32 %v463, %v1698
    %v1700 = vand.u32 %v1699, 4294901760
    %1701 = vmatpush1.msra.mxu0 %v1700
    %v1702 = vand.u32 %v526, 4294901760
    %v1703 = vsub.f32 %v526, %v1702
    %v1704 = vand.u32 %v1703, 4294901760
    %1705 = vmatprep.subr.mxu0 %v1704
    %v1706 = vand.u32 %v525, 4294901760
    %v1707 = vsub.f32 %v525, %v1706
    %v1708 = vand.u32 %v1707, 4294901760
    %1709 = vmatpush1.msra.mxu0 %v1708
    %v1710 = vand.u32 %v421, 4294901760
    %v1711 = vsub.f32 %v421, %v1710
    %v1712 = vand.u32 %v1711, 4294901760
    %1713 = vmatprep.subr.mxu0 %v1712
    %v1714 = vand.u32 %v420, 4294901760
    %v1715 = vsub.f32 %v420, %v1714
    %v1716 = vand.u32 %v1715, 4294901760
    %1717 = vmatpush1.msra.mxu0 %v1716
    %v1718 = vand.u32 %v378, 4294901760
    %v1719 = vsub.f32 %v378, %v1718
    %v1720 = vand.u32 %v1719, 4294901760
    %1721 = vmatprep.subr.mxu0 %v1720
    %v1722 = vand.u32 %v377, 4294901760
    %v1723 = vsub.f32 %v377, %v1722
    %v1724 = vand.u32 %v1723, 4294901760
    %1725 = vmatpush1.msra.mxu0 %v1724
    %v1726 = vand.u32 %v171, 4294901760
    %v1727 = vsub.f32 %v171, %v1726
    %v1728 = vand.u32 %v1727, 4294901760
    %1729 = vmatprep.subr.mxu0 %v1728
    %v1730 = vand.u32 %v170, 4294901760
    %v1731 = vsub.f32 %v170, %v1730
    %v1732 = vand.u32 %v1731, 4294901760
    %1733 = vmatpush1.msra.mxu0 %v1732
    %v1734 = vand.u32 %v334, 4294901760
    %v1735 = vsub.f32 %v334, %v1734
    %v1736 = vand.u32 %v1735, 4294901760
    %1737 = vmatprep.subr.mxu0 %v1736
    %v1738 = vand.u32 %v333, 4294901760
    %v1739 = vsub.f32 %v333, %v1738
    %v1740 = vand.u32 %v1739, 4294901760
    %1741 = vmatpush1.msra.mxu0 %v1740
    %v1742 = vand.u32 %v291, 4294901760
    %v1743 = vsub.f32 %v291, %v1742
    %v1744 = vand.u32 %v1743, 4294901760
    %1745 = vmatprep.subr.mxu0 %v1744
    %v1746 = vand.u32 %v290, 4294901760
    %v1747 = vsub.f32 %v290, %v1746
    %v1748 = vand.u32 %v1747, 4294901760
    %1749 = vmatpush1.msra.mxu0 %v1748
    %v1750 = vand.u32 %v491, 4294901760
    %v1751 = vsub.f32 %v491, %v1750
    %v1752 = vand.u32 %v1751, 4294901760
    %1753 = vmatprep.subr.mxu0 %v1752
    %v1754 = vand.u32 %v490, 4294901760
    %v1755 = vsub.f32 %v490, %v1754
    %v1756 = vand.u32 %v1755, 4294901760
    %1757 = vmatpush1.msra.mxu0 %v1756
    %v1758 = vand.u32 %v240, 4294901760
    %v1759 = vsub.f32 %v240, %v1758
    %v1760 = vand.u32 %v1759, 4294901760
    %1761 = vmatprep.subr.mxu0 %v1760
    %v1762 = vand.u32 %v239, 4294901760
    %v1763 = vsub.f32 %v239, %v1762
    %v1764 = vand.u32 %v1763, 4294901760
    %1765 = vmatpush1.msra.mxu0 %v1764
    %1766 = vmatprep.subr.mxu0 0.0
    %1767 = vmatpush2.msra.mxu0 0.0
    %1768 = vmatprep.subr.mxu0 0.0
    %1769 = vmatpush2.msra.mxu0 0.0
    %1770 = vmatprep.subr.mxu0 0.0
    %1771 = vmatpush2.msra.mxu0 0.0
    %1772 = vmatprep.subr.mxu0 0.0
    %1773 = vmatpush2.msra.mxu0 0.0
    %1774 = vmatprep.subr.mxu0 0.0
    %1775 = vmatpush2.msra.mxu0 0.0
    %1776 = vmatprep.subr.mxu0 0.0
    %1777 = vmatpush2.msra.mxu0 0.0
    %1778 = vmatprep.subr.mxu0 0.0
    %1779 = vmatpush2.msra.mxu0 0.0
    %1780 = vmatprep.subr.mxu0 0.0
    %1781 = vmatpush2.msra.mxu0 0.0
    %1782 = vmatprep.subr.mxu0 0.0
    %1783 = vmatpush2.msra.mxu0 0.0
    %1784 = vmatprep.subr.mxu0 0.0
    %1785 = vmatpush2.msra.mxu0 0.0
    %1786 = vmatprep.subr.mxu0 0.0
    %1787 = vmatpush2.msra.mxu0 0.0
    %1788 = vmatprep.subr.mxu0 0.0
    %1789 = vmatpush2.msra.mxu0 0.0
    %1790 = vmatprep.subr.mxu0 0.0
    %1791 = vmatpush2.msra.mxu0 0.0
    %1792 = vmatprep.subr.mxu0 0.0
    %1793 = vmatpush2.msra.mxu0 0.0
    %1794 = vmatprep.subr.mxu0 0.0
    %1795 = vmatpush2.msra.mxu0 0.0
    %1796 = vmatprep.subr.mxu0 0.0
    %1797 = vmatpush2.msra.mxu0 0.0
    %1798 = vmatprep.mubr.f32.mxu0 0.0
    %v1799 = vand.u32 %v548, 4294901760
    %1800 = vmatmul.mubr.f32.gmra.mxu0 %v1799
    %v1801 = vpop.f32.mrf.mxu0
    %v1802 = vadd.f32 %v1676, %v1801
    %v1803 = vpop.f32.mrf.mxu0
    %v1804 = vadd.f32 %v1678, %v1803
    %1805 = vdwg.mxu0
    %1806 = vmatprep.subr.mxu0 0.0
    %1807 = vmatpush1.msra.mxu0 0.0
    %1808 = vmatprep.subr.mxu0 0.0
    %1809 = vmatpush1.msra.mxu0 0.0
    %1810 = vmatprep.subr.mxu0 0.0
    %1811 = vmatpush1.msra.mxu0 0.0
    %1812 = vmatprep.subr.mxu0 0.0
    %1813 = vmatpush1.msra.mxu0 0.0
    %1814 = vmatprep.subr.mxu0 0.0
    %1815 = vmatpush1.msra.mxu0 0.0
    %1816 = vmatprep.subr.mxu0 0.0
    %1817 = vmatpush1.msra.mxu0 0.0
    %1818 = vmatprep.subr.mxu0 0.0
    %1819 = vmatpush1.msra.mxu0 0.0
    %v1820 = vand.u32 %v464, 4294901760
    %1821 = vmatprep.subr.mxu0 %v1820
    %v1822 = vand.u32 %v463, 4294901760
    %1823 = vmatpush1.msra.mxu0 %v1822
    %v1824 = vand.u32 %v526, 4294901760
    %1825 = vmatprep.subr.mxu0 %v1824
    %v1826 = vand.u32 %v525, 4294901760
    %1827 = vmatpush1.msra.mxu0 %v1826
    %v1828 = vand.u32 %v421, 4294901760
    %1829 = vmatprep.subr.mxu0 %v1828
    %v1830 = vand.u32 %v420, 4294901760
    %1831 = vmatpush1.msra.mxu0 %v1830
    %v1832 = vand.u32 %v378, 4294901760
    %1833 = vmatprep.subr.mxu0 %v1832
    %v1834 = vand.u32 %v377, 4294901760
    %1835 = vmatpush1.msra.mxu0 %v1834
    %v1836 = vand.u32 %v171, 4294901760
    %1837 = vmatprep.subr.mxu0 %v1836
    %v1838 = vand.u32 %v170, 4294901760
    %1839 = vmatpush1.msra.mxu0 %v1838
    %v1840 = vand.u32 %v334, 4294901760
    %1841 = vmatprep.subr.mxu0 %v1840
    %v1842 = vand.u32 %v333, 4294901760
    %1843 = vmatpush1.msra.mxu0 %v1842
    %v1844 = vand.u32 %v291, 4294901760
    %1845 = vmatprep.subr.mxu0 %v1844
    %v1846 = vand.u32 %v290, 4294901760
    %1847 = vmatpush1.msra.mxu0 %v1846
    %v1848 = vand.u32 %v491, 4294901760
    %1849 = vmatprep.subr.mxu0 %v1848
    %v1850 = vand.u32 %v490, 4294901760
    %1851 = vmatpush1.msra.mxu0 %v1850
    %v1852 = vand.u32 %v240, 4294901760
    %1853 = vmatprep.subr.mxu0 %v1852
    %v1854 = vand.u32 %v239, 4294901760
    %1855 = vmatpush1.msra.mxu0 %v1854
    %1856 = vmatprep.subr.mxu0 0.0
    %1857 = vmatpush2.msra.mxu0 0.0
    %1858 = vmatprep.subr.mxu0 0.0
    %1859 = vmatpush2.msra.mxu0 0.0
    %1860 = vmatprep.subr.mxu0 0.0
    %1861 = vmatpush2.msra.mxu0 0.0
    %1862 = vmatprep.subr.mxu0 0.0
    %1863 = vmatpush2.msra.mxu0 0.0
    %1864 = vmatprep.subr.mxu0 0.0
    %1865 = vmatpush2.msra.mxu0 0.0
    %1866 = vmatprep.subr.mxu0 0.0
    %1867 = vmatpush2.msra.mxu0 0.0
    %1868 = vmatprep.subr.mxu0 0.0
    %1869 = vmatpush2.msra.mxu0 0.0
    %1870 = vmatprep.subr.mxu0 0.0
    %1871 = vmatpush2.msra.mxu0 0.0
    %1872 = vmatprep.subr.mxu0 0.0
    %1873 = vmatpush2.msra.mxu0 0.0
    %1874 = vmatprep.subr.mxu0 0.0
    %1875 = vmatpush2.msra.mxu0 0.0
    %1876 = vmatprep.subr.mxu0 0.0
    %1877 = vmatpush2.msra.mxu0 0.0
    %1878 = vmatprep.subr.mxu0 0.0
    %1879 = vmatpush2.msra.mxu0 0.0
    %1880 = vmatprep.subr.mxu0 0.0
    %1881 = vmatpush2.msra.mxu0 0.0
    %1882 = vmatprep.subr.mxu0 0.0
    %1883 = vmatpush2.msra.mxu0 0.0
    %1884 = vmatprep.subr.mxu0 0.0
    %1885 = vmatpush2.msra.mxu0 0.0
    %1886 = vmatprep.subr.mxu0 0.0
    %1887 = vmatpush2.msra.mxu0 0.0
    %1888 = vmatprep.mubr.f32.mxu0 0.0
    %v1889 = vand.u32 %v548, 4294901760
    %1890 = vmatmul.mubr.f32.gmra.mxu0 %v1889
    %v1891 = vpop.f32.mrf.mxu0
    %v1892 = vadd.f32 %v1802, %v1891
    %v1893 = vpop.f32.mrf.mxu0
    %v1894 = vadd.f32 %v1804, %v1893
    %1895 = vdwg.mxu0
    %1896 = vmatprep.subr.mxu0 0.0
    %1897 = vmatpush1.msra.mxu0 0.0
    %1898 = vmatprep.subr.mxu0 0.0
    %1899 = vmatpush1.msra.mxu0 0.0
    %1900 = vmatprep.subr.mxu0 0.0
    %1901 = vmatpush1.msra.mxu0 0.0
    %1902 = vmatprep.subr.mxu0 0.0
    %1903 = vmatpush1.msra.mxu0 0.0
    %1904 = vmatprep.subr.mxu0 0.0
    %1905 = vmatpush1.msra.mxu0 0.0
    %1906 = vmatprep.subr.mxu0 0.0
    %1907 = vmatpush1.msra.mxu0 0.0
    %1908 = vmatprep.subr.mxu0 0.0
    %1909 = vmatpush1.msra.mxu0 0.0
    %v1910 = vand.u32 %v466, 4294901760
    %1911 = vmatprep.subr.mxu0 %v1910
    %v1912 = vand.u32 %v465, 4294901760
    %1913 = vmatpush1.msra.mxu0 %v1912
    %v1914 = vand.u32 %v528, 4294901760
    %1915 = vmatprep.subr.mxu0 %v1914
    %v1916 = vand.u32 %v527, 4294901760
    %1917 = vmatpush1.msra.mxu0 %v1916
    %v1918 = vand.u32 %v423, 4294901760
    %1919 = vmatprep.subr.mxu0 %v1918
    %v1920 = vand.u32 %v422, 4294901760
    %1921 = vmatpush1.msra.mxu0 %v1920
    %v1922 = vand.u32 %v380, 4294901760
    %1923 = vmatprep.subr.mxu0 %v1922
    %v1924 = vand.u32 %v379, 4294901760
    %1925 = vmatpush1.msra.mxu0 %v1924
    %v1926 = vand.u32 %v173, 4294901760
    %1927 = vmatprep.subr.mxu0 %v1926
    %v1928 = vand.u32 %v172, 4294901760
    %1929 = vmatpush1.msra.mxu0 %v1928
    %v1930 = vand.u32 %v336, 4294901760
    %1931 = vmatprep.subr.mxu0 %v1930
    %v1932 = vand.u32 %v335, 4294901760
    %1933 = vmatpush1.msra.mxu0 %v1932
    %v1934 = vand.u32 %v293, 4294901760
    %1935 = vmatprep.subr.mxu0 %v1934
    %v1936 = vand.u32 %v292, 4294901760
    %1937 = vmatpush1.msra.mxu0 %v1936
    %v1938 = vand.u32 %v493, 4294901760
    %1939 = vmatprep.subr.mxu0 %v1938
    %v1940 = vand.u32 %v492, 4294901760
    %1941 = vmatpush1.msra.mxu0 %v1940
    %v1942 = vand.u32 %v242, 4294901760
    %1943 = vmatprep.subr.mxu0 %v1942
    %v1944 = vand.u32 %v241, 4294901760
    %1945 = vmatpush1.msra.mxu0 %v1944
    %1946 = vmatprep.subr.mxu0 0.0
    %1947 = vmatpush2.msra.mxu0 0.0
    %1948 = vmatprep.subr.mxu0 0.0
    %1949 = vmatpush2.msra.mxu0 0.0
    %1950 = vmatprep.subr.mxu0 0.0
    %1951 = vmatpush2.msra.mxu0 0.0
    %1952 = vmatprep.subr.mxu0 0.0
    %1953 = vmatpush2.msra.mxu0 0.0
    %1954 = vmatprep.subr.mxu0 0.0
    %1955 = vmatpush2.msra.mxu0 0.0
    %1956 = vmatprep.subr.mxu0 0.0
    %1957 = vmatpush2.msra.mxu0 0.0
    %1958 = vmatprep.subr.mxu0 0.0
    %1959 = vmatpush2.msra.mxu0 0.0
    %1960 = vmatprep.subr.mxu0 0.0
    %1961 = vmatpush2.msra.mxu0 0.0
    %1962 = vmatprep.subr.mxu0 0.0
    %1963 = vmatpush2.msra.mxu0 0.0
    %1964 = vmatprep.subr.mxu0 0.0
    %1965 = vmatpush2.msra.mxu0 0.0
    %1966 = vmatprep.subr.mxu0 0.0
    %1967 = vmatpush2.msra.mxu0 0.0
    %1968 = vmatprep.subr.mxu0 0.0
    %1969 = vmatpush2.msra.mxu0 0.0
    %1970 = vmatprep.subr.mxu0 0.0
    %1971 = vmatpush2.msra.mxu0 0.0
    %1972 = vmatprep.subr.mxu0 0.0
    %1973 = vmatpush2.msra.mxu0 0.0
    %1974 = vmatprep.subr.mxu0 0.0
    %1975 = vmatpush2.msra.mxu0 0.0
    %1976 = vmatprep.subr.mxu0 0.0
    %1977 = vmatpush2.msra.mxu0 0.0
    %1978 = vmatprep.mubr.f32.mxu0 0.0
    %v1979 = vand.u32 %v548, 4294901760
    %v1980 = vsub.f32 %v548, %v1979
    %v1981 = vand.u32 %v1980, 4294901760
    %v1982 = vsub.f32 %v1980, %v1981
    %v1983 = vand.u32 %v1982, 4294901760
    %1984 = vmatmul.mubr.f32.gmra.mxu0 %v1983
    %v1985 = vpop.f32.mrf.mxu0
    %v1986 = vadd.f32 %v544, %v1985
    %v1987 = vpop.f32.mrf.mxu0
    %v1988 = vadd.f32 %v544, %v1987
    %1989 = vdwg.mxu0
    %1990 = vmatprep.subr.mxu0 0.0
    %1991 = vmatpush1.msra.mxu0 0.0
    %1992 = vmatprep.subr.mxu0 0.0
    %1993 = vmatpush1.msra.mxu0 0.0
    %1994 = vmatprep.subr.mxu0 0.0
    %1995 = vmatpush1.msra.mxu0 0.0
    %1996 = vmatprep.subr.mxu0 0.0
    %1997 = vmatpush1.msra.mxu0 0.0
    %1998 = vmatprep.subr.mxu0 0.0
    %1999 = vmatpush1.msra.mxu0 0.0
    %2000 = vmatprep.subr.mxu0 0.0
    %2001 = vmatpush1.msra.mxu0 0.0
    %2002 = vmatprep.subr.mxu0 0.0
    %2003 = vmatpush1.msra.mxu0 0.0
    %v2004 = vand.u32 %v466, 4294901760
    %v2005 = vsub.f32 %v466, %v2004
    %v2006 = vand.u32 %v2005, 4294901760
    %v2007 = vsub.f32 %v2005, %v2006
    %v2008 = vand.u32 %v2007, 4294901760
    %2009 = vmatprep.subr.mxu0 %v2008
    %v2010 = vand.u32 %v465, 4294901760
    %v2011 = vsub.f32 %v465, %v2010
    %v2012 = vand.u32 %v2011, 4294901760
    %v2013 = vsub.f32 %v2011, %v2012
    %v2014 = vand.u32 %v2013, 4294901760
    %2015 = vmatpush1.msra.mxu0 %v2014
    %v2016 = vand.u32 %v528, 4294901760
    %v2017 = vsub.f32 %v528, %v2016
    %v2018 = vand.u32 %v2017, 4294901760
    %v2019 = vsub.f32 %v2017, %v2018
    %v2020 = vand.u32 %v2019, 4294901760
    %2021 = vmatprep.subr.mxu0 %v2020
    %v2022 = vand.u32 %v527, 4294901760
    %v2023 = vsub.f32 %v527, %v2022
    %v2024 = vand.u32 %v2023, 4294901760
    %v2025 = vsub.f32 %v2023, %v2024
    %v2026 = vand.u32 %v2025, 4294901760
    %2027 = vmatpush1.msra.mxu0 %v2026
    %v2028 = vand.u32 %v423, 4294901760
    %v2029 = vsub.f32 %v423, %v2028
    %v2030 = vand.u32 %v2029, 4294901760
    %v2031 = vsub.f32 %v2029, %v2030
    %v2032 = vand.u32 %v2031, 4294901760
    %2033 = vmatprep.subr.mxu0 %v2032
    %v2034 = vand.u32 %v422, 4294901760
    %v2035 = vsub.f32 %v422, %v2034
    %v2036 = vand.u32 %v2035, 4294901760
    %v2037 = vsub.f32 %v2035, %v2036
    %v2038 = vand.u32 %v2037, 4294901760
    %2039 = vmatpush1.msra.mxu0 %v2038
    %v2040 = vand.u32 %v380, 4294901760
    %v2041 = vsub.f32 %v380, %v2040
    %v2042 = vand.u32 %v2041, 4294901760
    %v2043 = vsub.f32 %v2041, %v2042
    %v2044 = vand.u32 %v2043, 4294901760
    %2045 = vmatprep.subr.mxu0 %v2044
    %v2046 = vand.u32 %v379, 4294901760
    %v2047 = vsub.f32 %v379, %v2046
    %v2048 = vand.u32 %v2047, 4294901760
    %v2049 = vsub.f32 %v2047, %v2048
    %v2050 = vand.u32 %v2049, 4294901760
    %2051 = vmatpush1.msra.mxu0 %v2050
    %v2052 = vand.u32 %v173, 4294901760
    %v2053 = vsub.f32 %v173, %v2052
    %v2054 = vand.u32 %v2053, 4294901760
    %v2055 = vsub.f32 %v2053, %v2054
    %v2056 = vand.u32 %v2055, 4294901760
    %2057 = vmatprep.subr.mxu0 %v2056
    %v2058 = vand.u32 %v172, 4294901760
    %v2059 = vsub.f32 %v172, %v2058
    %v2060 = vand.u32 %v2059, 4294901760
    %v2061 = vsub.f32 %v2059, %v2060
    %v2062 = vand.u32 %v2061, 4294901760
    %2063 = vmatpush1.msra.mxu0 %v2062
    %v2064 = vand.u32 %v336, 4294901760
    %v2065 = vsub.f32 %v336, %v2064
    %v2066 = vand.u32 %v2065, 4294901760
    %v2067 = vsub.f32 %v2065, %v2066
    %v2068 = vand.u32 %v2067, 4294901760
    %2069 = vmatprep.subr.mxu0 %v2068
    %v2070 = vand.u32 %v335, 4294901760
    %v2071 = vsub.f32 %v335, %v2070
    %v2072 = vand.u32 %v2071, 4294901760
    %v2073 = vsub.f32 %v2071, %v2072
    %v2074 = vand.u32 %v2073, 4294901760
    %2075 = vmatpush1.msra.mxu0 %v2074
    %v2076 = vand.u32 %v293, 4294901760
    %v2077 = vsub.f32 %v293, %v2076
    %v2078 = vand.u32 %v2077, 4294901760
    %v2079 = vsub.f32 %v2077, %v2078
    %v2080 = vand.u32 %v2079, 4294901760
    %2081 = vmatprep.subr.mxu0 %v2080
    %v2082 = vand.u32 %v292, 4294901760
    %v2083 = vsub.f32 %v292, %v2082
    %v2084 = vand.u32 %v2083, 4294901760
    %v2085 = vsub.f32 %v2083, %v2084
    %v2086 = vand.u32 %v2085, 4294901760
    %2087 = vmatpush1.msra.mxu0 %v2086
    %v2088 = vand.u32 %v493, 4294901760
    %v2089 = vsub.f32 %v493, %v2088
    %v2090 = vand.u32 %v2089, 4294901760
    %v2091 = vsub.f32 %v2089, %v2090
    %v2092 = vand.u32 %v2091, 4294901760
    %2093 = vmatprep.subr.mxu0 %v2092
    %v2094 = vand.u32 %v492, 4294901760
    %v2095 = vsub.f32 %v492, %v2094
    %v2096 = vand.u32 %v2095, 4294901760
    %v2097 = vsub.f32 %v2095, %v2096
    %v2098 = vand.u32 %v2097, 4294901760
    %2099 = vmatpush1.msra.mxu0 %v2098
    %v2100 = vand.u32 %v242, 4294901760
    %v2101 = vsub.f32 %v242, %v2100
    %v2102 = vand.u32 %v2101, 4294901760
    %v2103 = vsub.f32 %v2101, %v2102
    %v2104 = vand.u32 %v2103, 4294901760
    %2105 = vmatprep.subr.mxu0 %v2104
    %v2106 = vand.u32 %v241, 4294901760
    %v2107 = vsub.f32 %v241, %v2106
    %v2108 = vand.u32 %v2107, 4294901760
    %v2109 = vsub.f32 %v2107, %v2108
    %v2110 = vand.u32 %v2109, 4294901760
    %2111 = vmatpush1.msra.mxu0 %v2110
    %2112 = vmatprep.subr.mxu0 0.0
    %2113 = vmatpush2.msra.mxu0 0.0
    %2114 = vmatprep.subr.mxu0 0.0
    %2115 = vmatpush2.msra.mxu0 0.0
    %2116 = vmatprep.subr.mxu0 0.0
    %2117 = vmatpush2.msra.mxu0 0.0
    %2118 = vmatprep.subr.mxu0 0.0
    %2119 = vmatpush2.msra.mxu0 0.0
    %2120 = vmatprep.subr.mxu0 0.0
    %2121 = vmatpush2.msra.mxu0 0.0
    %2122 = vmatprep.subr.mxu0 0.0
    %2123 = vmatpush2.msra.mxu0 0.0
    %2124 = vmatprep.subr.mxu0 0.0
    %2125 = vmatpush2.msra.mxu0 0.0
    %2126 = vmatprep.subr.mxu0 0.0
    %2127 = vmatpush2.msra.mxu0 0.0
    %2128 = vmatprep.subr.mxu0 0.0
    %2129 = vmatpush2.msra.mxu0 0.0
    %2130 = vmatprep.subr.mxu0 0.0
    %2131 = vmatpush2.msra.mxu0 0.0
    %2132 = vmatprep.subr.mxu0 0.0
    %2133 = vmatpush2.msra.mxu0 0.0
    %2134 = vmatprep.subr.mxu0 0.0
    %2135 = vmatpush2.msra.mxu0 0.0
    %2136 = vmatprep.subr.mxu0 0.0
    %2137 = vmatpush2.msra.mxu0 0.0
    %2138 = vmatprep.subr.mxu0 0.0
    %2139 = vmatpush2.msra.mxu0 0.0
    %2140 = vmatprep.subr.mxu0 0.0
    %2141 = vmatpush2.msra.mxu0 0.0
    %2142 = vmatprep.subr.mxu0 0.0
    %2143 = vmatpush2.msra.mxu0 0.0
    %2144 = vmatprep.mubr.f32.mxu0 0.0
    %v2145 = vand.u32 %v548, 4294901760
    %2146 = vmatmul.mubr.f32.gmra.mxu0 %v2145
    %v2147 = vpop.f32.mrf.mxu0
    %v2148 = vadd.f32 %v1986, %v2147
    %v2149 = vpop.f32.mrf.mxu0
    %v2150 = vadd.f32 %v1988, %v2149
    %2151 = vdwg.mxu0
    %2152 = vmatprep.subr.mxu0 0.0
    %2153 = vmatpush1.msra.mxu0 0.0
    %2154 = vmatprep.subr.mxu0 0.0
    %2155 = vmatpush1.msra.mxu0 0.0
    %2156 = vmatprep.subr.mxu0 0.0
    %2157 = vmatpush1.msra.mxu0 0.0
    %2158 = vmatprep.subr.mxu0 0.0
    %2159 = vmatpush1.msra.mxu0 0.0
    %2160 = vmatprep.subr.mxu0 0.0
    %2161 = vmatpush1.msra.mxu0 0.0
    %2162 = vmatprep.subr.mxu0 0.0
    %2163 = vmatpush1.msra.mxu0 0.0
    %2164 = vmatprep.subr.mxu0 0.0
    %2165 = vmatpush1.msra.mxu0 0.0
    %v2166 = vand.u32 %v466, 4294901760
    %v2167 = vsub.f32 %v466, %v2166
    %2168 = vmatprep.subr.mxu0 %v2167
    %v2169 = vand.u32 %v465, 4294901760
    %v2170 = vsub.f32 %v465, %v2169
    %2171 = vmatpush1.msra.mxu0 %v2170
    %v2172 = vand.u32 %v528, 4294901760
    %v2173 = vsub.f32 %v528, %v2172
    %2174 = vmatprep.subr.mxu0 %v2173
    %v2175 = vand.u32 %v527, 4294901760
    %v2176 = vsub.f32 %v527, %v2175
    %2177 = vmatpush1.msra.mxu0 %v2176
    %v2178 = vand.u32 %v423, 4294901760
    %v2179 = vsub.f32 %v423, %v2178
    %2180 = vmatprep.subr.mxu0 %v2179
    %v2181 = vand.u32 %v422, 4294901760
    %v2182 = vsub.f32 %v422, %v2181
    %2183 = vmatpush1.msra.mxu0 %v2182
    %v2184 = vand.u32 %v380, 4294901760
    %v2185 = vsub.f32 %v380, %v2184
    %2186 = vmatprep.subr.mxu0 %v2185
    %v2187 = vand.u32 %v379, 4294901760
    %v2188 = vsub.f32 %v379, %v2187
    %2189 = vmatpush1.msra.mxu0 %v2188
    %v2190 = vand.u32 %v173, 4294901760
    %v2191 = vsub.f32 %v173, %v2190
    %2192 = vmatprep.subr.mxu0 %v2191
    %v2193 = vand.u32 %v172, 4294901760
    %v2194 = vsub.f32 %v172, %v2193
    %2195 = vmatpush1.msra.mxu0 %v2194
    %v2196 = vand.u32 %v336, 4294901760
    %v2197 = vsub.f32 %v336, %v2196
    %2198 = vmatprep.subr.mxu0 %v2197
    %v2199 = vand.u32 %v335, 4294901760
    %v2200 = vsub.f32 %v335, %v2199
    %2201 = vmatpush1.msra.mxu0 %v2200
    %v2202 = vand.u32 %v293, 4294901760
    %v2203 = vsub.f32 %v293, %v2202
    %2204 = vmatprep.subr.mxu0 %v2203
    %v2205 = vand.u32 %v292, 4294901760
    %v2206 = vsub.f32 %v292, %v2205
    %2207 = vmatpush1.msra.mxu0 %v2206
    %v2208 = vand.u32 %v493, 4294901760
    %v2209 = vsub.f32 %v493, %v2208
    %2210 = vmatprep.subr.mxu0 %v2209
    %v2211 = vand.u32 %v492, 4294901760
    %v2212 = vsub.f32 %v492, %v2211
    %2213 = vmatpush1.msra.mxu0 %v2212
    %v2214 = vand.u32 %v242, 4294901760
    %v2215 = vsub.f32 %v242, %v2214
    %2216 = vmatprep.subr.mxu0 %v2215
    %v2217 = vand.u32 %v241, 4294901760
    %v2218 = vsub.f32 %v241, %v2217
    %2219 = vmatpush1.msra.mxu0 %v2218
    %2220 = vmatprep.subr.mxu0 0.0
    %2221 = vmatpush2.msra.mxu0 0.0
    %2222 = vmatprep.subr.mxu0 0.0
    %2223 = vmatpush2.msra.mxu0 0.0
    %2224 = vmatprep.subr.mxu0 0.0
    %2225 = vmatpush2.msra.mxu0 0.0
    %2226 = vmatprep.subr.mxu0 0.0
    %2227 = vmatpush2.msra.mxu0 0.0
    %2228 = vmatprep.subr.mxu0 0.0
    %2229 = vmatpush2.msra.mxu0 0.0
    %2230 = vmatprep.subr.mxu0 0.0
    %2231 = vmatpush2.msra.mxu0 0.0
    %2232 = vmatprep.subr.mxu0 0.0
    %2233 = vmatpush2.msra.mxu0 0.0
    %2234 = vmatprep.subr.mxu0 0.0
    %2235 = vmatpush2.msra.mxu0 0.0
    %2236 = vmatprep.subr.mxu0 0.0
    %2237 = vmatpush2.msra.mxu0 0.0
    %2238 = vmatprep.subr.mxu0 0.0
    %2239 = vmatpush2.msra.mxu0 0.0
    %2240 = vmatprep.subr.mxu0 0.0
    %2241 = vmatpush2.msra.mxu0 0.0
    %2242 = vmatprep.subr.mxu0 0.0
    %2243 = vmatpush2.msra.mxu0 0.0
    %2244 = vmatprep.subr.mxu0 0.0
    %2245 = vmatpush2.msra.mxu0 0.0
    %2246 = vmatprep.subr.mxu0 0.0
    %2247 = vmatpush2.msra.mxu0 0.0
    %2248 = vmatprep.subr.mxu0 0.0
    %2249 = vmatpush2.msra.mxu0 0.0
    %2250 = vmatprep.subr.mxu0 0.0
    %2251 = vmatpush2.msra.mxu0 0.0
    %2252 = vmatprep.mubr.f32.mxu0 0.0
    %v2253 = vand.u32 %v548, 4294901760
    %v2254 = vsub.f32 %v548, %v2253
    %2255 = vmatmul.mubr.f32.gmra.mxu0 %v2254
    %v2256 = vpop.f32.mrf.mxu0
    %v2257 = vadd.f32 %v2148, %v2256
    %v2258 = vpop.f32.mrf.mxu0
    %v2259 = vadd.f32 %v2150, %v2258
    %2260 = vdwg.mxu0
    %2261 = vmatprep.subr.mxu0 0.0
    %2262 = vmatpush1.msra.mxu0 0.0
    %2263 = vmatprep.subr.mxu0 0.0
    %2264 = vmatpush1.msra.mxu0 0.0
    %2265 = vmatprep.subr.mxu0 0.0
    %2266 = vmatpush1.msra.mxu0 0.0
    %2267 = vmatprep.subr.mxu0 0.0
    %2268 = vmatpush1.msra.mxu0 0.0
    %2269 = vmatprep.subr.mxu0 0.0
    %2270 = vmatpush1.msra.mxu0 0.0
    %2271 = vmatprep.subr.mxu0 0.0
    %2272 = vmatpush1.msra.mxu0 0.0
    %2273 = vmatprep.subr.mxu0 0.0
    %2274 = vmatpush1.msra.mxu0 0.0
    %v2275 = vand.u32 %v466, 4294901760
    %2276 = vmatprep.subr.mxu0 %v2275
    %v2277 = vand.u32 %v465, 4294901760
    %2278 = vmatpush1.msra.mxu0 %v2277
    %v2279 = vand.u32 %v528, 4294901760
    %2280 = vmatprep.subr.mxu0 %v2279
    %v2281 = vand.u32 %v527, 4294901760
    %2282 = vmatpush1.msra.mxu0 %v2281
    %v2283 = vand.u32 %v423, 4294901760
    %2284 = vmatprep.subr.mxu0 %v2283
    %v2285 = vand.u32 %v422, 4294901760
    %2286 = vmatpush1.msra.mxu0 %v2285
    %v2287 = vand.u32 %v380, 4294901760
    %2288 = vmatprep.subr.mxu0 %v2287
    %v2289 = vand.u32 %v379, 4294901760
    %2290 = vmatpush1.msra.mxu0 %v2289
    %v2291 = vand.u32 %v173, 4294901760
    %2292 = vmatprep.subr.mxu0 %v2291
    %v2293 = vand.u32 %v172, 4294901760
    %2294 = vmatpush1.msra.mxu0 %v2293
    %v2295 = vand.u32 %v336, 4294901760
    %2296 = vmatprep.subr.mxu0 %v2295
    %v2297 = vand.u32 %v335, 4294901760
    %2298 = vmatpush1.msra.mxu0 %v2297
    %v2299 = vand.u32 %v293, 4294901760
    %2300 = vmatprep.subr.mxu0 %v2299
    %v2301 = vand.u32 %v292, 4294901760
    %2302 = vmatpush1.msra.mxu0 %v2301
    %v2303 = vand.u32 %v493, 4294901760
    %2304 = vmatprep.subr.mxu0 %v2303
    %v2305 = vand.u32 %v492, 4294901760
    %2306 = vmatpush1.msra.mxu0 %v2305
    %v2307 = vand.u32 %v242, 4294901760
    %2308 = vmatprep.subr.mxu0 %v2307
    %v2309 = vand.u32 %v241, 4294901760
    %2310 = vmatpush1.msra.mxu0 %v2309
    %2311 = vmatprep.subr.mxu0 0.0
    %2312 = vmatpush2.msra.mxu0 0.0
    %2313 = vmatprep.subr.mxu0 0.0
    %2314 = vmatpush2.msra.mxu0 0.0
    %2315 = vmatprep.subr.mxu0 0.0
    %2316 = vmatpush2.msra.mxu0 0.0
    %2317 = vmatprep.subr.mxu0 0.0
    %2318 = vmatpush2.msra.mxu0 0.0
    %2319 = vmatprep.subr.mxu0 0.0
    %2320 = vmatpush2.msra.mxu0 0.0
    %2321 = vmatprep.subr.mxu0 0.0
    %2322 = vmatpush2.msra.mxu0 0.0
    %2323 = vmatprep.subr.mxu0 0.0
    %2324 = vmatpush2.msra.mxu0 0.0
    %2325 = vmatprep.subr.mxu0 0.0
    %2326 = vmatpush2.msra.mxu0 0.0
    %2327 = vmatprep.subr.mxu0 0.0
    %2328 = vmatpush2.msra.mxu0 0.0
    %2329 = vmatprep.subr.mxu0 0.0
    %2330 = vmatpush2.msra.mxu0 0.0
    %2331 = vmatprep.subr.mxu0 0.0
    %2332 = vmatpush2.msra.mxu0 0.0
    %2333 = vmatprep.subr.mxu0 0.0
    %2334 = vmatpush2.msra.mxu0 0.0
    %2335 = vmatprep.subr.mxu0 0.0
    %2336 = vmatpush2.msra.mxu0 0.0
    %2337 = vmatprep.subr.mxu0 0.0
    %2338 = vmatpush2.msra.mxu0 0.0
    %2339 = vmatprep.subr.mxu0 0.0
    %2340 = vmatpush2.msra.mxu0 0.0
    %2341 = vmatprep.subr.mxu0 0.0
    %2342 = vmatpush2.msra.mxu0 0.0
    %2343 = vmatprep.mubr.f32.mxu0 0.0
    %v2344 = vand.u32 %v548, 4294901760
    %v2345 = vsub.f32 %v548, %v2344
    %v2346 = vand.u32 %v2345, 4294901760
    %2347 = vmatmul.mubr.f32.gmra.mxu0 %v2346
    %v2348 = vpop.f32.mrf.mxu0
    %v2349 = vadd.f32 %v2257, %v2348
    %v2350 = vpop.f32.mrf.mxu0
    %v2351 = vadd.f32 %v2259, %v2350
    %2352 = vdwg.mxu0
    %2353 = vmatprep.subr.mxu0 0.0
    %2354 = vmatpush1.msra.mxu0 0.0
    %2355 = vmatprep.subr.mxu0 0.0
    %2356 = vmatpush1.msra.mxu0 0.0
    %2357 = vmatprep.subr.mxu0 0.0
    %2358 = vmatpush1.msra.mxu0 0.0
    %2359 = vmatprep.subr.mxu0 0.0
    %2360 = vmatpush1.msra.mxu0 0.0
    %2361 = vmatprep.subr.mxu0 0.0
    %2362 = vmatpush1.msra.mxu0 0.0
    %2363 = vmatprep.subr.mxu0 0.0
    %2364 = vmatpush1.msra.mxu0 0.0
    %2365 = vmatprep.subr.mxu0 0.0
    %2366 = vmatpush1.msra.mxu0 0.0
    %v2367 = vand.u32 %v466, 4294901760
    %v2368 = vsub.f32 %v466, %v2367
    %v2369 = vand.u32 %v2368, 4294901760
    %2370 = vmatprep.subr.mxu0 %v2369
    %v2371 = vand.u32 %v465, 4294901760
    %v2372 = vsub.f32 %v465, %v2371
    %v2373 = vand.u32 %v2372, 4294901760
    %2374 = vmatpush1.msra.mxu0 %v2373
    %v2375 = vand.u32 %v528, 4294901760
    %v2376 = vsub.f32 %v528, %v2375
    %v2377 = vand.u32 %v2376, 4294901760
    %2378 = vmatprep.subr.mxu0 %v2377
    %v2379 = vand.u32 %v527, 4294901760
    %v2380 = vsub.f32 %v527, %v2379
    %v2381 = vand.u32 %v2380, 4294901760
    %2382 = vmatpush1.msra.mxu0 %v2381
    %v2383 = vand.u32 %v423, 4294901760
    %v2384 = vsub.f32 %v423, %v2383
    %v2385 = vand.u32 %v2384, 4294901760
    %2386 = vmatprep.subr.mxu0 %v2385
    %v2387 = vand.u32 %v422, 4294901760
    %v2388 = vsub.f32 %v422, %v2387
    %v2389 = vand.u32 %v2388, 4294901760
    %2390 = vmatpush1.msra.mxu0 %v2389
    %v2391 = vand.u32 %v380, 4294901760
    %v2392 = vsub.f32 %v380, %v2391
    %v2393 = vand.u32 %v2392, 4294901760
    %2394 = vmatprep.subr.mxu0 %v2393
    %v2395 = vand.u32 %v379, 4294901760
    %v2396 = vsub.f32 %v379, %v2395
    %v2397 = vand.u32 %v2396, 4294901760
    %2398 = vmatpush1.msra.mxu0 %v2397
    %v2399 = vand.u32 %v173, 4294901760
    %v2400 = vsub.f32 %v173, %v2399
    %v2401 = vand.u32 %v2400, 4294901760
    %2402 = vmatprep.subr.mxu0 %v2401
    %v2403 = vand.u32 %v172, 4294901760
    %v2404 = vsub.f32 %v172, %v2403
    %v2405 = vand.u32 %v2404, 4294901760
    %2406 = vmatpush1.msra.mxu0 %v2405
    %v2407 = vand.u32 %v336, 4294901760
    %v2408 = vsub.f32 %v336, %v2407
    %v2409 = vand.u32 %v2408, 4294901760
    %2410 = vmatprep.subr.mxu0 %v2409
    %v2411 = vand.u32 %v335, 4294901760
    %v2412 = vsub.f32 %v335, %v2411
    %v2413 = vand.u32 %v2412, 4294901760
    %2414 = vmatpush1.msra.mxu0 %v2413
    %v2415 = vand.u32 %v293, 4294901760
    %v2416 = vsub.f32 %v293, %v2415
    %v2417 = vand.u32 %v2416, 4294901760
    %2418 = vmatprep.subr.mxu0 %v2417
    %v2419 = vand.u32 %v292, 4294901760
    %v2420 = vsub.f32 %v292, %v2419
    %v2421 = vand.u32 %v2420, 4294901760
    %2422 = vmatpush1.msra.mxu0 %v2421
    %v2423 = vand.u32 %v493, 4294901760
    %v2424 = vsub.f32 %v493, %v2423
    %v2425 = vand.u32 %v2424, 4294901760
    %2426 = vmatprep.subr.mxu0 %v2425
    %v2427 = vand.u32 %v492, 4294901760
    %v2428 = vsub.f32 %v492, %v2427
    %v2429 = vand.u32 %v2428, 4294901760
    %2430 = vmatpush1.msra.mxu0 %v2429
    %v2431 = vand.u32 %v242, 4294901760
    %v2432 = vsub.f32 %v242, %v2431
    %v2433 = vand.u32 %v2432, 4294901760
    %2434 = vmatprep.subr.mxu0 %v2433
    %v2435 = vand.u32 %v241, 4294901760
    %v2436 = vsub.f32 %v241, %v2435
    %v2437 = vand.u32 %v2436, 4294901760
    %2438 = vmatpush1.msra.mxu0 %v2437
    %2439 = vmatprep.subr.mxu0 0.0
    %2440 = vmatpush2.msra.mxu0 0.0
    %2441 = vmatprep.subr.mxu0 0.0
    %2442 = vmatpush2.msra.mxu0 0.0
    %2443 = vmatprep.subr.mxu0 0.0
    %2444 = vmatpush2.msra.mxu0 0.0
    %2445 = vmatprep.subr.mxu0 0.0
    %2446 = vmatpush2.msra.mxu0 0.0
    %2447 = vmatprep.subr.mxu0 0.0
    %2448 = vmatpush2.msra.mxu0 0.0
    %2449 = vmatprep.subr.mxu0 0.0
    %2450 = vmatpush2.msra.mxu0 0.0
    %2451 = vmatprep.subr.mxu0 0.0
    %2452 = vmatpush2.msra.mxu0 0.0
    %2453 = vmatprep.subr.mxu0 0.0
    %2454 = vmatpush2.msra.mxu0 0.0
    %2455 = vmatprep.subr.mxu0 0.0
    %2456 = vmatpush2.msra.mxu0 0.0
    %2457 = vmatprep.subr.mxu0 0.0
    %2458 = vmatpush2.msra.mxu0 0.0
    %2459 = vmatprep.subr.mxu0 0.0
    %2460 = vmatpush2.msra.mxu0 0.0
    %2461 = vmatprep.subr.mxu0 0.0
    %2462 = vmatpush2.msra.mxu0 0.0
    %2463 = vmatprep.subr.mxu0 0.0
    %2464 = vmatpush2.msra.mxu0 0.0
    %2465 = vmatprep.subr.mxu0 0.0
    %2466 = vmatpush2.msra.mxu0 0.0
    %2467 = vmatprep.subr.mxu0 0.0
    %2468 = vmatpush2.msra.mxu0 0.0
    %2469 = vmatprep.subr.mxu0 0.0
    %2470 = vmatpush2.msra.mxu0 0.0
    %2471 = vmatprep.mubr.f32.mxu0 0.0
    %v2472 = vand.u32 %v548, 4294901760
    %2473 = vmatmul.mubr.f32.gmra.mxu0 %v2472
    %v2474 = vpop.f32.mrf.mxu0
    %v2475 = vadd.f32 %v2349, %v2474
    %v2476 = vpop.f32.mrf.mxu0
    %v2477 = vadd.f32 %v2351, %v2476
    %2478 = vdwg.mxu0
    %2479 = vmatprep.subr.mxu0 0.0
    %2480 = vmatpush1.msra.mxu0 0.0
    %2481 = vmatprep.subr.mxu0 0.0
    %2482 = vmatpush1.msra.mxu0 0.0
    %2483 = vmatprep.subr.mxu0 0.0
    %2484 = vmatpush1.msra.mxu0 0.0
    %2485 = vmatprep.subr.mxu0 0.0
    %2486 = vmatpush1.msra.mxu0 0.0
    %2487 = vmatprep.subr.mxu0 0.0
    %2488 = vmatpush1.msra.mxu0 0.0
    %2489 = vmatprep.subr.mxu0 0.0
    %2490 = vmatpush1.msra.mxu0 0.0
    %2491 = vmatprep.subr.mxu0 0.0
    %2492 = vmatpush1.msra.mxu0 0.0
    %v2493 = vand.u32 %v466, 4294901760
    %2494 = vmatprep.subr.mxu0 %v2493
    %v2495 = vand.u32 %v465, 4294901760
    %2496 = vmatpush1.msra.mxu0 %v2495
    %v2497 = vand.u32 %v528, 4294901760
    %2498 = vmatprep.subr.mxu0 %v2497
    %v2499 = vand.u32 %v527, 4294901760
    %2500 = vmatpush1.msra.mxu0 %v2499
    %v2501 = vand.u32 %v423, 4294901760
    %2502 = vmatprep.subr.mxu0 %v2501
    %v2503 = vand.u32 %v422, 4294901760
    %2504 = vmatpush1.msra.mxu0 %v2503
    %v2505 = vand.u32 %v380, 4294901760
    %2506 = vmatprep.subr.mxu0 %v2505
    %v2507 = vand.u32 %v379, 4294901760
    %2508 = vmatpush1.msra.mxu0 %v2507
    %v2509 = vand.u32 %v173, 4294901760
    %2510 = vmatprep.subr.mxu0 %v2509
    %v2511 = vand.u32 %v172, 4294901760
    %2512 = vmatpush1.msra.mxu0 %v2511
    %v2513 = vand.u32 %v336, 4294901760
    %2514 = vmatprep.subr.mxu0 %v2513
    %v2515 = vand.u32 %v335, 4294901760
    %2516 = vmatpush1.msra.mxu0 %v2515
    %v2517 = vand.u32 %v293, 4294901760
    %2518 = vmatprep.subr.mxu0 %v2517
    %v2519 = vand.u32 %v292, 4294901760
    %2520 = vmatpush1.msra.mxu0 %v2519
    %v2521 = vand.u32 %v493, 4294901760
    %2522 = vmatprep.subr.mxu0 %v2521
    %v2523 = vand.u32 %v492, 4294901760
    %2524 = vmatpush1.msra.mxu0 %v2523
    %v2525 = vand.u32 %v242, 4294901760
    %2526 = vmatprep.subr.mxu0 %v2525
    %v2527 = vand.u32 %v241, 4294901760
    %2528 = vmatpush1.msra.mxu0 %v2527
    %2529 = vmatprep.subr.mxu0 0.0
    %2530 = vmatpush2.msra.mxu0 0.0
    %2531 = vmatprep.subr.mxu0 0.0
    %2532 = vmatpush2.msra.mxu0 0.0
    %2533 = vmatprep.subr.mxu0 0.0
    %2534 = vmatpush2.msra.mxu0 0.0
    %2535 = vmatprep.subr.mxu0 0.0
    %2536 = vmatpush2.msra.mxu0 0.0
    %2537 = vmatprep.subr.mxu0 0.0
    %2538 = vmatpush2.msra.mxu0 0.0
    %2539 = vmatprep.subr.mxu0 0.0
    %2540 = vmatpush2.msra.mxu0 0.0
    %2541 = vmatprep.subr.mxu0 0.0
    %2542 = vmatpush2.msra.mxu0 0.0
    %2543 = vmatprep.subr.mxu0 0.0
    %2544 = vmatpush2.msra.mxu0 0.0
    %2545 = vmatprep.subr.mxu0 0.0
    %2546 = vmatpush2.msra.mxu0 0.0
    %2547 = vmatprep.subr.mxu0 0.0
    %2548 = vmatpush2.msra.mxu0 0.0
    %2549 = vmatprep.subr.mxu0 0.0
    %2550 = vmatpush2.msra.mxu0 0.0
    %2551 = vmatprep.subr.mxu0 0.0
    %2552 = vmatpush2.msra.mxu0 0.0
    %2553 = vmatprep.subr.mxu0 0.0
    %2554 = vmatpush2.msra.mxu0 0.0
    %2555 = vmatprep.subr.mxu0 0.0
    %2556 = vmatpush2.msra.mxu0 0.0
    %2557 = vmatprep.subr.mxu0 0.0
    %2558 = vmatpush2.msra.mxu0 0.0
    %2559 = vmatprep.subr.mxu0 0.0
    %2560 = vmatpush2.msra.mxu0 0.0
    %2561 = vmatprep.mubr.f32.mxu0 0.0
    %v2562 = vand.u32 %v548, 4294901760
    %2563 = vmatmul.mubr.f32.gmra.mxu0 %v2562
    %v2564 = vpop.f32.mrf.mxu0
    %v2565 = vadd.f32 %v2475, %v2564
    %v2566 = vpop.f32.mrf.mxu0
    %v2567 = vadd.f32 %v2477, %v2566
    %2568 = vdwg.mxu0
    %2569 = vmatprep.subr.mxu0 0.0
    %2570 = vmatpush1.msra.mxu0 0.0
    %2571 = vmatprep.subr.mxu0 0.0
    %2572 = vmatpush1.msra.mxu0 0.0
    %2573 = vmatprep.subr.mxu0 0.0
    %2574 = vmatpush1.msra.mxu0 0.0
    %2575 = vmatprep.subr.mxu0 0.0
    %2576 = vmatpush1.msra.mxu0 0.0
    %2577 = vmatprep.subr.mxu0 0.0
    %2578 = vmatpush1.msra.mxu0 0.0
    %2579 = vmatprep.subr.mxu0 0.0
    %2580 = vmatpush1.msra.mxu0 0.0
    %2581 = vmatprep.subr.mxu0 0.0
    %2582 = vmatpush1.msra.mxu0 0.0
    %v2583 = vand.u32 %v468, 4294901760
    %2584 = vmatprep.subr.mxu0 %v2583
    %v2585 = vand.u32 %v467, 4294901760
    %2586 = vmatpush1.msra.mxu0 %v2585
    %v2587 = vand.u32 %v530, 4294901760
    %2588 = vmatprep.subr.mxu0 %v2587
    %v2589 = vand.u32 %v529, 4294901760
    %2590 = vmatpush1.msra.mxu0 %v2589
    %v2591 = vand.u32 %v425, 4294901760
    %2592 = vmatprep.subr.mxu0 %v2591
    %v2593 = vand.u32 %v424, 4294901760
    %2594 = vmatpush1.msra.mxu0 %v2593
    %v2595 = vand.u32 %v382, 4294901760
    %2596 = vmatprep.subr.mxu0 %v2595
    %v2597 = vand.u32 %v381, 4294901760
    %2598 = vmatpush1.msra.mxu0 %v2597
    %v2599 = vand.u32 %v175, 4294901760
    %2600 = vmatprep.subr.mxu0 %v2599
    %v2601 = vand.u32 %v174, 4294901760
    %2602 = vmatpush1.msra.mxu0 %v2601
    %v2603 = vand.u32 %v338, 4294901760
    %2604 = vmatprep.subr.mxu0 %v2603
    %v2605 = vand.u32 %v337, 4294901760
    %2606 = vmatpush1.msra.mxu0 %v2605
    %v2607 = vand.u32 %v295, 4294901760
    %2608 = vmatprep.subr.mxu0 %v2607
    %v2609 = vand.u32 %v294, 4294901760
    %2610 = vmatpush1.msra.mxu0 %v2609
    %v2611 = vand.u32 %v495, 4294901760
    %2612 = vmatprep.subr.mxu0 %v2611
    %v2613 = vand.u32 %v494, 4294901760
    %2614 = vmatpush1.msra.mxu0 %v2613
    %v2615 = vand.u32 %v244, 4294901760
    %2616 = vmatprep.subr.mxu0 %v2615
    %v2617 = vand.u32 %v243, 4294901760
    %2618 = vmatpush1.msra.mxu0 %v2617
    %2619 = vmatprep.subr.mxu0 0.0
    %2620 = vmatpush2.msra.mxu0 0.0
    %2621 = vmatprep.subr.mxu0 0.0
    %2622 = vmatpush2.msra.mxu0 0.0
    %2623 = vmatprep.subr.mxu0 0.0
    %2624 = vmatpush2.msra.mxu0 0.0
    %2625 = vmatprep.subr.mxu0 0.0
    %2626 = vmatpush2.msra.mxu0 0.0
    %2627 = vmatprep.subr.mxu0 0.0
    %2628 = vmatpush2.msra.mxu0 0.0
    %2629 = vmatprep.subr.mxu0 0.0
    %2630 = vmatpush2.msra.mxu0 0.0
    %2631 = vmatprep.subr.mxu0 0.0
    %2632 = vmatpush2.msra.mxu0 0.0
    %2633 = vmatprep.subr.mxu0 0.0
    %2634 = vmatpush2.msra.mxu0 0.0
    %2635 = vmatprep.subr.mxu0 0.0
    %2636 = vmatpush2.msra.mxu0 0.0
    %2637 = vmatprep.subr.mxu0 0.0
    %2638 = vmatpush2.msra.mxu0 0.0
    %2639 = vmatprep.subr.mxu0 0.0
    %2640 = vmatpush2.msra.mxu0 0.0
    %2641 = vmatprep.subr.mxu0 0.0
    %2642 = vmatpush2.msra.mxu0 0.0
    %2643 = vmatprep.subr.mxu0 0.0
    %2644 = vmatpush2.msra.mxu0 0.0
    %2645 = vmatprep.subr.mxu0 0.0
    %2646 = vmatpush2.msra.mxu0 0.0
    %2647 = vmatprep.subr.mxu0 0.0
    %2648 = vmatpush2.msra.mxu0 0.0
    %2649 = vmatprep.subr.mxu0 0.0
    %2650 = vmatpush2.msra.mxu0 0.0
    %2651 = vmatprep.mubr.f32.mxu0 0.0
    %v2652 = vand.u32 %v548, 4294901760
    %v2653 = vsub.f32 %v548, %v2652
    %v2654 = vand.u32 %v2653, 4294901760
    %v2655 = vsub.f32 %v2653, %v2654
    %v2656 = vand.u32 %v2655, 4294901760
    %2657 = vmatmul.mubr.f32.gmra.mxu0 %v2656
    %v2658 = vpop.f32.mrf.mxu0
    %v2659 = vadd.f32 %v544, %v2658
    %v2660 = vpop.f32.mrf.mxu0
    %v2661 = vadd.f32 %v544, %v2660
    %2662 = vdwg.mxu0
    %2663 = vmatprep.subr.mxu0 0.0
    %2664 = vmatpush1.msra.mxu0 0.0
    %2665 = vmatprep.subr.mxu0 0.0
    %2666 = vmatpush1.msra.mxu0 0.0
    %2667 = vmatprep.subr.mxu0 0.0
    %2668 = vmatpush1.msra.mxu0 0.0
    %2669 = vmatprep.subr.mxu0 0.0
    %2670 = vmatpush1.msra.mxu0 0.0
    %2671 = vmatprep.subr.mxu0 0.0
    %2672 = vmatpush1.msra.mxu0 0.0
    %2673 = vmatprep.subr.mxu0 0.0
    %2674 = vmatpush1.msra.mxu0 0.0
    %2675 = vmatprep.subr.mxu0 0.0
    %2676 = vmatpush1.msra.mxu0 0.0
    %v2677 = vand.u32 %v468, 4294901760
    %v2678 = vsub.f32 %v468, %v2677
    %v2679 = vand.u32 %v2678, 4294901760
    %v2680 = vsub.f32 %v2678, %v2679
    %v2681 = vand.u32 %v2680, 4294901760
    %2682 = vmatprep.subr.mxu0 %v2681
    %v2683 = vand.u32 %v467, 4294901760
    %v2684 = vsub.f32 %v467, %v2683
    %v2685 = vand.u32 %v2684, 4294901760
    %v2686 = vsub.f32 %v2684, %v2685
    %v2687 = vand.u32 %v2686, 4294901760
    %2688 = vmatpush1.msra.mxu0 %v2687
    %v2689 = vand.u32 %v530, 4294901760
    %v2690 = vsub.f32 %v530, %v2689
    %v2691 = vand.u32 %v2690, 4294901760
    %v2692 = vsub.f32 %v2690, %v2691
    %v2693 = vand.u32 %v2692, 4294901760
    %2694 = vmatprep.subr.mxu0 %v2693
    %v2695 = vand.u32 %v529, 4294901760
    %v2696 = vsub.f32 %v529, %v2695
    %v2697 = vand.u32 %v2696, 4294901760
    %v2698 = vsub.f32 %v2696, %v2697
    %v2699 = vand.u32 %v2698, 4294901760
    %2700 = vmatpush1.msra.mxu0 %v2699
    %v2701 = vand.u32 %v425, 4294901760
    %v2702 = vsub.f32 %v425, %v2701
    %v2703 = vand.u32 %v2702, 4294901760
    %v2704 = vsub.f32 %v2702, %v2703
    %v2705 = vand.u32 %v2704, 4294901760
    %2706 = vmatprep.subr.mxu0 %v2705
    %v2707 = vand.u32 %v424, 4294901760
    %v2708 = vsub.f32 %v424, %v2707
    %v2709 = vand.u32 %v2708, 4294901760
    %v2710 = vsub.f32 %v2708, %v2709
    %v2711 = vand.u32 %v2710, 4294901760
    %2712 = vmatpush1.msra.mxu0 %v2711
    %v2713 = vand.u32 %v382, 4294901760
    %v2714 = vsub.f32 %v382, %v2713
    %v2715 = vand.u32 %v2714, 4294901760
    %v2716 = vsub.f32 %v2714, %v2715
    %v2717 = vand.u32 %v2716, 4294901760
    %2718 = vmatprep.subr.mxu0 %v2717
    %v2719 = vand.u32 %v381, 4294901760
    %v2720 = vsub.f32 %v381, %v2719
    %v2721 = vand.u32 %v2720, 4294901760
    %v2722 = vsub.f32 %v2720, %v2721
    %v2723 = vand.u32 %v2722, 4294901760
    %2724 = vmatpush1.msra.mxu0 %v2723
    %v2725 = vand.u32 %v175, 4294901760
    %v2726 = vsub.f32 %v175, %v2725
    %v2727 = vand.u32 %v2726, 4294901760
    %v2728 = vsub.f32 %v2726, %v2727
    %v2729 = vand.u32 %v2728, 4294901760
    %2730 = vmatprep.subr.mxu0 %v2729
    %v2731 = vand.u32 %v174, 4294901760
    %v2732 = vsub.f32 %v174, %v2731
    %v2733 = vand.u32 %v2732, 4294901760
    %v2734 = vsub.f32 %v2732, %v2733
    %v2735 = vand.u32 %v2734, 4294901760
    %2736 = vmatpush1.msra.mxu0 %v2735
    %v2737 = vand.u32 %v338, 4294901760
    %v2738 = vsub.f32 %v338, %v2737
    %v2739 = vand.u32 %v2738, 4294901760
    %v2740 = vsub.f32 %v2738, %v2739
    %v2741 = vand.u32 %v2740, 4294901760
    %2742 = vmatprep.subr.mxu0 %v2741
    %v2743 = vand.u32 %v337, 4294901760
    %v2744 = vsub.f32 %v337, %v2743
    %v2745 = vand.u32 %v2744, 4294901760
    %v2746 = vsub.f32 %v2744, %v2745
    %v2747 = vand.u32 %v2746, 4294901760
    %2748 = vmatpush1.msra.mxu0 %v2747
    %v2749 = vand.u32 %v295, 4294901760
    %v2750 = vsub.f32 %v295, %v2749
    %v2751 = vand.u32 %v2750, 4294901760
    %v2752 = vsub.f32 %v2750, %v2751
    %v2753 = vand.u32 %v2752, 4294901760
    %2754 = vmatprep.subr.mxu0 %v2753
    %v2755 = vand.u32 %v294, 4294901760
    %v2756 = vsub.f32 %v294, %v2755
    %v2757 = vand.u32 %v2756, 4294901760
    %v2758 = vsub.f32 %v2756, %v2757
    %v2759 = vand.u32 %v2758, 4294901760
    %2760 = vmatpush1.msra.mxu0 %v2759
    %v2761 = vand.u32 %v495, 4294901760
    %v2762 = vsub.f32 %v495, %v2761
    %v2763 = vand.u32 %v2762, 4294901760
    %v2764 = vsub.f32 %v2762, %v2763
    %v2765 = vand.u32 %v2764, 4294901760
    %2766 = vmatprep.subr.mxu0 %v2765
    %v2767 = vand.u32 %v494, 4294901760
    %v2768 = vsub.f32 %v494, %v2767
    %v2769 = vand.u32 %v2768, 4294901760
    %v2770 = vsub.f32 %v2768, %v2769
    %v2771 = vand.u32 %v2770, 4294901760
    %2772 = vmatpush1.msra.mxu0 %v2771
    %v2773 = vand.u32 %v244, 4294901760
    %v2774 = vsub.f32 %v244, %v2773
    %v2775 = vand.u32 %v2774, 4294901760
    %v2776 = vsub.f32 %v2774, %v2775
    %v2777 = vand.u32 %v2776, 4294901760
    %2778 = vmatprep.subr.mxu0 %v2777
    %v2779 = vand.u32 %v243, 4294901760
    %v2780 = vsub.f32 %v243, %v2779
    %v2781 = vand.u32 %v2780, 4294901760
    %v2782 = vsub.f32 %v2780, %v2781
    %v2783 = vand.u32 %v2782, 4294901760
    %2784 = vmatpush1.msra.mxu0 %v2783
    %2785 = vmatprep.subr.mxu0 0.0
    %2786 = vmatpush2.msra.mxu0 0.0
    %2787 = vmatprep.subr.mxu0 0.0
    %2788 = vmatpush2.msra.mxu0 0.0
    %2789 = vmatprep.subr.mxu0 0.0
    %2790 = vmatpush2.msra.mxu0 0.0
    %2791 = vmatprep.subr.mxu0 0.0
    %2792 = vmatpush2.msra.mxu0 0.0
    %2793 = vmatprep.subr.mxu0 0.0
    %2794 = vmatpush2.msra.mxu0 0.0
    %2795 = vmatprep.subr.mxu0 0.0
    %2796 = vmatpush2.msra.mxu0 0.0
    %2797 = vmatprep.subr.mxu0 0.0
    %2798 = vmatpush2.msra.mxu0 0.0
    %2799 = vmatprep.subr.mxu0 0.0
    %2800 = vmatpush2.msra.mxu0 0.0
    %2801 = vmatprep.subr.mxu0 0.0
    %2802 = vmatpush2.msra.mxu0 0.0
    %2803 = vmatprep.subr.mxu0 0.0
    %2804 = vmatpush2.msra.mxu0 0.0
    %2805 = vmatprep.subr.mxu0 0.0
    %2806 = vmatpush2.msra.mxu0 0.0
    %2807 = vmatprep.subr.mxu0 0.0
    %2808 = vmatpush2.msra.mxu0 0.0
    %2809 = vmatprep.subr.mxu0 0.0
    %2810 = vmatpush2.msra.mxu0 0.0
    %2811 = vmatprep.subr.mxu0 0.0
    %2812 = vmatpush2.msra.mxu0 0.0
    %2813 = vmatprep.subr.mxu0 0.0
    %2814 = vmatpush2.msra.mxu0 0.0
    %2815 = vmatprep.subr.mxu0 0.0
    %2816 = vmatpush2.msra.mxu0 0.0
    %2817 = vmatprep.mubr.f32.mxu0 0.0
    %v2818 = vand.u32 %v548, 4294901760
    %2819 = vmatmul.mubr.f32.gmra.mxu0 %v2818
    %v2820 = vpop.f32.mrf.mxu0
    %v2821 = vadd.f32 %v2659, %v2820
    %v2822 = vpop.f32.mrf.mxu0
    %v2823 = vadd.f32 %v2661, %v2822
    %2824 = vdwg.mxu0
    %2825 = vmatprep.subr.mxu0 0.0
    %2826 = vmatpush1.msra.mxu0 0.0
    %2827 = vmatprep.subr.mxu0 0.0
    %2828 = vmatpush1.msra.mxu0 0.0
    %2829 = vmatprep.subr.mxu0 0.0
    %2830 = vmatpush1.msra.mxu0 0.0
    %2831 = vmatprep.subr.mxu0 0.0
    %2832 = vmatpush1.msra.mxu0 0.0
    %2833 = vmatprep.subr.mxu0 0.0
    %2834 = vmatpush1.msra.mxu0 0.0
    %2835 = vmatprep.subr.mxu0 0.0
    %2836 = vmatpush1.msra.mxu0 0.0
    %2837 = vmatprep.subr.mxu0 0.0
    %2838 = vmatpush1.msra.mxu0 0.0
    %v2839 = vand.u32 %v468, 4294901760
    %v2840 = vsub.f32 %v468, %v2839
    %2841 = vmatprep.subr.mxu0 %v2840
    %v2842 = vand.u32 %v467, 4294901760
    %v2843 = vsub.f32 %v467, %v2842
    %2844 = vmatpush1.msra.mxu0 %v2843
    %v2845 = vand.u32 %v530, 4294901760
    %v2846 = vsub.f32 %v530, %v2845
    %2847 = vmatprep.subr.mxu0 %v2846
    %v2848 = vand.u32 %v529, 4294901760
    %v2849 = vsub.f32 %v529, %v2848
    %2850 = vmatpush1.msra.mxu0 %v2849
    %v2851 = vand.u32 %v425, 4294901760
    %v2852 = vsub.f32 %v425, %v2851
    %2853 = vmatprep.subr.mxu0 %v2852
    %v2854 = vand.u32 %v424, 4294901760
    %v2855 = vsub.f32 %v424, %v2854
    %2856 = vmatpush1.msra.mxu0 %v2855
    %v2857 = vand.u32 %v382, 4294901760
    %v2858 = vsub.f32 %v382, %v2857
    %2859 = vmatprep.subr.mxu0 %v2858
    %v2860 = vand.u32 %v381, 4294901760
    %v2861 = vsub.f32 %v381, %v2860
    %2862 = vmatpush1.msra.mxu0 %v2861
    %v2863 = vand.u32 %v175, 4294901760
    %v2864 = vsub.f32 %v175, %v2863
    %2865 = vmatprep.subr.mxu0 %v2864
    %v2866 = vand.u32 %v174, 4294901760
    %v2867 = vsub.f32 %v174, %v2866
    %2868 = vmatpush1.msra.mxu0 %v2867
    %v2869 = vand.u32 %v338, 4294901760
    %v2870 = vsub.f32 %v338, %v2869
    %2871 = vmatprep.subr.mxu0 %v2870
    %v2872 = vand.u32 %v337, 4294901760
    %v2873 = vsub.f32 %v337, %v2872
    %2874 = vmatpush1.msra.mxu0 %v2873
    %v2875 = vand.u32 %v295, 4294901760
    %v2876 = vsub.f32 %v295, %v2875
    %2877 = vmatprep.subr.mxu0 %v2876
    %v2878 = vand.u32 %v294, 4294901760
    %v2879 = vsub.f32 %v294, %v2878
    %2880 = vmatpush1.msra.mxu0 %v2879
    %v2881 = vand.u32 %v495, 4294901760
    %v2882 = vsub.f32 %v495, %v2881
    %2883 = vmatprep.subr.mxu0 %v2882
    %v2884 = vand.u32 %v494, 4294901760
    %v2885 = vsub.f32 %v494, %v2884
    %2886 = vmatpush1.msra.mxu0 %v2885
    %v2887 = vand.u32 %v244, 4294901760
    %v2888 = vsub.f32 %v244, %v2887
    %2889 = vmatprep.subr.mxu0 %v2888
    %v2890 = vand.u32 %v243, 4294901760
    %v2891 = vsub.f32 %v243, %v2890
    %2892 = vmatpush1.msra.mxu0 %v2891
    %2893 = vmatprep.subr.mxu0 0.0
    %2894 = vmatpush2.msra.mxu0 0.0
    %2895 = vmatprep.subr.mxu0 0.0
    %2896 = vmatpush2.msra.mxu0 0.0
    %2897 = vmatprep.subr.mxu0 0.0
    %2898 = vmatpush2.msra.mxu0 0.0
    %2899 = vmatprep.subr.mxu0 0.0
    %2900 = vmatpush2.msra.mxu0 0.0
    %2901 = vmatprep.subr.mxu0 0.0
    %2902 = vmatpush2.msra.mxu0 0.0
    %2903 = vmatprep.subr.mxu0 0.0
    %2904 = vmatpush2.msra.mxu0 0.0
    %2905 = vmatprep.subr.mxu0 0.0
    %2906 = vmatpush2.msra.mxu0 0.0
    %2907 = vmatprep.subr.mxu0 0.0
    %2908 = vmatpush2.msra.mxu0 0.0
    %2909 = vmatprep.subr.mxu0 0.0
    %2910 = vmatpush2.msra.mxu0 0.0
    %2911 = vmatprep.subr.mxu0 0.0
    %2912 = vmatpush2.msra.mxu0 0.0
    %2913 = vmatprep.subr.mxu0 0.0
    %2914 = vmatpush2.msra.mxu0 0.0
    %2915 = vmatprep.subr.mxu0 0.0
    %2916 = vmatpush2.msra.mxu0 0.0
    %2917 = vmatprep.subr.mxu0 0.0
    %2918 = vmatpush2.msra.mxu0 0.0
    %2919 = vmatprep.subr.mxu0 0.0
    %2920 = vmatpush2.msra.mxu0 0.0
    %2921 = vmatprep.subr.mxu0 0.0
    %2922 = vmatpush2.msra.mxu0 0.0
    %2923 = vmatprep.subr.mxu0 0.0
    %2924 = vmatpush2.msra.mxu0 0.0
    %2925 = vmatprep.mubr.f32.mxu0 0.0
    %v2926 = vand.u32 %v548, 4294901760
    %v2927 = vsub.f32 %v548, %v2926
    %2928 = vmatmul.mubr.f32.gmra.mxu0 %v2927
    %v2929 = vpop.f32.mrf.mxu0
    %v2930 = vadd.f32 %v2821, %v2929
    %v2931 = vpop.f32.mrf.mxu0
    %v2932 = vadd.f32 %v2823, %v2931
    %2933 = vdwg.mxu0
    %2934 = vmatprep.subr.mxu0 0.0
    %2935 = vmatpush1.msra.mxu0 0.0
    %2936 = vmatprep.subr.mxu0 0.0
    %2937 = vmatpush1.msra.mxu0 0.0
    %2938 = vmatprep.subr.mxu0 0.0
    %2939 = vmatpush1.msra.mxu0 0.0
    %2940 = vmatprep.subr.mxu0 0.0
    %2941 = vmatpush1.msra.mxu0 0.0
    %2942 = vmatprep.subr.mxu0 0.0
    %2943 = vmatpush1.msra.mxu0 0.0
    %2944 = vmatprep.subr.mxu0 0.0
    %2945 = vmatpush1.msra.mxu0 0.0
    %2946 = vmatprep.subr.mxu0 0.0
    %2947 = vmatpush1.msra.mxu0 0.0
    %v2948 = vand.u32 %v468, 4294901760
    %2949 = vmatprep.subr.mxu0 %v2948
    %v2950 = vand.u32 %v467, 4294901760
    %2951 = vmatpush1.msra.mxu0 %v2950
    %v2952 = vand.u32 %v530, 4294901760
    %2953 = vmatprep.subr.mxu0 %v2952
    %v2954 = vand.u32 %v529, 4294901760
    %2955 = vmatpush1.msra.mxu0 %v2954
    %v2956 = vand.u32 %v425, 4294901760
    %2957 = vmatprep.subr.mxu0 %v2956
    %v2958 = vand.u32 %v424, 4294901760
    %2959 = vmatpush1.msra.mxu0 %v2958
    %v2960 = vand.u32 %v382, 4294901760
    %2961 = vmatprep.subr.mxu0 %v2960
    %v2962 = vand.u32 %v381, 4294901760
    %2963 = vmatpush1.msra.mxu0 %v2962
    %v2964 = vand.u32 %v175, 4294901760
    %2965 = vmatprep.subr.mxu0 %v2964
    %v2966 = vand.u32 %v174, 4294901760
    %2967 = vmatpush1.msra.mxu0 %v2966
    %v2968 = vand.u32 %v338, 4294901760
    %2969 = vmatprep.subr.mxu0 %v2968
    %v2970 = vand.u32 %v337, 4294901760
    %2971 = vmatpush1.msra.mxu0 %v2970
    %v2972 = vand.u32 %v295, 4294901760
    %2973 = vmatprep.subr.mxu0 %v2972
    %v2974 = vand.u32 %v294, 4294901760
    %2975 = vmatpush1.msra.mxu0 %v2974
    %v2976 = vand.u32 %v495, 4294901760
    %2977 = vmatprep.subr.mxu0 %v2976
    %v2978 = vand.u32 %v494, 4294901760
    %2979 = vmatpush1.msra.mxu0 %v2978
    %v2980 = vand.u32 %v244, 4294901760
    %2981 = vmatprep.subr.mxu0 %v2980
    %v2982 = vand.u32 %v243, 4294901760
    %2983 = vmatpush1.msra.mxu0 %v2982
    %2984 = vmatprep.subr.mxu0 0.0
    %2985 = vmatpush2.msra.mxu0 0.0
    %2986 = vmatprep.subr.mxu0 0.0
    %2987 = vmatpush2.msra.mxu0 0.0
    %2988 = vmatprep.subr.mxu0 0.0
    %2989 = vmatpush2.msra.mxu0 0.0
    %2990 = vmatprep.subr.mxu0 0.0
    %2991 = vmatpush2.msra.mxu0 0.0
    %2992 = vmatprep.subr.mxu0 0.0
    %2993 = vmatpush2.msra.mxu0 0.0
    %2994 = vmatprep.subr.mxu0 0.0
    %2995 = vmatpush2.msra.mxu0 0.0
    %2996 = vmatprep.subr.mxu0 0.0
    %2997 = vmatpush2.msra.mxu0 0.0
    %2998 = vmatprep.subr.mxu0 0.0
    %2999 = vmatpush2.msra.mxu0 0.0
    %3000 = vmatprep.subr.mxu0 0.0
    %3001 = vmatpush2.msra.mxu0 0.0
    %3002 = vmatprep.subr.mxu0 0.0
    %3003 = vmatpush2.msra.mxu0 0.0
    %3004 = vmatprep.subr.mxu0 0.0
    %3005 = vmatpush2.msra.mxu0 0.0
    %3006 = vmatprep.subr.mxu0 0.0
    %3007 = vmatpush2.msra.mxu0 0.0
    %3008 = vmatprep.subr.mxu0 0.0
    %3009 = vmatpush2.msra.mxu0 0.0
    %3010 = vmatprep.subr.mxu0 0.0
    %3011 = vmatpush2.msra.mxu0 0.0
    %3012 = vmatprep.subr.mxu0 0.0
    %3013 = vmatpush2.msra.mxu0 0.0
    %3014 = vmatprep.subr.mxu0 0.0
    %3015 = vmatpush2.msra.mxu0 0.0
    %3016 = vmatprep.mubr.f32.mxu0 0.0
    %v3017 = vand.u32 %v548, 4294901760
    %v3018 = vsub.f32 %v548, %v3017
    %v3019 = vand.u32 %v3018, 4294901760
    %3020 = vmatmul.mubr.f32.gmra.mxu0 %v3019
    %v3021 = vpop.f32.mrf.mxu0
    %v3022 = vadd.f32 %v2930, %v3021
    %v3023 = vpop.f32.mrf.mxu0
    %v3024 = vadd.f32 %v2932, %v3023
    %3025 = vdwg.mxu0
    %3026 = vmatprep.subr.mxu0 0.0
    %3027 = vmatpush1.msra.mxu0 0.0
    %3028 = vmatprep.subr.mxu0 0.0
    %3029 = vmatpush1.msra.mxu0 0.0
    %3030 = vmatprep.subr.mxu0 0.0
    %3031 = vmatpush1.msra.mxu0 0.0
    %3032 = vmatprep.subr.mxu0 0.0
    %3033 = vmatpush1.msra.mxu0 0.0
    %3034 = vmatprep.subr.mxu0 0.0
    %3035 = vmatpush1.msra.mxu0 0.0
    %3036 = vmatprep.subr.mxu0 0.0
    %3037 = vmatpush1.msra.mxu0 0.0
    %3038 = vmatprep.subr.mxu0 0.0
    %3039 = vmatpush1.msra.mxu0 0.0
    %v3040 = vand.u32 %v468, 4294901760
    %v3041 = vsub.f32 %v468, %v3040
    %v3042 = vand.u32 %v3041, 4294901760
    %3043 = vmatprep.subr.mxu0 %v3042
    %v3044 = vand.u32 %v467, 4294901760
    %v3045 = vsub.f32 %v467, %v3044
    %v3046 = vand.u32 %v3045, 4294901760
    %3047 = vmatpush1.msra.mxu0 %v3046
    %v3048 = vand.u32 %v530, 4294901760
    %v3049 = vsub.f32 %v530, %v3048
    %v3050 = vand.u32 %v3049, 4294901760
    %3051 = vmatprep.subr.mxu0 %v3050
    %v3052 = vand.u32 %v529, 4294901760
    %v3053 = vsub.f32 %v529, %v3052
    %v3054 = vand.u32 %v3053, 4294901760
    %3055 = vmatpush1.msra.mxu0 %v3054
    %v3056 = vand.u32 %v425, 4294901760
    %v3057 = vsub.f32 %v425, %v3056
    %v3058 = vand.u32 %v3057, 4294901760
    %3059 = vmatprep.subr.mxu0 %v3058
    %v3060 = vand.u32 %v424, 4294901760
    %v3061 = vsub.f32 %v424, %v3060
    %v3062 = vand.u32 %v3061, 4294901760
    %3063 = vmatpush1.msra.mxu0 %v3062
    %v3064 = vand.u32 %v382, 4294901760
    %v3065 = vsub.f32 %v382, %v3064
    %v3066 = vand.u32 %v3065, 4294901760
    %3067 = vmatprep.subr.mxu0 %v3066
    %v3068 = vand.u32 %v381, 4294901760
    %v3069 = vsub.f32 %v381, %v3068
    %v3070 = vand.u32 %v3069, 4294901760
    %3071 = vmatpush1.msra.mxu0 %v3070
    %v3072 = vand.u32 %v175, 4294901760
    %v3073 = vsub.f32 %v175, %v3072
    %v3074 = vand.u32 %v3073, 4294901760
    %3075 = vmatprep.subr.mxu0 %v3074
    %v3076 = vand.u32 %v174, 4294901760
    %v3077 = vsub.f32 %v174, %v3076
    %v3078 = vand.u32 %v3077, 4294901760
    %3079 = vmatpush1.msra.mxu0 %v3078
    %v3080 = vand.u32 %v338, 4294901760
    %v3081 = vsub.f32 %v338, %v3080
    %v3082 = vand.u32 %v3081, 4294901760
    %3083 = vmatprep.subr.mxu0 %v3082
    %v3084 = vand.u32 %v337, 4294901760
    %v3085 = vsub.f32 %v337, %v3084
    %v3086 = vand.u32 %v3085, 4294901760
    %3087 = vmatpush1.msra.mxu0 %v3086
    %v3088 = vand.u32 %v295, 4294901760
    %v3089 = vsub.f32 %v295, %v3088
    %v3090 = vand.u32 %v3089, 4294901760
    %3091 = vmatprep.subr.mxu0 %v3090
    %v3092 = vand.u32 %v294, 4294901760
    %v3093 = vsub.f32 %v294, %v3092
    %v3094 = vand.u32 %v3093, 4294901760
    %3095 = vmatpush1.msra.mxu0 %v3094
    %v3096 = vand.u32 %v495, 4294901760
    %v3097 = vsub.f32 %v495, %v3096
    %v3098 = vand.u32 %v3097, 4294901760
    %3099 = vmatprep.subr.mxu0 %v3098
    %v3100 = vand.u32 %v494, 4294901760
    %v3101 = vsub.f32 %v494, %v3100
    %v3102 = vand.u32 %v3101, 4294901760
    %3103 = vmatpush1.msra.mxu0 %v3102
    %v3104 = vand.u32 %v244, 4294901760
    %v3105 = vsub.f32 %v244, %v3104
    %v3106 = vand.u32 %v3105, 4294901760
    %3107 = vmatprep.subr.mxu0 %v3106
    %v3108 = vand.u32 %v243, 4294901760
    %v3109 = vsub.f32 %v243, %v3108
    %v3110 = vand.u32 %v3109, 4294901760
    %3111 = vmatpush1.msra.mxu0 %v3110
    %3112 = vmatprep.subr.mxu0 0.0
    %3113 = vmatpush2.msra.mxu0 0.0
    %3114 = vmatprep.subr.mxu0 0.0
    %3115 = vmatpush2.msra.mxu0 0.0
    %3116 = vmatprep.subr.mxu0 0.0
    %3117 = vmatpush2.msra.mxu0 0.0
    %3118 = vmatprep.subr.mxu0 0.0
    %3119 = vmatpush2.msra.mxu0 0.0
    %3120 = vmatprep.subr.mxu0 0.0
    %3121 = vmatpush2.msra.mxu0 0.0
    %3122 = vmatprep.subr.mxu0 0.0
    %3123 = vmatpush2.msra.mxu0 0.0
    %3124 = vmatprep.subr.mxu0 0.0
    %3125 = vmatpush2.msra.mxu0 0.0
    %3126 = vmatprep.subr.mxu0 0.0
    %3127 = vmatpush2.msra.mxu0 0.0
    %3128 = vmatprep.subr.mxu0 0.0
    %3129 = vmatpush2.msra.mxu0 0.0
    %3130 = vmatprep.subr.mxu0 0.0
    %3131 = vmatpush2.msra.mxu0 0.0
    %3132 = vmatprep.subr.mxu0 0.0
    %3133 = vmatpush2.msra.mxu0 0.0
    %3134 = vmatprep.subr.mxu0 0.0
    %3135 = vmatpush2.msra.mxu0 0.0
    %3136 = vmatprep.subr.mxu0 0.0
    %3137 = vmatpush2.msra.mxu0 0.0
    %3138 = vmatprep.subr.mxu0 0.0
    %3139 = vmatpush2.msra.mxu0 0.0
    %3140 = vmatprep.subr.mxu0 0.0
    %3141 = vmatpush2.msra.mxu0 0.0
    %3142 = vmatprep.subr.mxu0 0.0
    %3143 = vmatpush2.msra.mxu0 0.0
    %3144 = vmatprep.mubr.f32.mxu0 0.0
    %v3145 = vand.u32 %v548, 4294901760
    %3146 = vmatmul.mubr.f32.gmra.mxu0 %v3145
    %v3147 = vpop.f32.mrf.mxu0
    %v3148 = vadd.f32 %v3022, %v3147
    %v3149 = vpop.f32.mrf.mxu0
    %v3150 = vadd.f32 %v3024, %v3149
    %3151 = vdwg.mxu0
    %3152 = vmatprep.subr.mxu0 0.0
    %3153 = vmatpush1.msra.mxu0 0.0
    %3154 = vmatprep.subr.mxu0 0.0
    %3155 = vmatpush1.msra.mxu0 0.0
    %3156 = vmatprep.subr.mxu0 0.0
    %3157 = vmatpush1.msra.mxu0 0.0
    %3158 = vmatprep.subr.mxu0 0.0
    %3159 = vmatpush1.msra.mxu0 0.0
    %3160 = vmatprep.subr.mxu0 0.0
    %3161 = vmatpush1.msra.mxu0 0.0
    %3162 = vmatprep.subr.mxu0 0.0
    %3163 = vmatpush1.msra.mxu0 0.0
    %3164 = vmatprep.subr.mxu0 0.0
    %3165 = vmatpush1.msra.mxu0 0.0
    %v3166 = vand.u32 %v468, 4294901760
    %3167 = vmatprep.subr.mxu0 %v3166
    %v3168 = vand.u32 %v467, 4294901760
    %3169 = vmatpush1.msra.mxu0 %v3168
    %v3170 = vand.u32 %v530, 4294901760
    %3171 = vmatprep.subr.mxu0 %v3170
    %v3172 = vand.u32 %v529, 4294901760
    %3173 = vmatpush1.msra.mxu0 %v3172
    %v3174 = vand.u32 %v425, 4294901760
    %3175 = vmatprep.subr.mxu0 %v3174
    %v3176 = vand.u32 %v424, 4294901760
    %3177 = vmatpush1.msra.mxu0 %v3176
    %v3178 = vand.u32 %v382, 4294901760
    %3179 = vmatprep.subr.mxu0 %v3178
    %v3180 = vand.u32 %v381, 4294901760
    %3181 = vmatpush1.msra.mxu0 %v3180
    %v3182 = vand.u32 %v175, 4294901760
    %3183 = vmatprep.subr.mxu0 %v3182
    %v3184 = vand.u32 %v174, 4294901760
    %3185 = vmatpush1.msra.mxu0 %v3184
    %v3186 = vand.u32 %v338, 4294901760
    %3187 = vmatprep.subr.mxu0 %v3186
    %v3188 = vand.u32 %v337, 4294901760
    %3189 = vmatpush1.msra.mxu0 %v3188
    %v3190 = vand.u32 %v295, 4294901760
    %3191 = vmatprep.subr.mxu0 %v3190
    %v3192 = vand.u32 %v294, 4294901760
    %3193 = vmatpush1.msra.mxu0 %v3192
    %v3194 = vand.u32 %v495, 4294901760
    %3195 = vmatprep.subr.mxu0 %v3194
    %v3196 = vand.u32 %v494, 4294901760
    %3197 = vmatpush1.msra.mxu0 %v3196
    %v3198 = vand.u32 %v244, 4294901760
    %3199 = vmatprep.subr.mxu0 %v3198
    %v3200 = vand.u32 %v243, 4294901760
    %3201 = vmatpush1.msra.mxu0 %v3200
    %3202 = vmatprep.subr.mxu0 0.0
    %3203 = vmatpush2.msra.mxu0 0.0
    %3204 = vmatprep.subr.mxu0 0.0
    %3205 = vmatpush2.msra.mxu0 0.0
    %3206 = vmatprep.subr.mxu0 0.0
    %3207 = vmatpush2.msra.mxu0 0.0
    %3208 = vmatprep.subr.mxu0 0.0
    %3209 = vmatpush2.msra.mxu0 0.0
    %3210 = vmatprep.subr.mxu0 0.0
    %3211 = vmatpush2.msra.mxu0 0.0
    %3212 = vmatprep.subr.mxu0 0.0
    %3213 = vmatpush2.msra.mxu0 0.0
    %3214 = vmatprep.subr.mxu0 0.0
    %3215 = vmatpush2.msra.mxu0 0.0
    %3216 = vmatprep.subr.mxu0 0.0
    %3217 = vmatpush2.msra.mxu0 0.0
    %3218 = vmatprep.subr.mxu0 0.0
    %3219 = vmatpush2.msra.mxu0 0.0
    %3220 = vmatprep.subr.mxu0 0.0
    %3221 = vmatpush2.msra.mxu0 0.0
    %3222 = vmatprep.subr.mxu0 0.0
    %3223 = vmatpush2.msra.mxu0 0.0
    %3224 = vmatprep.subr.mxu0 0.0
    %3225 = vmatpush2.msra.mxu0 0.0
    %3226 = vmatprep.subr.mxu0 0.0
    %3227 = vmatpush2.msra.mxu0 0.0
    %3228 = vmatprep.subr.mxu0 0.0
    %3229 = vmatpush2.msra.mxu0 0.0
    %3230 = vmatprep.subr.mxu0 0.0
    %3231 = vmatpush2.msra.mxu0 0.0
    %3232 = vmatprep.subr.mxu0 0.0
    %3233 = vmatpush2.msra.mxu0 0.0
    %3234 = vmatprep.mubr.f32.mxu0 0.0
    %v3235 = vand.u32 %v548, 4294901760
    %3236 = vmatmul.mubr.f32.gmra.mxu0 %v3235
    %v3237 = vpop.f32.mrf.mxu0
    %v3238 = vadd.f32 %v3148, %v3237
    %v3239 = vpop.f32.mrf.mxu0
    %v3240 = vadd.f32 %v3150, %v3239
    %3241 = vdwg.mxu0
    %v3242 = vsel %vm96, 1, 0
    %v3243 = vsel %vm97, 1, 0
    %v3244 = vsel %vm98, 1, 0
    %v3245 = vsel %vm99, 1, 0
    %v3246 = vsel %vm100, 1, 0
    %v3247 = vsel %vm101, 1, 0
    %v3248 = vsel %vm102, 1, 0
    %v3249 = vsel %vm103, 1, 0
    %vm3250 = vcmp.eq.s32.totalorder %v3242, 1
    %vm3251 = vcmp.eq.s32.totalorder %v3243, 1
    %vm3252 = vcmp.eq.s32.totalorder %v3244, 1
    %vm3253 = vcmp.eq.s32.totalorder %v3245, 1
    %vm3254 = vcmp.eq.s32.totalorder %v3246, 1
    %vm3255 = vcmp.eq.s32.totalorder %v3247, 1
    %vm3256 = vcmp.eq.s32.totalorder %v3248, 1
    %vm3257 = vcmp.eq.s32.totalorder %v3249, 1
    %v3258 = vsel %vm3250, %v1219, 0.0
    %v3259 = vsel %vm3251, %v1221, 0.0
    %v3260 = vsel %vm3252, %v1892, 0.0
    %v3261 = vsel %vm3253, %v1894, 0.0
    %v3262 = vsel %vm3254, %v2565, 0.0
    %v3263 = vsel %vm3255, %v2567, 0.0
    %v3264 = vsel %vm3256, %v3238, 0.0
    %v3265 = vsel %vm3257, %v3240, 0.0
    %v3266 = vadd.f32 %v3258, %v3259
    %v3267 = vadd.f32 %v3266, %v3260
    %v3268 = vadd.f32 %v3267, %v3261
    %v3269 = vadd.f32 %v3268, %v3262
    %v3270 = vadd.f32 %v3269, %v3263
    %v3271 = vadd.f32 %v3270, %v3264
    %v3272 = vadd.f32 %v3271, %v3265
    %3273 = vadd.xlane.f32.xlu0 %v3272
    %v3274 = vpop.xlane.xlu0 %3273
    %v3275 = vmul.f32 %v3274, 0.001953125
    %v3276 = vsub.f32 %v1219, %v3275
    %v3277 = vsub.f32 %v1221, %v3275
    %v3278 = vsub.f32 %v1892, %v3275
    %v3279 = vsub.f32 %v1894, %v3275
    %v3280 = vsub.f32 %v2565, %v3275
    %v3281 = vsub.f32 %v2567, %v3275
    %v3282 = vsub.f32 %v3238, %v3275
    %v3283 = vsub.f32 %v3240, %v3275
    %v3284 = vsel %vm3250, %v3276, 0.0
    %v3285 = vsel %vm3251, %v3277, 0.0
    %v3286 = vsel %vm3252, %v3278, 0.0
    %v3287 = vsel %vm3253, %v3279, 0.0
    %v3288 = vsel %vm3254, %v3280, 0.0
    %v3289 = vsel %vm3255, %v3281, 0.0
    %v3290 = vsel %vm3256, %v3282, 0.0
    %v3291 = vsel %vm3257, %v3283, 0.0
    %v3292 = vmul.f32 %v3284, %v3284
    %v3293 = vmul.f32 %v3285, %v3285
    %v3294 = vmul.f32 %v3286, %v3286
    %v3295 = vmul.f32 %v3287, %v3287
    %v3296 = vmul.f32 %v3288, %v3288
    %v3297 = vmul.f32 %v3289, %v3289
    %v3298 = vmul.f32 %v3290, %v3290
    %v3299 = vmul.f32 %v3291, %v3291
    %v3300 = vadd.f32 %v3292, %v3293
    %v3301 = vadd.f32 %v3300, %v3294
    %v3302 = vadd.f32 %v3301, %v3295
    %v3303 = vadd.f32 %v3302, %v3296
    %v3304 = vadd.f32 %v3303, %v3297
    %v3305 = vadd.f32 %v3304, %v3298
    %v3306 = vadd.f32 %v3305, %v3299
    %3307 = vadd.xlane.f32.xlu0 %v3306
    %v3308 = vpop.xlane.xlu0 %3307
    %v3309 = vmul.f32 %v3308, 0.001953125
    %v3310 = vadd.f32 %v3309, 1e-05
    %v3311 = vrsqrt.pop %v3310
    %v3312 = vmul.f32 %v3284, %v3311
    %v3313 = vmul.f32 %v3285, %v3311
    %v3314 = vmul.f32 %v3286, %v3311
    %v3315 = vmul.f32 %v3287, %v3311
    %v3316 = vmul.f32 %v3288, %v3311
    %v3317 = vmul.f32 %v3289, %v3311
    %v3318 = vmul.f32 %v3290, %v3311
    %v3319 = vmul.f32 %v3291, %v3311
    %v3320 = vld [vmem:[%s3] sm:$0xff]
    %3322 = vset.pattern.permute.xlu0 0
    %3323 = vperm.xlu0 %3322, %v3320
    %v3324 = vpop.permute.xlu0 %3323
    %v3326 = vmul.f32 %v3312, %v3324
    %v3327 = vmul.f32 %v3313, %v3324
    %v3328 = vmul.f32 %v3314, %v3324
    %v3329 = vmul.f32 %v3315, %v3324
    %v3330 = vmul.f32 %v3316, %v3324
    %v3331 = vmul.f32 %v3317, %v3324
    %v3332 = vmul.f32 %v3318, %v3324
    %v3333 = vmul.f32 %v3319, %v3324
    %v3334 = vld [vmem:[%s4] sm:$0xff]
    %3336 = vset.pattern.permute.xlu0 0
    %3337 = vperm.xlu0 %3336, %v3334
    %v3338 = vpop.permute.xlu0 %3337
    %v3340 = vadd.f32 %v3326, %v3338
    %v3341 = vadd.f32 %v3327, %v3338
    %v3342 = vadd.f32 %v3328, %v3338
    %v3343 = vadd.f32 %v3329, %v3338
    %v3344 = vadd.f32 %v3330, %v3338
    %v3345 = vadd.f32 %v3331, %v3338
    %v3346 = vadd.f32 %v3332, %v3338
    %v3347 = vadd.f32 %v3333, %v3338
    %v3348 = vmax.f32 %v3340, 0.0
    %v3349 = vmax.f32 %v3341, 0.0
    %v3350 = vmax.f32 %v3342, 0.0
    %v3351 = vmax.f32 %v3343, 0.0
    %v3352 = vmax.f32 %v3344, 0.0
    %v3353 = vmax.f32 %v3345, 0.0
    %v3354 = vmax.f32 %v3346, 0.0
    %v3355 = vmax.f32 %v3347, 0.0
    %v3356 = vsel %vm3250, %v3348, 0.0
    %v3357 = vsel %vm3251, %v3349, 0.0
    %v3358 = vsel %vm3252, %v3350, 0.0
    %v3359 = vsel %vm3253, %v3351, 0.0
    %v3360 = vsel %vm3254, %v3352, 0.0
    %v3361 = vsel %vm3255, %v3353, 0.0
    %v3362 = vsel %vm3256, %v3354, 0.0
    %v3363 = vsel %vm3257, %v3355, 0.0
    %3364 = vst [vmem:[#allocation3 + $0x8] sm:$0xff] %v3356
    %3365 = vst [vmem:[#allocation3 + $0x10] sm:$0xff] %v3357
    %3366 = vst [vmem:[#allocation3 + $0x18] sm:$0xff] %v3358
    %3367 = vst [vmem:[#allocation3 + $0x20] sm:$0xff] %v3359
    %3368 = vst [vmem:[#allocation3 + $0x28] sm:$0xff] %v3360
    %3369 = vst [vmem:[#allocation3 + $0x30] sm:$0xff] %v3361
    %3370 = vst [vmem:[#allocation3 + $0x38] sm:$0xff] %v3362
    %3371 = vst [vmem:[#allocation3 + $0x40] sm:$0xff] %v3363
    %v3372 = vld [vmem:[#allocation3] sm:$0xff]
    %v3373 = vld [vmem:[#allocation3 + $0x8] sm:$0xff]
    %v3374 = vld [vmem:[#allocation3 + $0x10] sm:$0xff]
    %v3375 = vld [vmem:[#allocation3 + $0x18] sm:$0xff]
    %v3376 = vld [vmem:[#allocation3 + $0x20] sm:$0xff]
    %v3377 = vld [vmem:[#allocation3 + $0x28] sm:$0xff]
    %v3378 = vld [vmem:[#allocation3 + $0x30] sm:$0xff]
    %v3379 = vld [vmem:[#allocation3 + $0x38] sm:$0xff]
    %v3380 = vld [vmem:[#allocation3 + $0x40] sm:$0xff]
    %v3381 = vld [vmem:[#allocation3 + $0x48] sm:$0xff]
    %vm3382 = vcmp.ge.s32.totalorder %v177, 2
    %vm3383 = vcmp.ge.s32.totalorder %v178, 2
    %vm3384 = vcmp.ge.s32.totalorder %v179, 2
    %vm3385 = vcmp.ge.s32.totalorder %v180, 2
    %vm3386 = vcmp.ge.s32.totalorder %v181, 2
    %vm3387 = vcmp.ge.s32.totalorder %v182, 2
    %vm3388 = vcmp.ge.s32.totalorder %v183, 2
    %vm3389 = vcmp.ge.s32.totalorder %v184, 2
    %3399 = vrot.lane.b32.xlu0 %v3372, 34
    %v3400 = vpop.permute.xlu0 %3399
    %3401 = vrot.lane.b32.xlu0 %v3373, 34
    %v3402 = vpop.permute.xlu0 %3401
    %3403 = vrot.lane.b32.xlu0 %v3374, 34
    %v3404 = vpop.permute.xlu0 %3403
    %3405 = vrot.lane.b32.xlu0 %v3375, 34
    %v3406 = vpop.permute.xlu0 %3405
    %3407 = vrot.lane.b32.xlu0 %v3376, 34
    %v3408 = vpop.permute.xlu0 %3407
    %3409 = vrot.lane.b32.xlu0 %v3377, 34
    %v3410 = vpop.permute.xlu0 %3409
    %3411 = vrot.lane.b32.xlu0 %v3378, 34
    %v3412 = vpop.permute.xlu0 %3411
    %3413 = vrot.lane.b32.xlu0 %v3379, 34
    %v3414 = vpop.permute.xlu0 %3413
    %3415 = vrot.lane.b32.xlu0 %v3380, 34
    %v3416 = vpop.permute.xlu0 %3415
    %vm3417 = vcmask 277504
    %v3418 = vsel %vm3417, %v3400, %v3402
    %v3419 = vsel %vm3417, %v3402, %v3404
    %v3420 = vsel %vm3417, %v3404, %v3406
    %v3421 = vsel %vm3417, %v3406, %v3408
    %v3422 = vsel %vm3417, %v3408, %v3410
    %v3423 = vsel %vm3417, %v3410, %v3412
    %v3424 = vsel %vm3417, %v3412, %v3414
    %v3425 = vsel %vm3417, %v3414, %v3416
    %v3434 = vsel %vm3382, %v3418, 0.0
    %v3435 = vsel %vm3383, %v3419, 0.0
    %v3436 = vsel %vm3384, %v3420, 0.0
    %v3437 = vsel %vm3385, %v3421, 0.0
    %v3438 = vsel %vm3386, %v3422, 0.0
    %v3439 = vsel %vm3387, %v3423, 0.0
    %v3440 = vsel %vm3388, %v3424, 0.0
    %v3441 = vsel %vm3389, %v3425, 0.0
    %vm3442 = vcmp.lt.s32.totalorder %v177, 14
    %vm3443 = vcmp.lt.s32.totalorder %v178, 14
    %vm3444 = vcmp.lt.s32.totalorder %v179, 14
    %vm3445 = vcmp.lt.s32.totalorder %v180, 14
    %vm3446 = vcmp.lt.s32.totalorder %v181, 14
    %vm3447 = vcmp.lt.s32.totalorder %v182, 14
    %vm3448 = vcmp.lt.s32.totalorder %v183, 14
    %vm3449 = vcmp.lt.s32.totalorder %v184, 14
    %3450 = vrot.lane.b32.xlu0 %v3372, 30
    %v3451 = vpop.permute.xlu0 %3450
    %3452 = vrot.lane.b32.xlu0 %v3373, 30
    %v3453 = vpop.permute.xlu0 %3452
    %3454 = vrot.lane.b32.xlu0 %v3374, 30
    %v3455 = vpop.permute.xlu0 %3454
    %3456 = vrot.lane.b32.xlu0 %v3375, 30
    %v3457 = vpop.permute.xlu0 %3456
    %3458 = vrot.lane.b32.xlu0 %v3376, 30
    %v3459 = vpop.permute.xlu0 %3458
    %3460 = vrot.lane.b32.xlu0 %v3377, 30
    %v3461 = vpop.permute.xlu0 %3460
    %3462 = vrot.lane.b32.xlu0 %v3378, 30
    %v3463 = vpop.permute.xlu0 %3462
    %3464 = vrot.lane.b32.xlu0 %v3379, 30
    %v3465 = vpop.permute.xlu0 %3464
    %3466 = vrot.lane.b32.xlu0 %v3380, 30
    %v3467 = vpop.permute.xlu0 %3466
    %vm3468 = vcmask 244736
    %v3469 = vsel %vm3468, %v3451, %v3453
    %v3470 = vsel %vm3468, %v3453, %v3455
    %v3471 = vsel %vm3468, %v3455, %v3457
    %v3472 = vsel %vm3468, %v3457, %v3459
    %v3473 = vsel %vm3468, %v3459, %v3461
    %v3474 = vsel %vm3468, %v3461, %v3463
    %v3475 = vsel %vm3468, %v3463, %v3465
    %v3476 = vsel %vm3468, %v3465, %v3467
    %v3485 = vsel %vm3442, %v3469, 0.0
    %v3486 = vsel %vm3443, %v3470, 0.0
    %v3487 = vsel %vm3444, %v3471, 0.0
    %v3488 = vsel %vm3445, %v3472, 0.0
    %v3489 = vsel %vm3446, %v3473, 0.0
    %v3490 = vsel %vm3447, %v3474, 0.0
    %v3491 = vsel %vm3448, %v3475, 0.0
    %v3492 = vsel %vm3449, %v3476, 0.0
    %3493 = vrot.lane.b32.xlu0 %v3372, 2
    %v3494 = vpop.permute.xlu0 %3493
    %3495 = vrot.lane.b32.xlu0 %v3373, 2
    %v3496 = vpop.permute.xlu0 %3495
    %3497 = vrot.lane.b32.xlu0 %v3374, 2
    %v3498 = vpop.permute.xlu0 %3497
    %3499 = vrot.lane.b32.xlu0 %v3375, 2
    %v3500 = vpop.permute.xlu0 %3499
    %3501 = vrot.lane.b32.xlu0 %v3376, 2
    %v3502 = vpop.permute.xlu0 %3501
    %3503 = vrot.lane.b32.xlu0 %v3377, 2
    %v3504 = vpop.permute.xlu0 %3503
    %3505 = vrot.lane.b32.xlu0 %v3378, 2
    %v3506 = vpop.permute.xlu0 %3505
    %3507 = vrot.lane.b32.xlu0 %v3379, 2
    %v3508 = vpop.permute.xlu0 %3507
    %3509 = vrot.lane.b32.xlu0 %v3380, 2
    %v3510 = vpop.permute.xlu0 %3509
    %vm3511 = vcmask 15360
    %v3512 = vsel %vm3511, %v3494, %v3496
    %v3513 = vsel %vm3511, %v3496, %v3498
    %v3514 = vsel %vm3511, %v3498, %v3500
    %v3515 = vsel %vm3511, %v3500, %v3502
    %v3516 = vsel %vm3511, %v3502, %v3504
    %v3517 = vsel %vm3511, %v3504, %v3506
    %v3518 = vsel %vm3511, %v3506, %v3508
    %v3519 = vsel %vm3511, %v3508, %v3510
    %v3528 = vsel %vm3382, %v3512, 0.0
    %v3529 = vsel %vm3383, %v3513, 0.0
    %v3530 = vsel %vm3384, %v3514, 0.0
    %v3531 = vsel %vm3385, %v3515, 0.0
    %v3532 = vsel %vm3386, %v3516, 0.0
    %v3533 = vsel %vm3387, %v3517, 0.0
    %v3534 = vsel %vm3388, %v3518, 0.0
    %v3535 = vsel %vm3389, %v3519, 0.0
    %3537 = vrot.lane.b32.xlu0 %v3373, 126
    %v3538 = vpop.permute.xlu0 %3537
    %3539 = vrot.lane.b32.xlu0 %v3374, 126
    %v3540 = vpop.permute.xlu0 %3539
    %3541 = vrot.lane.b32.xlu0 %v3375, 126
    %v3542 = vpop.permute.xlu0 %3541
    %3543 = vrot.lane.b32.xlu0 %v3376, 126
    %v3544 = vpop.permute.xlu0 %3543
    %3545 = vrot.lane.b32.xlu0 %v3377, 126
    %v3546 = vpop.permute.xlu0 %3545
    %3547 = vrot.lane.b32.xlu0 %v3378, 126
    %v3548 = vpop.permute.xlu0 %3547
    %3549 = vrot.lane.b32.xlu0 %v3379, 126
    %v3550 = vpop.permute.xlu0 %3549
    %3551 = vrot.lane.b32.xlu0 %v3380, 126
    %v3552 = vpop.permute.xlu0 %3551
    %3553 = vrot.lane.b32.xlu0 %v3381, 126
    %v3554 = vpop.permute.xlu0 %3553
    %vm3555 = vcmask 1031168
    %v3556 = vsel %vm3555, %v3538, %v3540
    %v3557 = vsel %vm3555, %v3540, %v3542
    %v3558 = vsel %vm3555, %v3542, %v3544
    %v3559 = vsel %vm3555, %v3544, %v3546
    %v3560 = vsel %vm3555, %v3546, %v3548
    %v3561 = vsel %vm3555, %v3548, %v3550
    %v3562 = vsel %vm3555, %v3550, %v3552
    %v3563 = vsel %vm3555, %v3552, %v3554
    %v3572 = vsel %vm3442, %v3556, 0.0
    %v3573 = vsel %vm3443, %v3557, 0.0
    %v3574 = vsel %vm3444, %v3558, 0.0
    %v3575 = vsel %vm3445, %v3559, 0.0
    %v3576 = vsel %vm3446, %v3560, 0.0
    %v3577 = vsel %vm3447, %v3561, 0.0
    %v3578 = vsel %vm3448, %v3562, 0.0
    %v3579 = vsel %vm3449, %v3563, 0.0
    %3580 = vrot.lane.b32.xlu0 %v3373, 98
    %v3581 = vpop.permute.xlu0 %3580
    %3582 = vrot.lane.b32.xlu0 %v3374, 98
    %v3583 = vpop.permute.xlu0 %3582
    %3584 = vrot.lane.b32.xlu0 %v3375, 98
    %v3585 = vpop.permute.xlu0 %3584
    %3586 = vrot.lane.b32.xlu0 %v3376, 98
    %v3587 = vpop.permute.xlu0 %3586
    %3588 = vrot.lane.b32.xlu0 %v3377, 98
    %v3589 = vpop.permute.xlu0 %3588
    %3590 = vrot.lane.b32.xlu0 %v3378, 98
    %v3591 = vpop.permute.xlu0 %3590
    %3592 = vrot.lane.b32.xlu0 %v3379, 98
    %v3593 = vpop.permute.xlu0 %3592
    %3594 = vrot.lane.b32.xlu0 %v3380, 98
    %v3595 = vpop.permute.xlu0 %3594
    %3596 = vrot.lane.b32.xlu0 %v3381, 98
    %v3597 = vpop.permute.xlu0 %3596
    %vm3598 = vcmask 801792
    %v3599 = vsel %vm3598, %v3581, %v3583
    %v3600 = vsel %vm3598, %v3583, %v3585
    %v3601 = vsel %vm3598, %v3585, %v3587
    %v3602 = vsel %vm3598, %v3587, %v3589
    %v3603 = vsel %vm3598, %v3589, %v3591
    %v3604 = vsel %vm3598, %v3591, %v3593
    %v3605 = vsel %vm3598, %v3593, %v3595
    %v3606 = vsel %vm3598, %v3595, %v3597
    %v3615 = vsel %vm3382, %v3599, 0.0
    %v3616 = vsel %vm3383, %v3600, 0.0
    %v3617 = vsel %vm3384, %v3601, 0.0
    %v3618 = vsel %vm3385, %v3602, 0.0
    %v3619 = vsel %vm3386, %v3603, 0.0
    %v3620 = vsel %vm3387, %v3604, 0.0
    %v3621 = vsel %vm3388, %v3605, 0.0
    %v3622 = vsel %vm3389, %v3606, 0.0
    %3623 = vrot.lane.b32.xlu0 %v3373, 94
    %v3624 = vpop.permute.xlu0 %3623
    %3625 = vrot.lane.b32.xlu0 %v3374, 94
    %v3626 = vpop.permute.xlu0 %3625
    %3627 = vrot.lane.b32.xlu0 %v3375, 94
    %v3628 = vpop.permute.xlu0 %3627
    %3629 = vrot.lane.b32.xlu0 %v3376, 94
    %v3630 = vpop.permute.xlu0 %3629
    %3631 = vrot.lane.b32.xlu0 %v3377, 94
    %v3632 = vpop.permute.xlu0 %3631
    %3633 = vrot.lane.b32.xlu0 %v3378, 94
    %v3634 = vpop.permute.xlu0 %3633
    %3635 = vrot.lane.b32.xlu0 %v3379, 94
    %v3636 = vpop.permute.xlu0 %3635
    %3637 = vrot.lane.b32.xlu0 %v3380, 94
    %v3638 = vpop.permute.xlu0 %3637
    %3639 = vrot.lane.b32.xlu0 %v3381, 94
    %v3640 = vpop.permute.xlu0 %3639
    %vm3641 = vcmask 769024
    %v3642 = vsel %vm3641, %v3624, %v3626
    %v3643 = vsel %vm3641, %v3626, %v3628
    %v3644 = vsel %vm3641, %v3628, %v3630
    %v3645 = vsel %vm3641, %v3630, %v3632
    %v3646 = vsel %vm3641, %v3632, %v3634
    %v3647 = vsel %vm3641, %v3634, %v3636
    %v3648 = vsel %vm3641, %v3636, %v3638
    %v3649 = vsel %vm3641, %v3638, %v3640
    %v3658 = vsel %vm3442, %v3642, 0.0
    %v3659 = vsel %vm3443, %v3643, 0.0
    %v3660 = vsel %vm3444, %v3644, 0.0
    %v3661 = vsel %vm3445, %v3645, 0.0
    %v3662 = vsel %vm3446, %v3646, 0.0
    %v3663 = vsel %vm3447, %v3647, 0.0
    %v3664 = vsel %vm3448, %v3648, 0.0
    %v3665 = vsel %vm3449, %v3649, 0.0
    %3666 = vrot.lane.b32.xlu0 %v3372, 32
    %v3667 = vpop.permute.xlu0 %3666
    %3668 = vrot.lane.b32.xlu0 %v3373, 32
    %v3669 = vpop.permute.xlu0 %3668
    %3670 = vrot.lane.b32.xlu0 %v3374, 32
    %v3671 = vpop.permute.xlu0 %3670
    %3672 = vrot.lane.b32.xlu0 %v3375, 32
    %v3673 = vpop.permute.xlu0 %3672
    %3674 = vrot.lane.b32.xlu0 %v3376, 32
    %v3675 = vpop.permute.xlu0 %3674
    %3676 = vrot.lane.b32.xlu0 %v3377, 32
    %v3677 = vpop.permute.xlu0 %3676
    %3678 = vrot.lane.b32.xlu0 %v3378, 32
    %v3679 = vpop.permute.xlu0 %3678
    %3680 = vrot.lane.b32.xlu0 %v3379, 32
    %v3681 = vpop.permute.xlu0 %3680
    %3682 = vrot.lane.b32.xlu0 %v3380, 32
    %v3683 = vpop.permute.xlu0 %3682
    %vm3684 = vcmask 261120
    %v3685 = vsel %vm3684, %v3667, %v3669
    %v3686 = vsel %vm3684, %v3669, %v3671
    %v3687 = vsel %vm3684, %v3671, %v3673
    %v3688 = vsel %vm3684, %v3673, %v3675
    %v3689 = vsel %vm3684, %v3675, %v3677
    %v3690 = vsel %vm3684, %v3677, %v3679
    %v3691 = vsel %vm3684, %v3679, %v3681
    %v3692 = vsel %vm3684, %v3681, %v3683
    %3701 = vrot.lane.b32.xlu0 %v3373, 96
    %v3702 = vpop.permute.xlu0 %3701
    %3703 = vrot.lane.b32.xlu0 %v3374, 96
    %v3704 = vpop.permute.xlu0 %3703
    %3705 = vrot.lane.b32.xlu0 %v3375, 96
    %v3706 = vpop.permute.xlu0 %3705
    %3707 = vrot.lane.b32.xlu0 %v3376, 96
    %v3708 = vpop.permute.xlu0 %3707
    %3709 = vrot.lane.b32.xlu0 %v3377, 96
    %v3710 = vpop.permute.xlu0 %3709
    %3711 = vrot.lane.b32.xlu0 %v3378, 96
    %v3712 = vpop.permute.xlu0 %3711
    %3713 = vrot.lane.b32.xlu0 %v3379, 96
    %v3714 = vpop.permute.xlu0 %3713
    %3715 = vrot.lane.b32.xlu0 %v3380, 96
    %v3716 = vpop.permute.xlu0 %3715
    %3717 = vrot.lane.b32.xlu0 %v3381, 96
    %v3718 = vpop.permute.xlu0 %3717
    %v3719 = vsel %vm142, %v3702, %v3704
    %v3720 = vsel %vm142, %v3704, %v3706
    %v3721 = vsel %vm142, %v3706, %v3708
    %v3722 = vsel %vm142, %v3708, %v3710
    %v3723 = vsel %vm142, %v3710, %v3712
    %v3724 = vsel %vm142, %v3712, %v3714
    %v3725 = vsel %vm142, %v3714, %v3716
    %v3726 = vsel %vm142, %v3716, %v3718
    %vm3735 = vcmp.ge.s32.totalorder %v177, 6
    %vm3736 = vcmp.ge.s32.totalorder %v178, 6
    %vm3737 = vcmp.ge.s32.totalorder %v179, 6
    %vm3738 = vcmp.ge.s32.totalorder %v180, 6
    %vm3739 = vcmp.ge.s32.totalorder %v181, 6
    %vm3740 = vcmp.ge.s32.totalorder %v182, 6
    %vm3741 = vcmp.ge.s32.totalorder %v183, 6
    %vm3742 = vcmp.ge.s32.totalorder %v184, 6
    %3743 = vrot.lane.b32.xlu0 %v3372, 102
    %v3744 = vpop.permute.xlu0 %3743
    %3745 = vrot.lane.b32.xlu0 %v3373, 102
    %v3746 = vpop.permute.xlu0 %3745
    %3747 = vrot.lane.b32.xlu0 %v3374, 102
    %v3748 = vpop.permute.xlu0 %3747
    %3749 = vrot.lane.b32.xlu0 %v3375, 102
    %v3750 = vpop.permute.xlu0 %3749
    %3751 = vrot.lane.b32.xlu0 %v3376, 102
    %v3752 = vpop.permute.xlu0 %3751
    %3753 = vrot.lane.b32.xlu0 %v3377, 102
    %v3754 = vpop.permute.xlu0 %3753
    %3755 = vrot.lane.b32.xlu0 %v3378, 102
    %v3756 = vpop.permute.xlu0 %3755
    %3757 = vrot.lane.b32.xlu0 %v3379, 102
    %v3758 = vpop.permute.xlu0 %3757
    %3759 = vrot.lane.b32.xlu0 %v3380, 102
    %v3760 = vpop.permute.xlu0 %3759
    %vm3761 = vcmask 834560
    %v3762 = vsel %vm3761, %v3744, %v3746
    %v3763 = vsel %vm3761, %v3746, %v3748
    %v3764 = vsel %vm3761, %v3748, %v3750
    %v3765 = vsel %vm3761, %v3750, %v3752
    %v3766 = vsel %vm3761, %v3752, %v3754
    %v3767 = vsel %vm3761, %v3754, %v3756
    %v3768 = vsel %vm3761, %v3756, %v3758
    %v3769 = vsel %vm3761, %v3758, %v3760
    %v3778 = vsel %vm3735, %v3762, 0.0
    %v3779 = vsel %vm3736, %v3763, 0.0
    %v3780 = vsel %vm3737, %v3764, 0.0
    %v3781 = vsel %vm3738, %v3765, 0.0
    %v3782 = vsel %vm3739, %v3766, 0.0
    %v3783 = vsel %vm3740, %v3767, 0.0
    %v3784 = vsel %vm3741, %v3768, 0.0
    %v3785 = vsel %vm3742, %v3769, 0.0
    %vm3786 = vcmp.lt.s32.totalorder %v177, 10
    %vm3787 = vcmp.lt.s32.totalorder %v178, 10
    %vm3788 = vcmp.lt.s32.totalorder %v179, 10
    %vm3789 = vcmp.lt.s32.totalorder %v180, 10
    %vm3790 = vcmp.lt.s32.totalorder %v181, 10
    %vm3791 = vcmp.lt.s32.totalorder %v182, 10
    %vm3792 = vcmp.lt.s32.totalorder %v183, 10
    %vm3793 = vcmp.lt.s32.totalorder %v184, 10
    %3794 = vrot.lane.b32.xlu0 %v3372, 90
    %v3795 = vpop.permute.xlu0 %3794
    %3796 = vrot.lane.b32.xlu0 %v3373, 90
    %v3797 = vpop.permute.xlu0 %3796
    %3798 = vrot.lane.b32.xlu0 %v3374, 90
    %v3799 = vpop.permute.xlu0 %3798
    %3800 = vrot.lane.b32.xlu0 %v3375, 90
    %v3801 = vpop.permute.xlu0 %3800
    %3802 = vrot.lane.b32.xlu0 %v3376, 90
    %v3803 = vpop.permute.xlu0 %3802
    %3804 = vrot.lane.b32.xlu0 %v3377, 90
    %v3805 = vpop.permute.xlu0 %3804
    %3806 = vrot.lane.b32.xlu0 %v3378, 90
    %v3807 = vpop.permute.xlu0 %3806
    %3808 = vrot.lane.b32.xlu0 %v3379, 90
    %v3809 = vpop.permute.xlu0 %3808
    %3810 = vrot.lane.b32.xlu0 %v3380, 90
    %v3811 = vpop.permute.xlu0 %3810
    %vm3812 = vcmask 736256
    %v3813 = vsel %vm3812, %v3795, %v3797
    %v3814 = vsel %vm3812, %v3797, %v3799
    %v3815 = vsel %vm3812, %v3799, %v3801
    %v3816 = vsel %vm3812, %v3801, %v3803
    %v3817 = vsel %vm3812, %v3803, %v3805
    %v3818 = vsel %vm3812, %v3805, %v3807
    %v3819 = vsel %vm3812, %v3807, %v3809
    %v3820 = vsel %vm3812, %v3809, %v3811
    %v3829 = vsel %vm3786, %v3813, 0.0
    %v3830 = vsel %vm3787, %v3814, 0.0
    %v3831 = vsel %vm3788, %v3815, 0.0
    %v3832 = vsel %vm3789, %v3816, 0.0
    %v3833 = vsel %vm3790, %v3817, 0.0
    %v3834 = vsel %vm3791, %v3818, 0.0
    %v3835 = vsel %vm3792, %v3819, 0.0
    %v3836 = vsel %vm3793, %v3820, 0.0
    %3837 = vrot.lane.b32.xlu0 %v3372, 6
    %v3838 = vpop.permute.xlu0 %3837
    %3839 = vrot.lane.b32.xlu0 %v3373, 6
    %v3840 = vpop.permute.xlu0 %3839
    %3841 = vrot.lane.b32.xlu0 %v3374, 6
    %v3842 = vpop.permute.xlu0 %3841
    %3843 = vrot.lane.b32.xlu0 %v3375, 6
    %v3844 = vpop.permute.xlu0 %3843
    %3845 = vrot.lane.b32.xlu0 %v3376, 6
    %v3846 = vpop.permute.xlu0 %3845
    %3847 = vrot.lane.b32.xlu0 %v3377, 6
    %v3848 = vpop.permute.xlu0 %3847
    %3849 = vrot.lane.b32.xlu0 %v3378, 6
    %v3850 = vpop.permute.xlu0 %3849
    %3851 = vrot.lane.b32.xlu0 %v3379, 6
    %v3852 = vpop.permute.xlu0 %3851
    %3853 = vrot.lane.b32.xlu0 %v3380, 6
    %v3854 = vpop.permute.xlu0 %3853
    %vm3855 = vcmask 48128
    %v3856 = vsel %vm3855, %v3838, %v3840
    %v3857 = vsel %vm3855, %v3840, %v3842
    %v3858 = vsel %vm3855, %v3842, %v3844
    %v3859 = vsel %vm3855, %v3844, %v3846
    %v3860 = vsel %vm3855, %v3846, %v3848
    %v3861 = vsel %vm3855, %v3848, %v3850
    %v3862 = vsel %vm3855, %v3850, %v3852
    %v3863 = vsel %vm3855, %v3852, %v3854
    %v3872 = vsel %vm3735, %v3856, 0.0
    %v3873 = vsel %vm3736, %v3857, 0.0
    %v3874 = vsel %vm3737, %v3858, 0.0
    %v3875 = vsel %vm3738, %v3859, 0.0
    %v3876 = vsel %vm3739, %v3860, 0.0
    %v3877 = vsel %vm3740, %v3861, 0.0
    %v3878 = vsel %vm3741, %v3862, 0.0
    %v3879 = vsel %vm3742, %v3863, 0.0
    %3880 = vrot.lane.b32.xlu0 %v3373, 122
    %v3881 = vpop.permute.xlu0 %3880
    %3882 = vrot.lane.b32.xlu0 %v3374, 122
    %v3883 = vpop.permute.xlu0 %3882
    %3884 = vrot.lane.b32.xlu0 %v3375, 122
    %v3885 = vpop.permute.xlu0 %3884
    %3886 = vrot.lane.b32.xlu0 %v3376, 122
    %v3887 = vpop.permute.xlu0 %3886
    %3888 = vrot.lane.b32.xlu0 %v3377, 122
    %v3889 = vpop.permute.xlu0 %3888
    %3890 = vrot.lane.b32.xlu0 %v3378, 122
    %v3891 = vpop.permute.xlu0 %3890
    %3892 = vrot.lane.b32.xlu0 %v3379, 122
    %v3893 = vpop.permute.xlu0 %3892
    %3894 = vrot.lane.b32.xlu0 %v3380, 122
    %v3895 = vpop.permute.xlu0 %3894
    %3896 = vrot.lane.b32.xlu0 %v3381, 122
    %v3897 = vpop.permute.xlu0 %3896
    %vm3898 = vcmask 998400
    %v3899 = vsel %vm3898, %v3881, %v3883
    %v3900 = vsel %vm3898, %v3883, %v3885
    %v3901 = vsel %vm3898, %v3885, %v3887
    %v3902 = vsel %vm3898, %v3887, %v3889
    %v3903 = vsel %vm3898, %v3889, %v3891
    %v3904 = vsel %vm3898, %v3891, %v3893
    %v3905 = vsel %vm3898, %v3893, %v3895
    %v3906 = vsel %vm3898, %v3895, %v3897
    %v3915 = vsel %vm3786, %v3899, 0.0
    %v3916 = vsel %vm3787, %v3900, 0.0
    %v3917 = vsel %vm3788, %v3901, 0.0
    %v3918 = vsel %vm3789, %v3902, 0.0
    %v3919 = vsel %vm3790, %v3903, 0.0
    %v3920 = vsel %vm3791, %v3904, 0.0
    %v3921 = vsel %vm3792, %v3905, 0.0
    %v3922 = vsel %vm3793, %v3906, 0.0
    %3923 = vrot.lane.b32.xlu0 %v3373, 38
    %v3924 = vpop.permute.xlu0 %3923
    %3925 = vrot.lane.b32.xlu0 %v3374, 38
    %v3926 = vpop.permute.xlu0 %3925
    %3927 = vrot.lane.b32.xlu0 %v3375, 38
    %v3928 = vpop.permute.xlu0 %3927
    %3929 = vrot.lane.b32.xlu0 %v3376, 38
    %v3930 = vpop.permute.xlu0 %3929
    %3931 = vrot.lane.b32.xlu0 %v3377, 38
    %v3932 = vpop.permute.xlu0 %3931
    %3933 = vrot.lane.b32.xlu0 %v3378, 38
    %v3934 = vpop.permute.xlu0 %3933
    %3935 = vrot.lane.b32.xlu0 %v3379, 38
    %v3936 = vpop.permute.xlu0 %3935
    %3937 = vrot.lane.b32.xlu0 %v3380, 38
    %v3938 = vpop.permute.xlu0 %3937
    %3939 = vrot.lane.b32.xlu0 %v3381, 38
    %v3940 = vpop.permute.xlu0 %3939
    %vm3941 = vcmask 310272
    %v3942 = vsel %vm3941, %v3924, %v3926
    %v3943 = vsel %vm3941, %v3926, %v3928
    %v3944 = vsel %vm3941, %v3928, %v3930
    %v3945 = vsel %vm3941, %v3930, %v3932
    %v3946 = vsel %vm3941, %v3932, %v3934
    %v3947 = vsel %vm3941, %v3934, %v3936
    %v3948 = vsel %vm3941, %v3936, %v3938
    %v3949 = vsel %vm3941, %v3938, %v3940
    %v3958 = vsel %vm3735, %v3942, 0.0
    %v3959 = vsel %vm3736, %v3943, 0.0
    %v3960 = vsel %vm3737, %v3944, 0.0
    %v3961 = vsel %vm3738, %v3945, 0.0
    %v3962 = vsel %vm3739, %v3946, 0.0
    %v3963 = vsel %vm3740, %v3947, 0.0
    %v3964 = vsel %vm3741, %v3948, 0.0
    %v3965 = vsel %vm3742, %v3949, 0.0
    %3966 = vrot.lane.b32.xlu0 %v3373, 26
    %v3967 = vpop.permute.xlu0 %3966
    %3968 = vrot.lane.b32.xlu0 %v3374, 26
    %v3969 = vpop.permute.xlu0 %3968
    %3970 = vrot.lane.b32.xlu0 %v3375, 26
    %v3971 = vpop.permute.xlu0 %3970
    %3972 = vrot.lane.b32.xlu0 %v3376, 26
    %v3973 = vpop.permute.xlu0 %3972
    %3974 = vrot.lane.b32.xlu0 %v3377, 26
    %v3975 = vpop.permute.xlu0 %3974
    %3976 = vrot.lane.b32.xlu0 %v3378, 26
    %v3977 = vpop.permute.xlu0 %3976
    %3978 = vrot.lane.b32.xlu0 %v3379, 26
    %v3979 = vpop.permute.xlu0 %3978
    %3980 = vrot.lane.b32.xlu0 %v3380, 26
    %v3981 = vpop.permute.xlu0 %3980
    %3982 = vrot.lane.b32.xlu0 %v3381, 26
    %v3983 = vpop.permute.xlu0 %3982
    %vm3984 = vcmask 211968
    %v3985 = vsel %vm3984, %v3967, %v3969
    %v3986 = vsel %vm3984, %v3969, %v3971
    %v3987 = vsel %vm3984, %v3971, %v3973
    %v3988 = vsel %vm3984, %v3973, %v3975
    %v3989 = vsel %vm3984, %v3975, %v3977
    %v3990 = vsel %vm3984, %v3977, %v3979
    %v3991 = vsel %vm3984, %v3979, %v3981
    %v3992 = vsel %vm3984, %v3981, %v3983
    %v4001 = vsel %vm3786, %v3985, 0.0
    %v4002 = vsel %vm3787, %v3986, 0.0
    %v4003 = vsel %vm3788, %v3987, 0.0
    %v4004 = vsel %vm3789, %v3988, 0.0
    %v4005 = vsel %vm3790, %v3989, 0.0
    %v4006 = vsel %vm3791, %v3990, 0.0
    %v4007 = vsel %vm3792, %v3991, 0.0
    %v4008 = vsel %vm3793, %v3992, 0.0
    %4009 = vrot.lane.b32.xlu0 %v3372, 96
    %v4010 = vpop.permute.xlu0 %4009
    %v4011 = vsel %vm142, %v4010, %v3702
    %4013 = vrot.lane.b32.xlu0 %v3381, 32
    %v4014 = vpop.permute.xlu0 %4013
    %v4015 = vsel %vm3684, %v3683, %v4014
    %v4017 = vld [vmem:[%s5] sm:$0xff]
    %v4018 = vld [vmem:[%s5 + $0x8] sm:$0xff]
    %v4019 = vld [vmem:[%s6] sm:$0xff]
    %4021 = vset.pattern.permute.xlu0 0
    %4022 = vperm.xlu0 %4021, %v4019
    %v4023 = vpop.permute.xlu0 %4022
    %v4026 = vsel %vm487, %v4018, 0
    %v4028 = vand.u32 %v3959, 4294901760
    %4029 = vmatprep.subr.mxu0 %v4028
    %v4030 = vand.u32 %v3958, 4294901760
    %4031 = vmatpush1.msra.mxu0 %v4030
    %v4032 = vand.u32 %v3916, 4294901760
    %4033 = vmatprep.subr.mxu0 %v4032
    %v4034 = vand.u32 %v3915, 4294901760
    %4035 = vmatpush1.msra.mxu0 %v4034
    %v4036 = vand.u32 %v3374, 4294901760
    %4037 = vmatprep.subr.mxu0 %v4036
    %v4038 = vand.u32 %v3373, 4294901760
    %4039 = vmatpush1.msra.mxu0 %v4038
    %v4040 = vand.u32 %v3873, 4294901760
    %4041 = vmatprep.subr.mxu0 %v4040
    %v4042 = vand.u32 %v3872, 4294901760
    %4043 = vmatpush1.msra.mxu0 %v4042
    %v4044 = vand.u32 %v3830, 4294901760
    %4045 = vmatprep.subr.mxu0 %v4044
    %v4046 = vand.u32 %v3829, 4294901760
    %4047 = vmatpush1.msra.mxu0 %v4046
    %v4048 = vand.u32 %v3719, 4294901760
    %4049 = vmatprep.subr.mxu0 %v4048
    %v4050 = vand.u32 %v4011, 4294901760
    %4051 = vmatpush1.msra.mxu0 %v4050
    %v4052 = vand.u32 %v3779, 4294901760
    %4053 = vmatprep.subr.mxu0 %v4052
    %v4054 = vand.u32 %v3778, 4294901760
    %4055 = vmatpush1.msra.mxu0 %v4054
    %v4056 = vand.u32 %v3659, 4294901760
    %4057 = vmatprep.subr.mxu0 %v4056
    %v4058 = vand.u32 %v3658, 4294901760
    %4059 = vmatpush1.msra.mxu0 %v4058
    %v4060 = vand.u32 %v3720, 4294901760
    %4061 = vmatprep.subr.mxu0 %v4060
    %v4062 = vand.u32 %v3719, 4294901760
    %4063 = vmatpush1.msra.mxu0 %v4062
    %v4064 = vand.u32 %v3616, 4294901760
    %4065 = vmatprep.subr.mxu0 %v4064
    %v4066 = vand.u32 %v3615, 4294901760
    %4067 = vmatpush1.msra.mxu0 %v4066
    %v4068 = vand.u32 %v3573, 4294901760
    %4069 = vmatprep.subr.mxu0 %v4068
    %v4070 = vand.u32 %v3572, 4294901760
    %4071 = vmatpush1.msra.mxu0 %v4070
    %v4072 = vand.u32 %v3374, 4294901760
    %4073 = vmatprep.subr.mxu0 %v4072
    %v4074 = vand.u32 %v3373, 4294901760
    %4075 = vmatpush1.msra.mxu0 %v4074
    %v4076 = vand.u32 %v3529, 4294901760
    %4077 = vmatprep.subr.mxu0 %v4076
    %v4078 = vand.u32 %v3528, 4294901760
    %4079 = vmatpush1.msra.mxu0 %v4078
    %v4080 = vand.u32 %v3486, 4294901760
    %4081 = vmatprep.subr.mxu0 %v4080
    %v4082 = vand.u32 %v3485, 4294901760
    %4083 = vmatpush1.msra.mxu0 %v4082
    %v4084 = vand.u32 %v3686, 4294901760
    %4085 = vmatprep.subr.mxu0 %v4084
    %v4086 = vand.u32 %v3685, 4294901760
    %4087 = vmatpush1.msra.mxu0 %v4086
    %v4088 = vand.u32 %v3435, 4294901760
    %4089 = vmatprep.subr.mxu0 %v4088
    %v4090 = vand.u32 %v3434, 4294901760
    %4091 = vmatpush1.msra.mxu0 %v4090
    %4092 = vmatprep.subr.mxu0 0.0
    %4093 = vmatpush2.msra.mxu0 0.0
    %4094 = vmatprep.subr.mxu0 0.0
    %4095 = vmatpush2.msra.mxu0 0.0
    %4096 = vmatprep.subr.mxu0 0.0
    %4097 = vmatpush2.msra.mxu0 0.0
    %4098 = vmatprep.subr.mxu0 0.0
    %4099 = vmatpush2.msra.mxu0 0.0
    %4100 = vmatprep.subr.mxu0 0.0
    %4101 = vmatpush2.msra.mxu0 0.0
    %4102 = vmatprep.subr.mxu0 0.0
    %4103 = vmatpush2.msra.mxu0 0.0
    %4104 = vmatprep.subr.mxu0 0.0
    %4105 = vmatpush2.msra.mxu0 0.0
    %4106 = vmatprep.subr.mxu0 0.0
    %4107 = vmatpush2.msra.mxu0 0.0
    %4108 = vmatprep.subr.mxu0 0.0
    %4109 = vmatpush2.msra.mxu0 0.0
    %4110 = vmatprep.subr.mxu0 0.0
    %4111 = vmatpush2.msra.mxu0 0.0
    %4112 = vmatprep.subr.mxu0 0.0
    %4113 = vmatpush2.msra.mxu0 0.0
    %4114 = vmatprep.subr.mxu0 0.0
    %4115 = vmatpush2.msra.mxu0 0.0
    %4116 = vmatprep.subr.mxu0 0.0
    %4117 = vmatpush2.msra.mxu0 0.0
    %4118 = vmatprep.subr.mxu0 0.0
    %4119 = vmatpush2.msra.mxu0 0.0
    %v4120 = vand.u32 %v4002, 4294901760
    %4121 = vmatprep.subr.mxu0 %v4120
    %v4122 = vand.u32 %v4001, 4294901760
    %4123 = vmatpush2.msra.mxu0 %v4122
    %v4124 = vand.u32 %v3687, 4294901760
    %4125 = vmatprep.subr.mxu0 %v4124
    %v4126 = vand.u32 %v3686, 4294901760
    %4127 = vmatpush2.msra.mxu0 %v4126
    %v4128 = vand.u32 %v4026, 4294901760
    %v4129 = vsub.f32 %v4026, %v4128
    %v4130 = vand.u32 %v4129, 4294901760
    %v4131 = vsub.f32 %v4129, %v4130
    %v4132 = vand.u32 %v4131, 4294901760
    %4133 = vmatprep.mubr.f32.mxu0 %v4132
    %v4134 = vand.u32 %v4017, 4294901760
    %v4135 = vsub.f32 %v4017, %v4134
    %v4136 = vand.u32 %v4135, 4294901760
    %v4137 = vsub.f32 %v4135, %v4136
    %v4138 = vand.u32 %v4137, 4294901760
    %4139 = vmatmul.mubr.f32.gmra.mxu0 %v4138
    %v4140 = vpop.f32.mrf.mxu0
    %v4141 = vadd.f32 %v4023, %v4140
    %v4142 = vpop.f32.mrf.mxu0
    %v4143 = vadd.f32 %v4023, %v4142
    %4144 = vdwg.mxu0
    %v4145 = vand.u32 %v3959, 4294901760
    %v4146 = vsub.f32 %v3959, %v4145
    %v4147 = vand.u32 %v4146, 4294901760
    %v4148 = vsub.f32 %v4146, %v4147
    %v4149 = vand.u32 %v4148, 4294901760
    %4150 = vmatprep.subr.mxu0 %v4149
    %v4151 = vand.u32 %v3958, 4294901760
    %v4152 = vsub.f32 %v3958, %v4151
    %v4153 = vand.u32 %v4152, 4294901760
    %v4154 = vsub.f32 %v4152, %v4153
    %v4155 = vand.u32 %v4154, 4294901760
    %4156 = vmatpush1.msra.mxu0 %v4155
    %v4157 = vand.u32 %v3916, 4294901760
    %v4158 = vsub.f32 %v3916, %v4157
    %v4159 = vand.u32 %v4158, 4294901760
    %v4160 = vsub.f32 %v4158, %v4159
    %v4161 = vand.u32 %v4160, 4294901760
    %4162 = vmatprep.subr.mxu0 %v4161
    %v4163 = vand.u32 %v3915, 4294901760
    %v4164 = vsub.f32 %v3915, %v4163
    %v4165 = vand.u32 %v4164, 4294901760
    %v4166 = vsub.f32 %v4164, %v4165
    %v4167 = vand.u32 %v4166, 4294901760
    %4168 = vmatpush1.msra.mxu0 %v4167
    %v4169 = vand.u32 %v3374, 4294901760
    %v4170 = vsub.f32 %v3374, %v4169
    %v4171 = vand.u32 %v4170, 4294901760
    %v4172 = vsub.f32 %v4170, %v4171
    %v4173 = vand.u32 %v4172, 4294901760
    %4174 = vmatprep.subr.mxu0 %v4173
    %v4175 = vand.u32 %v3373, 4294901760
    %v4176 = vsub.f32 %v3373, %v4175
    %v4177 = vand.u32 %v4176, 4294901760
    %v4178 = vsub.f32 %v4176, %v4177
    %v4179 = vand.u32 %v4178, 4294901760
    %4180 = vmatpush1.msra.mxu0 %v4179
    %v4181 = vand.u32 %v3873, 4294901760
    %v4182 = vsub.f32 %v3873, %v4181
    %v4183 = vand.u32 %v4182, 4294901760
    %v4184 = vsub.f32 %v4182, %v4183
    %v4185 = vand.u32 %v4184, 4294901760
    %4186 = vmatprep.subr.mxu0 %v4185
    %v4187 = vand.u32 %v3872, 4294901760
    %v4188 = vsub.f32 %v3872, %v4187
    %v4189 = vand.u32 %v4188, 4294901760
    %v4190 = vsub.f32 %v4188, %v4189
    %v4191 = vand.u32 %v4190, 4294901760
    %4192 = vmatpush1.msra.mxu0 %v4191
    %v4193 = vand.u32 %v3830, 4294901760
    %v4194 = vsub.f32 %v3830, %v4193
    %v4195 = vand.u32 %v4194, 4294901760
    %v4196 = vsub.f32 %v4194, %v4195
    %v4197 = vand.u32 %v4196, 4294901760
    %4198 = vmatprep.subr.mxu0 %v4197
    %v4199 = vand.u32 %v3829, 4294901760
    %v4200 = vsub.f32 %v3829, %v4199
    %v4201 = vand.u32 %v4200, 4294901760
    %v4202 = vsub.f32 %v4200, %v4201
    %v4203 = vand.u32 %v4202, 4294901760
    %4204 = vmatpush1.msra.mxu0 %v4203
    %v4205 = vand.u32 %v3719, 4294901760
    %v4206 = vsub.f32 %v3719, %v4205
    %v4207 = vand.u32 %v4206, 4294901760
    %v4208 = vsub.f32 %v4206, %v4207
    %v4209 = vand.u32 %v4208, 4294901760
    %4210 = vmatprep.subr.mxu0 %v4209
    %v4211 = vand.u32 %v4011, 4294901760
    %v4212 = vsub.f32 %v4011, %v4211
    %v4213 = vand.u32 %v4212, 4294901760
    %v4214 = vsub.f32 %v4212, %v4213
    %v4215 = vand.u32 %v4214, 4294901760
    %4216 = vmatpush1.msra.mxu0 %v4215
    %v4217 = vand.u32 %v3779, 4294901760
    %v4218 = vsub.f32 %v3779, %v4217
    %v4219 = vand.u32 %v4218, 4294901760
    %v4220 = vsub.f32 %v4218, %v4219
    %v4221 = vand.u32 %v4220, 4294901760
    %4222 = vmatprep.subr.mxu0 %v4221
    %v4223 = vand.u32 %v3778, 4294901760
    %v4224 = vsub.f32 %v3778, %v4223
    %v4225 = vand.u32 %v4224, 4294901760
    %v4226 = vsub.f32 %v4224, %v4225
    %v4227 = vand.u32 %v4226, 4294901760
    %4228 = vmatpush1.msra.mxu0 %v4227
    %v4229 = vand.u32 %v3659, 4294901760
    %v4230 = vsub.f32 %v3659, %v4229
    %v4231 = vand.u32 %v4230, 4294901760
    %v4232 = vsub.f32 %v4230, %v4231
    %v4233 = vand.u32 %v4232, 4294901760
    %4234 = vmatprep.subr.mxu0 %v4233
    %v4235 = vand.u32 %v3658, 4294901760
    %v4236 = vsub.f32 %v3658, %v4235
    %v4237 = vand.u32 %v4236, 4294901760
    %v4238 = vsub.f32 %v4236, %v4237
    %v4239 = vand.u32 %v4238, 4294901760
    %4240 = vmatpush1.msra.mxu0 %v4239
    %v4241 = vand.u32 %v3720, 4294901760
    %v4242 = vsub.f32 %v3720, %v4241
    %v4243 = vand.u32 %v4242, 4294901760
    %v4244 = vsub.f32 %v4242, %v4243
    %v4245 = vand.u32 %v4244, 4294901760
    %4246 = vmatprep.subr.mxu0 %v4245
    %v4247 = vand.u32 %v3719, 4294901760
    %v4248 = vsub.f32 %v3719, %v4247
    %v4249 = vand.u32 %v4248, 4294901760
    %v4250 = vsub.f32 %v4248, %v4249
    %v4251 = vand.u32 %v4250, 4294901760
    %4252 = vmatpush1.msra.mxu0 %v4251
    %v4253 = vand.u32 %v3616, 4294901760
    %v4254 = vsub.f32 %v3616, %v4253
    %v4255 = vand.u32 %v4254, 4294901760
    %v4256 = vsub.f32 %v4254, %v4255
    %v4257 = vand.u32 %v4256, 4294901760
    %4258 = vmatprep.subr.mxu0 %v4257
    %v4259 = vand.u32 %v3615, 4294901760
    %v4260 = vsub.f32 %v3615, %v4259
    %v4261 = vand.u32 %v4260, 4294901760
    %v4262 = vsub.f32 %v4260, %v4261
    %v4263 = vand.u32 %v4262, 4294901760
    %4264 = vmatpush1.msra.mxu0 %v4263
    %v4265 = vand.u32 %v3573, 4294901760
    %v4266 = vsub.f32 %v3573, %v4265
    %v4267 = vand.u32 %v4266, 4294901760
    %v4268 = vsub.f32 %v4266, %v4267
    %v4269 = vand.u32 %v4268, 4294901760
    %4270 = vmatprep.subr.mxu0 %v4269
    %v4271 = vand.u32 %v3572, 4294901760
    %v4272 = vsub.f32 %v3572, %v4271
    %v4273 = vand.u32 %v4272, 4294901760
    %v4274 = vsub.f32 %v4272, %v4273
    %v4275 = vand.u32 %v4274, 4294901760
    %4276 = vmatpush1.msra.mxu0 %v4275
    %v4277 = vand.u32 %v3374, 4294901760
    %v4278 = vsub.f32 %v3374, %v4277
    %v4279 = vand.u32 %v4278, 4294901760
    %v4280 = vsub.f32 %v4278, %v4279
    %v4281 = vand.u32 %v4280, 4294901760
    %4282 = vmatprep.subr.mxu0 %v4281
    %v4283 = vand.u32 %v3373, 4294901760
    %v4284 = vsub.f32 %v3373, %v4283
    %v4285 = vand.u32 %v4284, 4294901760
    %v4286 = vsub.f32 %v4284, %v4285
    %v4287 = vand.u32 %v4286, 4294901760
    %4288 = vmatpush1.msra.mxu0 %v4287
    %v4289 = vand.u32 %v3529, 4294901760
    %v4290 = vsub.f32 %v3529, %v4289
    %v4291 = vand.u32 %v4290, 4294901760
    %v4292 = vsub.f32 %v4290, %v4291
    %v4293 = vand.u32 %v4292, 4294901760
    %4294 = vmatprep.subr.mxu0 %v4293
    %v4295 = vand.u32 %v3528, 4294901760
    %v4296 = vsub.f32 %v3528, %v4295
    %v4297 = vand.u32 %v4296, 4294901760
    %v4298 = vsub.f32 %v4296, %v4297
    %v4299 = vand.u32 %v4298, 4294901760
    %4300 = vmatpush1.msra.mxu0 %v4299
    %v4301 = vand.u32 %v3486, 4294901760
    %v4302 = vsub.f32 %v3486, %v4301
    %v4303 = vand.u32 %v4302, 4294901760
    %v4304 = vsub.f32 %v4302, %v4303
    %v4305 = vand.u32 %v4304, 4294901760
    %4306 = vmatprep.subr.mxu0 %v4305
    %v4307 = vand.u32 %v3485, 4294901760
    %v4308 = vsub.f32 %v3485, %v4307
    %v4309 = vand.u32 %v4308, 4294901760
    %v4310 = vsub.f32 %v4308, %v4309
    %v4311 = vand.u32 %v4310, 4294901760
    %4312 = vmatpush1.msra.mxu0 %v4311
    %v4313 = vand.u32 %v3686, 4294901760
    %v4314 = vsub.f32 %v3686, %v4313
    %v4315 = vand.u32 %v4314, 4294901760
    %v4316 = vsub.f32 %v4314, %v4315
    %v4317 = vand.u32 %v4316, 4294901760
    %4318 = vmatprep.subr.mxu0 %v4317
    %v4319 = vand.u32 %v3685, 4294901760
    %v4320 = vsub.f32 %v3685, %v4319
    %v4321 = vand.u32 %v4320, 4294901760
    %v4322 = vsub.f32 %v4320, %v4321
    %v4323 = vand.u32 %v4322, 4294901760
    %4324 = vmatpush1.msra.mxu0 %v4323
    %v4325 = vand.u32 %v3435, 4294901760
    %v4326 = vsub.f32 %v3435, %v4325
    %v4327 = vand.u32 %v4326, 4294901760
    %v4328 = vsub.f32 %v4326, %v4327
    %v4329 = vand.u32 %v4328, 4294901760
    %4330 = vmatprep.subr.mxu0 %v4329
    %v4331 = vand.u32 %v3434, 4294901760
    %v4332 = vsub.f32 %v3434, %v4331
    %v4333 = vand.u32 %v4332, 4294901760
    %v4334 = vsub.f32 %v4332, %v4333
    %v4335 = vand.u32 %v4334, 4294901760
    %4336 = vmatpush1.msra.mxu0 %v4335
    %4337 = vmatprep.subr.mxu0 0.0
    %4338 = vmatpush2.msra.mxu0 0.0
    %4339 = vmatprep.subr.mxu0 0.0
    %4340 = vmatpush2.msra.mxu0 0.0
    %4341 = vmatprep.subr.mxu0 0.0
    %4342 = vmatpush2.msra.mxu0 0.0
    %4343 = vmatprep.subr.mxu0 0.0
    %4344 = vmatpush2.msra.mxu0 0.0
    %4345 = vmatprep.subr.mxu0 0.0
    %4346 = vmatpush2.msra.mxu0 0.0
    %4347 = vmatprep.subr.mxu0 0.0
    %4348 = vmatpush2.msra.mxu0 0.0
    %4349 = vmatprep.subr.mxu0 0.0
    %4350 = vmatpush2.msra.mxu0 0.0
    %4351 = vmatprep.subr.mxu0 0.0
    %4352 = vmatpush2.msra.mxu0 0.0
    %4353 = vmatprep.subr.mxu0 0.0
    %4354 = vmatpush2.msra.mxu0 0.0
    %4355 = vmatprep.subr.mxu0 0.0
    %4356 = vmatpush2.msra.mxu0 0.0
    %4357 = vmatprep.subr.mxu0 0.0
    %4358 = vmatpush2.msra.mxu0 0.0
    %4359 = vmatprep.subr.mxu0 0.0
    %4360 = vmatpush2.msra.mxu0 0.0
    %4361 = vmatprep.subr.mxu0 0.0
    %4362 = vmatpush2.msra.mxu0 0.0
    %4363 = vmatprep.subr.mxu0 0.0
    %4364 = vmatpush2.msra.mxu0 0.0
    %v4365 = vand.u32 %v4002, 4294901760
    %v4366 = vsub.f32 %v4002, %v4365
    %v4367 = vand.u32 %v4366, 4294901760
    %v4368 = vsub.f32 %v4366, %v4367
    %v4369 = vand.u32 %v4368, 4294901760
    %4370 = vmatprep.subr.mxu0 %v4369
    %v4371 = vand.u32 %v4001, 4294901760
    %v4372 = vsub.f32 %v4001, %v4371
    %v4373 = vand.u32 %v4372, 4294901760
    %v4374 = vsub.f32 %v4372, %v4373
    %v4375 = vand.u32 %v4374, 4294901760
    %4376 = vmatpush2.msra.mxu0 %v4375
    %v4377 = vand.u32 %v3687, 4294901760
    %v4378 = vsub.f32 %v3687, %v4377
    %v4379 = vand.u32 %v4378, 4294901760
    %v4380 = vsub.f32 %v4378, %v4379
    %v4381 = vand.u32 %v4380, 4294901760
    %4382 = vmatprep.subr.mxu0 %v4381
    %v4383 = vand.u32 %v3686, 4294901760
    %v4384 = vsub.f32 %v3686, %v4383
    %v4385 = vand.u32 %v4384, 4294901760
    %v4386 = vsub.f32 %v4384, %v4385
    %v4387 = vand.u32 %v4386, 4294901760
    %4388 = vmatpush2.msra.mxu0 %v4387
    %v4389 = vand.u32 %v4026, 4294901760
    %4390 = vmatprep.mubr.f32.mxu0 %v4389
    %v4391 = vand.u32 %v4017, 4294901760
    %4392 = vmatmul.mubr.f32.gmra.mxu0 %v4391
    %v4393 = vpop.f32.mrf.mxu0
    %v4394 = vadd.f32 %v4141, %v4393
    %v4395 = vpop.f32.mrf.mxu0
    %v4396 = vadd.f32 %v4143, %v4395
    %4397 = vdwg.mxu0
    %v4398 = vand.u32 %v3959, 4294901760
    %v4399 = vsub.f32 %v3959, %v4398
    %4400 = vmatprep.subr.mxu0 %v4399
    %v4401 = vand.u32 %v3958, 4294901760
    %v4402 = vsub.f32 %v3958, %v4401
    %4403 = vmatpush1.msra.mxu0 %v4402
    %v4404 = vand.u32 %v3916, 4294901760
    %v4405 = vsub.f32 %v3916, %v4404
    %4406 = vmatprep.subr.mxu0 %v4405
    %v4407 = vand.u32 %v3915, 4294901760
    %v4408 = vsub.f32 %v3915, %v4407
    %4409 = vmatpush1.msra.mxu0 %v4408
    %v4410 = vand.u32 %v3374, 4294901760
    %v4411 = vsub.f32 %v3374, %v4410
    %4412 = vmatprep.subr.mxu0 %v4411
    %v4413 = vand.u32 %v3373, 4294901760
    %v4414 = vsub.f32 %v3373, %v4413
    %4415 = vmatpush1.msra.mxu0 %v4414
    %v4416 = vand.u32 %v3873, 4294901760
    %v4417 = vsub.f32 %v3873, %v4416
    %4418 = vmatprep.subr.mxu0 %v4417
    %v4419 = vand.u32 %v3872, 4294901760
    %v4420 = vsub.f32 %v3872, %v4419
    %4421 = vmatpush1.msra.mxu0 %v4420
    %v4422 = vand.u32 %v3830, 4294901760
    %v4423 = vsub.f32 %v3830, %v4422
    %4424 = vmatprep.subr.mxu0 %v4423
    %v4425 = vand.u32 %v3829, 4294901760
    %v4426 = vsub.f32 %v3829, %v4425
    %4427 = vmatpush1.msra.mxu0 %v4426
    %v4428 = vand.u32 %v3719, 4294901760
    %v4429 = vsub.f32 %v3719, %v4428
    %4430 = vmatprep.subr.mxu0 %v4429
    %v4431 = vand.u32 %v4011, 4294901760
    %v4432 = vsub.f32 %v4011, %v4431
    %4433 = vmatpush1.msra.mxu0 %v4432
    %v4434 = vand.u32 %v3779, 4294901760
    %v4435 = vsub.f32 %v3779, %v4434
    %4436 = vmatprep.subr.mxu0 %v4435
    %v4437 = vand.u32 %v3778, 4294901760
    %v4438 = vsub.f32 %v3778, %v4437
    %4439 = vmatpush1.msra.mxu0 %v4438
    %v4440 = vand.u32 %v3659, 4294901760
    %v4441 = vsub.f32 %v3659, %v4440
    %4442 = vmatprep.subr.mxu0 %v4441
    %v4443 = vand.u32 %v3658, 4294901760
    %v4444 = vsub.f32 %v3658, %v4443
    %4445 = vmatpush1.msra.mxu0 %v4444
    %v4446 = vand.u32 %v3720, 4294901760
    %v4447 = vsub.f32 %v3720, %v4446
    %4448 = vmatprep.subr.mxu0 %v4447
    %v4449 = vand.u32 %v3719, 4294901760
    %v4450 = vsub.f32 %v3719, %v4449
    %4451 = vmatpush1.msra.mxu0 %v4450
    %v4452 = vand.u32 %v3616, 4294901760
    %v4453 = vsub.f32 %v3616, %v4452
    %4454 = vmatprep.subr.mxu0 %v4453
    %v4455 = vand.u32 %v3615, 4294901760
    %v4456 = vsub.f32 %v3615, %v4455
    %4457 = vmatpush1.msra.mxu0 %v4456
    %v4458 = vand.u32 %v3573, 4294901760
    %v4459 = vsub.f32 %v3573, %v4458
    %4460 = vmatprep.subr.mxu0 %v4459
    %v4461 = vand.u32 %v3572, 4294901760
    %v4462 = vsub.f32 %v3572, %v4461
    %4463 = vmatpush1.msra.mxu0 %v4462
    %v4464 = vand.u32 %v3374, 4294901760
    %v4465 = vsub.f32 %v3374, %v4464
    %4466 = vmatprep.subr.mxu0 %v4465
    %v4467 = vand.u32 %v3373, 4294901760
    %v4468 = vsub.f32 %v3373, %v4467
    %4469 = vmatpush1.msra.mxu0 %v4468
    %v4470 = vand.u32 %v3529, 4294901760
    %v4471 = vsub.f32 %v3529, %v4470
    %4472 = vmatprep.subr.mxu0 %v4471
    %v4473 = vand.u32 %v3528, 4294901760
    %v4474 = vsub.f32 %v3528, %v4473
    %4475 = vmatpush1.msra.mxu0 %v4474
    %v4476 = vand.u32 %v3486, 4294901760
    %v4477 = vsub.f32 %v3486, %v4476
    %4478 = vmatprep.subr.mxu0 %v4477
    %v4479 = vand.u32 %v3485, 4294901760
    %v4480 = vsub.f32 %v3485, %v4479
    %4481 = vmatpush1.msra.mxu0 %v4480
    %v4482 = vand.u32 %v3686, 4294901760
    %v4483 = vsub.f32 %v3686, %v4482
    %4484 = vmatprep.subr.mxu0 %v4483
    %v4485 = vand.u32 %v3685, 4294901760
    %v4486 = vsub.f32 %v3685, %v4485
    %4487 = vmatpush1.msra.mxu0 %v4486
    %v4488 = vand.u32 %v3435, 4294901760
    %v4489 = vsub.f32 %v3435, %v4488
    %4490 = vmatprep.subr.mxu0 %v4489
    %v4491 = vand.u32 %v3434, 4294901760
    %v4492 = vsub.f32 %v3434, %v4491
    %4493 = vmatpush1.msra.mxu0 %v4492
    %4494 = vmatprep.subr.mxu0 0.0
    %4495 = vmatpush2.msra.mxu0 0.0
    %4496 = vmatprep.subr.mxu0 0.0
    %4497 = vmatpush2.msra.mxu0 0.0
    %4498 = vmatprep.subr.mxu0 0.0
    %4499 = vmatpush2.msra.mxu0 0.0
    %4500 = vmatprep.subr.mxu0 0.0
    %4501 = vmatpush2.msra.mxu0 0.0
    %4502 = vmatprep.subr.mxu0 0.0
    %4503 = vmatpush2.msra.mxu0 0.0
    %4504 = vmatprep.subr.mxu0 0.0
    %4505 = vmatpush2.msra.mxu0 0.0
    %4506 = vmatprep.subr.mxu0 0.0
    %4507 = vmatpush2.msra.mxu0 0.0
    %4508 = vmatprep.subr.mxu0 0.0
    %4509 = vmatpush2.msra.mxu0 0.0
    %4510 = vmatprep.subr.mxu0 0.0
    %4511 = vmatpush2.msra.mxu0 0.0
    %4512 = vmatprep.subr.mxu0 0.0
    %4513 = vmatpush2.msra.mxu0 0.0
    %4514 = vmatprep.subr.mxu0 0.0
    %4515 = vmatpush2.msra.mxu0 0.0
    %4516 = vmatprep.subr.mxu0 0.0
    %4517 = vmatpush2.msra.mxu0 0.0
    %4518 = vmatprep.subr.mxu0 0.0
    %4519 = vmatpush2.msra.mxu0 0.0
    %4520 = vmatprep.subr.mxu0 0.0
    %4521 = vmatpush2.msra.mxu0 0.0
    %v4522 = vand.u32 %v4002, 4294901760
    %v4523 = vsub.f32 %v4002, %v4522
    %4524 = vmatprep.subr.mxu0 %v4523
    %v4525 = vand.u32 %v4001, 4294901760
    %v4526 = vsub.f32 %v4001, %v4525
    %4527 = vmatpush2.msra.mxu0 %v4526
    %v4528 = vand.u32 %v3687, 4294901760
    %v4529 = vsub.f32 %v3687, %v4528
    %4530 = vmatprep.subr.mxu0 %v4529
    %v4531 = vand.u32 %v3686, 4294901760
    %v4532 = vsub.f32 %v3686, %v4531
    %4533 = vmatpush2.msra.mxu0 %v4532
    %v4534 = vand.u32 %v4026, 4294901760
    %v4535 = vsub.f32 %v4026, %v4534
    %4536 = vmatprep.mubr.f32.mxu0 %v4535
    %v4537 = vand.u32 %v4017, 4294901760
    %v4538 = vsub.f32 %v4017, %v4537
    %4539 = vmatmul.mubr.f32.gmra.mxu0 %v4538
    %v4540 = vpop.f32.mrf.mxu0
    %v4541 = vadd.f32 %v4394, %v4540
    %v4542 = vpop.f32.mrf.mxu0
    %v4543 = vadd.f32 %v4396, %v4542
    %4544 = vdwg.mxu0
    %v4545 = vand.u32 %v3959, 4294901760
    %4546 = vmatprep.subr.mxu0 %v4545
    %v4547 = vand.u32 %v3958, 4294901760
    %4548 = vmatpush1.msra.mxu0 %v4547
    %v4549 = vand.u32 %v3916, 4294901760
    %4550 = vmatprep.subr.mxu0 %v4549
    %v4551 = vand.u32 %v3915, 4294901760
    %4552 = vmatpush1.msra.mxu0 %v4551
    %v4553 = vand.u32 %v3374, 4294901760
    %4554 = vmatprep.subr.mxu0 %v4553
    %v4555 = vand.u32 %v3373, 4294901760
    %4556 = vmatpush1.msra.mxu0 %v4555
    %v4557 = vand.u32 %v3873, 4294901760
    %4558 = vmatprep.subr.mxu0 %v4557
    %v4559 = vand.u32 %v3872, 4294901760
    %4560 = vmatpush1.msra.mxu0 %v4559
    %v4561 = vand.u32 %v3830, 4294901760
    %4562 = vmatprep.subr.mxu0 %v4561
    %v4563 = vand.u32 %v3829, 4294901760
    %4564 = vmatpush1.msra.mxu0 %v4563
    %v4565 = vand.u32 %v3719, 4294901760
    %4566 = vmatprep.subr.mxu0 %v4565
    %v4567 = vand.u32 %v4011, 4294901760
    %4568 = vmatpush1.msra.mxu0 %v4567
    %v4569 = vand.u32 %v3779, 4294901760
    %4570 = vmatprep.subr.mxu0 %v4569
    %v4571 = vand.u32 %v3778, 4294901760
    %4572 = vmatpush1.msra.mxu0 %v4571
    %v4573 = vand.u32 %v3659, 4294901760
    %4574 = vmatprep.subr.mxu0 %v4573
    %v4575 = vand.u32 %v3658, 4294901760
    %4576 = vmatpush1.msra.mxu0 %v4575
    %v4577 = vand.u32 %v3720, 4294901760
    %4578 = vmatprep.subr.mxu0 %v4577
    %v4579 = vand.u32 %v3719, 4294901760
    %4580 = vmatpush1.msra.mxu0 %v4579
    %v4581 = vand.u32 %v3616, 4294901760
    %4582 = vmatprep.subr.mxu0 %v4581
    %v4583 = vand.u32 %v3615, 4294901760
    %4584 = vmatpush1.msra.mxu0 %v4583
    %v4585 = vand.u32 %v3573, 4294901760
    %4586 = vmatprep.subr.mxu0 %v4585
    %v4587 = vand.u32 %v3572, 4294901760
    %4588 = vmatpush1.msra.mxu0 %v4587
    %v4589 = vand.u32 %v3374, 4294901760
    %4590 = vmatprep.subr.mxu0 %v4589
    %v4591 = vand.u32 %v3373, 4294901760
    %4592 = vmatpush1.msra.mxu0 %v4591
    %v4593 = vand.u32 %v3529, 4294901760
    %4594 = vmatprep.subr.mxu0 %v4593
    %v4595 = vand.u32 %v3528, 4294901760
    %4596 = vmatpush1.msra.mxu0 %v4595
    %v4597 = vand.u32 %v3486, 4294901760
    %4598 = vmatprep.subr.mxu0 %v4597
    %v4599 = vand.u32 %v3485, 4294901760
    %4600 = vmatpush1.msra.mxu0 %v4599
    %v4601 = vand.u32 %v3686, 4294901760
    %4602 = vmatprep.subr.mxu0 %v4601
    %v4603 = vand.u32 %v3685, 4294901760
    %4604 = vmatpush1.msra.mxu0 %v4603
    %v4605 = vand.u32 %v3435, 4294901760
    %4606 = vmatprep.subr.mxu0 %v4605
    %v4607 = vand.u32 %v3434, 4294901760
    %4608 = vmatpush1.msra.mxu0 %v4607
    %4609 = vmatprep.subr.mxu0 0.0
    %4610 = vmatpush2.msra.mxu0 0.0
    %4611 = vmatprep.subr.mxu0 0.0
    %4612 = vmatpush2.msra.mxu0 0.0
    %4613 = vmatprep.subr.mxu0 0.0
    %4614 = vmatpush2.msra.mxu0 0.0
    %4615 = vmatprep.subr.mxu0 0.0
    %4616 = vmatpush2.msra.mxu0 0.0
    %4617 = vmatprep.subr.mxu0 0.0
    %4618 = vmatpush2.msra.mxu0 0.0
    %4619 = vmatprep.subr.mxu0 0.0
    %4620 = vmatpush2.msra.mxu0 0.0
    %4621 = vmatprep.subr.mxu0 0.0
    %4622 = vmatpush2.msra.mxu0 0.0
    %4623 = vmatprep.subr.mxu0 0.0
    %4624 = vmatpush2.msra.mxu0 0.0
    %4625 = vmatprep.subr.mxu0 0.0
    %4626 = vmatpush2.msra.mxu0 0.0
    %4627 = vmatprep.subr.mxu0 0.0
    %4628 = vmatpush2.msra.mxu0 0.0
    %4629 = vmatprep.subr.mxu0 0.0
    %4630 = vmatpush2.msra.mxu0 0.0
    %4631 = vmatprep.subr.mxu0 0.0
    %4632 = vmatpush2.msra.mxu0 0.0
    %4633 = vmatprep.subr.mxu0 0.0
    %4634 = vmatpush2.msra.mxu0 0.0
    %4635 = vmatprep.subr.mxu0 0.0
    %4636 = vmatpush2.msra.mxu0 0.0
    %v4637 = vand.u32 %v4002, 4294901760
    %4638 = vmatprep.subr.mxu0 %v4637
    %v4639 = vand.u32 %v4001, 4294901760
    %4640 = vmatpush2.msra.mxu0 %v4639
    %v4641 = vand.u32 %v3687, 4294901760
    %4642 = vmatprep.subr.mxu0 %v4641
    %v4643 = vand.u32 %v3686, 4294901760
    %4644 = vmatpush2.msra.mxu0 %v4643
    %v4645 = vand.u32 %v4026, 4294901760
    %v4646 = vsub.f32 %v4026, %v4645
    %v4647 = vand.u32 %v4646, 4294901760
    %4648 = vmatprep.mubr.f32.mxu0 %v4647
    %v4649 = vand.u32 %v4017, 4294901760
    %v4650 = vsub.f32 %v4017, %v4649
    %v4651 = vand.u32 %v4650, 4294901760
    %4652 = vmatmul.mubr.f32.gmra.mxu0 %v4651
    %v4653 = vpop.f32.mrf.mxu0
    %v4654 = vadd.f32 %v4541, %v4653
    %v4655 = vpop.f32.mrf.mxu0
    %v4656 = vadd.f32 %v4543, %v4655
    %4657 = vdwg.mxu0
    %v4658 = vand.u32 %v3959, 4294901760
    %v4659 = vsub.f32 %v3959, %v4658
    %v4660 = vand.u32 %v4659, 4294901760
    %4661 = vmatprep.subr.mxu0 %v4660
    %v4662 = vand.u32 %v3958, 4294901760
    %v4663 = vsub.f32 %v3958, %v4662
    %v4664 = vand.u32 %v4663, 4294901760
    %4665 = vmatpush1.msra.mxu0 %v4664
    %v4666 = vand.u32 %v3916, 4294901760
    %v4667 = vsub.f32 %v3916, %v4666
    %v4668 = vand.u32 %v4667, 4294901760
    %4669 = vmatprep.subr.mxu0 %v4668
    %v4670 = vand.u32 %v3915, 4294901760
    %v4671 = vsub.f32 %v3915, %v4670
    %v4672 = vand.u32 %v4671, 4294901760
    %4673 = vmatpush1.msra.mxu0 %v4672
    %v4674 = vand.u32 %v3374, 4294901760
    %v4675 = vsub.f32 %v3374, %v4674
    %v4676 = vand.u32 %v4675, 4294901760
    %4677 = vmatprep.subr.mxu0 %v4676
    %v4678 = vand.u32 %v3373, 4294901760
    %v4679 = vsub.f32 %v3373, %v4678
    %v4680 = vand.u32 %v4679, 4294901760
    %4681 = vmatpush1.msra.mxu0 %v4680
    %v4682 = vand.u32 %v3873, 4294901760
    %v4683 = vsub.f32 %v3873, %v4682
    %v4684 = vand.u32 %v4683, 4294901760
    %4685 = vmatprep.subr.mxu0 %v4684
    %v4686 = vand.u32 %v3872, 4294901760
    %v4687 = vsub.f32 %v3872, %v4686
    %v4688 = vand.u32 %v4687, 4294901760
    %4689 = vmatpush1.msra.mxu0 %v4688
    %v4690 = vand.u32 %v3830, 4294901760
    %v4691 = vsub.f32 %v3830, %v4690
    %v4692 = vand.u32 %v4691, 4294901760
    %4693 = vmatprep.subr.mxu0 %v4692
    %v4694 = vand.u32 %v3829, 4294901760
    %v4695 = vsub.f32 %v3829, %v4694
    %v4696 = vand.u32 %v4695, 4294901760
    %4697 = vmatpush1.msra.mxu0 %v4696
    %v4698 = vand.u32 %v3719, 4294901760
    %v4699 = vsub.f32 %v3719, %v4698
    %v4700 = vand.u32 %v4699, 4294901760
    %4701 = vmatprep.subr.mxu0 %v4700
    %v4702 = vand.u32 %v4011, 4294901760
    %v4703 = vsub.f32 %v4011, %v4702
    %v4704 = vand.u32 %v4703, 4294901760
    %4705 = vmatpush1.msra.mxu0 %v4704
    %v4706 = vand.u32 %v3779, 4294901760
    %v4707 = vsub.f32 %v3779, %v4706
    %v4708 = vand.u32 %v4707, 4294901760
    %4709 = vmatprep.subr.mxu0 %v4708
    %v4710 = vand.u32 %v3778, 4294901760
    %v4711 = vsub.f32 %v3778, %v4710
    %v4712 = vand.u32 %v4711, 4294901760
    %4713 = vmatpush1.msra.mxu0 %v4712
    %v4714 = vand.u32 %v3659, 4294901760
    %v4715 = vsub.f32 %v3659, %v4714
    %v4716 = vand.u32 %v4715, 4294901760
    %4717 = vmatprep.subr.mxu0 %v4716
    %v4718 = vand.u32 %v3658, 4294901760
    %v4719 = vsub.f32 %v3658, %v4718
    %v4720 = vand.u32 %v4719, 4294901760
    %4721 = vmatpush1.msra.mxu0 %v4720
    %v4722 = vand.u32 %v3720, 4294901760
    %v4723 = vsub.f32 %v3720, %v4722
    %v4724 = vand.u32 %v4723, 4294901760
    %4725 = vmatprep.subr.mxu0 %v4724
    %v4726 = vand.u32 %v3719, 4294901760
    %v4727 = vsub.f32 %v3719, %v4726
    %v4728 = vand.u32 %v4727, 4294901760
    %4729 = vmatpush1.msra.mxu0 %v4728
    %v4730 = vand.u32 %v3616, 4294901760
    %v4731 = vsub.f32 %v3616, %v4730
    %v4732 = vand.u32 %v4731, 4294901760
    %4733 = vmatprep.subr.mxu0 %v4732
    %v4734 = vand.u32 %v3615, 4294901760
    %v4735 = vsub.f32 %v3615, %v4734
    %v4736 = vand.u32 %v4735, 4294901760
    %4737 = vmatpush1.msra.mxu0 %v4736
    %v4738 = vand.u32 %v3573, 4294901760
    %v4739 = vsub.f32 %v3573, %v4738
    %v4740 = vand.u32 %v4739, 4294901760
    %4741 = vmatprep.subr.mxu0 %v4740
    %v4742 = vand.u32 %v3572, 4294901760
    %v4743 = vsub.f32 %v3572, %v4742
    %v4744 = vand.u32 %v4743, 4294901760
    %4745 = vmatpush1.msra.mxu0 %v4744
    %v4746 = vand.u32 %v3374, 4294901760
    %v4747 = vsub.f32 %v3374, %v4746
    %v4748 = vand.u32 %v4747, 4294901760
    %4749 = vmatprep.subr.mxu0 %v4748
    %v4750 = vand.u32 %v3373, 4294901760
    %v4751 = vsub.f32 %v3373, %v4750
    %v4752 = vand.u32 %v4751, 4294901760
    %4753 = vmatpush1.msra.mxu0 %v4752
    %v4754 = vand.u32 %v3529, 4294901760
    %v4755 = vsub.f32 %v3529, %v4754
    %v4756 = vand.u32 %v4755, 4294901760
    %4757 = vmatprep.subr.mxu0 %v4756
    %v4758 = vand.u32 %v3528, 4294901760
    %v4759 = vsub.f32 %v3528, %v4758
    %v4760 = vand.u32 %v4759, 4294901760
    %4761 = vmatpush1.msra.mxu0 %v4760
    %v4762 = vand.u32 %v3486, 4294901760
    %v4763 = vsub.f32 %v3486, %v4762
    %v4764 = vand.u32 %v4763, 4294901760
    %4765 = vmatprep.subr.mxu0 %v4764
    %v4766 = vand.u32 %v3485, 4294901760
    %v4767 = vsub.f32 %v3485, %v4766
    %v4768 = vand.u32 %v4767, 4294901760
    %4769 = vmatpush1.msra.mxu0 %v4768
    %v4770 = vand.u32 %v3686, 4294901760
    %v4771 = vsub.f32 %v3686, %v4770
    %v4772 = vand.u32 %v4771, 4294901760
    %4773 = vmatprep.subr.mxu0 %v4772
    %v4774 = vand.u32 %v3685, 4294901760
    %v4775 = vsub.f32 %v3685, %v4774
    %v4776 = vand.u32 %v4775, 4294901760
    %4777 = vmatpush1.msra.mxu0 %v4776
    %v4778 = vand.u32 %v3435, 4294901760
    %v4779 = vsub.f32 %v3435, %v4778
    %v4780 = vand.u32 %v4779, 4294901760
    %4781 = vmatprep.subr.mxu0 %v4780
    %v4782 = vand.u32 %v3434, 4294901760
    %v4783 = vsub.f32 %v3434, %v4782
    %v4784 = vand.u32 %v4783, 4294901760
    %4785 = vmatpush1.msra.mxu0 %v4784
    %4786 = vmatprep.subr.mxu0 0.0
    %4787 = vmatpush2.msra.mxu0 0.0
    %4788 = vmatprep.subr.mxu0 0.0
    %4789 = vmatpush2.msra.mxu0 0.0
    %4790 = vmatprep.subr.mxu0 0.0
    %4791 = vmatpush2.msra.mxu0 0.0
    %4792 = vmatprep.subr.mxu0 0.0
    %4793 = vmatpush2.msra.mxu0 0.0
    %4794 = vmatprep.subr.mxu0 0.0
    %4795 = vmatpush2.msra.mxu0 0.0
    %4796 = vmatprep.subr.mxu0 0.0
    %4797 = vmatpush2.msra.mxu0 0.0
    %4798 = vmatprep.subr.mxu0 0.0
    %4799 = vmatpush2.msra.mxu0 0.0
    %4800 = vmatprep.subr.mxu0 0.0
    %4801 = vmatpush2.msra.mxu0 0.0
    %4802 = vmatprep.subr.mxu0 0.0
    %4803 = vmatpush2.msra.mxu0 0.0
    %4804 = vmatprep.subr.mxu0 0.0
    %4805 = vmatpush2.msra.mxu0 0.0
    %4806 = vmatprep.subr.mxu0 0.0
    %4807 = vmatpush2.msra.mxu0 0.0
    %4808 = vmatprep.subr.mxu0 0.0
    %4809 = vmatpush2.msra.mxu0 0.0
    %4810 = vmatprep.subr.mxu0 0.0
    %4811 = vmatpush2.msra.mxu0 0.0
    %4812 = vmatprep.subr.mxu0 0.0
    %4813 = vmatpush2.msra.mxu0 0.0
    %v4814 = vand.u32 %v4002, 4294901760
    %v4815 = vsub.f32 %v4002, %v4814
    %v4816 = vand.u32 %v4815, 4294901760
    %4817 = vmatprep.subr.mxu0 %v4816
    %v4818 = vand.u32 %v4001, 4294901760
    %v4819 = vsub.f32 %v4001, %v4818
    %v4820 = vand.u32 %v4819, 4294901760
    %4821 = vmatpush2.msra.mxu0 %v4820
    %v4822 = vand.u32 %v3687, 4294901760
    %v4823 = vsub.f32 %v3687, %v4822
    %v4824 = vand.u32 %v4823, 4294901760
    %4825 = vmatprep.subr.mxu0 %v4824
    %v4826 = vand.u32 %v3686, 4294901760
    %v4827 = vsub.f32 %v3686, %v4826
    %v4828 = vand.u32 %v4827, 4294901760
    %4829 = vmatpush2.msra.mxu0 %v4828
    %v4830 = vand.u32 %v4026, 4294901760
    %4831 = vmatprep.mubr.f32.mxu0 %v4830
    %v4832 = vand.u32 %v4017, 4294901760
    %4833 = vmatmul.mubr.f32.gmra.mxu0 %v4832
    %v4834 = vpop.f32.mrf.mxu0
    %v4835 = vadd.f32 %v4654, %v4834
    %v4836 = vpop.f32.mrf.mxu0
    %v4837 = vadd.f32 %v4656, %v4836
    %4838 = vdwg.mxu0
    %v4839 = vand.u32 %v3959, 4294901760
    %4840 = vmatprep.subr.mxu0 %v4839
    %v4841 = vand.u32 %v3958, 4294901760
    %4842 = vmatpush1.msra.mxu0 %v4841
    %v4843 = vand.u32 %v3916, 4294901760
    %4844 = vmatprep.subr.mxu0 %v4843
    %v4845 = vand.u32 %v3915, 4294901760
    %4846 = vmatpush1.msra.mxu0 %v4845
    %v4847 = vand.u32 %v3374, 4294901760
    %4848 = vmatprep.subr.mxu0 %v4847
    %v4849 = vand.u32 %v3373, 4294901760
    %4850 = vmatpush1.msra.mxu0 %v4849
    %v4851 = vand.u32 %v3873, 4294901760
    %4852 = vmatprep.subr.mxu0 %v4851
    %v4853 = vand.u32 %v3872, 4294901760
    %4854 = vmatpush1.msra.mxu0 %v4853
    %v4855 = vand.u32 %v3830, 4294901760
    %4856 = vmatprep.subr.mxu0 %v4855
    %v4857 = vand.u32 %v3829, 4294901760
    %4858 = vmatpush1.msra.mxu0 %v4857
    %v4859 = vand.u32 %v3719, 4294901760
    %4860 = vmatprep.subr.mxu0 %v4859
    %v4861 = vand.u32 %v4011, 4294901760
    %4862 = vmatpush1.msra.mxu0 %v4861
    %v4863 = vand.u32 %v3779, 4294901760
    %4864 = vmatprep.subr.mxu0 %v4863
    %v4865 = vand.u32 %v3778, 4294901760
    %4866 = vmatpush1.msra.mxu0 %v4865
    %v4867 = vand.u32 %v3659, 4294901760
    %4868 = vmatprep.subr.mxu0 %v4867
    %v4869 = vand.u32 %v3658, 4294901760
    %4870 = vmatpush1.msra.mxu0 %v4869
    %v4871 = vand.u32 %v3720, 4294901760
    %4872 = vmatprep.subr.mxu0 %v4871
    %v4873 = vand.u32 %v3719, 4294901760
    %4874 = vmatpush1.msra.mxu0 %v4873
    %v4875 = vand.u32 %v3616, 4294901760
    %4876 = vmatprep.subr.mxu0 %v4875
    %v4877 = vand.u32 %v3615, 4294901760
    %4878 = vmatpush1.msra.mxu0 %v4877
    %v4879 = vand.u32 %v3573, 4294901760
    %4880 = vmatprep.subr.mxu0 %v4879
    %v4881 = vand.u32 %v3572, 4294901760
    %4882 = vmatpush1.msra.mxu0 %v4881
    %v4883 = vand.u32 %v3374, 4294901760
    %4884 = vmatprep.subr.mxu0 %v4883
    %v4885 = vand.u32 %v3373, 4294901760
    %4886 = vmatpush1.msra.mxu0 %v4885
    %v4887 = vand.u32 %v3529, 4294901760
    %4888 = vmatprep.subr.mxu0 %v4887
    %v4889 = vand.u32 %v3528, 4294901760
    %4890 = vmatpush1.msra.mxu0 %v4889
    %v4891 = vand.u32 %v3486, 4294901760
    %4892 = vmatprep.subr.mxu0 %v4891
    %v4893 = vand.u32 %v3485, 4294901760
    %4894 = vmatpush1.msra.mxu0 %v4893
    %v4895 = vand.u32 %v3686, 4294901760
    %4896 = vmatprep.subr.mxu0 %v4895
    %v4897 = vand.u32 %v3685, 4294901760
    %4898 = vmatpush1.msra.mxu0 %v4897
    %v4899 = vand.u32 %v3435, 4294901760
    %4900 = vmatprep.subr.mxu0 %v4899
    %v4901 = vand.u32 %v3434, 4294901760
    %4902 = vmatpush1.msra.mxu0 %v4901
    %4903 = vmatprep.subr.mxu0 0.0
    %4904 = vmatpush2.msra.mxu0 0.0
    %4905 = vmatprep.subr.mxu0 0.0
    %4906 = vmatpush2.msra.mxu0 0.0
    %4907 = vmatprep.subr.mxu0 0.0
    %4908 = vmatpush2.msra.mxu0 0.0
    %4909 = vmatprep.subr.mxu0 0.0
    %4910 = vmatpush2.msra.mxu0 0.0
    %4911 = vmatprep.subr.mxu0 0.0
    %4912 = vmatpush2.msra.mxu0 0.0
    %4913 = vmatprep.subr.mxu0 0.0
    %4914 = vmatpush2.msra.mxu0 0.0
    %4915 = vmatprep.subr.mxu0 0.0
    %4916 = vmatpush2.msra.mxu0 0.0
    %4917 = vmatprep.subr.mxu0 0.0
    %4918 = vmatpush2.msra.mxu0 0.0
    %4919 = vmatprep.subr.mxu0 0.0
    %4920 = vmatpush2.msra.mxu0 0.0
    %4921 = vmatprep.subr.mxu0 0.0
    %4922 = vmatpush2.msra.mxu0 0.0
    %4923 = vmatprep.subr.mxu0 0.0
    %4924 = vmatpush2.msra.mxu0 0.0
    %4925 = vmatprep.subr.mxu0 0.0
    %4926 = vmatpush2.msra.mxu0 0.0
    %4927 = vmatprep.subr.mxu0 0.0
    %4928 = vmatpush2.msra.mxu0 0.0
    %4929 = vmatprep.subr.mxu0 0.0
    %4930 = vmatpush2.msra.mxu0 0.0
    %v4931 = vand.u32 %v4002, 4294901760
    %4932 = vmatprep.subr.mxu0 %v4931
    %v4933 = vand.u32 %v4001, 4294901760
    %4934 = vmatpush2.msra.mxu0 %v4933
    %v4935 = vand.u32 %v3687, 4294901760
    %4936 = vmatprep.subr.mxu0 %v4935
    %v4937 = vand.u32 %v3686, 4294901760
    %4938 = vmatpush2.msra.mxu0 %v4937
    %v4939 = vand.u32 %v4026, 4294901760
    %4940 = vmatprep.mubr.f32.mxu0 %v4939
    %v4941 = vand.u32 %v4017, 4294901760
    %4942 = vmatmul.mubr.f32.gmra.mxu0 %v4941
    %v4943 = vpop.f32.mrf.mxu0
    %v4944 = vadd.f32 %v4835, %v4943
    %v4945 = vpop.f32.mrf.mxu0
    %v4946 = vadd.f32 %v4837, %v4945
    %4947 = vdwg.mxu0
    %v4948 = vand.u32 %v3961, 4294901760
    %4949 = vmatprep.subr.mxu0 %v4948
    %v4950 = vand.u32 %v3960, 4294901760
    %4951 = vmatpush1.msra.mxu0 %v4950
    %v4952 = vand.u32 %v3918, 4294901760
    %4953 = vmatprep.subr.mxu0 %v4952
    %v4954 = vand.u32 %v3917, 4294901760
    %4955 = vmatpush1.msra.mxu0 %v4954
    %v4956 = vand.u32 %v3376, 4294901760
    %4957 = vmatprep.subr.mxu0 %v4956
    %v4958 = vand.u32 %v3375, 4294901760
    %4959 = vmatpush1.msra.mxu0 %v4958
    %v4960 = vand.u32 %v3875, 4294901760
    %4961 = vmatprep.subr.mxu0 %v4960
    %v4962 = vand.u32 %v3874, 4294901760
    %4963 = vmatpush1.msra.mxu0 %v4962
    %v4964 = vand.u32 %v3832, 4294901760
    %4965 = vmatprep.subr.mxu0 %v4964
    %v4966 = vand.u32 %v3831, 4294901760
    %4967 = vmatpush1.msra.mxu0 %v4966
    %v4968 = vand.u32 %v3721, 4294901760
    %4969 = vmatprep.subr.mxu0 %v4968
    %v4970 = vand.u32 %v3720, 4294901760
    %4971 = vmatpush1.msra.mxu0 %v4970
    %v4972 = vand.u32 %v3781, 4294901760
    %4973 = vmatprep.subr.mxu0 %v4972
    %v4974 = vand.u32 %v3780, 4294901760
    %4975 = vmatpush1.msra.mxu0 %v4974
    %v4976 = vand.u32 %v3661, 4294901760
    %4977 = vmatprep.subr.mxu0 %v4976
    %v4978 = vand.u32 %v3660, 4294901760
    %4979 = vmatpush1.msra.mxu0 %v4978
    %v4980 = vand.u32 %v3722, 4294901760
    %4981 = vmatprep.subr.mxu0 %v4980
    %v4982 = vand.u32 %v3721, 4294901760
    %4983 = vmatpush1.msra.mxu0 %v4982
    %v4984 = vand.u32 %v3618, 4294901760
    %4985 = vmatprep.subr.mxu0 %v4984
    %v4986 = vand.u32 %v3617, 4294901760
    %4987 = vmatpush1.msra.mxu0 %v4986
    %v4988 = vand.u32 %v3575, 4294901760
    %4989 = vmatprep.subr.mxu0 %v4988
    %v4990 = vand.u32 %v3574, 4294901760
    %4991 = vmatpush1.msra.mxu0 %v4990
    %v4992 = vand.u32 %v3376, 4294901760
    %4993 = vmatprep.subr.mxu0 %v4992
    %v4994 = vand.u32 %v3375, 4294901760
    %4995 = vmatpush1.msra.mxu0 %v4994
    %v4996 = vand.u32 %v3531, 4294901760
    %4997 = vmatprep.subr.mxu0 %v4996
    %v4998 = vand.u32 %v3530, 4294901760
    %4999 = vmatpush1.msra.mxu0 %v4998
    %v5000 = vand.u32 %v3488, 4294901760
    %5001 = vmatprep.subr.mxu0 %v5000
    %v5002 = vand.u32 %v3487, 4294901760
    %5003 = vmatpush1.msra.mxu0 %v5002
    %v5004 = vand.u32 %v3688, 4294901760
    %5005 = vmatprep.subr.mxu0 %v5004
    %v5006 = vand.u32 %v3687, 4294901760
    %5007 = vmatpush1.msra.mxu0 %v5006
    %v5008 = vand.u32 %v3437, 4294901760
    %5009 = vmatprep.subr.mxu0 %v5008
    %v5010 = vand.u32 %v3436, 4294901760
    %5011 = vmatpush1.msra.mxu0 %v5010
    %5012 = vmatprep.subr.mxu0 0.0
    %5013 = vmatpush2.msra.mxu0 0.0
    %5014 = vmatprep.subr.mxu0 0.0
    %5015 = vmatpush2.msra.mxu0 0.0
    %5016 = vmatprep.subr.mxu0 0.0
    %5017 = vmatpush2.msra.mxu0 0.0
    %5018 = vmatprep.subr.mxu0 0.0
    %5019 = vmatpush2.msra.mxu0 0.0
    %5020 = vmatprep.subr.mxu0 0.0
    %5021 = vmatpush2.msra.mxu0 0.0
    %5022 = vmatprep.subr.mxu0 0.0
    %5023 = vmatpush2.msra.mxu0 0.0
    %5024 = vmatprep.subr.mxu0 0.0
    %5025 = vmatpush2.msra.mxu0 0.0
    %5026 = vmatprep.subr.mxu0 0.0
    %5027 = vmatpush2.msra.mxu0 0.0
    %5028 = vmatprep.subr.mxu0 0.0
    %5029 = vmatpush2.msra.mxu0 0.0
    %5030 = vmatprep.subr.mxu0 0.0
    %5031 = vmatpush2.msra.mxu0 0.0
    %5032 = vmatprep.subr.mxu0 0.0
    %5033 = vmatpush2.msra.mxu0 0.0
    %5034 = vmatprep.subr.mxu0 0.0
    %5035 = vmatpush2.msra.mxu0 0.0
    %5036 = vmatprep.subr.mxu0 0.0
    %5037 = vmatpush2.msra.mxu0 0.0
    %5038 = vmatprep.subr.mxu0 0.0
    %5039 = vmatpush2.msra.mxu0 0.0
    %v5040 = vand.u32 %v4004, 4294901760
    %5041 = vmatprep.subr.mxu0 %v5040
    %v5042 = vand.u32 %v4003, 4294901760
    %5043 = vmatpush2.msra.mxu0 %v5042
    %v5044 = vand.u32 %v3689, 4294901760
    %5045 = vmatprep.subr.mxu0 %v5044
    %v5046 = vand.u32 %v3688, 4294901760
    %5047 = vmatpush2.msra.mxu0 %v5046
    %v5048 = vand.u32 %v4026, 4294901760
    %v5049 = vsub.f32 %v4026, %v5048
    %v5050 = vand.u32 %v5049, 4294901760
    %v5051 = vsub.f32 %v5049, %v5050
    %v5052 = vand.u32 %v5051, 4294901760
    %5053 = vmatprep.mubr.f32.mxu0 %v5052
    %v5054 = vand.u32 %v4017, 4294901760
    %v5055 = vsub.f32 %v4017, %v5054
    %v5056 = vand.u32 %v5055, 4294901760
    %v5057 = vsub.f32 %v5055, %v5056
    %v5058 = vand.u32 %v5057, 4294901760
    %5059 = vmatmul.mubr.f32.gmra.mxu0 %v5058
    %v5060 = vpop.f32.mrf.mxu0
    %v5061 = vadd.f32 %v4023, %v5060
    %v5062 = vpop.f32.mrf.mxu0
    %v5063 = vadd.f32 %v4023, %v5062
    %5064 = vdwg.mxu0
    %v5065 = vand.u32 %v3961, 4294901760
    %v5066 = vsub.f32 %v3961, %v5065
    %v5067 = vand.u32 %v5066, 4294901760
    %v5068 = vsub.f32 %v5066, %v5067
    %v5069 = vand.u32 %v5068, 4294901760
    %5070 = vmatprep.subr.mxu0 %v5069
    %v5071 = vand.u32 %v3960, 4294901760
    %v5072 = vsub.f32 %v3960, %v5071
    %v5073 = vand.u32 %v5072, 4294901760
    %v5074 = vsub.f32 %v5072, %v5073
    %v5075 = vand.u32 %v5074, 4294901760
    %5076 = vmatpush1.msra.mxu0 %v5075
    %v5077 = vand.u32 %v3918, 4294901760
    %v5078 = vsub.f32 %v3918, %v5077
    %v5079 = vand.u32 %v5078, 4294901760
    %v5080 = vsub.f32 %v5078, %v5079
    %v5081 = vand.u32 %v5080, 4294901760
    %5082 = vmatprep.subr.mxu0 %v5081
    %v5083 = vand.u32 %v3917, 4294901760
    %v5084 = vsub.f32 %v3917, %v5083
    %v5085 = vand.u32 %v5084, 4294901760
    %v5086 = vsub.f32 %v5084, %v5085
    %v5087 = vand.u32 %v5086, 4294901760
    %5088 = vmatpush1.msra.mxu0 %v5087
    %v5089 = vand.u32 %v3376, 4294901760
    %v5090 = vsub.f32 %v3376, %v5089
    %v5091 = vand.u32 %v5090, 4294901760
    %v5092 = vsub.f32 %v5090, %v5091
    %v5093 = vand.u32 %v5092, 4294901760
    %5094 = vmatprep.subr.mxu0 %v5093
    %v5095 = vand.u32 %v3375, 4294901760
    %v5096 = vsub.f32 %v3375, %v5095
    %v5097 = vand.u32 %v5096, 4294901760
    %v5098 = vsub.f32 %v5096, %v5097
    %v5099 = vand.u32 %v5098, 4294901760
    %5100 = vmatpush1.msra.mxu0 %v5099
    %v5101 = vand.u32 %v3875, 4294901760
    %v5102 = vsub.f32 %v3875, %v5101
    %v5103 = vand.u32 %v5102, 4294901760
    %v5104 = vsub.f32 %v5102, %v5103
    %v5105 = vand.u32 %v5104, 4294901760
    %5106 = vmatprep.subr.mxu0 %v5105
    %v5107 = vand.u32 %v3874, 4294901760
    %v5108 = vsub.f32 %v3874, %v5107
    %v5109 = vand.u32 %v5108, 4294901760
    %v5110 = vsub.f32 %v5108, %v5109
    %v5111 = vand.u32 %v5110, 4294901760
    %5112 = vmatpush1.msra.mxu0 %v5111
    %v5113 = vand.u32 %v3832, 4294901760
    %v5114 = vsub.f32 %v3832, %v5113
    %v5115 = vand.u32 %v5114, 4294901760
    %v5116 = vsub.f32 %v5114, %v5115
    %v5117 = vand.u32 %v5116, 4294901760
    %5118 = vmatprep.subr.mxu0 %v5117
    %v5119 = vand.u32 %v3831, 4294901760
    %v5120 = vsub.f32 %v3831, %v5119
    %v5121 = vand.u32 %v5120, 4294901760
    %v5122 = vsub.f32 %v5120, %v5121
    %v5123 = vand.u32 %v5122, 4294901760
    %5124 = vmatpush1.msra.mxu0 %v5123
    %v5125 = vand.u32 %v3721, 4294901760
    %v5126 = vsub.f32 %v3721, %v5125
    %v5127 = vand.u32 %v5126, 4294901760
    %v5128 = vsub.f32 %v5126, %v5127
    %v5129 = vand.u32 %v5128, 4294901760
    %5130 = vmatprep.subr.mxu0 %v5129
    %v5131 = vand.u32 %v3720, 4294901760
    %v5132 = vsub.f32 %v3720, %v5131
    %v5133 = vand.u32 %v5132, 4294901760
    %v5134 = vsub.f32 %v5132, %v5133
    %v5135 = vand.u32 %v5134, 4294901760
    %5136 = vmatpush1.msra.mxu0 %v5135
    %v5137 = vand.u32 %v3781, 4294901760
    %v5138 = vsub.f32 %v3781, %v5137
    %v5139 = vand.u32 %v5138, 4294901760
    %v5140 = vsub.f32 %v5138, %v5139
    %v5141 = vand.u32 %v5140, 4294901760
    %5142 = vmatprep.subr.mxu0 %v5141
    %v5143 = vand.u32 %v3780, 4294901760
    %v5144 = vsub.f32 %v3780, %v5143
    %v5145 = vand.u32 %v5144, 4294901760
    %v5146 = vsub.f32 %v5144, %v5145
    %v5147 = vand.u32 %v5146, 4294901760
    %5148 = vmatpush1.msra.mxu0 %v5147
    %v5149 = vand.u32 %v3661, 4294901760
    %v5150 = vsub.f32 %v3661, %v5149
    %v5151 = vand.u32 %v5150, 4294901760
    %v5152 = vsub.f32 %v5150, %v5151
    %v5153 = vand.u32 %v5152, 4294901760
    %5154 = vmatprep.subr.mxu0 %v5153
    %v5155 = vand.u32 %v3660, 4294901760
    %v5156 = vsub.f32 %v3660, %v5155
    %v5157 = vand.u32 %v5156, 4294901760
    %v5158 = vsub.f32 %v5156, %v5157
    %v5159 = vand.u32 %v5158, 4294901760
    %5160 = vmatpush1.msra.mxu0 %v5159
    %v5161 = vand.u32 %v3722, 4294901760
    %v5162 = vsub.f32 %v3722, %v5161
    %v5163 = vand.u32 %v5162, 4294901760
    %v5164 = vsub.f32 %v5162, %v5163
    %v5165 = vand.u32 %v5164, 4294901760
    %5166 = vmatprep.subr.mxu0 %v5165
    %v5167 = vand.u32 %v3721, 4294901760
    %v5168 = vsub.f32 %v3721, %v5167
    %v5169 = vand.u32 %v5168, 4294901760
    %v5170 = vsub.f32 %v5168, %v5169
    %v5171 = vand.u32 %v5170, 4294901760
    %5172 = vmatpush1.msra.mxu0 %v5171
    %v5173 = vand.u32 %v3618, 4294901760
    %v5174 = vsub.f32 %v3618, %v5173
    %v5175 = vand.u32 %v5174, 4294901760
    %v5176 = vsub.f32 %v5174, %v5175
    %v5177 = vand.u32 %v5176, 4294901760
    %5178 = vmatprep.subr.mxu0 %v5177
    %v5179 = vand.u32 %v3617, 4294901760
    %v5180 = vsub.f32 %v3617, %v5179
    %v5181 = vand.u32 %v5180, 4294901760
    %v5182 = vsub.f32 %v5180, %v5181
    %v5183 = vand.u32 %v5182, 4294901760
    %5184 = vmatpush1.msra.mxu0 %v5183
    %v5185 = vand.u32 %v3575, 4294901760
    %v5186 = vsub.f32 %v3575, %v5185
    %v5187 = vand.u32 %v5186, 4294901760
    %v5188 = vsub.f32 %v5186, %v5187
    %v5189 = vand.u32 %v5188, 4294901760
    %5190 = vmatprep.subr.mxu0 %v5189
    %v5191 = vand.u32 %v3574, 4294901760
    %v5192 = vsub.f32 %v3574, %v5191
    %v5193 = vand.u32 %v5192, 4294901760
    %v5194 = vsub.f32 %v5192, %v5193
    %v5195 = vand.u32 %v5194, 4294901760
    %5196 = vmatpush1.msra.mxu0 %v5195
    %v5197 = vand.u32 %v3376, 4294901760
    %v5198 = vsub.f32 %v3376, %v5197
    %v5199 = vand.u32 %v5198, 4294901760
    %v5200 = vsub.f32 %v5198, %v5199
    %v5201 = vand.u32 %v5200, 4294901760
    %5202 = vmatprep.subr.mxu0 %v5201
    %v5203 = vand.u32 %v3375, 4294901760
    %v5204 = vsub.f32 %v3375, %v5203
    %v5205 = vand.u32 %v5204, 4294901760
    %v5206 = vsub.f32 %v5204, %v5205
    %v5207 = vand.u32 %v5206, 4294901760
    %5208 = vmatpush1.msra.mxu0 %v5207
    %v5209 = vand.u32 %v3531, 4294901760
    %v5210 = vsub.f32 %v3531, %v5209
    %v5211 = vand.u32 %v5210, 4294901760
    %v5212 = vsub.f32 %v5210, %v5211
    %v5213 = vand.u32 %v5212, 4294901760
    %5214 = vmatprep.subr.mxu0 %v5213
    %v5215 = vand.u32 %v3530, 4294901760
    %v5216 = vsub.f32 %v3530, %v5215
    %v5217 = vand.u32 %v5216, 4294901760
    %v5218 = vsub.f32 %v5216, %v5217
    %v5219 = vand.u32 %v5218, 4294901760
    %5220 = vmatpush1.msra.mxu0 %v5219
    %v5221 = vand.u32 %v3488, 4294901760
    %v5222 = vsub.f32 %v3488, %v5221
    %v5223 = vand.u32 %v5222, 4294901760
    %v5224 = vsub.f32 %v5222, %v5223
    %v5225 = vand.u32 %v5224, 4294901760
    %5226 = vmatprep.subr.mxu0 %v5225
    %v5227 = vand.u32 %v3487, 4294901760
    %v5228 = vsub.f32 %v3487, %v5227
    %v5229 = vand.u32 %v5228, 4294901760
    %v5230 = vsub.f32 %v5228, %v5229
    %v5231 = vand.u32 %v5230, 4294901760
    %5232 = vmatpush1.msra.mxu0 %v5231
    %v5233 = vand.u32 %v3688, 4294901760
    %v5234 = vsub.f32 %v3688, %v5233
    %v5235 = vand.u32 %v5234, 4294901760
    %v5236 = vsub.f32 %v5234, %v5235
    %v5237 = vand.u32 %v5236, 4294901760
    %5238 = vmatprep.subr.mxu0 %v5237
    %v5239 = vand.u32 %v3687, 4294901760
    %v5240 = vsub.f32 %v3687, %v5239
    %v5241 = vand.u32 %v5240, 4294901760
    %v5242 = vsub.f32 %v5240, %v5241
    %v5243 = vand.u32 %v5242, 4294901760
    %5244 = vmatpush1.msra.mxu0 %v5243
    %v5245 = vand.u32 %v3437, 4294901760
    %v5246 = vsub.f32 %v3437, %v5245
    %v5247 = vand.u32 %v5246, 4294901760
    %v5248 = vsub.f32 %v5246, %v5247
    %v5249 = vand.u32 %v5248, 4294901760
    %5250 = vmatprep.subr.mxu0 %v5249
    %v5251 = vand.u32 %v3436, 4294901760
    %v5252 = vsub.f32 %v3436, %v5251
    %v5253 = vand.u32 %v5252, 4294901760
    %v5254 = vsub.f32 %v5252, %v5253
    %v5255 = vand.u32 %v5254, 4294901760
    %5256 = vmatpush1.msra.mxu0 %v5255
    %5257 = vmatprep.subr.mxu0 0.0
    %5258 = vmatpush2.msra.mxu0 0.0
    %5259 = vmatprep.subr.mxu0 0.0
    %5260 = vmatpush2.msra.mxu0 0.0
    %5261 = vmatprep.subr.mxu0 0.0
    %5262 = vmatpush2.msra.mxu0 0.0
    %5263 = vmatprep.subr.mxu0 0.0
    %5264 = vmatpush2.msra.mxu0 0.0
    %5265 = vmatprep.subr.mxu0 0.0
    %5266 = vmatpush2.msra.mxu0 0.0
    %5267 = vmatprep.subr.mxu0 0.0
    %5268 = vmatpush2.msra.mxu0 0.0
    %5269 = vmatprep.subr.mxu0 0.0
    %5270 = vmatpush2.msra.mxu0 0.0
    %5271 = vmatprep.subr.mxu0 0.0
    %5272 = vmatpush2.msra.mxu0 0.0
    %5273 = vmatprep.subr.mxu0 0.0
    %5274 = vmatpush2.msra.mxu0 0.0
    %5275 = vmatprep.subr.mxu0 0.0
    %5276 = vmatpush2.msra.mxu0 0.0
    %5277 = vmatprep.subr.mxu0 0.0
    %5278 = vmatpush2.msra.mxu0 0.0
    %5279 = vmatprep.subr.mxu0 0.0
    %5280 = vmatpush2.msra.mxu0 0.0
    %5281 = vmatprep.subr.mxu0 0.0
    %5282 = vmatpush2.msra.mxu0 0.0
    %5283 = vmatprep.subr.mxu0 0.0
    %5284 = vmatpush2.msra.mxu0 0.0
    %v5285 = vand.u32 %v4004, 4294901760
    %v5286 = vsub.f32 %v4004, %v5285
    %v5287 = vand.u32 %v5286, 4294901760
    %v5288 = vsub.f32 %v5286, %v5287
    %v5289 = vand.u32 %v5288, 4294901760
    %5290 = vmatprep.subr.mxu0 %v5289
    %v5291 = vand.u32 %v4003, 4294901760
    %v5292 = vsub.f32 %v4003, %v5291
    %v5293 = vand.u32 %v5292, 4294901760
    %v5294 = vsub.f32 %v5292, %v5293
    %v5295 = vand.u32 %v5294, 4294901760
    %5296 = vmatpush2.msra.mxu0 %v5295
    %v5297 = vand.u32 %v3689, 4294901760
    %v5298 = vsub.f32 %v3689, %v5297
    %v5299 = vand.u32 %v5298, 4294901760
    %v5300 = vsub.f32 %v5298, %v5299
    %v5301 = vand.u32 %v5300, 4294901760
    %5302 = vmatprep.subr.mxu0 %v5301
    %v5303 = vand.u32 %v3688, 4294901760
    %v5304 = vsub.f32 %v3688, %v5303
    %v5305 = vand.u32 %v5304, 4294901760
    %v5306 = vsub.f32 %v5304, %v5305
    %v5307 = vand.u32 %v5306, 4294901760
    %5308 = vmatpush2.msra.mxu0 %v5307
    %v5309 = vand.u32 %v4026, 4294901760
    %5310 = vmatprep.mubr.f32.mxu0 %v5309
    %v5311 = vand.u32 %v4017, 4294901760
    %5312 = vmatmul.mubr.f32.gmra.mxu0 %v5311
    %v5313 = vpop.f32.mrf.mxu0
    %v5314 = vadd.f32 %v5061, %v5313
    %v5315 = vpop.f32.mrf.mxu0
    %v5316 = vadd.f32 %v5063, %v5315
    %5317 = vdwg.mxu0
    %v5318 = vand.u32 %v3961, 4294901760
    %v5319 = vsub.f32 %v3961, %v5318
    %5320 = vmatprep.subr.mxu0 %v5319
    %v5321 = vand.u32 %v3960, 4294901760
    %v5322 = vsub.f32 %v3960, %v5321
    %5323 = vmatpush1.msra.mxu0 %v5322
    %v5324 = vand.u32 %v3918, 4294901760
    %v5325 = vsub.f32 %v3918, %v5324
    %5326 = vmatprep.subr.mxu0 %v5325
    %v5327 = vand.u32 %v3917, 4294901760
    %v5328 = vsub.f32 %v3917, %v5327
    %5329 = vmatpush1.msra.mxu0 %v5328
    %v5330 = vand.u32 %v3376, 4294901760
    %v5331 = vsub.f32 %v3376, %v5330
    %5332 = vmatprep.subr.mxu0 %v5331
    %v5333 = vand.u32 %v3375, 4294901760
    %v5334 = vsub.f32 %v3375, %v5333
    %5335 = vmatpush1.msra.mxu0 %v5334
    %v5336 = vand.u32 %v3875, 4294901760
    %v5337 = vsub.f32 %v3875, %v5336
    %5338 = vmatprep.subr.mxu0 %v5337
    %v5339 = vand.u32 %v3874, 4294901760
    %v5340 = vsub.f32 %v3874, %v5339
    %5341 = vmatpush1.msra.mxu0 %v5340
    %v5342 = vand.u32 %v3832, 4294901760
    %v5343 = vsub.f32 %v3832, %v5342
    %5344 = vmatprep.subr.mxu0 %v5343
    %v5345 = vand.u32 %v3831, 4294901760
    %v5346 = vsub.f32 %v3831, %v5345
    %5347 = vmatpush1.msra.mxu0 %v5346
    %v5348 = vand.u32 %v3721, 4294901760
    %v5349 = vsub.f32 %v3721, %v5348
    %5350 = vmatprep.subr.mxu0 %v5349
    %v5351 = vand.u32 %v3720, 4294901760
    %v5352 = vsub.f32 %v3720, %v5351
    %5353 = vmatpush1.msra.mxu0 %v5352
    %v5354 = vand.u32 %v3781, 4294901760
    %v5355 = vsub.f32 %v3781, %v5354
    %5356 = vmatprep.subr.mxu0 %v5355
    %v5357 = vand.u32 %v3780, 4294901760
    %v5358 = vsub.f32 %v3780, %v5357
    %5359 = vmatpush1.msra.mxu0 %v5358
    %v5360 = vand.u32 %v3661, 4294901760
    %v5361 = vsub.f32 %v3661, %v5360
    %5362 = vmatprep.subr.mxu0 %v5361
    %v5363 = vand.u32 %v3660, 4294901760
    %v5364 = vsub.f32 %v3660, %v5363
    %5365 = vmatpush1.msra.mxu0 %v5364
    %v5366 = vand.u32 %v3722, 4294901760
    %v5367 = vsub.f32 %v3722, %v5366
    %5368 = vmatprep.subr.mxu0 %v5367
    %v5369 = vand.u32 %v3721, 4294901760
    %v5370 = vsub.f32 %v3721, %v5369
    %5371 = vmatpush1.msra.mxu0 %v5370
    %v5372 = vand.u32 %v3618, 4294901760
    %v5373 = vsub.f32 %v3618, %v5372
    %5374 = vmatprep.subr.mxu0 %v5373
    %v5375 = vand.u32 %v3617, 4294901760
    %v5376 = vsub.f32 %v3617, %v5375
    %5377 = vmatpush1.msra.mxu0 %v5376
    %v5378 = vand.u32 %v3575, 4294901760
    %v5379 = vsub.f32 %v3575, %v5378
    %5380 = vmatprep.subr.mxu0 %v5379
    %v5381 = vand.u32 %v3574, 4294901760
    %v5382 = vsub.f32 %v3574, %v5381
    %5383 = vmatpush1.msra.mxu0 %v5382
    %v5384 = vand.u32 %v3376, 4294901760
    %v5385 = vsub.f32 %v3376, %v5384
    %5386 = vmatprep.subr.mxu0 %v5385
    %v5387 = vand.u32 %v3375, 4294901760
    %v5388 = vsub.f32 %v3375, %v5387
    %5389 = vmatpush1.msra.mxu0 %v5388
    %v5390 = vand.u32 %v3531, 4294901760
    %v5391 = vsub.f32 %v3531, %v5390
    %5392 = vmatprep.subr.mxu0 %v5391
    %v5393 = vand.u32 %v3530, 4294901760
    %v5394 = vsub.f32 %v3530, %v5393
    %5395 = vmatpush1.msra.mxu0 %v5394
    %v5396 = vand.u32 %v3488, 4294901760
    %v5397 = vsub.f32 %v3488, %v5396
    %5398 = vmatprep.subr.mxu0 %v5397
    %v5399 = vand.u32 %v3487, 4294901760
    %v5400 = vsub.f32 %v3487, %v5399
    %5401 = vmatpush1.msra.mxu0 %v5400
    %v5402 = vand.u32 %v3688, 4294901760
    %v5403 = vsub.f32 %v3688, %v5402
    %5404 = vmatprep.subr.mxu0 %v5403
    %v5405 = vand.u32 %v3687, 4294901760
    %v5406 = vsub.f32 %v3687, %v5405
    %5407 = vmatpush1.msra.mxu0 %v5406
    %v5408 = vand.u32 %v3437, 4294901760
    %v5409 = vsub.f32 %v3437, %v5408
    %5410 = vmatprep.subr.mxu0 %v5409
    %v5411 = vand.u32 %v3436, 4294901760
    %v5412 = vsub.f32 %v3436, %v5411
    %5413 = vmatpush1.msra.mxu0 %v5412
    %5414 = vmatprep.subr.mxu0 0.0
    %5415 = vmatpush2.msra.mxu0 0.0
    %5416 = vmatprep.subr.mxu0 0.0
    %5417 = vmatpush2.msra.mxu0 0.0
    %5418 = vmatprep.subr.mxu0 0.0
    %5419 = vmatpush2.msra.mxu0 0.0
    %5420 = vmatprep.subr.mxu0 0.0
    %5421 = vmatpush2.msra.mxu0 0.0
    %5422 = vmatprep.subr.mxu0 0.0
    %5423 = vmatpush2.msra.mxu0 0.0
    %5424 = vmatprep.subr.mxu0 0.0
    %5425 = vmatpush2.msra.mxu0 0.0
    %5426 = vmatprep.subr.mxu0 0.0
    %5427 = vmatpush2.msra.mxu0 0.0
    %5428 = vmatprep.subr.mxu0 0.0
    %5429 = vmatpush2.msra.mxu0 0.0
    %5430 = vmatprep.subr.mxu0 0.0
    %5431 = vmatpush2.msra.mxu0 0.0
    %5432 = vmatprep.subr.mxu0 0.0
    %5433 = vmatpush2.msra.mxu0 0.0
    %5434 = vmatprep.subr.mxu0 0.0
    %5435 = vmatpush2.msra.mxu0 0.0
    %5436 = vmatprep.subr.mxu0 0.0
    %5437 = vmatpush2.msra.mxu0 0.0
    %5438 = vmatprep.subr.mxu0 0.0
    %5439 = vmatpush2.msra.mxu0 0.0
    %5440 = vmatprep.subr.mxu0 0.0
    %5441 = vmatpush2.msra.mxu0 0.0
    %v5442 = vand.u32 %v4004, 4294901760
    %v5443 = vsub.f32 %v4004, %v5442
    %5444 = vmatprep.subr.mxu0 %v5443
    %v5445 = vand.u32 %v4003, 4294901760
    %v5446 = vsub.f32 %v4003, %v5445
    %5447 = vmatpush2.msra.mxu0 %v5446
    %v5448 = vand.u32 %v3689, 4294901760
    %v5449 = vsub.f32 %v3689, %v5448
    %5450 = vmatprep.subr.mxu0 %v5449
    %v5451 = vand.u32 %v3688, 4294901760
    %v5452 = vsub.f32 %v3688, %v5451
    %5453 = vmatpush2.msra.mxu0 %v5452
    %v5454 = vand.u32 %v4026, 4294901760
    %v5455 = vsub.f32 %v4026, %v5454
    %5456 = vmatprep.mubr.f32.mxu0 %v5455
    %v5457 = vand.u32 %v4017, 4294901760
    %v5458 = vsub.f32 %v4017, %v5457
    %5459 = vmatmul.mubr.f32.gmra.mxu0 %v5458
    %v5460 = vpop.f32.mrf.mxu0
    %v5461 = vadd.f32 %v5314, %v5460
    %v5462 = vpop.f32.mrf.mxu0
    %v5463 = vadd.f32 %v5316, %v5462
    %5464 = vdwg.mxu0
    %v5465 = vand.u32 %v3961, 4294901760
    %5466 = vmatprep.subr.mxu0 %v5465
    %v5467 = vand.u32 %v3960, 4294901760
    %5468 = vmatpush1.msra.mxu0 %v5467
    %v5469 = vand.u32 %v3918, 4294901760
    %5470 = vmatprep.subr.mxu0 %v5469
    %v5471 = vand.u32 %v3917, 4294901760
    %5472 = vmatpush1.msra.mxu0 %v5471
    %v5473 = vand.u32 %v3376, 4294901760
    %5474 = vmatprep.subr.mxu0 %v5473
    %v5475 = vand.u32 %v3375, 4294901760
    %5476 = vmatpush1.msra.mxu0 %v5475
    %v5477 = vand.u32 %v3875, 4294901760
    %5478 = vmatprep.subr.mxu0 %v5477
    %v5479 = vand.u32 %v3874, 4294901760
    %5480 = vmatpush1.msra.mxu0 %v5479
    %v5481 = vand.u32 %v3832, 4294901760
    %5482 = vmatprep.subr.mxu0 %v5481
    %v5483 = vand.u32 %v3831, 4294901760
    %5484 = vmatpush1.msra.mxu0 %v5483
    %v5485 = vand.u32 %v3721, 4294901760
    %5486 = vmatprep.subr.mxu0 %v5485
    %v5487 = vand.u32 %v3720, 4294901760
    %5488 = vmatpush1.msra.mxu0 %v5487
    %v5489 = vand.u32 %v3781, 4294901760
    %5490 = vmatprep.subr.mxu0 %v5489
    %v5491 = vand.u32 %v3780, 4294901760
    %5492 = vmatpush1.msra.mxu0 %v5491
    %v5493 = vand.u32 %v3661, 4294901760
    %5494 = vmatprep.subr.mxu0 %v5493
    %v5495 = vand.u32 %v3660, 4294901760
    %5496 = vmatpush1.msra.mxu0 %v5495
    %v5497 = vand.u32 %v3722, 4294901760
    %5498 = vmatprep.subr.mxu0 %v5497
    %v5499 = vand.u32 %v3721, 4294901760
    %5500 = vmatpush1.msra.mxu0 %v5499
    %v5501 = vand.u32 %v3618, 4294901760
    %5502 = vmatprep.subr.mxu0 %v5501
    %v5503 = vand.u32 %v3617, 4294901760
    %5504 = vmatpush1.msra.mxu0 %v5503
    %v5505 = vand.u32 %v3575, 4294901760
    %5506 = vmatprep.subr.mxu0 %v5505
    %v5507 = vand.u32 %v3574, 4294901760
    %5508 = vmatpush1.msra.mxu0 %v5507
    %v5509 = vand.u32 %v3376, 4294901760
    %5510 = vmatprep.subr.mxu0 %v5509
    %v5511 = vand.u32 %v3375, 4294901760
    %5512 = vmatpush1.msra.mxu0 %v5511
    %v5513 = vand.u32 %v3531, 4294901760
    %5514 = vmatprep.subr.mxu0 %v5513
    %v5515 = vand.u32 %v3530, 4294901760
    %5516 = vmatpush1.msra.mxu0 %v5515
    %v5517 = vand.u32 %v3488, 4294901760
    %5518 = vmatprep.subr.mxu0 %v5517
    %v5519 = vand.u32 %v3487, 4294901760
    %5520 = vmatpush1.msra.mxu0 %v5519
    %v5521 = vand.u32 %v3688, 4294901760
    %5522 = vmatprep.subr.mxu0 %v5521
    %v5523 = vand.u32 %v3687, 4294901760
    %5524 = vmatpush1.msra.mxu0 %v5523
    %v5525 = vand.u32 %v3437, 4294901760
    %5526 = vmatprep.subr.mxu0 %v5525
    %v5527 = vand.u32 %v3436, 4294901760
    %5528 = vmatpush1.msra.mxu0 %v5527
    %5529 = vmatprep.subr.mxu0 0.0
    %5530 = vmatpush2.msra.mxu0 0.0
    %5531 = vmatprep.subr.mxu0 0.0
    %5532 = vmatpush2.msra.mxu0 0.0
    %5533 = vmatprep.subr.mxu0 0.0
    %5534 = vmatpush2.msra.mxu0 0.0
    %5535 = vmatprep.subr.mxu0 0.0
    %5536 = vmatpush2.msra.mxu0 0.0
    %5537 = vmatprep.subr.mxu0 0.0
    %5538 = vmatpush2.msra.mxu0 0.0
    %5539 = vmatprep.subr.mxu0 0.0
    %5540 = vmatpush2.msra.mxu0 0.0
    %5541 = vmatprep.subr.mxu0 0.0
    %5542 = vmatpush2.msra.mxu0 0.0
    %5543 = vmatprep.subr.mxu0 0.0
    %5544 = vmatpush2.msra.mxu0 0.0
    %5545 = vmatprep.subr.mxu0 0.0
    %5546 = vmatpush2.msra.mxu0 0.0
    %5547 = vmatprep.subr.mxu0 0.0
    %5548 = vmatpush2.msra.mxu0 0.0
    %5549 = vmatprep.subr.mxu0 0.0
    %5550 = vmatpush2.msra.mxu0 0.0
    %5551 = vmatprep.subr.mxu0 0.0
    %5552 = vmatpush2.msra.mxu0 0.0
    %5553 = vmatprep.subr.mxu0 0.0
    %5554 = vmatpush2.msra.mxu0 0.0
    %5555 = vmatprep.subr.mxu0 0.0
    %5556 = vmatpush2.msra.mxu0 0.0
    %v5557 = vand.u32 %v4004, 4294901760
    %5558 = vmatprep.subr.mxu0 %v5557
    %v5559 = vand.u32 %v4003, 4294901760
    %5560 = vmatpush2.msra.mxu0 %v5559
    %v5561 = vand.u32 %v3689, 4294901760
    %5562 = vmatprep.subr.mxu0 %v5561
    %v5563 = vand.u32 %v3688, 4294901760
    %5564 = vmatpush2.msra.mxu0 %v5563
    %v5565 = vand.u32 %v4026, 4294901760
    %v5566 = vsub.f32 %v4026, %v5565
    %v5567 = vand.u32 %v5566, 4294901760
    %5568 = vmatprep.mubr.f32.mxu0 %v5567
    %v5569 = vand.u32 %v4017, 4294901760
    %v5570 = vsub.f32 %v4017, %v5569
    %v5571 = vand.u32 %v5570, 4294901760
    %5572 = vmatmul.mubr.f32.gmra.mxu0 %v5571
    %v5573 = vpop.f32.mrf.mxu0
    %v5574 = vadd.f32 %v5461, %v5573
    %v5575 = vpop.f32.mrf.mxu0
    %v5576 = vadd.f32 %v5463, %v5575
    %5577 = vdwg.mxu0
    %v5578 = vand.u32 %v3961, 4294901760
    %v5579 = vsub.f32 %v3961, %v5578
    %v5580 = vand.u32 %v5579, 4294901760
    %5581 = vmatprep.subr.mxu0 %v5580
    %v5582 = vand.u32 %v3960, 4294901760
    %v5583 = vsub.f32 %v3960, %v5582
    %v5584 = vand.u32 %v5583, 4294901760
    %5585 = vmatpush1.msra.mxu0 %v5584
    %v5586 = vand.u32 %v3918, 4294901760
    %v5587 = vsub.f32 %v3918, %v5586
    %v5588 = vand.u32 %v5587, 4294901760
    %5589 = vmatprep.subr.mxu0 %v5588
    %v5590 = vand.u32 %v3917, 4294901760
    %v5591 = vsub.f32 %v3917, %v5590
    %v5592 = vand.u32 %v5591, 4294901760
    %5593 = vmatpush1.msra.mxu0 %v5592
    %v5594 = vand.u32 %v3376, 4294901760
    %v5595 = vsub.f32 %v3376, %v5594
    %v5596 = vand.u32 %v5595, 4294901760
    %5597 = vmatprep.subr.mxu0 %v5596
    %v5598 = vand.u32 %v3375, 4294901760
    %v5599 = vsub.f32 %v3375, %v5598
    %v5600 = vand.u32 %v5599, 4294901760
    %5601 = vmatpush1.msra.mxu0 %v5600
    %v5602 = vand.u32 %v3875, 4294901760
    %v5603 = vsub.f32 %v3875, %v5602
    %v5604 = vand.u32 %v5603, 4294901760
    %5605 = vmatprep.subr.mxu0 %v5604
    %v5606 = vand.u32 %v3874, 4294901760
    %v5607 = vsub.f32 %v3874, %v5606
    %v5608 = vand.u32 %v5607, 4294901760
    %5609 = vmatpush1.msra.mxu0 %v5608
    %v5610 = vand.u32 %v3832, 4294901760
    %v5611 = vsub.f32 %v3832, %v5610
    %v5612 = vand.u32 %v5611, 4294901760
    %5613 = vmatprep.subr.mxu0 %v5612
    %v5614 = vand.u32 %v3831, 4294901760
    %v5615 = vsub.f32 %v3831, %v5614
    %v5616 = vand.u32 %v5615, 4294901760
    %5617 = vmatpush1.msra.mxu0 %v5616
    %v5618 = vand.u32 %v3721, 4294901760
    %v5619 = vsub.f32 %v3721, %v5618
    %v5620 = vand.u32 %v5619, 4294901760
    %5621 = vmatprep.subr.mxu0 %v5620
    %v5622 = vand.u32 %v3720, 4294901760
    %v5623 = vsub.f32 %v3720, %v5622
    %v5624 = vand.u32 %v5623, 4294901760
    %5625 = vmatpush1.msra.mxu0 %v5624
    %v5626 = vand.u32 %v3781, 4294901760
    %v5627 = vsub.f32 %v3781, %v5626
    %v5628 = vand.u32 %v5627, 4294901760
    %5629 = vmatprep.subr.mxu0 %v5628
    %v5630 = vand.u32 %v3780, 4294901760
    %v5631 = vsub.f32 %v3780, %v5630
    %v5632 = vand.u32 %v5631, 4294901760
    %5633 = vmatpush1.msra.mxu0 %v5632
    %v5634 = vand.u32 %v3661, 4294901760
    %v5635 = vsub.f32 %v3661, %v5634
    %v5636 = vand.u32 %v5635, 4294901760
    %5637 = vmatprep.subr.mxu0 %v5636
    %v5638 = vand.u32 %v3660, 4294901760
    %v5639 = vsub.f32 %v3660, %v5638
    %v5640 = vand.u32 %v5639, 4294901760
    %5641 = vmatpush1.msra.mxu0 %v5640
    %v5642 = vand.u32 %v3722, 4294901760
    %v5643 = vsub.f32 %v3722, %v5642
    %v5644 = vand.u32 %v5643, 4294901760
    %5645 = vmatprep.subr.mxu0 %v5644
    %v5646 = vand.u32 %v3721, 4294901760
    %v5647 = vsub.f32 %v3721, %v5646
    %v5648 = vand.u32 %v5647, 4294901760
    %5649 = vmatpush1.msra.mxu0 %v5648
    %v5650 = vand.u32 %v3618, 4294901760
    %v5651 = vsub.f32 %v3618, %v5650
    %v5652 = vand.u32 %v5651, 4294901760
    %5653 = vmatprep.subr.mxu0 %v5652
    %v5654 = vand.u32 %v3617, 4294901760
    %v5655 = vsub.f32 %v3617, %v5654
    %v5656 = vand.u32 %v5655, 4294901760
    %5657 = vmatpush1.msra.mxu0 %v5656
    %v5658 = vand.u32 %v3575, 4294901760
    %v5659 = vsub.f32 %v3575, %v5658
    %v5660 = vand.u32 %v5659, 4294901760
    %5661 = vmatprep.subr.mxu0 %v5660
    %v5662 = vand.u32 %v3574, 4294901760
    %v5663 = vsub.f32 %v3574, %v5662
    %v5664 = vand.u32 %v5663, 4294901760
    %5665 = vmatpush1.msra.mxu0 %v5664
    %v5666 = vand.u32 %v3376, 4294901760
    %v5667 = vsub.f32 %v3376, %v5666
    %v5668 = vand.u32 %v5667, 4294901760
    %5669 = vmatprep.subr.mxu0 %v5668
    %v5670 = vand.u32 %v3375, 4294901760
    %v5671 = vsub.f32 %v3375, %v5670
    %v5672 = vand.u32 %v5671, 4294901760
    %5673 = vmatpush1.msra.mxu0 %v5672
    %v5674 = vand.u32 %v3531, 4294901760
    %v5675 = vsub.f32 %v3531, %v5674
    %v5676 = vand.u32 %v5675, 4294901760
    %5677 = vmatprep.subr.mxu0 %v5676
    %v5678 = vand.u32 %v3530, 4294901760
    %v5679 = vsub.f32 %v3530, %v5678
    %v5680 = vand.u32 %v5679, 4294901760
    %5681 = vmatpush1.msra.mxu0 %v5680
    %v5682 = vand.u32 %v3488, 4294901760
    %v5683 = vsub.f32 %v3488, %v5682
    %v5684 = vand.u32 %v5683, 4294901760
    %5685 = vmatprep.subr.mxu0 %v5684
    %v5686 = vand.u32 %v3487, 4294901760
    %v5687 = vsub.f32 %v3487, %v5686
    %v5688 = vand.u32 %v5687, 4294901760
    %5689 = vmatpush1.msra.mxu0 %v5688
    %v5690 = vand.u32 %v3688, 4294901760
    %v5691 = vsub.f32 %v3688, %v5690
    %v5692 = vand.u32 %v5691, 4294901760
    %5693 = vmatprep.subr.mxu0 %v5692
    %v5694 = vand.u32 %v3687, 4294901760
    %v5695 = vsub.f32 %v3687, %v5694
    %v5696 = vand.u32 %v5695, 4294901760
    %5697 = vmatpush1.msra.mxu0 %v5696
    %v5698 = vand.u32 %v3437, 4294901760
    %v5699 = vsub.f32 %v3437, %v5698
    %v5700 = vand.u32 %v5699, 4294901760
    %5701 = vmatprep.subr.mxu0 %v5700
    %v5702 = vand.u32 %v3436, 4294901760
    %v5703 = vsub.f32 %v3436, %v5702
    %v5704 = vand.u32 %v5703, 4294901760
    %5705 = vmatpush1.msra.mxu0 %v5704
    %5706 = vmatprep.subr.mxu0 0.0
    %5707 = vmatpush2.msra.mxu0 0.0
    %5708 = vmatprep.subr.mxu0 0.0
    %5709 = vmatpush2.msra.mxu0 0.0
    %5710 = vmatprep.subr.mxu0 0.0
    %5711 = vmatpush2.msra.mxu0 0.0
    %5712 = vmatprep.subr.mxu0 0.0
    %5713 = vmatpush2.msra.mxu0 0.0
    %5714 = vmatprep.subr.mxu0 0.0
    %5715 = vmatpush2.msra.mxu0 0.0
    %5716 = vmatprep.subr.mxu0 0.0
    %5717 = vmatpush2.msra.mxu0 0.0
    %5718 = vmatprep.subr.mxu0 0.0
    %5719 = vmatpush2.msra.mxu0 0.0
    %5720 = vmatprep.subr.mxu0 0.0
    %5721 = vmatpush2.msra.mxu0 0.0
    %5722 = vmatprep.subr.mxu0 0.0
    %5723 = vmatpush2.msra.mxu0 0.0
    %5724 = vmatprep.subr.mxu0 0.0
    %5725 = vmatpush2.msra.mxu0 0.0
    %5726 = vmatprep.subr.mxu0 0.0
    %5727 = vmatpush2.msra.mxu0 0.0
    %5728 = vmatprep.subr.mxu0 0.0
    %5729 = vmatpush2.msra.mxu0 0.0
    %5730 = vmatprep.subr.mxu0 0.0
    %5731 = vmatpush2.msra.mxu0 0.0
    %5732 = vmatprep.subr.mxu0 0.0
    %5733 = vmatpush2.msra.mxu0 0.0
    %v5734 = vand.u32 %v4004, 4294901760
    %v5735 = vsub.f32 %v4004, %v5734
    %v5736 = vand.u32 %v5735, 4294901760
    %5737 = vmatprep.subr.mxu0 %v5736
    %v5738 = vand.u32 %v4003, 4294901760
    %v5739 = vsub.f32 %v4003, %v5738
    %v5740 = vand.u32 %v5739, 4294901760
    %5741 = vmatpush2.msra.mxu0 %v5740
    %v5742 = vand.u32 %v3689, 4294901760
    %v5743 = vsub.f32 %v3689, %v5742
    %v5744 = vand.u32 %v5743, 4294901760
    %5745 = vmatprep.subr.mxu0 %v5744
    %v5746 = vand.u32 %v3688, 4294901760
    %v5747 = vsub.f32 %v3688, %v5746
    %v5748 = vand.u32 %v5747, 4294901760
    %5749 = vmatpush2.msra.mxu0 %v5748
    %v5750 = vand.u32 %v4026, 4294901760
    %5751 = vmatprep.mubr.f32.mxu0 %v5750
    %v5752 = vand.u32 %v4017, 4294901760
    %5753 = vmatmul.mubr.f32.gmra.mxu0 %v5752
    %v5754 = vpop.f32.mrf.mxu0
    %v5755 = vadd.f32 %v5574, %v5754
    %v5756 = vpop.f32.mrf.mxu0
    %v5757 = vadd.f32 %v5576, %v5756
    %5758 = vdwg.mxu0
    %v5759 = vand.u32 %v3961, 4294901760
    %5760 = vmatprep.subr.mxu0 %v5759
    %v5761 = vand.u32 %v3960, 4294901760
    %5762 = vmatpush1.msra.mxu0 %v5761
    %v5763 = vand.u32 %v3918, 4294901760
    %5764 = vmatprep.subr.mxu0 %v5763
    %v5765 = vand.u32 %v3917, 4294901760
    %5766 = vmatpush1.msra.mxu0 %v5765
    %v5767 = vand.u32 %v3376, 4294901760
    %5768 = vmatprep.subr.mxu0 %v5767
    %v5769 = vand.u32 %v3375, 4294901760
    %5770 = vmatpush1.msra.mxu0 %v5769
    %v5771 = vand.u32 %v3875, 4294901760
    %5772 = vmatprep.subr.mxu0 %v5771
    %v5773 = vand.u32 %v3874, 4294901760
    %5774 = vmatpush1.msra.mxu0 %v5773
    %v5775 = vand.u32 %v3832, 4294901760
    %5776 = vmatprep.subr.mxu0 %v5775
    %v5777 = vand.u32 %v3831, 4294901760
    %5778 = vmatpush1.msra.mxu0 %v5777
    %v5779 = vand.u32 %v3721, 4294901760
    %5780 = vmatprep.subr.mxu0 %v5779
    %v5781 = vand.u32 %v3720, 4294901760
    %5782 = vmatpush1.msra.mxu0 %v5781
    %v5783 = vand.u32 %v3781, 4294901760
    %5784 = vmatprep.subr.mxu0 %v5783
    %v5785 = vand.u32 %v3780, 4294901760
    %5786 = vmatpush1.msra.mxu0 %v5785
    %v5787 = vand.u32 %v3661, 4294901760
    %5788 = vmatprep.subr.mxu0 %v5787
    %v5789 = vand.u32 %v3660, 4294901760
    %5790 = vmatpush1.msra.mxu0 %v5789
    %v5791 = vand.u32 %v3722, 4294901760
    %5792 = vmatprep.subr.mxu0 %v5791
    %v5793 = vand.u32 %v3721, 4294901760
    %5794 = vmatpush1.msra.mxu0 %v5793
    %v5795 = vand.u32 %v3618, 4294901760
    %5796 = vmatprep.subr.mxu0 %v5795
    %v5797 = vand.u32 %v3617, 4294901760
    %5798 = vmatpush1.msra.mxu0 %v5797
    %v5799 = vand.u32 %v3575, 4294901760
    %5800 = vmatprep.subr.mxu0 %v5799
    %v5801 = vand.u32 %v3574, 4294901760
    %5802 = vmatpush1.msra.mxu0 %v5801
    %v5803 = vand.u32 %v3376, 4294901760
    %5804 = vmatprep.subr.mxu0 %v5803
    %v5805 = vand.u32 %v3375, 4294901760
    %5806 = vmatpush1.msra.mxu0 %v5805
    %v5807 = vand.u32 %v3531, 4294901760
    %5808 = vmatprep.subr.mxu0 %v5807
    %v5809 = vand.u32 %v3530, 4294901760
    %5810 = vmatpush1.msra.mxu0 %v5809
    %v5811 = vand.u32 %v3488, 4294901760
    %5812 = vmatprep.subr.mxu0 %v5811
    %v5813 = vand.u32 %v3487, 4294901760
    %5814 = vmatpush1.msra.mxu0 %v5813
    %v5815 = vand.u32 %v3688, 4294901760
    %5816 = vmatprep.subr.mxu0 %v5815
    %v5817 = vand.u32 %v3687, 4294901760
    %5818 = vmatpush1.msra.mxu0 %v5817
    %v5819 = vand.u32 %v3437, 4294901760
    %5820 = vmatprep.subr.mxu0 %v5819
    %v5821 = vand.u32 %v3436, 4294901760
    %5822 = vmatpush1.msra.mxu0 %v5821
    %5823 = vmatprep.subr.mxu0 0.0
    %5824 = vmatpush2.msra.mxu0 0.0
    %5825 = vmatprep.subr.mxu0 0.0
    %5826 = vmatpush2.msra.mxu0 0.0
    %5827 = vmatprep.subr.mxu0 0.0
    %5828 = vmatpush2.msra.mxu0 0.0
    %5829 = vmatprep.subr.mxu0 0.0
    %5830 = vmatpush2.msra.mxu0 0.0
    %5831 = vmatprep.subr.mxu0 0.0
    %5832 = vmatpush2.msra.mxu0 0.0
    %5833 = vmatprep.subr.mxu0 0.0
    %5834 = vmatpush2.msra.mxu0 0.0
    %5835 = vmatprep.subr.mxu0 0.0
    %5836 = vmatpush2.msra.mxu0 0.0
    %5837 = vmatprep.subr.mxu0 0.0
    %5838 = vmatpush2.msra.mxu0 0.0
    %5839 = vmatprep.subr.mxu0 0.0
    %5840 = vmatpush2.msra.mxu0 0.0
    %5841 = vmatprep.subr.mxu0 0.0
    %5842 = vmatpush2.msra.mxu0 0.0
    %5843 = vmatprep.subr.mxu0 0.0
    %5844 = vmatpush2.msra.mxu0 0.0
    %5845 = vmatprep.subr.mxu0 0.0
    %5846 = vmatpush2.msra.mxu0 0.0
    %5847 = vmatprep.subr.mxu0 0.0
    %5848 = vmatpush2.msra.mxu0 0.0
    %5849 = vmatprep.subr.mxu0 0.0
    %5850 = vmatpush2.msra.mxu0 0.0
    %v5851 = vand.u32 %v4004, 4294901760
    %5852 = vmatprep.subr.mxu0 %v5851
    %v5853 = vand.u32 %v4003, 4294901760
    %5854 = vmatpush2.msra.mxu0 %v5853
    %v5855 = vand.u32 %v3689, 4294901760
    %5856 = vmatprep.subr.mxu0 %v5855
    %v5857 = vand.u32 %v3688, 4294901760
    %5858 = vmatpush2.msra.mxu0 %v5857
    %v5859 = vand.u32 %v4026, 4294901760
    %5860 = vmatprep.mubr.f32.mxu0 %v5859
    %v5861 = vand.u32 %v4017, 4294901760
    %5862 = vmatmul.mubr.f32.gmra.mxu0 %v5861
    %v5863 = vpop.f32.mrf.mxu0
    %v5864 = vadd.f32 %v5755, %v5863
    %v5865 = vpop.f32.mrf.mxu0
    %v5866 = vadd.f32 %v5757, %v5865
    %5867 = vdwg.mxu0
    %v5868 = vand.u32 %v3963, 4294901760
    %5869 = vmatprep.subr.mxu0 %v5868
    %v5870 = vand.u32 %v3962, 4294901760
    %5871 = vmatpush1.msra.mxu0 %v5870
    %v5872 = vand.u32 %v3920, 4294901760
    %5873 = vmatprep.subr.mxu0 %v5872
    %v5874 = vand.u32 %v3919, 4294901760
    %5875 = vmatpush1.msra.mxu0 %v5874
    %v5876 = vand.u32 %v3378, 4294901760
    %5877 = vmatprep.subr.mxu0 %v5876
    %v5878 = vand.u32 %v3377, 4294901760
    %5879 = vmatpush1.msra.mxu0 %v5878
    %v5880 = vand.u32 %v3877, 4294901760
    %5881 = vmatprep.subr.mxu0 %v5880
    %v5882 = vand.u32 %v3876, 4294901760
    %5883 = vmatpush1.msra.mxu0 %v5882
    %v5884 = vand.u32 %v3834, 4294901760
    %5885 = vmatprep.subr.mxu0 %v5884
    %v5886 = vand.u32 %v3833, 4294901760
    %5887 = vmatpush1.msra.mxu0 %v5886
    %v5888 = vand.u32 %v3723, 4294901760
    %5889 = vmatprep.subr.mxu0 %v5888
    %v5890 = vand.u32 %v3722, 4294901760
    %5891 = vmatpush1.msra.mxu0 %v5890
    %v5892 = vand.u32 %v3783, 4294901760
    %5893 = vmatprep.subr.mxu0 %v5892
    %v5894 = vand.u32 %v3782, 4294901760
    %5895 = vmatpush1.msra.mxu0 %v5894
    %v5896 = vand.u32 %v3663, 4294901760
    %5897 = vmatprep.subr.mxu0 %v5896
    %v5898 = vand.u32 %v3662, 4294901760
    %5899 = vmatpush1.msra.mxu0 %v5898
    %v5900 = vand.u32 %v3724, 4294901760
    %5901 = vmatprep.subr.mxu0 %v5900
    %v5902 = vand.u32 %v3723, 4294901760
    %5903 = vmatpush1.msra.mxu0 %v5902
    %v5904 = vand.u32 %v3620, 4294901760
    %5905 = vmatprep.subr.mxu0 %v5904
    %v5906 = vand.u32 %v3619, 4294901760
    %5907 = vmatpush1.msra.mxu0 %v5906
    %v5908 = vand.u32 %v3577, 4294901760
    %5909 = vmatprep.subr.mxu0 %v5908
    %v5910 = vand.u32 %v3576, 4294901760
    %5911 = vmatpush1.msra.mxu0 %v5910
    %v5912 = vand.u32 %v3378, 4294901760
    %5913 = vmatprep.subr.mxu0 %v5912
    %v5914 = vand.u32 %v3377, 4294901760
    %5915 = vmatpush1.msra.mxu0 %v5914
    %v5916 = vand.u32 %v3533, 4294901760
    %5917 = vmatprep.subr.mxu0 %v5916
    %v5918 = vand.u32 %v3532, 4294901760
    %5919 = vmatpush1.msra.mxu0 %v5918
    %v5920 = vand.u32 %v3490, 4294901760
    %5921 = vmatprep.subr.mxu0 %v5920
    %v5922 = vand.u32 %v3489, 4294901760
    %5923 = vmatpush1.msra.mxu0 %v5922
    %v5924 = vand.u32 %v3690, 4294901760
    %5925 = vmatprep.subr.mxu0 %v5924
    %v5926 = vand.u32 %v3689, 4294901760
    %5927 = vmatpush1.msra.mxu0 %v5926
    %v5928 = vand.u32 %v3439, 4294901760
    %5929 = vmatprep.subr.mxu0 %v5928
    %v5930 = vand.u32 %v3438, 4294901760
    %5931 = vmatpush1.msra.mxu0 %v5930
    %5932 = vmatprep.subr.mxu0 0.0
    %5933 = vmatpush2.msra.mxu0 0.0
    %5934 = vmatprep.subr.mxu0 0.0
    %5935 = vmatpush2.msra.mxu0 0.0
    %5936 = vmatprep.subr.mxu0 0.0
    %5937 = vmatpush2.msra.mxu0 0.0
    %5938 = vmatprep.subr.mxu0 0.0
    %5939 = vmatpush2.msra.mxu0 0.0
    %5940 = vmatprep.subr.mxu0 0.0
    %5941 = vmatpush2.msra.mxu0 0.0
    %5942 = vmatprep.subr.mxu0 0.0
    %5943 = vmatpush2.msra.mxu0 0.0
    %5944 = vmatprep.subr.mxu0 0.0
    %5945 = vmatpush2.msra.mxu0 0.0
    %5946 = vmatprep.subr.mxu0 0.0
    %5947 = vmatpush2.msra.mxu0 0.0
    %5948 = vmatprep.subr.mxu0 0.0
    %5949 = vmatpush2.msra.mxu0 0.0
    %5950 = vmatprep.subr.mxu0 0.0
    %5951 = vmatpush2.msra.mxu0 0.0
    %5952 = vmatprep.subr.mxu0 0.0
    %5953 = vmatpush2.msra.mxu0 0.0
    %5954 = vmatprep.subr.mxu0 0.0
    %5955 = vmatpush2.msra.mxu0 0.0
    %5956 = vmatprep.subr.mxu0 0.0
    %5957 = vmatpush2.msra.mxu0 0.0
    %5958 = vmatprep.subr.mxu0 0.0
    %5959 = vmatpush2.msra.mxu0 0.0
    %v5960 = vand.u32 %v4006, 4294901760
    %5961 = vmatprep.subr.mxu0 %v5960
    %v5962 = vand.u32 %v4005, 4294901760
    %5963 = vmatpush2.msra.mxu0 %v5962
    %v5964 = vand.u32 %v3691, 4294901760
    %5965 = vmatprep.subr.mxu0 %v5964
    %v5966 = vand.u32 %v3690, 4294901760
    %5967 = vmatpush2.msra.mxu0 %v5966
    %v5968 = vand.u32 %v4026, 4294901760
    %v5969 = vsub.f32 %v4026, %v5968
    %v5970 = vand.u32 %v5969, 4294901760
    %v5971 = vsub.f32 %v5969, %v5970
    %v5972 = vand.u32 %v5971, 4294901760
    %5973 = vmatprep.mubr.f32.mxu0 %v5972
    %v5974 = vand.u32 %v4017, 4294901760
    %v5975 = vsub.f32 %v4017, %v5974
    %v5976 = vand.u32 %v5975, 4294901760
    %v5977 = vsub.f32 %v5975, %v5976
    %v5978 = vand.u32 %v5977, 4294901760
    %5979 = vmatmul.mubr.f32.gmra.mxu0 %v5978
    %v5980 = vpop.f32.mrf.mxu0
    %v5981 = vadd.f32 %v4023, %v5980
    %v5982 = vpop.f32.mrf.mxu0
    %v5983 = vadd.f32 %v4023, %v5982
    %5984 = vdwg.mxu0
    %v5985 = vand.u32 %v3963, 4294901760
    %v5986 = vsub.f32 %v3963, %v5985
    %v5987 = vand.u32 %v5986, 4294901760
    %v5988 = vsub.f32 %v5986, %v5987
    %v5989 = vand.u32 %v5988, 4294901760
    %5990 = vmatprep.subr.mxu0 %v5989
    %v5991 = vand.u32 %v3962, 4294901760
    %v5992 = vsub.f32 %v3962, %v5991
    %v5993 = vand.u32 %v5992, 4294901760
    %v5994 = vsub.f32 %v5992, %v5993
    %v5995 = vand.u32 %v5994, 4294901760
    %5996 = vmatpush1.msra.mxu0 %v5995
    %v5997 = vand.u32 %v3920, 4294901760
    %v5998 = vsub.f32 %v3920, %v5997
    %v5999 = vand.u32 %v5998, 4294901760
    %v6000 = vsub.f32 %v5998, %v5999
    %v6001 = vand.u32 %v6000, 4294901760
    %6002 = vmatprep.subr.mxu0 %v6001
    %v6003 = vand.u32 %v3919, 4294901760
    %v6004 = vsub.f32 %v3919, %v6003
    %v6005 = vand.u32 %v6004, 4294901760
    %v6006 = vsub.f32 %v6004, %v6005
    %v6007 = vand.u32 %v6006, 4294901760
    %6008 = vmatpush1.msra.mxu0 %v6007
    %v6009 = vand.u32 %v3378, 4294901760
    %v6010 = vsub.f32 %v3378, %v6009
    %v6011 = vand.u32 %v6010, 4294901760
    %v6012 = vsub.f32 %v6010, %v6011
    %v6013 = vand.u32 %v6012, 4294901760
    %6014 = vmatprep.subr.mxu0 %v6013
    %v6015 = vand.u32 %v3377, 4294901760
    %v6016 = vsub.f32 %v3377, %v6015
    %v6017 = vand.u32 %v6016, 4294901760
    %v6018 = vsub.f32 %v6016, %v6017
    %v6019 = vand.u32 %v6018, 4294901760
    %6020 = vmatpush1.msra.mxu0 %v6019
    %v6021 = vand.u32 %v3877, 4294901760
    %v6022 = vsub.f32 %v3877, %v6021
    %v6023 = vand.u32 %v6022, 4294901760
    %v6024 = vsub.f32 %v6022, %v6023
    %v6025 = vand.u32 %v6024, 4294901760
    %6026 = vmatprep.subr.mxu0 %v6025
    %v6027 = vand.u32 %v3876, 4294901760
    %v6028 = vsub.f32 %v3876, %v6027
    %v6029 = vand.u32 %v6028, 4294901760
    %v6030 = vsub.f32 %v6028, %v6029
    %v6031 = vand.u32 %v6030, 4294901760
    %6032 = vmatpush1.msra.mxu0 %v6031
    %v6033 = vand.u32 %v3834, 4294901760
    %v6034 = vsub.f32 %v3834, %v6033
    %v6035 = vand.u32 %v6034, 4294901760
    %v6036 = vsub.f32 %v6034, %v6035
    %v6037 = vand.u32 %v6036, 4294901760
    %6038 = vmatprep.subr.mxu0 %v6037
    %v6039 = vand.u32 %v3833, 4294901760
    %v6040 = vsub.f32 %v3833, %v6039
    %v6041 = vand.u32 %v6040, 4294901760
    %v6042 = vsub.f32 %v6040, %v6041
    %v6043 = vand.u32 %v6042, 4294901760
    %6044 = vmatpush1.msra.mxu0 %v6043
    %v6045 = vand.u32 %v3723, 4294901760
    %v6046 = vsub.f32 %v3723, %v6045
    %v6047 = vand.u32 %v6046, 4294901760
    %v6048 = vsub.f32 %v6046, %v6047
    %v6049 = vand.u32 %v6048, 4294901760
    %6050 = vmatprep.subr.mxu0 %v6049
    %v6051 = vand.u32 %v3722, 4294901760
    %v6052 = vsub.f32 %v3722, %v6051
    %v6053 = vand.u32 %v6052, 4294901760
    %v6054 = vsub.f32 %v6052, %v6053
    %v6055 = vand.u32 %v6054, 4294901760
    %6056 = vmatpush1.msra.mxu0 %v6055
    %v6057 = vand.u32 %v3783, 4294901760
    %v6058 = vsub.f32 %v3783, %v6057
    %v6059 = vand.u32 %v6058, 4294901760
    %v6060 = vsub.f32 %v6058, %v6059
    %v6061 = vand.u32 %v6060, 4294901760
    %6062 = vmatprep.subr.mxu0 %v6061
    %v6063 = vand.u32 %v3782, 4294901760
    %v6064 = vsub.f32 %v3782, %v6063
    %v6065 = vand.u32 %v6064, 4294901760
    %v6066 = vsub.f32 %v6064, %v6065
    %v6067 = vand.u32 %v6066, 4294901760
    %6068 = vmatpush1.msra.mxu0 %v6067
    %v6069 = vand.u32 %v3663, 4294901760
    %v6070 = vsub.f32 %v3663, %v6069
    %v6071 = vand.u32 %v6070, 4294901760
    %v6072 = vsub.f32 %v6070, %v6071
    %v6073 = vand.u32 %v6072, 4294901760
    %6074 = vmatprep.subr.mxu0 %v6073
    %v6075 = vand.u32 %v3662, 4294901760
    %v6076 = vsub.f32 %v3662, %v6075
    %v6077 = vand.u32 %v6076, 4294901760
    %v6078 = vsub.f32 %v6076, %v6077
    %v6079 = vand.u32 %v6078, 4294901760
    %6080 = vmatpush1.msra.mxu0 %v6079
    %v6081 = vand.u32 %v3724, 4294901760
    %v6082 = vsub.f32 %v3724, %v6081
    %v6083 = vand.u32 %v6082, 4294901760
    %v6084 = vsub.f32 %v6082, %v6083
    %v6085 = vand.u32 %v6084, 4294901760
    %6086 = vmatprep.subr.mxu0 %v6085
    %v6087 = vand.u32 %v3723, 4294901760
    %v6088 = vsub.f32 %v3723, %v6087
    %v6089 = vand.u32 %v6088, 4294901760
    %v6090 = vsub.f32 %v6088, %v6089
    %v6091 = vand.u32 %v6090, 4294901760
    %6092 = vmatpush1.msra.mxu0 %v6091
    %v6093 = vand.u32 %v3620, 4294901760
    %v6094 = vsub.f32 %v3620, %v6093
    %v6095 = vand.u32 %v6094, 4294901760
    %v6096 = vsub.f32 %v6094, %v6095
    %v6097 = vand.u32 %v6096, 4294901760
    %6098 = vmatprep.subr.mxu0 %v6097
    %v6099 = vand.u32 %v3619, 4294901760
    %v6100 = vsub.f32 %v3619, %v6099
    %v6101 = vand.u32 %v6100, 4294901760
    %v6102 = vsub.f32 %v6100, %v6101
    %v6103 = vand.u32 %v6102, 4294901760
    %6104 = vmatpush1.msra.mxu0 %v6103
    %v6105 = vand.u32 %v3577, 4294901760
    %v6106 = vsub.f32 %v3577, %v6105
    %v6107 = vand.u32 %v6106, 4294901760
    %v6108 = vsub.f32 %v6106, %v6107
    %v6109 = vand.u32 %v6108, 4294901760
    %6110 = vmatprep.subr.mxu0 %v6109
    %v6111 = vand.u32 %v3576, 4294901760
    %v6112 = vsub.f32 %v3576, %v6111
    %v6113 = vand.u32 %v6112, 4294901760
    %v6114 = vsub.f32 %v6112, %v6113
    %v6115 = vand.u32 %v6114, 4294901760
    %6116 = vmatpush1.msra.mxu0 %v6115
    %v6117 = vand.u32 %v3378, 4294901760
    %v6118 = vsub.f32 %v3378, %v6117
    %v6119 = vand.u32 %v6118, 4294901760
    %v6120 = vsub.f32 %v6118, %v6119
    %v6121 = vand.u32 %v6120, 4294901760
    %6122 = vmatprep.subr.mxu0 %v6121
    %v6123 = vand.u32 %v3377, 4294901760
    %v6124 = vsub.f32 %v3377, %v6123
    %v6125 = vand.u32 %v6124, 4294901760
    %v6126 = vsub.f32 %v6124, %v6125
    %v6127 = vand.u32 %v6126, 4294901760
    %6128 = vmatpush1.msra.mxu0 %v6127
    %v6129 = vand.u32 %v3533, 4294901760
    %v6130 = vsub.f32 %v3533, %v6129
    %v6131 = vand.u32 %v6130, 4294901760
    %v6132 = vsub.f32 %v6130, %v6131
    %v6133 = vand.u32 %v6132, 4294901760
    %6134 = vmatprep.subr.mxu0 %v6133
    %v6135 = vand.u32 %v3532, 4294901760
    %v6136 = vsub.f32 %v3532, %v6135
    %v6137 = vand.u32 %v6136, 4294901760
    %v6138 = vsub.f32 %v6136, %v6137
    %v6139 = vand.u32 %v6138, 4294901760
    %6140 = vmatpush1.msra.mxu0 %v6139
    %v6141 = vand.u32 %v3490, 4294901760
    %v6142 = vsub.f32 %v3490, %v6141
    %v6143 = vand.u32 %v6142, 4294901760
    %v6144 = vsub.f32 %v6142, %v6143
    %v6145 = vand.u32 %v6144, 4294901760
    %6146 = vmatprep.subr.mxu0 %v6145
    %v6147 = vand.u32 %v3489, 4294901760
    %v6148 = vsub.f32 %v3489, %v6147
    %v6149 = vand.u32 %v6148, 4294901760
    %v6150 = vsub.f32 %v6148, %v6149
    %v6151 = vand.u32 %v6150, 4294901760
    %6152 = vmatpush1.msra.mxu0 %v6151
    %v6153 = vand.u32 %v3690, 4294901760
    %v6154 = vsub.f32 %v3690, %v6153
    %v6155 = vand.u32 %v6154, 4294901760
    %v6156 = vsub.f32 %v6154, %v6155
    %v6157 = vand.u32 %v6156, 4294901760
    %6158 = vmatprep.subr.mxu0 %v6157
    %v6159 = vand.u32 %v3689, 4294901760
    %v6160 = vsub.f32 %v3689, %v6159
    %v6161 = vand.u32 %v6160, 4294901760
    %v6162 = vsub.f32 %v6160, %v6161
    %v6163 = vand.u32 %v6162, 4294901760
    %6164 = vmatpush1.msra.mxu0 %v6163
    %v6165 = vand.u32 %v3439, 4294901760
    %v6166 = vsub.f32 %v3439, %v6165
    %v6167 = vand.u32 %v6166, 4294901760
    %v6168 = vsub.f32 %v6166, %v6167
    %v6169 = vand.u32 %v6168, 4294901760
    %6170 = vmatprep.subr.mxu0 %v6169
    %v6171 = vand.u32 %v3438, 4294901760
    %v6172 = vsub.f32 %v3438, %v6171
    %v6173 = vand.u32 %v6172, 4294901760
    %v6174 = vsub.f32 %v6172, %v6173
    %v6175 = vand.u32 %v6174, 4294901760
    %6176 = vmatpush1.msra.mxu0 %v6175
    %6177 = vmatprep.subr.mxu0 0.0
    %6178 = vmatpush2.msra.mxu0 0.0
    %6179 = vmatprep.subr.mxu0 0.0
    %6180 = vmatpush2.msra.mxu0 0.0
    %6181 = vmatprep.subr.mxu0 0.0
    %6182 = vmatpush2.msra.mxu0 0.0
    %6183 = vmatprep.subr.mxu0 0.0
    %6184 = vmatpush2.msra.mxu0 0.0
    %6185 = vmatprep.subr.mxu0 0.0
    %6186 = vmatpush2.msra.mxu0 0.0
    %6187 = vmatprep.subr.mxu0 0.0
    %6188 = vmatpush2.msra.mxu0 0.0
    %6189 = vmatprep.subr.mxu0 0.0
    %6190 = vmatpush2.msra.mxu0 0.0
    %6191 = vmatprep.subr.mxu0 0.0
    %6192 = vmatpush2.msra.mxu0 0.0
    %6193 = vmatprep.subr.mxu0 0.0
    %6194 = vmatpush2.msra.mxu0 0.0
    %6195 = vmatprep.subr.mxu0 0.0
    %6196 = vmatpush2.msra.mxu0 0.0
    %6197 = vmatprep.subr.mxu0 0.0
    %6198 = vmatpush2.msra.mxu0 0.0
    %6199 = vmatprep.subr.mxu0 0.0
    %6200 = vmatpush2.msra.mxu0 0.0
    %6201 = vmatprep.subr.mxu0 0.0
    %6202 = vmatpush2.msra.mxu0 0.0
    %6203 = vmatprep.subr.mxu0 0.0
    %6204 = vmatpush2.msra.mxu0 0.0
    %v6205 = vand.u32 %v4006, 4294901760
    %v6206 = vsub.f32 %v4006, %v6205
    %v6207 = vand.u32 %v6206, 4294901760
    %v6208 = vsub.f32 %v6206, %v6207
    %v6209 = vand.u32 %v6208, 4294901760
    %6210 = vmatprep.subr.mxu0 %v6209
    %v6211 = vand.u32 %v4005, 4294901760
    %v6212 = vsub.f32 %v4005, %v6211
    %v6213 = vand.u32 %v6212, 4294901760
    %v6214 = vsub.f32 %v6212, %v6213
    %v6215 = vand.u32 %v6214, 4294901760
    %6216 = vmatpush2.msra.mxu0 %v6215
    %v6217 = vand.u32 %v3691, 4294901760
    %v6218 = vsub.f32 %v3691, %v6217
    %v6219 = vand.u32 %v6218, 4294901760
    %v6220 = vsub.f32 %v6218, %v6219
    %v6221 = vand.u32 %v6220, 4294901760
    %6222 = vmatprep.subr.mxu0 %v6221
    %v6223 = vand.u32 %v3690, 4294901760
    %v6224 = vsub.f32 %v3690, %v6223
    %v6225 = vand.u32 %v6224, 4294901760
    %v6226 = vsub.f32 %v6224, %v6225
    %v6227 = vand.u32 %v6226, 4294901760
    %6228 = vmatpush2.msra.mxu0 %v6227
    %v6229 = vand.u32 %v4026, 4294901760
    %6230 = vmatprep.mubr.f32.mxu0 %v6229
    %v6231 = vand.u32 %v4017, 4294901760
    %6232 = vmatmul.mubr.f32.gmra.mxu0 %v6231
    %v6233 = vpop.f32.mrf.mxu0
    %v6234 = vadd.f32 %v5981, %v6233
    %v6235 = vpop.f32.mrf.mxu0
    %v6236 = vadd.f32 %v5983, %v6235
    %6237 = vdwg.mxu0
    %v6238 = vand.u32 %v3963, 4294901760
    %v6239 = vsub.f32 %v3963, %v6238
    %6240 = vmatprep.subr.mxu0 %v6239
    %v6241 = vand.u32 %v3962, 4294901760
    %v6242 = vsub.f32 %v3962, %v6241
    %6243 = vmatpush1.msra.mxu0 %v6242
    %v6244 = vand.u32 %v3920, 4294901760
    %v6245 = vsub.f32 %v3920, %v6244
    %6246 = vmatprep.subr.mxu0 %v6245
    %v6247 = vand.u32 %v3919, 4294901760
    %v6248 = vsub.f32 %v3919, %v6247
    %6249 = vmatpush1.msra.mxu0 %v6248
    %v6250 = vand.u32 %v3378, 4294901760
    %v6251 = vsub.f32 %v3378, %v6250
    %6252 = vmatprep.subr.mxu0 %v6251
    %v6253 = vand.u32 %v3377, 4294901760
    %v6254 = vsub.f32 %v3377, %v6253
    %6255 = vmatpush1.msra.mxu0 %v6254
    %v6256 = vand.u32 %v3877, 4294901760
    %v6257 = vsub.f32 %v3877, %v6256
    %6258 = vmatprep.subr.mxu0 %v6257
    %v6259 = vand.u32 %v3876, 4294901760
    %v6260 = vsub.f32 %v3876, %v6259
    %6261 = vmatpush1.msra.mxu0 %v6260
    %v6262 = vand.u32 %v3834, 4294901760
    %v6263 = vsub.f32 %v3834, %v6262
    %6264 = vmatprep.subr.mxu0 %v6263
    %v6265 = vand.u32 %v3833, 4294901760
    %v6266 = vsub.f32 %v3833, %v6265
    %6267 = vmatpush1.msra.mxu0 %v6266
    %v6268 = vand.u32 %v3723, 4294901760
    %v6269 = vsub.f32 %v3723, %v6268
    %6270 = vmatprep.subr.mxu0 %v6269
    %v6271 = vand.u32 %v3722, 4294901760
    %v6272 = vsub.f32 %v3722, %v6271
    %6273 = vmatpush1.msra.mxu0 %v6272
    %v6274 = vand.u32 %v3783, 4294901760
    %v6275 = vsub.f32 %v3783, %v6274
    %6276 = vmatprep.subr.mxu0 %v6275
    %v6277 = vand.u32 %v3782, 4294901760
    %v6278 = vsub.f32 %v3782, %v6277
    %6279 = vmatpush1.msra.mxu0 %v6278
    %v6280 = vand.u32 %v3663, 4294901760
    %v6281 = vsub.f32 %v3663, %v6280
    %6282 = vmatprep.subr.mxu0 %v6281
    %v6283 = vand.u32 %v3662, 4294901760
    %v6284 = vsub.f32 %v3662, %v6283
    %6285 = vmatpush1.msra.mxu0 %v6284
    %v6286 = vand.u32 %v3724, 4294901760
    %v6287 = vsub.f32 %v3724, %v6286
    %6288 = vmatprep.subr.mxu0 %v6287
    %v6289 = vand.u32 %v3723, 4294901760
    %v6290 = vsub.f32 %v3723, %v6289
    %6291 = vmatpush1.msra.mxu0 %v6290
    %v6292 = vand.u32 %v3620, 4294901760
    %v6293 = vsub.f32 %v3620, %v6292
    %6294 = vmatprep.subr.mxu0 %v6293
    %v6295 = vand.u32 %v3619, 4294901760
    %v6296 = vsub.f32 %v3619, %v6295
    %6297 = vmatpush1.msra.mxu0 %v6296
    %v6298 = vand.u32 %v3577, 4294901760
    %v6299 = vsub.f32 %v3577, %v6298
    %6300 = vmatprep.subr.mxu0 %v6299
    %v6301 = vand.u32 %v3576, 4294901760
    %v6302 = vsub.f32 %v3576, %v6301
    %6303 = vmatpush1.msra.mxu0 %v6302
    %v6304 = vand.u32 %v3378, 4294901760
    %v6305 = vsub.f32 %v3378, %v6304
    %6306 = vmatprep.subr.mxu0 %v6305
    %v6307 = vand.u32 %v3377, 4294901760
    %v6308 = vsub.f32 %v3377, %v6307
    %6309 = vmatpush1.msra.mxu0 %v6308
    %v6310 = vand.u32 %v3533, 4294901760
    %v6311 = vsub.f32 %v3533, %v6310
    %6312 = vmatprep.subr.mxu0 %v6311
    %v6313 = vand.u32 %v3532, 4294901760
    %v6314 = vsub.f32 %v3532, %v6313
    %6315 = vmatpush1.msra.mxu0 %v6314
    %v6316 = vand.u32 %v3490, 4294901760
    %v6317 = vsub.f32 %v3490, %v6316
    %6318 = vmatprep.subr.mxu0 %v6317
    %v6319 = vand.u32 %v3489, 4294901760
    %v6320 = vsub.f32 %v3489, %v6319
    %6321 = vmatpush1.msra.mxu0 %v6320
    %v6322 = vand.u32 %v3690, 4294901760
    %v6323 = vsub.f32 %v3690, %v6322
    %6324 = vmatprep.subr.mxu0 %v6323
    %v6325 = vand.u32 %v3689, 4294901760
    %v6326 = vsub.f32 %v3689, %v6325
    %6327 = vmatpush1.msra.mxu0 %v6326
    %v6328 = vand.u32 %v3439, 4294901760
    %v6329 = vsub.f32 %v3439, %v6328
    %6330 = vmatprep.subr.mxu0 %v6329
    %v6331 = vand.u32 %v3438, 4294901760
    %v6332 = vsub.f32 %v3438, %v6331
    %6333 = vmatpush1.msra.mxu0 %v6332
    %6334 = vmatprep.subr.mxu0 0.0
    %6335 = vmatpush2.msra.mxu0 0.0
    %6336 = vmatprep.subr.mxu0 0.0
    %6337 = vmatpush2.msra.mxu0 0.0
    %6338 = vmatprep.subr.mxu0 0.0
    %6339 = vmatpush2.msra.mxu0 0.0
    %6340 = vmatprep.subr.mxu0 0.0
    %6341 = vmatpush2.msra.mxu0 0.0
    %6342 = vmatprep.subr.mxu0 0.0
    %6343 = vmatpush2.msra.mxu0 0.0
    %6344 = vmatprep.subr.mxu0 0.0
    %6345 = vmatpush2.msra.mxu0 0.0
    %6346 = vmatprep.subr.mxu0 0.0
    %6347 = vmatpush2.msra.mxu0 0.0
    %6348 = vmatprep.subr.mxu0 0.0
    %6349 = vmatpush2.msra.mxu0 0.0
    %6350 = vmatprep.subr.mxu0 0.0
    %6351 = vmatpush2.msra.mxu0 0.0
    %6352 = vmatprep.subr.mxu0 0.0
    %6353 = vmatpush2.msra.mxu0 0.0
    %6354 = vmatprep.subr.mxu0 0.0
    %6355 = vmatpush2.msra.mxu0 0.0
    %6356 = vmatprep.subr.mxu0 0.0
    %6357 = vmatpush2.msra.mxu0 0.0
    %6358 = vmatprep.subr.mxu0 0.0
    %6359 = vmatpush2.msra.mxu0 0.0
    %6360 = vmatprep.subr.mxu0 0.0
    %6361 = vmatpush2.msra.mxu0 0.0
    %v6362 = vand.u32 %v4006, 4294901760
    %v6363 = vsub.f32 %v4006, %v6362
    %6364 = vmatprep.subr.mxu0 %v6363
    %v6365 = vand.u32 %v4005, 4294901760
    %v6366 = vsub.f32 %v4005, %v6365
    %6367 = vmatpush2.msra.mxu0 %v6366
    %v6368 = vand.u32 %v3691, 4294901760
    %v6369 = vsub.f32 %v3691, %v6368
    %6370 = vmatprep.subr.mxu0 %v6369
    %v6371 = vand.u32 %v3690, 4294901760
    %v6372 = vsub.f32 %v3690, %v6371
    %6373 = vmatpush2.msra.mxu0 %v6372
    %v6374 = vand.u32 %v4026, 4294901760
    %v6375 = vsub.f32 %v4026, %v6374
    %6376 = vmatprep.mubr.f32.mxu0 %v6375
    %v6377 = vand.u32 %v4017, 4294901760
    %v6378 = vsub.f32 %v4017, %v6377
    %6379 = vmatmul.mubr.f32.gmra.mxu0 %v6378
    %v6380 = vpop.f32.mrf.mxu0
    %v6381 = vadd.f32 %v6234, %v6380
    %v6382 = vpop.f32.mrf.mxu0
    %v6383 = vadd.f32 %v6236, %v6382
    %6384 = vdwg.mxu0
    %v6385 = vand.u32 %v3963, 4294901760
    %6386 = vmatprep.subr.mxu0 %v6385
    %v6387 = vand.u32 %v3962, 4294901760
    %6388 = vmatpush1.msra.mxu0 %v6387
    %v6389 = vand.u32 %v3920, 4294901760
    %6390 = vmatprep.subr.mxu0 %v6389
    %v6391 = vand.u32 %v3919, 4294901760
    %6392 = vmatpush1.msra.mxu0 %v6391
    %v6393 = vand.u32 %v3378, 4294901760
    %6394 = vmatprep.subr.mxu0 %v6393
    %v6395 = vand.u32 %v3377, 4294901760
    %6396 = vmatpush1.msra.mxu0 %v6395
    %v6397 = vand.u32 %v3877, 4294901760
    %6398 = vmatprep.subr.mxu0 %v6397
    %v6399 = vand.u32 %v3876, 4294901760
    %6400 = vmatpush1.msra.mxu0 %v6399
    %v6401 = vand.u32 %v3834, 4294901760
    %6402 = vmatprep.subr.mxu0 %v6401
    %v6403 = vand.u32 %v3833, 4294901760
    %6404 = vmatpush1.msra.mxu0 %v6403
    %v6405 = vand.u32 %v3723, 4294901760
    %6406 = vmatprep.subr.mxu0 %v6405
    %v6407 = vand.u32 %v3722, 4294901760
    %6408 = vmatpush1.msra.mxu0 %v6407
    %v6409 = vand.u32 %v3783, 4294901760
    %6410 = vmatprep.subr.mxu0 %v6409
    %v6411 = vand.u32 %v3782, 4294901760
    %6412 = vmatpush1.msra.mxu0 %v6411
    %v6413 = vand.u32 %v3663, 4294901760
    %6414 = vmatprep.subr.mxu0 %v6413
    %v6415 = vand.u32 %v3662, 4294901760
    %6416 = vmatpush1.msra.mxu0 %v6415
    %v6417 = vand.u32 %v3724, 4294901760
    %6418 = vmatprep.subr.mxu0 %v6417
    %v6419 = vand.u32 %v3723, 4294901760
    %6420 = vmatpush1.msra.mxu0 %v6419
    %v6421 = vand.u32 %v3620, 4294901760
    %6422 = vmatprep.subr.mxu0 %v6421
    %v6423 = vand.u32 %v3619, 4294901760
    %6424 = vmatpush1.msra.mxu0 %v6423
    %v6425 = vand.u32 %v3577, 4294901760
    %6426 = vmatprep.subr.mxu0 %v6425
    %v6427 = vand.u32 %v3576, 4294901760
    %6428 = vmatpush1.msra.mxu0 %v6427
    %v6429 = vand.u32 %v3378, 4294901760
    %6430 = vmatprep.subr.mxu0 %v6429
    %v6431 = vand.u32 %v3377, 4294901760
    %6432 = vmatpush1.msra.mxu0 %v6431
    %v6433 = vand.u32 %v3533, 4294901760
    %6434 = vmatprep.subr.mxu0 %v6433
    %v6435 = vand.u32 %v3532, 4294901760
    %6436 = vmatpush1.msra.mxu0 %v6435
    %v6437 = vand.u32 %v3490, 4294901760
    %6438 = vmatprep.subr.mxu0 %v6437
    %v6439 = vand.u32 %v3489, 4294901760
    %6440 = vmatpush1.msra.mxu0 %v6439
    %v6441 = vand.u32 %v3690, 4294901760
    %6442 = vmatprep.subr.mxu0 %v6441
    %v6443 = vand.u32 %v3689, 4294901760
    %6444 = vmatpush1.msra.mxu0 %v6443
    %v6445 = vand.u32 %v3439, 4294901760
    %6446 = vmatprep.subr.mxu0 %v6445
    %v6447 = vand.u32 %v3438, 4294901760
    %6448 = vmatpush1.msra.mxu0 %v6447
    %6449 = vmatprep.subr.mxu0 0.0
    %6450 = vmatpush2.msra.mxu0 0.0
    %6451 = vmatprep.subr.mxu0 0.0
    %6452 = vmatpush2.msra.mxu0 0.0
    %6453 = vmatprep.subr.mxu0 0.0
    %6454 = vmatpush2.msra.mxu0 0.0
    %6455 = vmatprep.subr.mxu0 0.0
    %6456 = vmatpush2.msra.mxu0 0.0
    %6457 = vmatprep.subr.mxu0 0.0
    %6458 = vmatpush2.msra.mxu0 0.0
    %6459 = vmatprep.subr.mxu0 0.0
    %6460 = vmatpush2.msra.mxu0 0.0
    %6461 = vmatprep.subr.mxu0 0.0
    %6462 = vmatpush2.msra.mxu0 0.0
    %6463 = vmatprep.subr.mxu0 0.0
    %6464 = vmatpush2.msra.mxu0 0.0
    %6465 = vmatprep.subr.mxu0 0.0
    %6466 = vmatpush2.msra.mxu0 0.0
    %6467 = vmatprep.subr.mxu0 0.0
    %6468 = vmatpush2.msra.mxu0 0.0
    %6469 = vmatprep.subr.mxu0 0.0
    %6470 = vmatpush2.msra.mxu0 0.0
    %6471 = vmatprep.subr.mxu0 0.0
    %6472 = vmatpush2.msra.mxu0 0.0
    %6473 = vmatprep.subr.mxu0 0.0
    %6474 = vmatpush2.msra.mxu0 0.0
    %6475 = vmatprep.subr.mxu0 0.0
    %6476 = vmatpush2.msra.mxu0 0.0
    %v6477 = vand.u32 %v4006, 4294901760
    %6478 = vmatprep.subr.mxu0 %v6477
    %v6479 = vand.u32 %v4005, 4294901760
    %6480 = vmatpush2.msra.mxu0 %v6479
    %v6481 = vand.u32 %v3691, 4294901760
    %6482 = vmatprep.subr.mxu0 %v6481
    %v6483 = vand.u32 %v3690, 4294901760
    %6484 = vmatpush2.msra.mxu0 %v6483
    %v6485 = vand.u32 %v4026, 4294901760
    %v6486 = vsub.f32 %v4026, %v6485
    %v6487 = vand.u32 %v6486, 4294901760
    %6488 = vmatprep.mubr.f32.mxu0 %v6487
    %v6489 = vand.u32 %v4017, 4294901760
    %v6490 = vsub.f32 %v4017, %v6489
    %v6491 = vand.u32 %v6490, 4294901760
    %6492 = vmatmul.mubr.f32.gmra.mxu0 %v6491
    %v6493 = vpop.f32.mrf.mxu0
    %v6494 = vadd.f32 %v6381, %v6493
    %v6495 = vpop.f32.mrf.mxu0
    %v6496 = vadd.f32 %v6383, %v6495
    %6497 = vdwg.mxu0
    %v6498 = vand.u32 %v3963, 4294901760
    %v6499 = vsub.f32 %v3963, %v6498
    %v6500 = vand.u32 %v6499, 4294901760
    %6501 = vmatprep.subr.mxu0 %v6500
    %v6502 = vand.u32 %v3962, 4294901760
    %v6503 = vsub.f32 %v3962, %v6502
    %v6504 = vand.u32 %v6503, 4294901760
    %6505 = vmatpush1.msra.mxu0 %v6504
    %v6506 = vand.u32 %v3920, 4294901760
    %v6507 = vsub.f32 %v3920, %v6506
    %v6508 = vand.u32 %v6507, 4294901760
    %6509 = vmatprep.subr.mxu0 %v6508
    %v6510 = vand.u32 %v3919, 4294901760
    %v6511 = vsub.f32 %v3919, %v6510
    %v6512 = vand.u32 %v6511, 4294901760
    %6513 = vmatpush1.msra.mxu0 %v6512
    %v6514 = vand.u32 %v3378, 4294901760
    %v6515 = vsub.f32 %v3378, %v6514
    %v6516 = vand.u32 %v6515, 4294901760
    %6517 = vmatprep.subr.mxu0 %v6516
    %v6518 = vand.u32 %v3377, 4294901760
    %v6519 = vsub.f32 %v3377, %v6518
    %v6520 = vand.u32 %v6519, 4294901760
    %6521 = vmatpush1.msra.mxu0 %v6520
    %v6522 = vand.u32 %v3877, 4294901760
    %v6523 = vsub.f32 %v3877, %v6522
    %v6524 = vand.u32 %v6523, 4294901760
    %6525 = vmatprep.subr.mxu0 %v6524
    %v6526 = vand.u32 %v3876, 4294901760
    %v6527 = vsub.f32 %v3876, %v6526
    %v6528 = vand.u32 %v6527, 4294901760
    %6529 = vmatpush1.msra.mxu0 %v6528
    %v6530 = vand.u32 %v3834, 4294901760
    %v6531 = vsub.f32 %v3834, %v6530
    %v6532 = vand.u32 %v6531, 4294901760
    %6533 = vmatprep.subr.mxu0 %v6532
    %v6534 = vand.u32 %v3833, 4294901760
    %v6535 = vsub.f32 %v3833, %v6534
    %v6536 = vand.u32 %v6535, 4294901760
    %6537 = vmatpush1.msra.mxu0 %v6536
    %v6538 = vand.u32 %v3723, 4294901760
    %v6539 = vsub.f32 %v3723, %v6538
    %v6540 = vand.u32 %v6539, 4294901760
    %6541 = vmatprep.subr.mxu0 %v6540
    %v6542 = vand.u32 %v3722, 4294901760
    %v6543 = vsub.f32 %v3722, %v6542
    %v6544 = vand.u32 %v6543, 4294901760
    %6545 = vmatpush1.msra.mxu0 %v6544
    %v6546 = vand.u32 %v3783, 4294901760
    %v6547 = vsub.f32 %v3783, %v6546
    %v6548 = vand.u32 %v6547, 4294901760
    %6549 = vmatprep.subr.mxu0 %v6548
    %v6550 = vand.u32 %v3782, 4294901760
    %v6551 = vsub.f32 %v3782, %v6550
    %v6552 = vand.u32 %v6551, 4294901760
    %6553 = vmatpush1.msra.mxu0 %v6552
    %v6554 = vand.u32 %v3663, 4294901760
    %v6555 = vsub.f32 %v3663, %v6554
    %v6556 = vand.u32 %v6555, 4294901760
    %6557 = vmatprep.subr.mxu0 %v6556
    %v6558 = vand.u32 %v3662, 4294901760
    %v6559 = vsub.f32 %v3662, %v6558
    %v6560 = vand.u32 %v6559, 4294901760
    %6561 = vmatpush1.msra.mxu0 %v6560
    %v6562 = vand.u32 %v3724, 4294901760
    %v6563 = vsub.f32 %v3724, %v6562
    %v6564 = vand.u32 %v6563, 4294901760
    %6565 = vmatprep.subr.mxu0 %v6564
    %v6566 = vand.u32 %v3723, 4294901760
    %v6567 = vsub.f32 %v3723, %v6566
    %v6568 = vand.u32 %v6567, 4294901760
    %6569 = vmatpush1.msra.mxu0 %v6568
    %v6570 = vand.u32 %v3620, 4294901760
    %v6571 = vsub.f32 %v3620, %v6570
    %v6572 = vand.u32 %v6571, 4294901760
    %6573 = vmatprep.subr.mxu0 %v6572
    %v6574 = vand.u32 %v3619, 4294901760
    %v6575 = vsub.f32 %v3619, %v6574
    %v6576 = vand.u32 %v6575, 4294901760
    %6577 = vmatpush1.msra.mxu0 %v6576
    %v6578 = vand.u32 %v3577, 4294901760
    %v6579 = vsub.f32 %v3577, %v6578
    %v6580 = vand.u32 %v6579, 4294901760
    %6581 = vmatprep.subr.mxu0 %v6580
    %v6582 = vand.u32 %v3576, 4294901760
    %v6583 = vsub.f32 %v3576, %v6582
    %v6584 = vand.u32 %v6583, 4294901760
    %6585 = vmatpush1.msra.mxu0 %v6584
    %v6586 = vand.u32 %v3378, 4294901760
    %v6587 = vsub.f32 %v3378, %v6586
    %v6588 = vand.u32 %v6587, 4294901760
    %6589 = vmatprep.subr.mxu0 %v6588
    %v6590 = vand.u32 %v3377, 4294901760
    %v6591 = vsub.f32 %v3377, %v6590
    %v6592 = vand.u32 %v6591, 4294901760
    %6593 = vmatpush1.msra.mxu0 %v6592
    %v6594 = vand.u32 %v3533, 4294901760
    %v6595 = vsub.f32 %v3533, %v6594
    %v6596 = vand.u32 %v6595, 4294901760
    %6597 = vmatprep.subr.mxu0 %v6596
    %v6598 = vand.u32 %v3532, 4294901760
    %v6599 = vsub.f32 %v3532, %v6598
    %v6600 = vand.u32 %v6599, 4294901760
    %6601 = vmatpush1.msra.mxu0 %v6600
    %v6602 = vand.u32 %v3490, 4294901760
    %v6603 = vsub.f32 %v3490, %v6602
    %v6604 = vand.u32 %v6603, 4294901760
    %6605 = vmatprep.subr.mxu0 %v6604
    %v6606 = vand.u32 %v3489, 4294901760
    %v6607 = vsub.f32 %v3489, %v6606
    %v6608 = vand.u32 %v6607, 4294901760
    %6609 = vmatpush1.msra.mxu0 %v6608
    %v6610 = vand.u32 %v3690, 4294901760
    %v6611 = vsub.f32 %v3690, %v6610
    %v6612 = vand.u32 %v6611, 4294901760
    %6613 = vmatprep.subr.mxu0 %v6612
    %v6614 = vand.u32 %v3689, 4294901760
    %v6615 = vsub.f32 %v3689, %v6614
    %v6616 = vand.u32 %v6615, 4294901760
    %6617 = vmatpush1.msra.mxu0 %v6616
    %v6618 = vand.u32 %v3439, 4294901760
    %v6619 = vsub.f32 %v3439, %v6618
    %v6620 = vand.u32 %v6619, 4294901760
    %6621 = vmatprep.subr.mxu0 %v6620
    %v6622 = vand.u32 %v3438, 4294901760
    %v6623 = vsub.f32 %v3438, %v6622
    %v6624 = vand.u32 %v6623, 4294901760
    %6625 = vmatpush1.msra.mxu0 %v6624
    %6626 = vmatprep.subr.mxu0 0.0
    %6627 = vmatpush2.msra.mxu0 0.0
    %6628 = vmatprep.subr.mxu0 0.0
    %6629 = vmatpush2.msra.mxu0 0.0
    %6630 = vmatprep.subr.mxu0 0.0
    %6631 = vmatpush2.msra.mxu0 0.0
    %6632 = vmatprep.subr.mxu0 0.0
    %6633 = vmatpush2.msra.mxu0 0.0
    %6634 = vmatprep.subr.mxu0 0.0
    %6635 = vmatpush2.msra.mxu0 0.0
    %6636 = vmatprep.subr.mxu0 0.0
    %6637 = vmatpush2.msra.mxu0 0.0
    %6638 = vmatprep.subr.mxu0 0.0
    %6639 = vmatpush2.msra.mxu0 0.0
    %6640 = vmatprep.subr.mxu0 0.0
    %6641 = vmatpush2.msra.mxu0 0.0
    %6642 = vmatprep.subr.mxu0 0.0
    %6643 = vmatpush2.msra.mxu0 0.0
    %6644 = vmatprep.subr.mxu0 0.0
    %6645 = vmatpush2.msra.mxu0 0.0
    %6646 = vmatprep.subr.mxu0 0.0
    %6647 = vmatpush2.msra.mxu0 0.0
    %6648 = vmatprep.subr.mxu0 0.0
    %6649 = vmatpush2.msra.mxu0 0.0
    %6650 = vmatprep.subr.mxu0 0.0
    %6651 = vmatpush2.msra.mxu0 0.0
    %6652 = vmatprep.subr.mxu0 0.0
    %6653 = vmatpush2.msra.mxu0 0.0
    %v6654 = vand.u32 %v4006, 4294901760
    %v6655 = vsub.f32 %v4006, %v6654
    %v6656 = vand.u32 %v6655, 4294901760
    %6657 = vmatprep.subr.mxu0 %v6656
    %v6658 = vand.u32 %v4005, 4294901760
    %v6659 = vsub.f32 %v4005, %v6658
    %v6660 = vand.u32 %v6659, 4294901760
    %6661 = vmatpush2.msra.mxu0 %v6660
    %v6662 = vand.u32 %v3691, 4294901760
    %v6663 = vsub.f32 %v3691, %v6662
    %v6664 = vand.u32 %v6663, 4294901760
    %6665 = vmatprep.subr.mxu0 %v6664
    %v6666 = vand.u32 %v3690, 4294901760
    %v6667 = vsub.f32 %v3690, %v6666
    %v6668 = vand.u32 %v6667, 4294901760
    %6669 = vmatpush2.msra.mxu0 %v6668
    %v6670 = vand.u32 %v4026, 4294901760
    %6671 = vmatprep.mubr.f32.mxu0 %v6670
    %v6672 = vand.u32 %v4017, 4294901760
    %6673 = vmatmul.mubr.f32.gmra.mxu0 %v6672
    %v6674 = vpop.f32.mrf.mxu0
    %v6675 = vadd.f32 %v6494, %v6674
    %v6676 = vpop.f32.mrf.mxu0
    %v6677 = vadd.f32 %v6496, %v6676
    %6678 = vdwg.mxu0
    %v6679 = vand.u32 %v3963, 4294901760
    %6680 = vmatprep.subr.mxu0 %v6679
    %v6681 = vand.u32 %v3962, 4294901760
    %6682 = vmatpush1.msra.mxu0 %v6681
    %v6683 = vand.u32 %v3920, 4294901760
    %6684 = vmatprep.subr.mxu0 %v6683
    %v6685 = vand.u32 %v3919, 4294901760
    %6686 = vmatpush1.msra.mxu0 %v6685
    %v6687 = vand.u32 %v3378, 4294901760
    %6688 = vmatprep.subr.mxu0 %v6687
    %v6689 = vand.u32 %v3377, 4294901760
    %6690 = vmatpush1.msra.mxu0 %v6689
    %v6691 = vand.u32 %v3877, 4294901760
    %6692 = vmatprep.subr.mxu0 %v6691
    %v6693 = vand.u32 %v3876, 4294901760
    %6694 = vmatpush1.msra.mxu0 %v6693
    %v6695 = vand.u32 %v3834, 4294901760
    %6696 = vmatprep.subr.mxu0 %v6695
    %v6697 = vand.u32 %v3833, 4294901760
    %6698 = vmatpush1.msra.mxu0 %v6697
    %v6699 = vand.u32 %v3723, 4294901760
    %6700 = vmatprep.subr.mxu0 %v6699
    %v6701 = vand.u32 %v3722, 4294901760
    %6702 = vmatpush1.msra.mxu0 %v6701
    %v6703 = vand.u32 %v3783, 4294901760
    %6704 = vmatprep.subr.mxu0 %v6703
    %v6705 = vand.u32 %v3782, 4294901760
    %6706 = vmatpush1.msra.mxu0 %v6705
    %v6707 = vand.u32 %v3663, 4294901760
    %6708 = vmatprep.subr.mxu0 %v6707
    %v6709 = vand.u32 %v3662, 4294901760
    %6710 = vmatpush1.msra.mxu0 %v6709
    %v6711 = vand.u32 %v3724, 4294901760
    %6712 = vmatprep.subr.mxu0 %v6711
    %v6713 = vand.u32 %v3723, 4294901760
    %6714 = vmatpush1.msra.mxu0 %v6713
    %v6715 = vand.u32 %v3620, 4294901760
    %6716 = vmatprep.subr.mxu0 %v6715
    %v6717 = vand.u32 %v3619, 4294901760
    %6718 = vmatpush1.msra.mxu0 %v6717
    %v6719 = vand.u32 %v3577, 4294901760
    %6720 = vmatprep.subr.mxu0 %v6719
    %v6721 = vand.u32 %v3576, 4294901760
    %6722 = vmatpush1.msra.mxu0 %v6721
    %v6723 = vand.u32 %v3378, 4294901760
    %6724 = vmatprep.subr.mxu0 %v6723
    %v6725 = vand.u32 %v3377, 4294901760
    %6726 = vmatpush1.msra.mxu0 %v6725
    %v6727 = vand.u32 %v3533, 4294901760
    %6728 = vmatprep.subr.mxu0 %v6727
    %v6729 = vand.u32 %v3532, 4294901760
    %6730 = vmatpush1.msra.mxu0 %v6729
    %v6731 = vand.u32 %v3490, 4294901760
    %6732 = vmatprep.subr.mxu0 %v6731
    %v6733 = vand.u32 %v3489, 4294901760
    %6734 = vmatpush1.msra.mxu0 %v6733
    %v6735 = vand.u32 %v3690, 4294901760
    %6736 = vmatprep.subr.mxu0 %v6735
    %v6737 = vand.u32 %v3689, 4294901760
    %6738 = vmatpush1.msra.mxu0 %v6737
    %v6739 = vand.u32 %v3439, 4294901760
    %6740 = vmatprep.subr.mxu0 %v6739
    %v6741 = vand.u32 %v3438, 4294901760
    %6742 = vmatpush1.msra.mxu0 %v6741
    %6743 = vmatprep.subr.mxu0 0.0
    %6744 = vmatpush2.msra.mxu0 0.0
    %6745 = vmatprep.subr.mxu0 0.0
    %6746 = vmatpush2.msra.mxu0 0.0
    %6747 = vmatprep.subr.mxu0 0.0
    %6748 = vmatpush2.msra.mxu0 0.0
    %6749 = vmatprep.subr.mxu0 0.0
    %6750 = vmatpush2.msra.mxu0 0.0
    %6751 = vmatprep.subr.mxu0 0.0
    %6752 = vmatpush2.msra.mxu0 0.0
    %6753 = vmatprep.subr.mxu0 0.0
    %6754 = vmatpush2.msra.mxu0 0.0
    %6755 = vmatprep.subr.mxu0 0.0
    %6756 = vmatpush2.msra.mxu0 0.0
    %6757 = vmatprep.subr.mxu0 0.0
    %6758 = vmatpush2.msra.mxu0 0.0
    %6759 = vmatprep.subr.mxu0 0.0
    %6760 = vmatpush2.msra.mxu0 0.0
    %6761 = vmatprep.subr.mxu0 0.0
    %6762 = vmatpush2.msra.mxu0 0.0
    %6763 = vmatprep.subr.mxu0 0.0
    %6764 = vmatpush2.msra.mxu0 0.0
    %6765 = vmatprep.subr.mxu0 0.0
    %6766 = vmatpush2.msra.mxu0 0.0
    %6767 = vmatprep.subr.mxu0 0.0
    %6768 = vmatpush2.msra.mxu0 0.0
    %6769 = vmatprep.subr.mxu0 0.0
    %6770 = vmatpush2.msra.mxu0 0.0
    %v6771 = vand.u32 %v4006, 4294901760
    %6772 = vmatprep.subr.mxu0 %v6771
    %v6773 = vand.u32 %v4005, 4294901760
    %6774 = vmatpush2.msra.mxu0 %v6773
    %v6775 = vand.u32 %v3691, 4294901760
    %6776 = vmatprep.subr.mxu0 %v6775
    %v6777 = vand.u32 %v3690, 4294901760
    %6778 = vmatpush2.msra.mxu0 %v6777
    %v6779 = vand.u32 %v4026, 4294901760
    %6780 = vmatprep.mubr.f32.mxu0 %v6779
    %v6781 = vand.u32 %v4017, 4294901760
    %6782 = vmatmul.mubr.f32.gmra.mxu0 %v6781
    %v6783 = vpop.f32.mrf.mxu0
    %v6784 = vadd.f32 %v6675, %v6783
    %v6785 = vpop.f32.mrf.mxu0
    %v6786 = vadd.f32 %v6677, %v6785
    %6787 = vdwg.mxu0
    %v6788 = vand.u32 %v3965, 4294901760
    %6789 = vmatprep.subr.mxu0 %v6788
    %v6790 = vand.u32 %v3964, 4294901760
    %6791 = vmatpush1.msra.mxu0 %v6790
    %v6792 = vand.u32 %v3922, 4294901760
    %6793 = vmatprep.subr.mxu0 %v6792
    %v6794 = vand.u32 %v3921, 4294901760
    %6795 = vmatpush1.msra.mxu0 %v6794
    %v6796 = vand.u32 %v3380, 4294901760
    %6797 = vmatprep.subr.mxu0 %v6796
    %v6798 = vand.u32 %v3379, 4294901760
    %6799 = vmatpush1.msra.mxu0 %v6798
    %v6800 = vand.u32 %v3879, 4294901760
    %6801 = vmatprep.subr.mxu0 %v6800
    %v6802 = vand.u32 %v3878, 4294901760
    %6803 = vmatpush1.msra.mxu0 %v6802
    %v6804 = vand.u32 %v3836, 4294901760
    %6805 = vmatprep.subr.mxu0 %v6804
    %v6806 = vand.u32 %v3835, 4294901760
    %6807 = vmatpush1.msra.mxu0 %v6806
    %v6808 = vand.u32 %v3725, 4294901760
    %6809 = vmatprep.subr.mxu0 %v6808
    %v6810 = vand.u32 %v3724, 4294901760
    %6811 = vmatpush1.msra.mxu0 %v6810
    %v6812 = vand.u32 %v3785, 4294901760
    %6813 = vmatprep.subr.mxu0 %v6812
    %v6814 = vand.u32 %v3784, 4294901760
    %6815 = vmatpush1.msra.mxu0 %v6814
    %v6816 = vand.u32 %v3665, 4294901760
    %6817 = vmatprep.subr.mxu0 %v6816
    %v6818 = vand.u32 %v3664, 4294901760
    %6819 = vmatpush1.msra.mxu0 %v6818
    %v6820 = vand.u32 %v3726, 4294901760
    %6821 = vmatprep.subr.mxu0 %v6820
    %v6822 = vand.u32 %v3725, 4294901760
    %6823 = vmatpush1.msra.mxu0 %v6822
    %v6824 = vand.u32 %v3622, 4294901760
    %6825 = vmatprep.subr.mxu0 %v6824
    %v6826 = vand.u32 %v3621, 4294901760
    %6827 = vmatpush1.msra.mxu0 %v6826
    %v6828 = vand.u32 %v3579, 4294901760
    %6829 = vmatprep.subr.mxu0 %v6828
    %v6830 = vand.u32 %v3578, 4294901760
    %6831 = vmatpush1.msra.mxu0 %v6830
    %v6832 = vand.u32 %v3380, 4294901760
    %6833 = vmatprep.subr.mxu0 %v6832
    %v6834 = vand.u32 %v3379, 4294901760
    %6835 = vmatpush1.msra.mxu0 %v6834
    %v6836 = vand.u32 %v3535, 4294901760
    %6837 = vmatprep.subr.mxu0 %v6836
    %v6838 = vand.u32 %v3534, 4294901760
    %6839 = vmatpush1.msra.mxu0 %v6838
    %v6840 = vand.u32 %v3492, 4294901760
    %6841 = vmatprep.subr.mxu0 %v6840
    %v6842 = vand.u32 %v3491, 4294901760
    %6843 = vmatpush1.msra.mxu0 %v6842
    %v6844 = vand.u32 %v3692, 4294901760
    %6845 = vmatprep.subr.mxu0 %v6844
    %v6846 = vand.u32 %v3691, 4294901760
    %6847 = vmatpush1.msra.mxu0 %v6846
    %v6848 = vand.u32 %v3441, 4294901760
    %6849 = vmatprep.subr.mxu0 %v6848
    %v6850 = vand.u32 %v3440, 4294901760
    %6851 = vmatpush1.msra.mxu0 %v6850
    %6852 = vmatprep.subr.mxu0 0.0
    %6853 = vmatpush2.msra.mxu0 0.0
    %6854 = vmatprep.subr.mxu0 0.0
    %6855 = vmatpush2.msra.mxu0 0.0
    %6856 = vmatprep.subr.mxu0 0.0
    %6857 = vmatpush2.msra.mxu0 0.0
    %6858 = vmatprep.subr.mxu0 0.0
    %6859 = vmatpush2.msra.mxu0 0.0
    %6860 = vmatprep.subr.mxu0 0.0
    %6861 = vmatpush2.msra.mxu0 0.0
    %6862 = vmatprep.subr.mxu0 0.0
    %6863 = vmatpush2.msra.mxu0 0.0
    %6864 = vmatprep.subr.mxu0 0.0
    %6865 = vmatpush2.msra.mxu0 0.0
    %6866 = vmatprep.subr.mxu0 0.0
    %6867 = vmatpush2.msra.mxu0 0.0
    %6868 = vmatprep.subr.mxu0 0.0
    %6869 = vmatpush2.msra.mxu0 0.0
    %6870 = vmatprep.subr.mxu0 0.0
    %6871 = vmatpush2.msra.mxu0 0.0
    %6872 = vmatprep.subr.mxu0 0.0
    %6873 = vmatpush2.msra.mxu0 0.0
    %6874 = vmatprep.subr.mxu0 0.0
    %6875 = vmatpush2.msra.mxu0 0.0
    %6876 = vmatprep.subr.mxu0 0.0
    %6877 = vmatpush2.msra.mxu0 0.0
    %6878 = vmatprep.subr.mxu0 0.0
    %6879 = vmatpush2.msra.mxu0 0.0
    %v6880 = vand.u32 %v4008, 4294901760
    %6881 = vmatprep.subr.mxu0 %v6880
    %v6882 = vand.u32 %v4007, 4294901760
    %6883 = vmatpush2.msra.mxu0 %v6882
    %v6884 = vand.u32 %v4015, 4294901760
    %6885 = vmatprep.subr.mxu0 %v6884
    %v6886 = vand.u32 %v3692, 4294901760
    %6887 = vmatpush2.msra.mxu0 %v6886
    %v6888 = vand.u32 %v4026, 4294901760
    %v6889 = vsub.f32 %v4026, %v6888
    %v6890 = vand.u32 %v6889, 4294901760
    %v6891 = vsub.f32 %v6889, %v6890
    %v6892 = vand.u32 %v6891, 4294901760
    %6893 = vmatprep.mubr.f32.mxu0 %v6892
    %v6894 = vand.u32 %v4017, 4294901760
    %v6895 = vsub.f32 %v4017, %v6894
    %v6896 = vand.u32 %v6895, 4294901760
    %v6897 = vsub.f32 %v6895, %v6896
    %v6898 = vand.u32 %v6897, 4294901760
    %6899 = vmatmul.mubr.f32.gmra.mxu0 %v6898
    %v6900 = vpop.f32.mrf.mxu0
    %v6901 = vadd.f32 %v4023, %v6900
    %v6902 = vpop.f32.mrf.mxu0
    %v6903 = vadd.f32 %v4023, %v6902
    %6904 = vdwg.mxu0
    %v6905 = vand.u32 %v3965, 4294901760
    %v6906 = vsub.f32 %v3965, %v6905
    %v6907 = vand.u32 %v6906, 4294901760
    %v6908 = vsub.f32 %v6906, %v6907
    %v6909 = vand.u32 %v6908, 4294901760
    %6910 = vmatprep.subr.mxu0 %v6909
    %v6911 = vand.u32 %v3964, 4294901760
    %v6912 = vsub.f32 %v3964, %v6911
    %v6913 = vand.u32 %v6912, 4294901760
    %v6914 = vsub.f32 %v6912, %v6913
    %v6915 = vand.u32 %v6914, 4294901760
    %6916 = vmatpush1.msra.mxu0 %v6915
    %v6917 = vand.u32 %v3922, 4294901760
    %v6918 = vsub.f32 %v3922, %v6917
    %v6919 = vand.u32 %v6918, 4294901760
    %v6920 = vsub.f32 %v6918, %v6919
    %v6921 = vand.u32 %v6920, 4294901760
    %6922 = vmatprep.subr.mxu0 %v6921
    %v6923 = vand.u32 %v3921, 4294901760
    %v6924 = vsub.f32 %v3921, %v6923
    %v6925 = vand.u32 %v6924, 4294901760
    %v6926 = vsub.f32 %v6924, %v6925
    %v6927 = vand.u32 %v6926, 4294901760
    %6928 = vmatpush1.msra.mxu0 %v6927
    %v6929 = vand.u32 %v3380, 4294901760
    %v6930 = vsub.f32 %v3380, %v6929
    %v6931 = vand.u32 %v6930, 4294901760
    %v6932 = vsub.f32 %v6930, %v6931
    %v6933 = vand.u32 %v6932, 4294901760
    %6934 = vmatprep.subr.mxu0 %v6933
    %v6935 = vand.u32 %v3379, 4294901760
    %v6936 = vsub.f32 %v3379, %v6935
    %v6937 = vand.u32 %v6936, 4294901760
    %v6938 = vsub.f32 %v6936, %v6937
    %v6939 = vand.u32 %v6938, 4294901760
    %6940 = vmatpush1.msra.mxu0 %v6939
    %v6941 = vand.u32 %v3879, 4294901760
    %v6942 = vsub.f32 %v3879, %v6941
    %v6943 = vand.u32 %v6942, 4294901760
    %v6944 = vsub.f32 %v6942, %v6943
    %v6945 = vand.u32 %v6944, 4294901760
    %6946 = vmatprep.subr.mxu0 %v6945
    %v6947 = vand.u32 %v3878, 4294901760
    %v6948 = vsub.f32 %v3878, %v6947
    %v6949 = vand.u32 %v6948, 4294901760
    %v6950 = vsub.f32 %v6948, %v6949
    %v6951 = vand.u32 %v6950, 4294901760
    %6952 = vmatpush1.msra.mxu0 %v6951
    %v6953 = vand.u32 %v3836, 4294901760
    %v6954 = vsub.f32 %v3836, %v6953
    %v6955 = vand.u32 %v6954, 4294901760
    %v6956 = vsub.f32 %v6954, %v6955
    %v6957 = vand.u32 %v6956, 4294901760
    %6958 = vmatprep.subr.mxu0 %v6957
    %v6959 = vand.u32 %v3835, 4294901760
    %v6960 = vsub.f32 %v3835, %v6959
    %v6961 = vand.u32 %v6960, 4294901760
    %v6962 = vsub.f32 %v6960, %v6961
    %v6963 = vand.u32 %v6962, 4294901760
    %6964 = vmatpush1.msra.mxu0 %v6963
    %v6965 = vand.u32 %v3725, 4294901760
    %v6966 = vsub.f32 %v3725, %v6965
    %v6967 = vand.u32 %v6966, 4294901760
    %v6968 = vsub.f32 %v6966, %v6967
    %v6969 = vand.u32 %v6968, 4294901760
    %6970 = vmatprep.subr.mxu0 %v6969
    %v6971 = vand.u32 %v3724, 4294901760
    %v6972 = vsub.f32 %v3724, %v6971
    %v6973 = vand.u32 %v6972, 4294901760
    %v6974 = vsub.f32 %v6972, %v6973
    %v6975 = vand.u32 %v6974, 4294901760
    %6976 = vmatpush1.msra.mxu0 %v6975
    %v6977 = vand.u32 %v3785, 4294901760
    %v6978 = vsub.f32 %v3785, %v6977
    %v6979 = vand.u32 %v6978, 4294901760
    %v6980 = vsub.f32 %v6978, %v6979
    %v6981 = vand.u32 %v6980, 4294901760
    %6982 = vmatprep.subr.mxu0 %v6981
    %v6983 = vand.u32 %v3784, 4294901760
    %v6984 = vsub.f32 %v3784, %v6983
    %v6985 = vand.u32 %v6984, 4294901760
    %v6986 = vsub.f32 %v6984, %v6985
    %v6987 = vand.u32 %v6986, 4294901760
    %6988 = vmatpush1.msra.mxu0 %v6987
    %v6989 = vand.u32 %v3665, 4294901760
    %v6990 = vsub.f32 %v3665, %v6989
    %v6991 = vand.u32 %v6990, 4294901760
    %v6992 = vsub.f32 %v6990, %v6991
    %v6993 = vand.u32 %v6992, 4294901760
    %6994 = vmatprep.subr.mxu0 %v6993
    %v6995 = vand.u32 %v3664, 4294901760
    %v6996 = vsub.f32 %v3664, %v6995
    %v6997 = vand.u32 %v6996, 4294901760
    %v6998 = vsub.f32 %v6996, %v6997
    %v6999 = vand.u32 %v6998, 4294901760
    %7000 = vmatpush1.msra.mxu0 %v6999
    %v7001 = vand.u32 %v3726, 4294901760
    %v7002 = vsub.f32 %v3726, %v7001
    %v7003 = vand.u32 %v7002, 4294901760
    %v7004 = vsub.f32 %v7002, %v7003
    %v7005 = vand.u32 %v7004, 4294901760
    %7006 = vmatprep.subr.mxu0 %v7005
    %v7007 = vand.u32 %v3725, 4294901760
    %v7008 = vsub.f32 %v3725, %v7007
    %v7009 = vand.u32 %v7008, 4294901760
    %v7010 = vsub.f32 %v7008, %v7009
    %v7011 = vand.u32 %v7010, 4294901760
    %7012 = vmatpush1.msra.mxu0 %v7011
    %v7013 = vand.u32 %v3622, 4294901760
    %v7014 = vsub.f32 %v3622, %v7013
    %v7015 = vand.u32 %v7014, 4294901760
    %v7016 = vsub.f32 %v7014, %v7015
    %v7017 = vand.u32 %v7016, 4294901760
    %7018 = vmatprep.subr.mxu0 %v7017
    %v7019 = vand.u32 %v3621, 4294901760
    %v7020 = vsub.f32 %v3621, %v7019
    %v7021 = vand.u32 %v7020, 4294901760
    %v7022 = vsub.f32 %v7020, %v7021
    %v7023 = vand.u32 %v7022, 4294901760
    %7024 = vmatpush1.msra.mxu0 %v7023
    %v7025 = vand.u32 %v3579, 4294901760
    %v7026 = vsub.f32 %v3579, %v7025
    %v7027 = vand.u32 %v7026, 4294901760
    %v7028 = vsub.f32 %v7026, %v7027
    %v7029 = vand.u32 %v7028, 4294901760
    %7030 = vmatprep.subr.mxu0 %v7029
    %v7031 = vand.u32 %v3578, 4294901760
    %v7032 = vsub.f32 %v3578, %v7031
    %v7033 = vand.u32 %v7032, 4294901760
    %v7034 = vsub.f32 %v7032, %v7033
    %v7035 = vand.u32 %v7034, 4294901760
    %7036 = vmatpush1.msra.mxu0 %v7035
    %v7037 = vand.u32 %v3380, 4294901760
    %v7038 = vsub.f32 %v3380, %v7037
    %v7039 = vand.u32 %v7038, 4294901760
    %v7040 = vsub.f32 %v7038, %v7039
    %v7041 = vand.u32 %v7040, 4294901760
    %7042 = vmatprep.subr.mxu0 %v7041
    %v7043 = vand.u32 %v3379, 4294901760
    %v7044 = vsub.f32 %v3379, %v7043
    %v7045 = vand.u32 %v7044, 4294901760
    %v7046 = vsub.f32 %v7044, %v7045
    %v7047 = vand.u32 %v7046, 4294901760
    %7048 = vmatpush1.msra.mxu0 %v7047
    %v7049 = vand.u32 %v3535, 4294901760
    %v7050 = vsub.f32 %v3535, %v7049
    %v7051 = vand.u32 %v7050, 4294901760
    %v7052 = vsub.f32 %v7050, %v7051
    %v7053 = vand.u32 %v7052, 4294901760
    %7054 = vmatprep.subr.mxu0 %v7053
    %v7055 = vand.u32 %v3534, 4294901760
    %v7056 = vsub.f32 %v3534, %v7055
    %v7057 = vand.u32 %v7056, 4294901760
    %v7058 = vsub.f32 %v7056, %v7057
    %v7059 = vand.u32 %v7058, 4294901760
    %7060 = vmatpush1.msra.mxu0 %v7059
    %v7061 = vand.u32 %v3492, 4294901760
    %v7062 = vsub.f32 %v3492, %v7061
    %v7063 = vand.u32 %v7062, 4294901760
    %v7064 = vsub.f32 %v7062, %v7063
    %v7065 = vand.u32 %v7064, 4294901760
    %7066 = vmatprep.subr.mxu0 %v7065
    %v7067 = vand.u32 %v3491, 4294901760
    %v7068 = vsub.f32 %v3491, %v7067
    %v7069 = vand.u32 %v7068, 4294901760
    %v7070 = vsub.f32 %v7068, %v7069
    %v7071 = vand.u32 %v7070, 4294901760
    %7072 = vmatpush1.msra.mxu0 %v7071
    %v7073 = vand.u32 %v3692, 4294901760
    %v7074 = vsub.f32 %v3692, %v7073
    %v7075 = vand.u32 %v7074, 4294901760
    %v7076 = vsub.f32 %v7074, %v7075
    %v7077 = vand.u32 %v7076, 4294901760
    %7078 = vmatprep.subr.mxu0 %v7077
    %v7079 = vand.u32 %v3691, 4294901760
    %v7080 = vsub.f32 %v3691, %v7079
    %v7081 = vand.u32 %v7080, 4294901760
    %v7082 = vsub.f32 %v7080, %v7081
    %v7083 = vand.u32 %v7082, 4294901760
    %7084 = vmatpush1.msra.mxu0 %v7083
    %v7085 = vand.u32 %v3441, 4294901760
    %v7086 = vsub.f32 %v3441, %v7085
    %v7087 = vand.u32 %v7086, 4294901760
    %v7088 = vsub.f32 %v7086, %v7087
    %v7089 = vand.u32 %v7088, 4294901760
    %7090 = vmatprep.subr.mxu0 %v7089
    %v7091 = vand.u32 %v3440, 4294901760
    %v7092 = vsub.f32 %v3440, %v7091
    %v7093 = vand.u32 %v7092, 4294901760
    %v7094 = vsub.f32 %v7092, %v7093
    %v7095 = vand.u32 %v7094, 4294901760
    %7096 = vmatpush1.msra.mxu0 %v7095
    %7097 = vmatprep.subr.mxu0 0.0
    %7098 = vmatpush2.msra.mxu0 0.0
    %7099 = vmatprep.subr.mxu0 0.0
    %7100 = vmatpush2.msra.mxu0 0.0
    %7101 = vmatprep.subr.mxu0 0.0
    %7102 = vmatpush2.msra.mxu0 0.0
    %7103 = vmatprep.subr.mxu0 0.0
    %7104 = vmatpush2.msra.mxu0 0.0
    %7105 = vmatprep.subr.mxu0 0.0
    %7106 = vmatpush2.msra.mxu0 0.0
    %7107 = vmatprep.subr.mxu0 0.0
    %7108 = vmatpush2.msra.mxu0 0.0
    %7109 = vmatprep.subr.mxu0 0.0
    %7110 = vmatpush2.msra.mxu0 0.0
    %7111 = vmatprep.subr.mxu0 0.0
    %7112 = vmatpush2.msra.mxu0 0.0
    %7113 = vmatprep.subr.mxu0 0.0
    %7114 = vmatpush2.msra.mxu0 0.0
    %7115 = vmatprep.subr.mxu0 0.0
    %7116 = vmatpush2.msra.mxu0 0.0
    %7117 = vmatprep.subr.mxu0 0.0
    %7118 = vmatpush2.msra.mxu0 0.0
    %7119 = vmatprep.subr.mxu0 0.0
    %7120 = vmatpush2.msra.mxu0 0.0
    %7121 = vmatprep.subr.mxu0 0.0
    %7122 = vmatpush2.msra.mxu0 0.0
    %7123 = vmatprep.subr.mxu0 0.0
    %7124 = vmatpush2.msra.mxu0 0.0
    %v7125 = vand.u32 %v4008, 4294901760
    %v7126 = vsub.f32 %v4008, %v7125
    %v7127 = vand.u32 %v7126, 4294901760
    %v7128 = vsub.f32 %v7126, %v7127
    %v7129 = vand.u32 %v7128, 4294901760
    %7130 = vmatprep.subr.mxu0 %v7129
    %v7131 = vand.u32 %v4007, 4294901760
    %v7132 = vsub.f32 %v4007, %v7131
    %v7133 = vand.u32 %v7132, 4294901760
    %v7134 = vsub.f32 %v7132, %v7133
    %v7135 = vand.u32 %v7134, 4294901760
    %7136 = vmatpush2.msra.mxu0 %v7135
    %v7137 = vand.u32 %v4015, 4294901760
    %v7138 = vsub.f32 %v4015, %v7137
    %v7139 = vand.u32 %v7138, 4294901760
    %v7140 = vsub.f32 %v7138, %v7139
    %v7141 = vand.u32 %v7140, 4294901760
    %7142 = vmatprep.subr.mxu0 %v7141
    %v7143 = vand.u32 %v3692, 4294901760
    %v7144 = vsub.f32 %v3692, %v7143
    %v7145 = vand.u32 %v7144, 4294901760
    %v7146 = vsub.f32 %v7144, %v7145
    %v7147 = vand.u32 %v7146, 4294901760
    %7148 = vmatpush2.msra.mxu0 %v7147
    %v7149 = vand.u32 %v4026, 4294901760
    %7150 = vmatprep.mubr.f32.mxu0 %v7149
    %v7151 = vand.u32 %v4017, 4294901760
    %7152 = vmatmul.mubr.f32.gmra.mxu0 %v7151
    %v7153 = vpop.f32.mrf.mxu0
    %v7154 = vadd.f32 %v6901, %v7153
    %v7155 = vpop.f32.mrf.mxu0
    %v7156 = vadd.f32 %v6903, %v7155
    %7157 = vdwg.mxu0
    %v7158 = vand.u32 %v3965, 4294901760
    %v7159 = vsub.f32 %v3965, %v7158
    %7160 = vmatprep.subr.mxu0 %v7159
    %v7161 = vand.u32 %v3964, 4294901760
    %v7162 = vsub.f32 %v3964, %v7161
    %7163 = vmatpush1.msra.mxu0 %v7162
    %v7164 = vand.u32 %v3922, 4294901760
    %v7165 = vsub.f32 %v3922, %v7164
    %7166 = vmatprep.subr.mxu0 %v7165
    %v7167 = vand.u32 %v3921, 4294901760
    %v7168 = vsub.f32 %v3921, %v7167
    %7169 = vmatpush1.msra.mxu0 %v7168
    %v7170 = vand.u32 %v3380, 4294901760
    %v7171 = vsub.f32 %v3380, %v7170
    %7172 = vmatprep.subr.mxu0 %v7171
    %v7173 = vand.u32 %v3379, 4294901760
    %v7174 = vsub.f32 %v3379, %v7173
    %7175 = vmatpush1.msra.mxu0 %v7174
    %v7176 = vand.u32 %v3879, 4294901760
    %v7177 = vsub.f32 %v3879, %v7176
    %7178 = vmatprep.subr.mxu0 %v7177
    %v7179 = vand.u32 %v3878, 4294901760
    %v7180 = vsub.f32 %v3878, %v7179
    %7181 = vmatpush1.msra.mxu0 %v7180
    %v7182 = vand.u32 %v3836, 4294901760
    %v7183 = vsub.f32 %v3836, %v7182
    %7184 = vmatprep.subr.mxu0 %v7183
    %v7185 = vand.u32 %v3835, 4294901760
    %v7186 = vsub.f32 %v3835, %v7185
    %7187 = vmatpush1.msra.mxu0 %v7186
    %v7188 = vand.u32 %v3725, 4294901760
    %v7189 = vsub.f32 %v3725, %v7188
    %7190 = vmatprep.subr.mxu0 %v7189
    %v7191 = vand.u32 %v3724, 4294901760
    %v7192 = vsub.f32 %v3724, %v7191
    %7193 = vmatpush1.msra.mxu0 %v7192
    %v7194 = vand.u32 %v3785, 4294901760
    %v7195 = vsub.f32 %v3785, %v7194
    %7196 = vmatprep.subr.mxu0 %v7195
    %v7197 = vand.u32 %v3784, 4294901760
    %v7198 = vsub.f32 %v3784, %v7197
    %7199 = vmatpush1.msra.mxu0 %v7198
    %v7200 = vand.u32 %v3665, 4294901760
    %v7201 = vsub.f32 %v3665, %v7200
    %7202 = vmatprep.subr.mxu0 %v7201
    %v7203 = vand.u32 %v3664, 4294901760
    %v7204 = vsub.f32 %v3664, %v7203
    %7205 = vmatpush1.msra.mxu0 %v7204
    %v7206 = vand.u32 %v3726, 4294901760
    %v7207 = vsub.f32 %v3726, %v7206
    %7208 = vmatprep.subr.mxu0 %v7207
    %v7209 = vand.u32 %v3725, 4294901760
    %v7210 = vsub.f32 %v3725, %v7209
    %7211 = vmatpush1.msra.mxu0 %v7210
    %v7212 = vand.u32 %v3622, 4294901760
    %v7213 = vsub.f32 %v3622, %v7212
    %7214 = vmatprep.subr.mxu0 %v7213
    %v7215 = vand.u32 %v3621, 4294901760
    %v7216 = vsub.f32 %v3621, %v7215
    %7217 = vmatpush1.msra.mxu0 %v7216
    %v7218 = vand.u32 %v3579, 4294901760
    %v7219 = vsub.f32 %v3579, %v7218
    %7220 = vmatprep.subr.mxu0 %v7219
    %v7221 = vand.u32 %v3578, 4294901760
    %v7222 = vsub.f32 %v3578, %v7221
    %7223 = vmatpush1.msra.mxu0 %v7222
    %v7224 = vand.u32 %v3380, 4294901760
    %v7225 = vsub.f32 %v3380, %v7224
    %7226 = vmatprep.subr.mxu0 %v7225
    %v7227 = vand.u32 %v3379, 4294901760
    %v7228 = vsub.f32 %v3379, %v7227
    %7229 = vmatpush1.msra.mxu0 %v7228
    %v7230 = vand.u32 %v3535, 4294901760
    %v7231 = vsub.f32 %v3535, %v7230
    %7232 = vmatprep.subr.mxu0 %v7231
    %v7233 = vand.u32 %v3534, 4294901760
    %v7234 = vsub.f32 %v3534, %v7233
    %7235 = vmatpush1.msra.mxu0 %v7234
    %v7236 = vand.u32 %v3492, 4294901760
    %v7237 = vsub.f32 %v3492, %v7236
    %7238 = vmatprep.subr.mxu0 %v7237
    %v7239 = vand.u32 %v3491, 4294901760
    %v7240 = vsub.f32 %v3491, %v7239
    %7241 = vmatpush1.msra.mxu0 %v7240
    %v7242 = vand.u32 %v3692, 4294901760
    %v7243 = vsub.f32 %v3692, %v7242
    %7244 = vmatprep.subr.mxu0 %v7243
    %v7245 = vand.u32 %v3691, 4294901760
    %v7246 = vsub.f32 %v3691, %v7245
    %7247 = vmatpush1.msra.mxu0 %v7246
    %v7248 = vand.u32 %v3441, 4294901760
    %v7249 = vsub.f32 %v3441, %v7248
    %7250 = vmatprep.subr.mxu0 %v7249
    %v7251 = vand.u32 %v3440, 4294901760
    %v7252 = vsub.f32 %v3440, %v7251
    %7253 = vmatpush1.msra.mxu0 %v7252
    %7254 = vmatprep.subr.mxu0 0.0
    %7255 = vmatpush2.msra.mxu0 0.0
    %7256 = vmatprep.subr.mxu0 0.0
    %7257 = vmatpush2.msra.mxu0 0.0
    %7258 = vmatprep.subr.mxu0 0.0
    %7259 = vmatpush2.msra.mxu0 0.0
    %7260 = vmatprep.subr.mxu0 0.0
    %7261 = vmatpush2.msra.mxu0 0.0
    %7262 = vmatprep.subr.mxu0 0.0
    %7263 = vmatpush2.msra.mxu0 0.0
    %7264 = vmatprep.subr.mxu0 0.0
    %7265 = vmatpush2.msra.mxu0 0.0
    %7266 = vmatprep.subr.mxu0 0.0
    %7267 = vmatpush2.msra.mxu0 0.0
    %7268 = vmatprep.subr.mxu0 0.0
    %7269 = vmatpush2.msra.mxu0 0.0
    %7270 = vmatprep.subr.mxu0 0.0
    %7271 = vmatpush2.msra.mxu0 0.0
    %7272 = vmatprep.subr.mxu0 0.0
    %7273 = vmatpush2.msra.mxu0 0.0
    %7274 = vmatprep.subr.mxu0 0.0
    %7275 = vmatpush2.msra.mxu0 0.0
    %7276 = vmatprep.subr.mxu0 0.0
    %7277 = vmatpush2.msra.mxu0 0.0
    %7278 = vmatprep.subr.mxu0 0.0
    %7279 = vmatpush2.msra.mxu0 0.0
    %7280 = vmatprep.subr.mxu0 0.0
    %7281 = vmatpush2.msra.mxu0 0.0
    %v7282 = vand.u32 %v4008, 4294901760
    %v7283 = vsub.f32 %v4008, %v7282
    %7284 = vmatprep.subr.mxu0 %v7283
    %v7285 = vand.u32 %v4007, 4294901760
    %v7286 = vsub.f32 %v4007, %v7285
    %7287 = vmatpush2.msra.mxu0 %v7286
    %v7288 = vand.u32 %v4015, 4294901760
    %v7289 = vsub.f32 %v4015, %v7288
    %7290 = vmatprep.subr.mxu0 %v7289
    %v7291 = vand.u32 %v3692, 4294901760
    %v7292 = vsub.f32 %v3692, %v7291
    %7293 = vmatpush2.msra.mxu0 %v7292
    %v7294 = vand.u32 %v4026, 4294901760
    %v7295 = vsub.f32 %v4026, %v7294
    %7296 = vmatprep.mubr.f32.mxu0 %v7295
    %v7297 = vand.u32 %v4017, 4294901760
    %v7298 = vsub.f32 %v4017, %v7297
    %7299 = vmatmul.mubr.f32.gmra.mxu0 %v7298
    %v7300 = vpop.f32.mrf.mxu0
    %v7301 = vadd.f32 %v7154, %v7300
    %v7302 = vpop.f32.mrf.mxu0
    %v7303 = vadd.f32 %v7156, %v7302
    %7304 = vdwg.mxu0
    %v7305 = vand.u32 %v3965, 4294901760
    %7306 = vmatprep.subr.mxu0 %v7305
    %v7307 = vand.u32 %v3964, 4294901760
    %7308 = vmatpush1.msra.mxu0 %v7307
    %v7309 = vand.u32 %v3922, 4294901760
    %7310 = vmatprep.subr.mxu0 %v7309
    %v7311 = vand.u32 %v3921, 4294901760
    %7312 = vmatpush1.msra.mxu0 %v7311
    %v7313 = vand.u32 %v3380, 4294901760
    %7314 = vmatprep.subr.mxu0 %v7313
    %v7315 = vand.u32 %v3379, 4294901760
    %7316 = vmatpush1.msra.mxu0 %v7315
    %v7317 = vand.u32 %v3879, 4294901760
    %7318 = vmatprep.subr.mxu0 %v7317
    %v7319 = vand.u32 %v3878, 4294901760
    %7320 = vmatpush1.msra.mxu0 %v7319
    %v7321 = vand.u32 %v3836, 4294901760
    %7322 = vmatprep.subr.mxu0 %v7321
    %v7323 = vand.u32 %v3835, 4294901760
    %7324 = vmatpush1.msra.mxu0 %v7323
    %v7325 = vand.u32 %v3725, 4294901760
    %7326 = vmatprep.subr.mxu0 %v7325
    %v7327 = vand.u32 %v3724, 4294901760
    %7328 = vmatpush1.msra.mxu0 %v7327
    %v7329 = vand.u32 %v3785, 4294901760
    %7330 = vmatprep.subr.mxu0 %v7329
    %v7331 = vand.u32 %v3784, 4294901760
    %7332 = vmatpush1.msra.mxu0 %v7331
    %v7333 = vand.u32 %v3665, 4294901760
    %7334 = vmatprep.subr.mxu0 %v7333
    %v7335 = vand.u32 %v3664, 4294901760
    %7336 = vmatpush1.msra.mxu0 %v7335
    %v7337 = vand.u32 %v3726, 4294901760
    %7338 = vmatprep.subr.mxu0 %v7337
    %v7339 = vand.u32 %v3725, 4294901760
    %7340 = vmatpush1.msra.mxu0 %v7339
    %v7341 = vand.u32 %v3622, 4294901760
    %7342 = vmatprep.subr.mxu0 %v7341
    %v7343 = vand.u32 %v3621, 4294901760
    %7344 = vmatpush1.msra.mxu0 %v7343
    %v7345 = vand.u32 %v3579, 4294901760
    %7346 = vmatprep.subr.mxu0 %v7345
    %v7347 = vand.u32 %v3578, 4294901760
    %7348 = vmatpush1.msra.mxu0 %v7347
    %v7349 = vand.u32 %v3380, 4294901760
    %7350 = vmatprep.subr.mxu0 %v7349
    %v7351 = vand.u32 %v3379, 4294901760
    %7352 = vmatpush1.msra.mxu0 %v7351
    %v7353 = vand.u32 %v3535, 4294901760
    %7354 = vmatprep.subr.mxu0 %v7353
    %v7355 = vand.u32 %v3534, 4294901760
    %7356 = vmatpush1.msra.mxu0 %v7355
    %v7357 = vand.u32 %v3492, 4294901760
    %7358 = vmatprep.subr.mxu0 %v7357
    %v7359 = vand.u32 %v3491, 4294901760
    %7360 = vmatpush1.msra.mxu0 %v7359
    %v7361 = vand.u32 %v3692, 4294901760
    %7362 = vmatprep.subr.mxu0 %v7361
    %v7363 = vand.u32 %v3691, 4294901760
    %7364 = vmatpush1.msra.mxu0 %v7363
    %v7365 = vand.u32 %v3441, 4294901760
    %7366 = vmatprep.subr.mxu0 %v7365
    %v7367 = vand.u32 %v3440, 4294901760
    %7368 = vmatpush1.msra.mxu0 %v7367
    %7369 = vmatprep.subr.mxu0 0.0
    %7370 = vmatpush2.msra.mxu0 0.0
    %7371 = vmatprep.subr.mxu0 0.0
    %7372 = vmatpush2.msra.mxu0 0.0
    %7373 = vmatprep.subr.mxu0 0.0
    %7374 = vmatpush2.msra.mxu0 0.0
    %7375 = vmatprep.subr.mxu0 0.0
    %7376 = vmatpush2.msra.mxu0 0.0
    %7377 = vmatprep.subr.mxu0 0.0
    %7378 = vmatpush2.msra.mxu0 0.0
    %7379 = vmatprep.subr.mxu0 0.0
    %7380 = vmatpush2.msra.mxu0 0.0
    %7381 = vmatprep.subr.mxu0 0.0
    %7382 = vmatpush2.msra.mxu0 0.0
    %7383 = vmatprep.subr.mxu0 0.0
    %7384 = vmatpush2.msra.mxu0 0.0
    %7385 = vmatprep.subr.mxu0 0.0
    %7386 = vmatpush2.msra.mxu0 0.0
    %7387 = vmatprep.subr.mxu0 0.0
    %7388 = vmatpush2.msra.mxu0 0.0
    %7389 = vmatprep.subr.mxu0 0.0
    %7390 = vmatpush2.msra.mxu0 0.0
    %7391 = vmatprep.subr.mxu0 0.0
    %7392 = vmatpush2.msra.mxu0 0.0
    %7393 = vmatprep.subr.mxu0 0.0
    %7394 = vmatpush2.msra.mxu0 0.0
    %7395 = vmatprep.subr.mxu0 0.0
    %7396 = vmatpush2.msra.mxu0 0.0
    %v7397 = vand.u32 %v4008, 4294901760
    %7398 = vmatprep.subr.mxu0 %v7397
    %v7399 = vand.u32 %v4007, 4294901760
    %7400 = vmatpush2.msra.mxu0 %v7399
    %v7401 = vand.u32 %v4015, 4294901760
    %7402 = vmatprep.subr.mxu0 %v7401
    %v7403 = vand.u32 %v3692, 4294901760
    %7404 = vmatpush2.msra.mxu0 %v7403
    %v7405 = vand.u32 %v4026, 4294901760
    %v7406 = vsub.f32 %v4026, %v7405
    %v7407 = vand.u32 %v7406, 4294901760
    %7408 = vmatprep.mubr.f32.mxu0 %v7407
    %v7409 = vand.u32 %v4017, 4294901760
    %v7410 = vsub.f32 %v4017, %v7409
    %v7411 = vand.u32 %v7410, 4294901760
    %7412 = vmatmul.mubr.f32.gmra.mxu0 %v7411
    %v7413 = vpop.f32.mrf.mxu0
    %v7414 = vadd.f32 %v7301, %v7413
    %v7415 = vpop.f32.mrf.mxu0
    %v7416 = vadd.f32 %v7303, %v7415
    %7417 = vdwg.mxu0
    %v7418 = vand.u32 %v3965, 4294901760
    %v7419 = vsub.f32 %v3965, %v7418
    %v7420 = vand.u32 %v7419, 4294901760
    %7421 = vmatprep.subr.mxu0 %v7420
    %v7422 = vand.u32 %v3964, 4294901760
    %v7423 = vsub.f32 %v3964, %v7422
    %v7424 = vand.u32 %v7423, 4294901760
    %7425 = vmatpush1.msra.mxu0 %v7424
    %v7426 = vand.u32 %v3922, 4294901760
    %v7427 = vsub.f32 %v3922, %v7426
    %v7428 = vand.u32 %v7427, 4294901760
    %7429 = vmatprep.subr.mxu0 %v7428
    %v7430 = vand.u32 %v3921, 4294901760
    %v7431 = vsub.f32 %v3921, %v7430
    %v7432 = vand.u32 %v7431, 4294901760
    %7433 = vmatpush1.msra.mxu0 %v7432
    %v7434 = vand.u32 %v3380, 4294901760
    %v7435 = vsub.f32 %v3380, %v7434
    %v7436 = vand.u32 %v7435, 4294901760
    %7437 = vmatprep.subr.mxu0 %v7436
    %v7438 = vand.u32 %v3379, 4294901760
    %v7439 = vsub.f32 %v3379, %v7438
    %v7440 = vand.u32 %v7439, 4294901760
    %7441 = vmatpush1.msra.mxu0 %v7440
    %v7442 = vand.u32 %v3879, 4294901760
    %v7443 = vsub.f32 %v3879, %v7442
    %v7444 = vand.u32 %v7443, 4294901760
    %7445 = vmatprep.subr.mxu0 %v7444
    %v7446 = vand.u32 %v3878, 4294901760
    %v7447 = vsub.f32 %v3878, %v7446
    %v7448 = vand.u32 %v7447, 4294901760
    %7449 = vmatpush1.msra.mxu0 %v7448
    %v7450 = vand.u32 %v3836, 4294901760
    %v7451 = vsub.f32 %v3836, %v7450
    %v7452 = vand.u32 %v7451, 4294901760
    %7453 = vmatprep.subr.mxu0 %v7452
    %v7454 = vand.u32 %v3835, 4294901760
    %v7455 = vsub.f32 %v3835, %v7454
    %v7456 = vand.u32 %v7455, 4294901760
    %7457 = vmatpush1.msra.mxu0 %v7456
    %v7458 = vand.u32 %v3725, 4294901760
    %v7459 = vsub.f32 %v3725, %v7458
    %v7460 = vand.u32 %v7459, 4294901760
    %7461 = vmatprep.subr.mxu0 %v7460
    %v7462 = vand.u32 %v3724, 4294901760
    %v7463 = vsub.f32 %v3724, %v7462
    %v7464 = vand.u32 %v7463, 4294901760
    %7465 = vmatpush1.msra.mxu0 %v7464
    %v7466 = vand.u32 %v3785, 4294901760
    %v7467 = vsub.f32 %v3785, %v7466
    %v7468 = vand.u32 %v7467, 4294901760
    %7469 = vmatprep.subr.mxu0 %v7468
    %v7470 = vand.u32 %v3784, 4294901760
    %v7471 = vsub.f32 %v3784, %v7470
    %v7472 = vand.u32 %v7471, 4294901760
    %7473 = vmatpush1.msra.mxu0 %v7472
    %v7474 = vand.u32 %v3665, 4294901760
    %v7475 = vsub.f32 %v3665, %v7474
    %v7476 = vand.u32 %v7475, 4294901760
    %7477 = vmatprep.subr.mxu0 %v7476
    %v7478 = vand.u32 %v3664, 4294901760
    %v7479 = vsub.f32 %v3664, %v7478
    %v7480 = vand.u32 %v7479, 4294901760
    %7481 = vmatpush1.msra.mxu0 %v7480
    %v7482 = vand.u32 %v3726, 4294901760
    %v7483 = vsub.f32 %v3726, %v7482
    %v7484 = vand.u32 %v7483, 4294901760
    %7485 = vmatprep.subr.mxu0 %v7484
    %v7486 = vand.u32 %v3725, 4294901760
    %v7487 = vsub.f32 %v3725, %v7486
    %v7488 = vand.u32 %v7487, 4294901760
    %7489 = vmatpush1.msra.mxu0 %v7488
    %v7490 = vand.u32 %v3622, 4294901760
    %v7491 = vsub.f32 %v3622, %v7490
    %v7492 = vand.u32 %v7491, 4294901760
    %7493 = vmatprep.subr.mxu0 %v7492
    %v7494 = vand.u32 %v3621, 4294901760
    %v7495 = vsub.f32 %v3621, %v7494
    %v7496 = vand.u32 %v7495, 4294901760
    %7497 = vmatpush1.msra.mxu0 %v7496
    %v7498 = vand.u32 %v3579, 4294901760
    %v7499 = vsub.f32 %v3579, %v7498
    %v7500 = vand.u32 %v7499, 4294901760
    %7501 = vmatprep.subr.mxu0 %v7500
    %v7502 = vand.u32 %v3578, 4294901760
    %v7503 = vsub.f32 %v3578, %v7502
    %v7504 = vand.u32 %v7503, 4294901760
    %7505 = vmatpush1.msra.mxu0 %v7504
    %v7506 = vand.u32 %v3380, 4294901760
    %v7507 = vsub.f32 %v3380, %v7506
    %v7508 = vand.u32 %v7507, 4294901760
    %7509 = vmatprep.subr.mxu0 %v7508
    %v7510 = vand.u32 %v3379, 4294901760
    %v7511 = vsub.f32 %v3379, %v7510
    %v7512 = vand.u32 %v7511, 4294901760
    %7513 = vmatpush1.msra.mxu0 %v7512
    %v7514 = vand.u32 %v3535, 4294901760
    %v7515 = vsub.f32 %v3535, %v7514
    %v7516 = vand.u32 %v7515, 4294901760
    %7517 = vmatprep.subr.mxu0 %v7516
    %v7518 = vand.u32 %v3534, 4294901760
    %v7519 = vsub.f32 %v3534, %v7518
    %v7520 = vand.u32 %v7519, 4294901760
    %7521 = vmatpush1.msra.mxu0 %v7520
    %v7522 = vand.u32 %v3492, 4294901760
    %v7523 = vsub.f32 %v3492, %v7522
    %v7524 = vand.u32 %v7523, 4294901760
    %7525 = vmatprep.subr.mxu0 %v7524
    %v7526 = vand.u32 %v3491, 4294901760
    %v7527 = vsub.f32 %v3491, %v7526
    %v7528 = vand.u32 %v7527, 4294901760
    %7529 = vmatpush1.msra.mxu0 %v7528
    %v7530 = vand.u32 %v3692, 4294901760
    %v7531 = vsub.f32 %v3692, %v7530
    %v7532 = vand.u32 %v7531, 4294901760
    %7533 = vmatprep.subr.mxu0 %v7532
    %v7534 = vand.u32 %v3691, 4294901760
    %v7535 = vsub.f32 %v3691, %v7534
    %v7536 = vand.u32 %v7535, 4294901760
    %7537 = vmatpush1.msra.mxu0 %v7536
    %v7538 = vand.u32 %v3441, 4294901760
    %v7539 = vsub.f32 %v3441, %v7538
    %v7540 = vand.u32 %v7539, 4294901760
    %7541 = vmatprep.subr.mxu0 %v7540
    %v7542 = vand.u32 %v3440, 4294901760
    %v7543 = vsub.f32 %v3440, %v7542
    %v7544 = vand.u32 %v7543, 4294901760
    %7545 = vmatpush1.msra.mxu0 %v7544
    %7546 = vmatprep.subr.mxu0 0.0
    %7547 = vmatpush2.msra.mxu0 0.0
    %7548 = vmatprep.subr.mxu0 0.0
    %7549 = vmatpush2.msra.mxu0 0.0
    %7550 = vmatprep.subr.mxu0 0.0
    %7551 = vmatpush2.msra.mxu0 0.0
    %7552 = vmatprep.subr.mxu0 0.0
    %7553 = vmatpush2.msra.mxu0 0.0
    %7554 = vmatprep.subr.mxu0 0.0
    %7555 = vmatpush2.msra.mxu0 0.0
    %7556 = vmatprep.subr.mxu0 0.0
    %7557 = vmatpush2.msra.mxu0 0.0
    %7558 = vmatprep.subr.mxu0 0.0
    %7559 = vmatpush2.msra.mxu0 0.0
    %7560 = vmatprep.subr.mxu0 0.0
    %7561 = vmatpush2.msra.mxu0 0.0
    %7562 = vmatprep.subr.mxu0 0.0
    %7563 = vmatpush2.msra.mxu0 0.0
    %7564 = vmatprep.subr.mxu0 0.0
    %7565 = vmatpush2.msra.mxu0 0.0
    %7566 = vmatprep.subr.mxu0 0.0
    %7567 = vmatpush2.msra.mxu0 0.0
    %7568 = vmatprep.subr.mxu0 0.0
    %7569 = vmatpush2.msra.mxu0 0.0
    %7570 = vmatprep.subr.mxu0 0.0
    %7571 = vmatpush2.msra.mxu0 0.0
    %7572 = vmatprep.subr.mxu0 0.0
    %7573 = vmatpush2.msra.mxu0 0.0
    %v7574 = vand.u32 %v4008, 4294901760
    %v7575 = vsub.f32 %v4008, %v7574
    %v7576 = vand.u32 %v7575, 4294901760
    %7577 = vmatprep.subr.mxu0 %v7576
    %v7578 = vand.u32 %v4007, 4294901760
    %v7579 = vsub.f32 %v4007, %v7578
    %v7580 = vand.u32 %v7579, 4294901760
    %7581 = vmatpush2.msra.mxu0 %v7580
    %v7582 = vand.u32 %v4015, 4294901760
    %v7583 = vsub.f32 %v4015, %v7582
    %v7584 = vand.u32 %v7583, 4294901760
    %7585 = vmatprep.subr.mxu0 %v7584
    %v7586 = vand.u32 %v3692, 4294901760
    %v7587 = vsub.f32 %v3692, %v7586
    %v7588 = vand.u32 %v7587, 4294901760
    %7589 = vmatpush2.msra.mxu0 %v7588
    %v7590 = vand.u32 %v4026, 4294901760
    %7591 = vmatprep.mubr.f32.mxu0 %v7590
    %v7592 = vand.u32 %v4017, 4294901760
    %7593 = vmatmul.mubr.f32.gmra.mxu0 %v7592
    %v7594 = vpop.f32.mrf.mxu0
    %v7595 = vadd.f32 %v7414, %v7594
    %v7596 = vpop.f32.mrf.mxu0
    %v7597 = vadd.f32 %v7416, %v7596
    %7598 = vdwg.mxu0
    %v7599 = vand.u32 %v3965, 4294901760
    %7600 = vmatprep.subr.mxu0 %v7599
    %v7601 = vand.u32 %v3964, 4294901760
    %7602 = vmatpush1.msra.mxu0 %v7601
    %v7603 = vand.u32 %v3922, 4294901760
    %7604 = vmatprep.subr.mxu0 %v7603
    %v7605 = vand.u32 %v3921, 4294901760
    %7606 = vmatpush1.msra.mxu0 %v7605
    %v7607 = vand.u32 %v3380, 4294901760
    %7608 = vmatprep.subr.mxu0 %v7607
    %v7609 = vand.u32 %v3379, 4294901760
    %7610 = vmatpush1.msra.mxu0 %v7609
    %v7611 = vand.u32 %v3879, 4294901760
    %7612 = vmatprep.subr.mxu0 %v7611
    %v7613 = vand.u32 %v3878, 4294901760
    %7614 = vmatpush1.msra.mxu0 %v7613
    %v7615 = vand.u32 %v3836, 4294901760
    %7616 = vmatprep.subr.mxu0 %v7615
    %v7617 = vand.u32 %v3835, 4294901760
    %7618 = vmatpush1.msra.mxu0 %v7617
    %v7619 = vand.u32 %v3725, 4294901760
    %7620 = vmatprep.subr.mxu0 %v7619
    %v7621 = vand.u32 %v3724, 4294901760
    %7622 = vmatpush1.msra.mxu0 %v7621
    %v7623 = vand.u32 %v3785, 4294901760
    %7624 = vmatprep.subr.mxu0 %v7623
    %v7625 = vand.u32 %v3784, 4294901760
    %7626 = vmatpush1.msra.mxu0 %v7625
    %v7627 = vand.u32 %v3665, 4294901760
    %7628 = vmatprep.subr.mxu0 %v7627
    %v7629 = vand.u32 %v3664, 4294901760
    %7630 = vmatpush1.msra.mxu0 %v7629
    %v7631 = vand.u32 %v3726, 4294901760
    %7632 = vmatprep.subr.mxu0 %v7631
    %v7633 = vand.u32 %v3725, 4294901760
    %7634 = vmatpush1.msra.mxu0 %v7633
    %v7635 = vand.u32 %v3622, 4294901760
    %7636 = vmatprep.subr.mxu0 %v7635
    %v7637 = vand.u32 %v3621, 4294901760
    %7638 = vmatpush1.msra.mxu0 %v7637
    %v7639 = vand.u32 %v3579, 4294901760
    %7640 = vmatprep.subr.mxu0 %v7639
    %v7641 = vand.u32 %v3578, 4294901760
    %7642 = vmatpush1.msra.mxu0 %v7641
    %v7643 = vand.u32 %v3380, 4294901760
    %7644 = vmatprep.subr.mxu0 %v7643
    %v7645 = vand.u32 %v3379, 4294901760
    %7646 = vmatpush1.msra.mxu0 %v7645
    %v7647 = vand.u32 %v3535, 4294901760
    %7648 = vmatprep.subr.mxu0 %v7647
    %v7649 = vand.u32 %v3534, 4294901760
    %7650 = vmatpush1.msra.mxu0 %v7649
    %v7651 = vand.u32 %v3492, 4294901760
    %7652 = vmatprep.subr.mxu0 %v7651
    %v7653 = vand.u32 %v3491, 4294901760
    %7654 = vmatpush1.msra.mxu0 %v7653
    %v7655 = vand.u32 %v3692, 4294901760
    %7656 = vmatprep.subr.mxu0 %v7655
    %v7657 = vand.u32 %v3691, 4294901760
    %7658 = vmatpush1.msra.mxu0 %v7657
    %v7659 = vand.u32 %v3441, 4294901760
    %7660 = vmatprep.subr.mxu0 %v7659
    %v7661 = vand.u32 %v3440, 4294901760
    %7662 = vmatpush1.msra.mxu0 %v7661
    %7663 = vmatprep.subr.mxu0 0.0
    %7664 = vmatpush2.msra.mxu0 0.0
    %7665 = vmatprep.subr.mxu0 0.0
    %7666 = vmatpush2.msra.mxu0 0.0
    %7667 = vmatprep.subr.mxu0 0.0
    %7668 = vmatpush2.msra.mxu0 0.0
    %7669 = vmatprep.subr.mxu0 0.0
    %7670 = vmatpush2.msra.mxu0 0.0
    %7671 = vmatprep.subr.mxu0 0.0
    %7672 = vmatpush2.msra.mxu0 0.0
    %7673 = vmatprep.subr.mxu0 0.0
    %7674 = vmatpush2.msra.mxu0 0.0
    %7675 = vmatprep.subr.mxu0 0.0
    %7676 = vmatpush2.msra.mxu0 0.0
    %7677 = vmatprep.subr.mxu0 0.0
    %7678 = vmatpush2.msra.mxu0 0.0
    %7679 = vmatprep.subr.mxu0 0.0
    %7680 = vmatpush2.msra.mxu0 0.0
    %7681 = vmatprep.subr.mxu0 0.0
    %7682 = vmatpush2.msra.mxu0 0.0
    %7683 = vmatprep.subr.mxu0 0.0
    %7684 = vmatpush2.msra.mxu0 0.0
    %7685 = vmatprep.subr.mxu0 0.0
    %7686 = vmatpush2.msra.mxu0 0.0
    %7687 = vmatprep.subr.mxu0 0.0
    %7688 = vmatpush2.msra.mxu0 0.0
    %7689 = vmatprep.subr.mxu0 0.0
    %7690 = vmatpush2.msra.mxu0 0.0
    %v7691 = vand.u32 %v4008, 4294901760
    %7692 = vmatprep.subr.mxu0 %v7691
    %v7693 = vand.u32 %v4007, 4294901760
    %7694 = vmatpush2.msra.mxu0 %v7693
    %v7695 = vand.u32 %v4015, 4294901760
    %7696 = vmatprep.subr.mxu0 %v7695
    %v7697 = vand.u32 %v3692, 4294901760
    %7698 = vmatpush2.msra.mxu0 %v7697
    %v7699 = vand.u32 %v4026, 4294901760
    %7700 = vmatprep.mubr.f32.mxu0 %v7699
    %v7701 = vand.u32 %v4017, 4294901760
    %7702 = vmatmul.mubr.f32.gmra.mxu0 %v7701
    %v7703 = vpop.f32.mrf.mxu0
    %v7704 = vadd.f32 %v7595, %v7703
    %v7705 = vpop.f32.mrf.mxu0
    %v7706 = vadd.f32 %v7597, %v7705
    %7707 = vdwg.mxu0
    %v7708 = vsel %vm3250, %v4944, 0.0
    %v7709 = vsel %vm3251, %v4946, 0.0
    %v7710 = vsel %vm3252, %v5864, 0.0
    %v7711 = vsel %vm3253, %v5866, 0.0
    %v7712 = vsel %vm3254, %v6784, 0.0
    %v7713 = vsel %vm3255, %v6786, 0.0
    %v7714 = vsel %vm3256, %v7704, 0.0
    %v7715 = vsel %vm3257, %v7706, 0.0
    %v7716 = vadd.f32 %v7708, %v7709
    %v7717 = vadd.f32 %v7716, %v7710
    %v7718 = vadd.f32 %v7717, %v7711
    %v7719 = vadd.f32 %v7718, %v7712
    %v7720 = vadd.f32 %v7719, %v7713
    %v7721 = vadd.f32 %v7720, %v7714
    %v7722 = vadd.f32 %v7721, %v7715
    %7723 = vadd.xlane.f32.xlu0 %v7722
    %v7724 = vpop.xlane.xlu0 %7723
    %v7725 = vmul.f32 %v7724, 0.001953125
    %v7726 = vsub.f32 %v4944, %v7725
    %v7727 = vsub.f32 %v4946, %v7725
    %v7728 = vsub.f32 %v5864, %v7725
    %v7729 = vsub.f32 %v5866, %v7725
    %v7730 = vsub.f32 %v6784, %v7725
    %v7731 = vsub.f32 %v6786, %v7725
    %v7732 = vsub.f32 %v7704, %v7725
    %v7733 = vsub.f32 %v7706, %v7725
    %v7734 = vsel %vm3250, %v7726, 0.0
    %v7735 = vsel %vm3251, %v7727, 0.0
    %v7736 = vsel %vm3252, %v7728, 0.0
    %v7737 = vsel %vm3253, %v7729, 0.0
    %v7738 = vsel %vm3254, %v7730, 0.0
    %v7739 = vsel %vm3255, %v7731, 0.0
    %v7740 = vsel %vm3256, %v7732, 0.0
    %v7741 = vsel %vm3257, %v7733, 0.0
    %v7742 = vmul.f32 %v7734, %v7734
    %v7743 = vmul.f32 %v7735, %v7735
    %v7744 = vmul.f32 %v7736, %v7736
    %v7745 = vmul.f32 %v7737, %v7737
    %v7746 = vmul.f32 %v7738, %v7738
    %v7747 = vmul.f32 %v7739, %v7739
    %v7748 = vmul.f32 %v7740, %v7740
    %v7749 = vmul.f32 %v7741, %v7741
    %v7750 = vadd.f32 %v7742, %v7743
    %v7751 = vadd.f32 %v7750, %v7744
    %v7752 = vadd.f32 %v7751, %v7745
    %v7753 = vadd.f32 %v7752, %v7746
    %v7754 = vadd.f32 %v7753, %v7747
    %v7755 = vadd.f32 %v7754, %v7748
    %v7756 = vadd.f32 %v7755, %v7749
    %7757 = vadd.xlane.f32.xlu0 %v7756
    %v7758 = vpop.xlane.xlu0 %7757
    %v7759 = vmul.f32 %v7758, 0.001953125
    %v7760 = vadd.f32 %v7759, 1e-05
    %v7761 = vrsqrt.pop %v7760
    %v7762 = vmul.f32 %v7734, %v7761
    %v7763 = vmul.f32 %v7735, %v7761
    %v7764 = vmul.f32 %v7736, %v7761
    %v7765 = vmul.f32 %v7737, %v7761
    %v7766 = vmul.f32 %v7738, %v7761
    %v7767 = vmul.f32 %v7739, %v7761
    %v7768 = vmul.f32 %v7740, %v7761
    %v7769 = vmul.f32 %v7741, %v7761
    %v7770 = vld [vmem:[%s7] sm:$0xff]
    %7772 = vset.pattern.permute.xlu0 0
    %7773 = vperm.xlu0 %7772, %v7770
    %v7774 = vpop.permute.xlu0 %7773
    %v7776 = vmul.f32 %v7762, %v7774
    %v7777 = vmul.f32 %v7763, %v7774
    %v7778 = vmul.f32 %v7764, %v7774
    %v7779 = vmul.f32 %v7765, %v7774
    %v7780 = vmul.f32 %v7766, %v7774
    %v7781 = vmul.f32 %v7767, %v7774
    %v7782 = vmul.f32 %v7768, %v7774
    %v7783 = vmul.f32 %v7769, %v7774
    %v7784 = vld [vmem:[%s8] sm:$0xff]
    %7786 = vset.pattern.permute.xlu0 0
    %7787 = vperm.xlu0 %7786, %v7784
    %v7788 = vpop.permute.xlu0 %7787
    %v7790 = vadd.f32 %v7776, %v7788
    %v7791 = vadd.f32 %v7777, %v7788
    %v7792 = vadd.f32 %v7778, %v7788
    %v7793 = vadd.f32 %v7779, %v7788
    %v7794 = vadd.f32 %v7780, %v7788
    %v7795 = vadd.f32 %v7781, %v7788
    %v7796 = vadd.f32 %v7782, %v7788
    %v7797 = vadd.f32 %v7783, %v7788
    %v7798 = vmax.f32 %v7790, 0.0
    %v7799 = vmax.f32 %v7791, 0.0
    %v7800 = vmax.f32 %v7792, 0.0
    %v7801 = vmax.f32 %v7793, 0.0
    %v7802 = vmax.f32 %v7794, 0.0
    %v7803 = vmax.f32 %v7795, 0.0
    %v7804 = vmax.f32 %v7796, 0.0
    %v7805 = vmax.f32 %v7797, 0.0
    %v7806 = vsel %vm3250, %v7798, 0.0
    %v7807 = vsel %vm3251, %v7799, 0.0
    %v7808 = vsel %vm3252, %v7800, 0.0
    %v7809 = vsel %vm3253, %v7801, 0.0
    %v7810 = vsel %vm3254, %v7802, 0.0
    %v7811 = vsel %vm3255, %v7803, 0.0
    %v7812 = vsel %vm3256, %v7804, 0.0
    %v7813 = vsel %vm3257, %v7805, 0.0
    %7814 = vst [vmem:[#allocation4 + $0x8] sm:$0xff] %v7806
    %7815 = vst [vmem:[#allocation4 + $0x10] sm:$0xff] %v7807
    %7816 = vst [vmem:[#allocation4 + $0x18] sm:$0xff] %v7808
    %7817 = vst [vmem:[#allocation4 + $0x20] sm:$0xff] %v7809
    %7818 = vst [vmem:[#allocation4 + $0x28] sm:$0xff] %v7810
    %7819 = vst [vmem:[#allocation4 + $0x30] sm:$0xff] %v7811
    %7820 = vst [vmem:[#allocation4 + $0x38] sm:$0xff] %v7812
    %7821 = vst [vmem:[#allocation4 + $0x40] sm:$0xff] %v7813
    %v7822 = vld [vmem:[#allocation4] sm:$0xff]
    %v7823 = vld [vmem:[#allocation4 + $0x8] sm:$0xff]
    %v7824 = vld [vmem:[#allocation4 + $0x10] sm:$0xff]
    %v7825 = vld [vmem:[#allocation4 + $0x18] sm:$0xff]
    %v7826 = vld [vmem:[#allocation4 + $0x20] sm:$0xff]
    %v7827 = vld [vmem:[#allocation4 + $0x28] sm:$0xff]
    %v7828 = vld [vmem:[#allocation4 + $0x30] sm:$0xff]
    %v7829 = vld [vmem:[#allocation4 + $0x38] sm:$0xff]
    %v7830 = vld [vmem:[#allocation4 + $0x40] sm:$0xff]
    %v7831 = vld [vmem:[#allocation4 + $0x48] sm:$0xff]
    %7841 = vrot.lane.b32.xlu0 %v7822, 17
    %v7842 = vpop.permute.xlu0 %7841
    %7843 = vrot.lane.b32.xlu0 %v7823, 17
    %v7844 = vpop.permute.xlu0 %7843
    %7845 = vrot.lane.b32.xlu0 %v7824, 17
    %v7846 = vpop.permute.xlu0 %7845
    %7847 = vrot.lane.b32.xlu0 %v7825, 17
    %v7848 = vpop.permute.xlu0 %7847
    %7849 = vrot.lane.b32.xlu0 %v7826, 17
    %v7850 = vpop.permute.xlu0 %7849
    %7851 = vrot.lane.b32.xlu0 %v7827, 17
    %v7852 = vpop.permute.xlu0 %7851
    %7853 = vrot.lane.b32.xlu0 %v7828, 17
    %v7854 = vpop.permute.xlu0 %7853
    %7855 = vrot.lane.b32.xlu0 %v7829, 17
    %v7856 = vpop.permute.xlu0 %7855
    %7857 = vrot.lane.b32.xlu0 %v7830, 17
    %v7858 = vpop.permute.xlu0 %7857
    %v7859 = vsel %vm220, %v7842, %v7844
    %v7860 = vsel %vm220, %v7844, %v7846
    %v7861 = vsel %vm220, %v7846, %v7848
    %v7862 = vsel %vm220, %v7848, %v7850
    %v7863 = vsel %vm220, %v7850, %v7852
    %v7864 = vsel %vm220, %v7852, %v7854
    %v7865 = vsel %vm220, %v7854, %v7856
    %v7866 = vsel %vm220, %v7856, %v7858
    %v7875 = vsel %vm185, %v7859, 0.0
    %v7876 = vsel %vm186, %v7860, 0.0
    %v7877 = vsel %vm187, %v7861, 0.0
    %v7878 = vsel %vm188, %v7862, 0.0
    %v7879 = vsel %vm189, %v7863, 0.0
    %v7880 = vsel %vm190, %v7864, 0.0
    %v7881 = vsel %vm191, %v7865, 0.0
    %v7882 = vsel %vm192, %v7866, 0.0
    %7883 = vrot.lane.b32.xlu0 %v7822, 15
    %v7884 = vpop.permute.xlu0 %7883
    %7885 = vrot.lane.b32.xlu0 %v7823, 15
    %v7886 = vpop.permute.xlu0 %7885
    %7887 = vrot.lane.b32.xlu0 %v7824, 15
    %v7888 = vpop.permute.xlu0 %7887
    %7889 = vrot.lane.b32.xlu0 %v7825, 15
    %v7890 = vpop.permute.xlu0 %7889
    %7891 = vrot.lane.b32.xlu0 %v7826, 15
    %v7892 = vpop.permute.xlu0 %7891
    %7893 = vrot.lane.b32.xlu0 %v7827, 15
    %v7894 = vpop.permute.xlu0 %7893
    %7895 = vrot.lane.b32.xlu0 %v7828, 15
    %v7896 = vpop.permute.xlu0 %7895
    %7897 = vrot.lane.b32.xlu0 %v7829, 15
    %v7898 = vpop.permute.xlu0 %7897
    %7899 = vrot.lane.b32.xlu0 %v7830, 15
    %v7900 = vpop.permute.xlu0 %7899
    %v7901 = vsel %vm271, %v7884, %v7886
    %v7902 = vsel %vm271, %v7886, %v7888
    %v7903 = vsel %vm271, %v7888, %v7890
    %v7904 = vsel %vm271, %v7890, %v7892
    %v7905 = vsel %vm271, %v7892, %v7894
    %v7906 = vsel %vm271, %v7894, %v7896
    %v7907 = vsel %vm271, %v7896, %v7898
    %v7908 = vsel %vm271, %v7898, %v7900
    %v7917 = vsel %vm245, %v7901, 0.0
    %v7918 = vsel %vm246, %v7902, 0.0
    %v7919 = vsel %vm247, %v7903, 0.0
    %v7920 = vsel %vm248, %v7904, 0.0
    %v7921 = vsel %vm249, %v7905, 0.0
    %v7922 = vsel %vm250, %v7906, 0.0
    %v7923 = vsel %vm251, %v7907, 0.0
    %v7924 = vsel %vm252, %v7908, 0.0
    %7925 = vrot.lane.b32.xlu0 %v7822, 1
    %v7926 = vpop.permute.xlu0 %7925
    %7927 = vrot.lane.b32.xlu0 %v7823, 1
    %v7928 = vpop.permute.xlu0 %7927
    %7929 = vrot.lane.b32.xlu0 %v7824, 1
    %v7930 = vpop.permute.xlu0 %7929
    %7931 = vrot.lane.b32.xlu0 %v7825, 1
    %v7932 = vpop.permute.xlu0 %7931
    %7933 = vrot.lane.b32.xlu0 %v7826, 1
    %v7934 = vpop.permute.xlu0 %7933
    %7935 = vrot.lane.b32.xlu0 %v7827, 1
    %v7936 = vpop.permute.xlu0 %7935
    %7937 = vrot.lane.b32.xlu0 %v7828, 1
    %v7938 = vpop.permute.xlu0 %7937
    %7939 = vrot.lane.b32.xlu0 %v7829, 1
    %v7940 = vpop.permute.xlu0 %7939
    %7941 = vrot.lane.b32.xlu0 %v7830, 1
    %v7942 = vpop.permute.xlu0 %7941
    %v7943 = vsel %vm314, %v7926, %v7928
    %v7944 = vsel %vm314, %v7928, %v7930
    %v7945 = vsel %vm314, %v7930, %v7932
    %v7946 = vsel %vm314, %v7932, %v7934
    %v7947 = vsel %vm314, %v7934, %v7936
    %v7948 = vsel %vm314, %v7936, %v7938
    %v7949 = vsel %vm314, %v7938, %v7940
    %v7950 = vsel %vm314, %v7940, %v7942
    %v7959 = vsel %vm185, %v7943, 0.0
    %v7960 = vsel %vm186, %v7944, 0.0
    %v7961 = vsel %vm187, %v7945, 0.0
    %v7962 = vsel %vm188, %v7946, 0.0
    %v7963 = vsel %vm189, %v7947, 0.0
    %v7964 = vsel %vm190, %v7948, 0.0
    %v7965 = vsel %vm191, %v7949, 0.0
    %v7966 = vsel %vm192, %v7950, 0.0
    %7968 = vrot.lane.b32.xlu0 %v7823, 127
    %v7969 = vpop.permute.xlu0 %7968
    %7970 = vrot.lane.b32.xlu0 %v7824, 127
    %v7971 = vpop.permute.xlu0 %7970
    %7972 = vrot.lane.b32.xlu0 %v7825, 127
    %v7973 = vpop.permute.xlu0 %7972
    %7974 = vrot.lane.b32.xlu0 %v7826, 127
    %v7975 = vpop.permute.xlu0 %7974
    %7976 = vrot.lane.b32.xlu0 %v7827, 127
    %v7977 = vpop.permute.xlu0 %7976
    %7978 = vrot.lane.b32.xlu0 %v7828, 127
    %v7979 = vpop.permute.xlu0 %7978
    %7980 = vrot.lane.b32.xlu0 %v7829, 127
    %v7981 = vpop.permute.xlu0 %7980
    %7982 = vrot.lane.b32.xlu0 %v7830, 127
    %v7983 = vpop.permute.xlu0 %7982
    %7984 = vrot.lane.b32.xlu0 %v7831, 127
    %v7985 = vpop.permute.xlu0 %7984
    %v7986 = vsel %vm358, %v7969, %v7971
    %v7987 = vsel %vm358, %v7971, %v7973
    %v7988 = vsel %vm358, %v7973, %v7975
    %v7989 = vsel %vm358, %v7975, %v7977
    %v7990 = vsel %vm358, %v7977, %v7979
    %v7991 = vsel %vm358, %v7979, %v7981
    %v7992 = vsel %vm358, %v7981, %v7983
    %v7993 = vsel %vm358, %v7983, %v7985
    %v8002 = vsel %vm245, %v7986, 0.0
    %v8003 = vsel %vm246, %v7987, 0.0
    %v8004 = vsel %vm247, %v7988, 0.0
    %v8005 = vsel %vm248, %v7989, 0.0
    %v8006 = vsel %vm249, %v7990, 0.0
    %v8007 = vsel %vm250, %v7991, 0.0
    %v8008 = vsel %vm251, %v7992, 0.0
    %v8009 = vsel %vm252, %v7993, 0.0
    %8010 = vrot.lane.b32.xlu0 %v7823, 113
    %v8011 = vpop.permute.xlu0 %8010
    %8012 = vrot.lane.b32.xlu0 %v7824, 113
    %v8013 = vpop.permute.xlu0 %8012
    %8014 = vrot.lane.b32.xlu0 %v7825, 113
    %v8015 = vpop.permute.xlu0 %8014
    %8016 = vrot.lane.b32.xlu0 %v7826, 113
    %v8017 = vpop.permute.xlu0 %8016
    %8018 = vrot.lane.b32.xlu0 %v7827, 113
    %v8019 = vpop.permute.xlu0 %8018
    %8020 = vrot.lane.b32.xlu0 %v7828, 113
    %v8021 = vpop.permute.xlu0 %8020
    %8022 = vrot.lane.b32.xlu0 %v7829, 113
    %v8023 = vpop.permute.xlu0 %8022
    %8024 = vrot.lane.b32.xlu0 %v7830, 113
    %v8025 = vpop.permute.xlu0 %8024
    %8026 = vrot.lane.b32.xlu0 %v7831, 113
    %v8027 = vpop.permute.xlu0 %8026
    %v8028 = vsel %vm401, %v8011, %v8013
    %v8029 = vsel %vm401, %v8013, %v8015
    %v8030 = vsel %vm401, %v8015, %v8017
    %v8031 = vsel %vm401, %v8017, %v8019
    %v8032 = vsel %vm401, %v8019, %v8021
    %v8033 = vsel %vm401, %v8021, %v8023
    %v8034 = vsel %vm401, %v8023, %v8025
    %v8035 = vsel %vm401, %v8025, %v8027
    %v8044 = vsel %vm185, %v8028, 0.0
    %v8045 = vsel %vm186, %v8029, 0.0
    %v8046 = vsel %vm187, %v8030, 0.0
    %v8047 = vsel %vm188, %v8031, 0.0
    %v8048 = vsel %vm189, %v8032, 0.0
    %v8049 = vsel %vm190, %v8033, 0.0
    %v8050 = vsel %vm191, %v8034, 0.0
    %v8051 = vsel %vm192, %v8035, 0.0
    %8052 = vrot.lane.b32.xlu0 %v7823, 111
    %v8053 = vpop.permute.xlu0 %8052
    %8054 = vrot.lane.b32.xlu0 %v7824, 111
    %v8055 = vpop.permute.xlu0 %8054
    %8056 = vrot.lane.b32.xlu0 %v7825, 111
    %v8057 = vpop.permute.xlu0 %8056
    %8058 = vrot.lane.b32.xlu0 %v7826, 111
    %v8059 = vpop.permute.xlu0 %8058
    %8060 = vrot.lane.b32.xlu0 %v7827, 111
    %v8061 = vpop.permute.xlu0 %8060
    %8062 = vrot.lane.b32.xlu0 %v7828, 111
    %v8063 = vpop.permute.xlu0 %8062
    %8064 = vrot.lane.b32.xlu0 %v7829, 111
    %v8065 = vpop.permute.xlu0 %8064
    %8066 = vrot.lane.b32.xlu0 %v7830, 111
    %v8067 = vpop.permute.xlu0 %8066
    %8068 = vrot.lane.b32.xlu0 %v7831, 111
    %v8069 = vpop.permute.xlu0 %8068
    %v8070 = vsel %vm444, %v8053, %v8055
    %v8071 = vsel %vm444, %v8055, %v8057
    %v8072 = vsel %vm444, %v8057, %v8059
    %v8073 = vsel %vm444, %v8059, %v8061
    %v8074 = vsel %vm444, %v8061, %v8063
    %v8075 = vsel %vm444, %v8063, %v8065
    %v8076 = vsel %vm444, %v8065, %v8067
    %v8077 = vsel %vm444, %v8067, %v8069
    %v8086 = vsel %vm245, %v8070, 0.0
    %v8087 = vsel %vm246, %v8071, 0.0
    %v8088 = vsel %vm247, %v8072, 0.0
    %v8089 = vsel %vm248, %v8073, 0.0
    %v8090 = vsel %vm249, %v8074, 0.0
    %v8091 = vsel %vm250, %v8075, 0.0
    %v8092 = vsel %vm251, %v8076, 0.0
    %v8093 = vsel %vm252, %v8077, 0.0
    %8094 = vrot.lane.b32.xlu0 %v7822, 16
    %v8095 = vpop.permute.xlu0 %8094
    %8096 = vrot.lane.b32.xlu0 %v7823, 16
    %v8097 = vpop.permute.xlu0 %8096
    %8098 = vrot.lane.b32.xlu0 %v7824, 16
    %v8099 = vpop.permute.xlu0 %8098
    %8100 = vrot.lane.b32.xlu0 %v7825, 16
    %v8101 = vpop.permute.xlu0 %8100
    %8102 = vrot.lane.b32.xlu0 %v7826, 16
    %v8103 = vpop.permute.xlu0 %8102
    %8104 = vrot.lane.b32.xlu0 %v7827, 16
    %v8105 = vpop.permute.xlu0 %8104
    %8106 = vrot.lane.b32.xlu0 %v7828, 16
    %v8107 = vpop.permute.xlu0 %8106
    %8108 = vrot.lane.b32.xlu0 %v7829, 16
    %v8109 = vpop.permute.xlu0 %8108
    %8110 = vrot.lane.b32.xlu0 %v7830, 16
    %v8111 = vpop.permute.xlu0 %8110
    %v8112 = vsel %vm487, %v8095, %v8097
    %v8113 = vsel %vm487, %v8097, %v8099
    %v8114 = vsel %vm487, %v8099, %v8101
    %v8115 = vsel %vm487, %v8101, %v8103
    %v8116 = vsel %vm487, %v8103, %v8105
    %v8117 = vsel %vm487, %v8105, %v8107
    %v8118 = vsel %vm487, %v8107, %v8109
    %v8119 = vsel %vm487, %v8109, %v8111
    %8128 = vrot.lane.b32.xlu0 %v7823, 112
    %v8129 = vpop.permute.xlu0 %8128
    %8130 = vrot.lane.b32.xlu0 %v7824, 112
    %v8131 = vpop.permute.xlu0 %8130
    %8132 = vrot.lane.b32.xlu0 %v7825, 112
    %v8133 = vpop.permute.xlu0 %8132
    %8134 = vrot.lane.b32.xlu0 %v7826, 112
    %v8135 = vpop.permute.xlu0 %8134
    %8136 = vrot.lane.b32.xlu0 %v7827, 112
    %v8137 = vpop.permute.xlu0 %8136
    %8138 = vrot.lane.b32.xlu0 %v7828, 112
    %v8139 = vpop.permute.xlu0 %8138
    %8140 = vrot.lane.b32.xlu0 %v7829, 112
    %v8141 = vpop.permute.xlu0 %8140
    %8142 = vrot.lane.b32.xlu0 %v7830, 112
    %v8143 = vpop.permute.xlu0 %8142
    %8144 = vrot.lane.b32.xlu0 %v7831, 112
    %v8145 = vpop.permute.xlu0 %8144
    %v8146 = vsel %vm522, %v8129, %v8131
    %v8147 = vsel %vm522, %v8131, %v8133
    %v8148 = vsel %vm522, %v8133, %v8135
    %v8149 = vsel %vm522, %v8135, %v8137
    %v8150 = vsel %vm522, %v8137, %v8139
    %v8151 = vsel %vm522, %v8139, %v8141
    %v8152 = vsel %vm522, %v8141, %v8143
    %v8153 = vsel %vm522, %v8143, %v8145
    %v8162 = vld [vmem:[%s9] sm:$0xff]
    %v8163 = vld [vmem:[%s10] sm:$0xff]
    %8165 = vset.pattern.permute.xlu0 0
    %8166 = vperm.xlu0 %8165, %v8163
    %v8167 = vpop.permute.xlu0 %8166
    %v8170 = vsel %vm546, %v8162, 0
    %8172 = vmatprep.subr.mxu0 0.0
    %8173 = vmatpush1.msra.mxu0 0.0
    %8174 = vmatprep.subr.mxu0 0.0
    %8175 = vmatpush1.msra.mxu0 0.0
    %8176 = vmatprep.subr.mxu0 0.0
    %8177 = vmatpush1.msra.mxu0 0.0
    %8178 = vmatprep.subr.mxu0 0.0
    %8179 = vmatpush1.msra.mxu0 0.0
    %8180 = vmatprep.subr.mxu0 0.0
    %8181 = vmatpush1.msra.mxu0 0.0
    %8182 = vmatprep.subr.mxu0 0.0
    %8183 = vmatpush1.msra.mxu0 0.0
    %8184 = vmatprep.subr.mxu0 0.0
    %8185 = vmatpush1.msra.mxu0 0.0
    %v8186 = vand.u32 %v8087, 4294901760
    %8187 = vmatprep.subr.mxu0 %v8186
    %v8188 = vand.u32 %v8086, 4294901760
    %8189 = vmatpush1.msra.mxu0 %v8188
    %v8190 = vand.u32 %v8147, 4294901760
    %8191 = vmatprep.subr.mxu0 %v8190
    %v8192 = vand.u32 %v8146, 4294901760
    %8193 = vmatpush1.msra.mxu0 %v8192
    %v8194 = vand.u32 %v8045, 4294901760
    %8195 = vmatprep.subr.mxu0 %v8194
    %v8196 = vand.u32 %v8044, 4294901760
    %8197 = vmatpush1.msra.mxu0 %v8196
    %v8198 = vand.u32 %v8003, 4294901760
    %8199 = vmatprep.subr.mxu0 %v8198
    %v8200 = vand.u32 %v8002, 4294901760
    %8201 = vmatpush1.msra.mxu0 %v8200
    %v8202 = vand.u32 %v7824, 4294901760
    %8203 = vmatprep.subr.mxu0 %v8202
    %v8204 = vand.u32 %v7823, 4294901760
    %8205 = vmatpush1.msra.mxu0 %v8204
    %v8206 = vand.u32 %v7960, 4294901760
    %8207 = vmatprep.subr.mxu0 %v8206
    %v8208 = vand.u32 %v7959, 4294901760
    %8209 = vmatpush1.msra.mxu0 %v8208
    %v8210 = vand.u32 %v7918, 4294901760
    %8211 = vmatprep.subr.mxu0 %v8210
    %v8212 = vand.u32 %v7917, 4294901760
    %8213 = vmatpush1.msra.mxu0 %v8212
    %v8214 = vand.u32 %v8113, 4294901760
    %8215 = vmatprep.subr.mxu0 %v8214
    %v8216 = vand.u32 %v8112, 4294901760
    %8217 = vmatpush1.msra.mxu0 %v8216
    %v8218 = vand.u32 %v7876, 4294901760
    %8219 = vmatprep.subr.mxu0 %v8218
    %v8220 = vand.u32 %v7875, 4294901760
    %8221 = vmatpush1.msra.mxu0 %v8220
    %8222 = vmatprep.subr.mxu0 0.0
    %8223 = vmatpush2.msra.mxu0 0.0
    %8224 = vmatprep.subr.mxu0 0.0
    %8225 = vmatpush2.msra.mxu0 0.0
    %8226 = vmatprep.subr.mxu0 0.0
    %8227 = vmatpush2.msra.mxu0 0.0
    %8228 = vmatprep.subr.mxu0 0.0
    %8229 = vmatpush2.msra.mxu0 0.0
    %8230 = vmatprep.subr.mxu0 0.0
    %8231 = vmatpush2.msra.mxu0 0.0
    %8232 = vmatprep.subr.mxu0 0.0
    %8233 = vmatpush2.msra.mxu0 0.0
    %8234 = vmatprep.subr.mxu0 0.0
    %8235 = vmatpush2.msra.mxu0 0.0
    %8236 = vmatprep.subr.mxu0 0.0
    %8237 = vmatpush2.msra.mxu0 0.0
    %8238 = vmatprep.subr.mxu0 0.0
    %8239 = vmatpush2.msra.mxu0 0.0
    %8240 = vmatprep.subr.mxu0 0.0
    %8241 = vmatpush2.msra.mxu0 0.0
    %8242 = vmatprep.subr.mxu0 0.0
    %8243 = vmatpush2.msra.mxu0 0.0
    %8244 = vmatprep.subr.mxu0 0.0
    %8245 = vmatpush2.msra.mxu0 0.0
    %8246 = vmatprep.subr.mxu0 0.0
    %8247 = vmatpush2.msra.mxu0 0.0
    %8248 = vmatprep.subr.mxu0 0.0
    %8249 = vmatpush2.msra.mxu0 0.0
    %8250 = vmatprep.subr.mxu0 0.0
    %8251 = vmatpush2.msra.mxu0 0.0
    %8252 = vmatprep.subr.mxu0 0.0
    %8253 = vmatpush2.msra.mxu0 0.0
    %8254 = vmatprep.mubr.f32.mxu0 0.0
    %v8255 = vand.u32 %v8170, 4294901760
    %v8256 = vsub.f32 %v8170, %v8255
    %v8257 = vand.u32 %v8256, 4294901760
    %v8258 = vsub.f32 %v8256, %v8257
    %v8259 = vand.u32 %v8258, 4294901760
    %8260 = vmatmul.mubr.f32.gmra.mxu0 %v8259
    %v8261 = vpop.f32.mrf.mxu0
    %v8262 = vadd.f32 %v8167, %v8261
    %v8263 = vpop.f32.mrf.mxu0
    %v8264 = vadd.f32 %v8167, %v8263
    %8265 = vdwg.mxu0
    %8266 = vmatprep.subr.mxu0 0.0
    %8267 = vmatpush1.msra.mxu0 0.0
    %8268 = vmatprep.subr.mxu0 0.0
    %8269 = vmatpush1.msra.mxu0 0.0
    %8270 = vmatprep.subr.mxu0 0.0
    %8271 = vmatpush1.msra.mxu0 0.0
    %8272 = vmatprep.subr.mxu0 0.0
    %8273 = vmatpush1.msra.mxu0 0.0
    %8274 = vmatprep.subr.mxu0 0.0
    %8275 = vmatpush1.msra.mxu0 0.0
    %8276 = vmatprep.subr.mxu0 0.0
    %8277 = vmatpush1.msra.mxu0 0.0
    %8278 = vmatprep.subr.mxu0 0.0
    %8279 = vmatpush1.msra.mxu0 0.0
    %v8280 = vand.u32 %v8087, 4294901760
    %v8281 = vsub.f32 %v8087, %v8280
    %v8282 = vand.u32 %v8281, 4294901760
    %v8283 = vsub.f32 %v8281, %v8282
    %v8284 = vand.u32 %v8283, 4294901760
    %8285 = vmatprep.subr.mxu0 %v8284
    %v8286 = vand.u32 %v8086, 4294901760
    %v8287 = vsub.f32 %v8086, %v8286
    %v8288 = vand.u32 %v8287, 4294901760
    %v8289 = vsub.f32 %v8287, %v8288
    %v8290 = vand.u32 %v8289, 4294901760
    %8291 = vmatpush1.msra.mxu0 %v8290
    %v8292 = vand.u32 %v8147, 4294901760
    %v8293 = vsub.f32 %v8147, %v8292
    %v8294 = vand.u32 %v8293, 4294901760
    %v8295 = vsub.f32 %v8293, %v8294
    %v8296 = vand.u32 %v8295, 4294901760
    %8297 = vmatprep.subr.mxu0 %v8296
    %v8298 = vand.u32 %v8146, 4294901760
    %v8299 = vsub.f32 %v8146, %v8298
    %v8300 = vand.u32 %v8299, 4294901760
    %v8301 = vsub.f32 %v8299, %v8300
    %v8302 = vand.u32 %v8301, 4294901760
    %8303 = vmatpush1.msra.mxu0 %v8302
    %v8304 = vand.u32 %v8045, 4294901760
    %v8305 = vsub.f32 %v8045, %v8304
    %v8306 = vand.u32 %v8305, 4294901760
    %v8307 = vsub.f32 %v8305, %v8306
    %v8308 = vand.u32 %v8307, 4294901760
    %8309 = vmatprep.subr.mxu0 %v8308
    %v8310 = vand.u32 %v8044, 4294901760
    %v8311 = vsub.f32 %v8044, %v8310
    %v8312 = vand.u32 %v8311, 4294901760
    %v8313 = vsub.f32 %v8311, %v8312
    %v8314 = vand.u32 %v8313, 4294901760
    %8315 = vmatpush1.msra.mxu0 %v8314
    %v8316 = vand.u32 %v8003, 4294901760
    %v8317 = vsub.f32 %v8003, %v8316
    %v8318 = vand.u32 %v8317, 4294901760
    %v8319 = vsub.f32 %v8317, %v8318
    %v8320 = vand.u32 %v8319, 4294901760
    %8321 = vmatprep.subr.mxu0 %v8320
    %v8322 = vand.u32 %v8002, 4294901760
    %v8323 = vsub.f32 %v8002, %v8322
    %v8324 = vand.u32 %v8323, 4294901760
    %v8325 = vsub.f32 %v8323, %v8324
    %v8326 = vand.u32 %v8325, 4294901760
    %8327 = vmatpush1.msra.mxu0 %v8326
    %v8328 = vand.u32 %v7824, 4294901760
    %v8329 = vsub.f32 %v7824, %v8328
    %v8330 = vand.u32 %v8329, 4294901760
    %v8331 = vsub.f32 %v8329, %v8330
    %v8332 = vand.u32 %v8331, 4294901760
    %8333 = vmatprep.subr.mxu0 %v8332
    %v8334 = vand.u32 %v7823, 4294901760
    %v8335 = vsub.f32 %v7823, %v8334
    %v8336 = vand.u32 %v8335, 4294901760
    %v8337 = vsub.f32 %v8335, %v8336
    %v8338 = vand.u32 %v8337, 4294901760
    %8339 = vmatpush1.msra.mxu0 %v8338
    %v8340 = vand.u32 %v7960, 4294901760
    %v8341 = vsub.f32 %v7960, %v8340
    %v8342 = vand.u32 %v8341, 4294901760
    %v8343 = vsub.f32 %v8341, %v8342
    %v8344 = vand.u32 %v8343, 4294901760
    %8345 = vmatprep.subr.mxu0 %v8344
    %v8346 = vand.u32 %v7959, 4294901760
    %v8347 = vsub.f32 %v7959, %v8346
    %v8348 = vand.u32 %v8347, 4294901760
    %v8349 = vsub.f32 %v8347, %v8348
    %v8350 = vand.u32 %v8349, 4294901760
    %8351 = vmatpush1.msra.mxu0 %v8350
    %v8352 = vand.u32 %v7918, 4294901760
    %v8353 = vsub.f32 %v7918, %v8352
    %v8354 = vand.u32 %v8353, 4294901760
    %v8355 = vsub.f32 %v8353, %v8354
    %v8356 = vand.u32 %v8355, 4294901760
    %8357 = vmatprep.subr.mxu0 %v8356
    %v8358 = vand.u32 %v7917, 4294901760
    %v8359 = vsub.f32 %v7917, %v8358
    %v8360 = vand.u32 %v8359, 4294901760
    %v8361 = vsub.f32 %v8359, %v8360
    %v8362 = vand.u32 %v8361, 4294901760
    %8363 = vmatpush1.msra.mxu0 %v8362
    %v8364 = vand.u32 %v8113, 4294901760
    %v8365 = vsub.f32 %v8113, %v8364
    %v8366 = vand.u32 %v8365, 4294901760
    %v8367 = vsub.f32 %v8365, %v8366
    %v8368 = vand.u32 %v8367, 4294901760
    %8369 = vmatprep.subr.mxu0 %v8368
    %v8370 = vand.u32 %v8112, 4294901760
    %v8371 = vsub.f32 %v8112, %v8370
    %v8372 = vand.u32 %v8371, 4294901760
    %v8373 = vsub.f32 %v8371, %v8372
    %v8374 = vand.u32 %v8373, 4294901760
    %8375 = vmatpush1.msra.mxu0 %v8374
    %v8376 = vand.u32 %v7876, 4294901760
    %v8377 = vsub.f32 %v7876, %v8376
    %v8378 = vand.u32 %v8377, 4294901760
    %v8379 = vsub.f32 %v8377, %v8378
    %v8380 = vand.u32 %v8379, 4294901760
    %8381 = vmatprep.subr.mxu0 %v8380
    %v8382 = vand.u32 %v7875, 4294901760
    %v8383 = vsub.f32 %v7875, %v8382
    %v8384 = vand.u32 %v8383, 4294901760
    %v8385 = vsub.f32 %v8383, %v8384
    %v8386 = vand.u32 %v8385, 4294901760
    %8387 = vmatpush1.msra.mxu0 %v8386
    %8388 = vmatprep.subr.mxu0 0.0
    %8389 = vmatpush2.msra.mxu0 0.0
    %8390 = vmatprep.subr.mxu0 0.0
    %8391 = vmatpush2.msra.mxu0 0.0
    %8392 = vmatprep.subr.mxu0 0.0
    %8393 = vmatpush2.msra.mxu0 0.0
    %8394 = vmatprep.subr.mxu0 0.0
    %8395 = vmatpush2.msra.mxu0 0.0
    %8396 = vmatprep.subr.mxu0 0.0
    %8397 = vmatpush2.msra.mxu0 0.0
    %8398 = vmatprep.subr.mxu0 0.0
    %8399 = vmatpush2.msra.mxu0 0.0
    %8400 = vmatprep.subr.mxu0 0.0
    %8401 = vmatpush2.msra.mxu0 0.0
    %8402 = vmatprep.subr.mxu0 0.0
    %8403 = vmatpush2.msra.mxu0 0.0
    %8404 = vmatprep.subr.mxu0 0.0
    %8405 = vmatpush2.msra.mxu0 0.0
    %8406 = vmatprep.subr.mxu0 0.0
    %8407 = vmatpush2.msra.mxu0 0.0
    %8408 = vmatprep.subr.mxu0 0.0
    %8409 = vmatpush2.msra.mxu0 0.0
    %8410 = vmatprep.subr.mxu0 0.0
    %8411 = vmatpush2.msra.mxu0 0.0
    %8412 = vmatprep.subr.mxu0 0.0
    %8413 = vmatpush2.msra.mxu0 0.0
    %8414 = vmatprep.subr.mxu0 0.0
    %8415 = vmatpush2.msra.mxu0 0.0
    %8416 = vmatprep.subr.mxu0 0.0
    %8417 = vmatpush2.msra.mxu0 0.0
    %8418 = vmatprep.subr.mxu0 0.0
    %8419 = vmatpush2.msra.mxu0 0.0
    %8420 = vmatprep.mubr.f32.mxu0 0.0
    %v8421 = vand.u32 %v8170, 4294901760
    %8422 = vmatmul.mubr.f32.gmra.mxu0 %v8421
    %v8423 = vpop.f32.mrf.mxu0
    %v8424 = vadd.f32 %v8262, %v8423
    %v8425 = vpop.f32.mrf.mxu0
    %v8426 = vadd.f32 %v8264, %v8425
    %8427 = vdwg.mxu0
    %8428 = vmatprep.subr.mxu0 0.0
    %8429 = vmatpush1.msra.mxu0 0.0
    %8430 = vmatprep.subr.mxu0 0.0
    %8431 = vmatpush1.msra.mxu0 0.0
    %8432 = vmatprep.subr.mxu0 0.0
    %8433 = vmatpush1.msra.mxu0 0.0
    %8434 = vmatprep.subr.mxu0 0.0
    %8435 = vmatpush1.msra.mxu0 0.0
    %8436 = vmatprep.subr.mxu0 0.0
    %8437 = vmatpush1.msra.mxu0 0.0
    %8438 = vmatprep.subr.mxu0 0.0
    %8439 = vmatpush1.msra.mxu0 0.0
    %8440 = vmatprep.subr.mxu0 0.0
    %8441 = vmatpush1.msra.mxu0 0.0
    %v8442 = vand.u32 %v8087, 4294901760
    %v8443 = vsub.f32 %v8087, %v8442
    %8444 = vmatprep.subr.mxu0 %v8443
    %v8445 = vand.u32 %v8086, 4294901760
    %v8446 = vsub.f32 %v8086, %v8445
    %8447 = vmatpush1.msra.mxu0 %v8446
    %v8448 = vand.u32 %v8147, 4294901760
    %v8449 = vsub.f32 %v8147, %v8448
    %8450 = vmatprep.subr.mxu0 %v8449
    %v8451 = vand.u32 %v8146, 4294901760
    %v8452 = vsub.f32 %v8146, %v8451
    %8453 = vmatpush1.msra.mxu0 %v8452
    %v8454 = vand.u32 %v8045, 4294901760
    %v8455 = vsub.f32 %v8045, %v8454
    %8456 = vmatprep.subr.mxu0 %v8455
    %v8457 = vand.u32 %v8044, 4294901760
    %v8458 = vsub.f32 %v8044, %v8457
    %8459 = vmatpush1.msra.mxu0 %v8458
    %v8460 = vand.u32 %v8003, 4294901760
    %v8461 = vsub.f32 %v8003, %v8460
    %8462 = vmatprep.subr.mxu0 %v8461
    %v8463 = vand.u32 %v8002, 4294901760
    %v8464 = vsub.f32 %v8002, %v8463
    %8465 = vmatpush1.msra.mxu0 %v8464
    %v8466 = vand.u32 %v7824, 4294901760
    %v8467 = vsub.f32 %v7824, %v8466
    %8468 = vmatprep.subr.mxu0 %v8467
    %v8469 = vand.u32 %v7823, 4294901760
    %v8470 = vsub.f32 %v7823, %v8469
    %8471 = vmatpush1.msra.mxu0 %v8470
    %v8472 = vand.u32 %v7960, 4294901760
    %v8473 = vsub.f32 %v7960, %v8472
    %8474 = vmatprep.subr.mxu0 %v8473
    %v8475 = vand.u32 %v7959, 4294901760
    %v8476 = vsub.f32 %v7959, %v8475
    %8477 = vmatpush1.msra.mxu0 %v8476
    %v8478 = vand.u32 %v7918, 4294901760
    %v8479 = vsub.f32 %v7918, %v8478
    %8480 = vmatprep.subr.mxu0 %v8479
    %v8481 = vand.u32 %v7917, 4294901760
    %v8482 = vsub.f32 %v7917, %v8481
    %8483 = vmatpush1.msra.mxu0 %v8482
    %v8484 = vand.u32 %v8113, 4294901760
    %v8485 = vsub.f32 %v8113, %v8484
    %8486 = vmatprep.subr.mxu0 %v8485
    %v8487 = vand.u32 %v8112, 4294901760
    %v8488 = vsub.f32 %v8112, %v8487
    %8489 = vmatpush1.msra.mxu0 %v8488
    %v8490 = vand.u32 %v7876, 4294901760
    %v8491 = vsub.f32 %v7876, %v8490
    %8492 = vmatprep.subr.mxu0 %v8491
    %v8493 = vand.u32 %v7875, 4294901760
    %v8494 = vsub.f32 %v7875, %v8493
    %8495 = vmatpush1.msra.mxu0 %v8494
    %8496 = vmatprep.subr.mxu0 0.0
    %8497 = vmatpush2.msra.mxu0 0.0
    %8498 = vmatprep.subr.mxu0 0.0
    %8499 = vmatpush2.msra.mxu0 0.0
    %8500 = vmatprep.subr.mxu0 0.0
    %8501 = vmatpush2.msra.mxu0 0.0
    %8502 = vmatprep.subr.mxu0 0.0
    %8503 = vmatpush2.msra.mxu0 0.0
    %8504 = vmatprep.subr.mxu0 0.0
    %8505 = vmatpush2.msra.mxu0 0.0
    %8506 = vmatprep.subr.mxu0 0.0
    %8507 = vmatpush2.msra.mxu0 0.0
    %8508 = vmatprep.subr.mxu0 0.0
    %8509 = vmatpush2.msra.mxu0 0.0
    %8510 = vmatprep.subr.mxu0 0.0
    %8511 = vmatpush2.msra.mxu0 0.0
    %8512 = vmatprep.subr.mxu0 0.0
    %8513 = vmatpush2.msra.mxu0 0.0
    %8514 = vmatprep.subr.mxu0 0.0
    %8515 = vmatpush2.msra.mxu0 0.0
    %8516 = vmatprep.subr.mxu0 0.0
    %8517 = vmatpush2.msra.mxu0 0.0
    %8518 = vmatprep.subr.mxu0 0.0
    %8519 = vmatpush2.msra.mxu0 0.0
    %8520 = vmatprep.subr.mxu0 0.0
    %8521 = vmatpush2.msra.mxu0 0.0
    %8522 = vmatprep.subr.mxu0 0.0
    %8523 = vmatpush2.msra.mxu0 0.0
    %8524 = vmatprep.subr.mxu0 0.0
    %8525 = vmatpush2.msra.mxu0 0.0
    %8526 = vmatprep.subr.mxu0 0.0
    %8527 = vmatpush2.msra.mxu0 0.0
    %8528 = vmatprep.mubr.f32.mxu0 0.0
    %v8529 = vand.u32 %v8170, 4294901760
    %v8530 = vsub.f32 %v8170, %v8529
    %8531 = vmatmul.mubr.f32.gmra.mxu0 %v8530
    %v8532 = vpop.f32.mrf.mxu0
    %v8533 = vadd.f32 %v8424, %v8532
    %v8534 = vpop.f32.mrf.mxu0
    %v8535 = vadd.f32 %v8426, %v8534
    %8536 = vdwg.mxu0
    %8537 = vmatprep.subr.mxu0 0.0
    %8538 = vmatpush1.msra.mxu0 0.0
    %8539 = vmatprep.subr.mxu0 0.0
    %8540 = vmatpush1.msra.mxu0 0.0
    %8541 = vmatprep.subr.mxu0 0.0
    %8542 = vmatpush1.msra.mxu0 0.0
    %8543 = vmatprep.subr.mxu0 0.0
    %8544 = vmatpush1.msra.mxu0 0.0
    %8545 = vmatprep.subr.mxu0 0.0
    %8546 = vmatpush1.msra.mxu0 0.0
    %8547 = vmatprep.subr.mxu0 0.0
    %8548 = vmatpush1.msra.mxu0 0.0
    %8549 = vmatprep.subr.mxu0 0.0
    %8550 = vmatpush1.msra.mxu0 0.0
    %v8551 = vand.u32 %v8087, 4294901760
    %8552 = vmatprep.subr.mxu0 %v8551
    %v8553 = vand.u32 %v8086, 4294901760
    %8554 = vmatpush1.msra.mxu0 %v8553
    %v8555 = vand.u32 %v8147, 4294901760
    %8556 = vmatprep.subr.mxu0 %v8555
    %v8557 = vand.u32 %v8146, 4294901760
    %8558 = vmatpush1.msra.mxu0 %v8557
    %v8559 = vand.u32 %v8045, 4294901760
    %8560 = vmatprep.subr.mxu0 %v8559
    %v8561 = vand.u32 %v8044, 4294901760
    %8562 = vmatpush1.msra.mxu0 %v8561
    %v8563 = vand.u32 %v8003, 4294901760
    %8564 = vmatprep.subr.mxu0 %v8563
    %v8565 = vand.u32 %v8002, 4294901760
    %8566 = vmatpush1.msra.mxu0 %v8565
    %v8567 = vand.u32 %v7824, 4294901760
    %8568 = vmatprep.subr.mxu0 %v8567
    %v8569 = vand.u32 %v7823, 4294901760
    %8570 = vmatpush1.msra.mxu0 %v8569
    %v8571 = vand.u32 %v7960, 4294901760
    %8572 = vmatprep.subr.mxu0 %v8571
    %v8573 = vand.u32 %v7959, 4294901760
    %8574 = vmatpush1.msra.mxu0 %v8573
    %v8575 = vand.u32 %v7918, 4294901760
    %8576 = vmatprep.subr.mxu0 %v8575
    %v8577 = vand.u32 %v7917, 4294901760
    %8578 = vmatpush1.msra.mxu0 %v8577
    %v8579 = vand.u32 %v8113, 4294901760
    %8580 = vmatprep.subr.mxu0 %v8579
    %v8581 = vand.u32 %v8112, 4294901760
    %8582 = vmatpush1.msra.mxu0 %v8581
    %v8583 = vand.u32 %v7876, 4294901760
    %8584 = vmatprep.subr.mxu0 %v8583
    %v8585 = vand.u32 %v7875, 4294901760
    %8586 = vmatpush1.msra.mxu0 %v8585
    %8587 = vmatprep.subr.mxu0 0.0
    %8588 = vmatpush2.msra.mxu0 0.0
    %8589 = vmatprep.subr.mxu0 0.0
    %8590 = vmatpush2.msra.mxu0 0.0
    %8591 = vmatprep.subr.mxu0 0.0
    %8592 = vmatpush2.msra.mxu0 0.0
    %8593 = vmatprep.subr.mxu0 0.0
    %8594 = vmatpush2.msra.mxu0 0.0
    %8595 = vmatprep.subr.mxu0 0.0
    %8596 = vmatpush2.msra.mxu0 0.0
    %8597 = vmatprep.subr.mxu0 0.0
    %8598 = vmatpush2.msra.mxu0 0.0
    %8599 = vmatprep.subr.mxu0 0.0
    %8600 = vmatpush2.msra.mxu0 0.0
    %8601 = vmatprep.subr.mxu0 0.0
    %8602 = vmatpush2.msra.mxu0 0.0
    %8603 = vmatprep.subr.mxu0 0.0
    %8604 = vmatpush2.msra.mxu0 0.0
    %8605 = vmatprep.subr.mxu0 0.0
    %8606 = vmatpush2.msra.mxu0 0.0
    %8607 = vmatprep.subr.mxu0 0.0
    %8608 = vmatpush2.msra.mxu0 0.0
    %8609 = vmatprep.subr.mxu0 0.0
    %8610 = vmatpush2.msra.mxu0 0.0
    %8611 = vmatprep.subr.mxu0 0.0
    %8612 = vmatpush2.msra.mxu0 0.0
    %8613 = vmatprep.subr.mxu0 0.0
    %8614 = vmatpush2.msra.mxu0 0.0
    %8615 = vmatprep.subr.mxu0 0.0
    %8616 = vmatpush2.msra.mxu0 0.0
    %8617 = vmatprep.subr.mxu0 0.0
    %8618 = vmatpush2.msra.mxu0 0.0
    %8619 = vmatprep.mubr.f32.mxu0 0.0
    %v8620 = vand.u32 %v8170, 4294901760
    %v8621 = vsub.f32 %v8170, %v8620
    %v8622 = vand.u32 %v8621, 4294901760
    %8623 = vmatmul.mubr.f32.gmra.mxu0 %v8622
    %v8624 = vpop.f32.mrf.mxu0
    %v8625 = vadd.f32 %v8533, %v8624
    %v8626 = vpop.f32.mrf.mxu0
    %v8627 = vadd.f32 %v8535, %v8626
    %8628 = vdwg.mxu0
    %8629 = vmatprep.subr.mxu0 0.0
    %8630 = vmatpush1.msra.mxu0 0.0
    %8631 = vmatprep.subr.mxu0 0.0
    %8632 = vmatpush1.msra.mxu0 0.0
    %8633 = vmatprep.subr.mxu0 0.0
    %8634 = vmatpush1.msra.mxu0 0.0
    %8635 = vmatprep.subr.mxu0 0.0
    %8636 = vmatpush1.msra.mxu0 0.0
    %8637 = vmatprep.subr.mxu0 0.0
    %8638 = vmatpush1.msra.mxu0 0.0
    %8639 = vmatprep.subr.mxu0 0.0
    %8640 = vmatpush1.msra.mxu0 0.0
    %8641 = vmatprep.subr.mxu0 0.0
    %8642 = vmatpush1.msra.mxu0 0.0
    %v8643 = vand.u32 %v8087, 4294901760
    %v8644 = vsub.f32 %v8087, %v8643
    %v8645 = vand.u32 %v8644, 4294901760
    %8646 = vmatprep.subr.mxu0 %v8645
    %v8647 = vand.u32 %v8086, 4294901760
    %v8648 = vsub.f32 %v8086, %v8647
    %v8649 = vand.u32 %v8648, 4294901760
    %8650 = vmatpush1.msra.mxu0 %v8649
    %v8651 = vand.u32 %v8147, 4294901760
    %v8652 = vsub.f32 %v8147, %v8651
    %v8653 = vand.u32 %v8652, 4294901760
    %8654 = vmatprep.subr.mxu0 %v8653
    %v8655 = vand.u32 %v8146, 4294901760
    %v8656 = vsub.f32 %v8146, %v8655
    %v8657 = vand.u32 %v8656, 4294901760
    %8658 = vmatpush1.msra.mxu0 %v8657
    %v8659 = vand.u32 %v8045, 4294901760
    %v8660 = vsub.f32 %v8045, %v8659
    %v8661 = vand.u32 %v8660, 4294901760
    %8662 = vmatprep.subr.mxu0 %v8661
    %v8663 = vand.u32 %v8044, 4294901760
    %v8664 = vsub.f32 %v8044, %v8663
    %v8665 = vand.u32 %v8664, 4294901760
    %8666 = vmatpush1.msra.mxu0 %v8665
    %v8667 = vand.u32 %v8003, 4294901760
    %v8668 = vsub.f32 %v8003, %v8667
    %v8669 = vand.u32 %v8668, 4294901760
    %8670 = vmatprep.subr.mxu0 %v8669
    %v8671 = vand.u32 %v8002, 4294901760
    %v8672 = vsub.f32 %v8002, %v8671
    %v8673 = vand.u32 %v8672, 4294901760
    %8674 = vmatpush1.msra.mxu0 %v8673
    %v8675 = vand.u32 %v7824, 4294901760
    %v8676 = vsub.f32 %v7824, %v8675
    %v8677 = vand.u32 %v8676, 4294901760
    %8678 = vmatprep.subr.mxu0 %v8677
    %v8679 = vand.u32 %v7823, 4294901760
    %v8680 = vsub.f32 %v7823, %v8679
    %v8681 = vand.u32 %v8680, 4294901760
    %8682 = vmatpush1.msra.mxu0 %v8681
    %v8683 = vand.u32 %v7960, 4294901760
    %v8684 = vsub.f32 %v7960, %v8683
    %v8685 = vand.u32 %v8684, 4294901760
    %8686 = vmatprep.subr.mxu0 %v8685
    %v8687 = vand.u32 %v7959, 4294901760
    %v8688 = vsub.f32 %v7959, %v8687
    %v8689 = vand.u32 %v8688, 4294901760
    %8690 = vmatpush1.msra.mxu0 %v8689
    %v8691 = vand.u32 %v7918, 4294901760
    %v8692 = vsub.f32 %v7918, %v8691
    %v8693 = vand.u32 %v8692, 4294901760
    %8694 = vmatprep.subr.mxu0 %v8693
    %v8695 = vand.u32 %v7917, 4294901760
    %v8696 = vsub.f32 %v7917, %v8695
    %v8697 = vand.u32 %v8696, 4294901760
    %8698 = vmatpush1.msra.mxu0 %v8697
    %v8699 = vand.u32 %v8113, 4294901760
    %v8700 = vsub.f32 %v8113, %v8699
    %v8701 = vand.u32 %v8700, 4294901760
    %8702 = vmatprep.subr.mxu0 %v8701
    %v8703 = vand.u32 %v8112, 4294901760
    %v8704 = vsub.f32 %v8112, %v8703
    %v8705 = vand.u32 %v8704, 4294901760
    %8706 = vmatpush1.msra.mxu0 %v8705
    %v8707 = vand.u32 %v7876, 4294901760
    %v8708 = vsub.f32 %v7876, %v8707
    %v8709 = vand.u32 %v8708, 4294901760
    %8710 = vmatprep.subr.mxu0 %v8709
    %v8711 = vand.u32 %v7875, 4294901760
    %v8712 = vsub.f32 %v7875, %v8711
    %v8713 = vand.u32 %v8712, 4294901760
    %8714 = vmatpush1.msra.mxu0 %v8713
    %8715 = vmatprep.subr.mxu0 0.0
    %8716 = vmatpush2.msra.mxu0 0.0
    %8717 = vmatprep.subr.mxu0 0.0
    %8718 = vmatpush2.msra.mxu0 0.0
    %8719 = vmatprep.subr.mxu0 0.0
    %8720 = vmatpush2.msra.mxu0 0.0
    %8721 = vmatprep.subr.mxu0 0.0
    %8722 = vmatpush2.msra.mxu0 0.0
    %8723 = vmatprep.subr.mxu0 0.0
    %8724 = vmatpush2.msra.mxu0 0.0
    %8725 = vmatprep.subr.mxu0 0.0
    %8726 = vmatpush2.msra.mxu0 0.0
    %8727 = vmatprep.subr.mxu0 0.0
    %8728 = vmatpush2.msra.mxu0 0.0
    %8729 = vmatprep.subr.mxu0 0.0
    %8730 = vmatpush2.msra.mxu0 0.0
    %8731 = vmatprep.subr.mxu0 0.0
    %8732 = vmatpush2.msra.mxu0 0.0
    %8733 = vmatprep.subr.mxu0 0.0
    %8734 = vmatpush2.msra.mxu0 0.0
    %8735 = vmatprep.subr.mxu0 0.0
    %8736 = vmatpush2.msra.mxu0 0.0
    %8737 = vmatprep.subr.mxu0 0.0
    %8738 = vmatpush2.msra.mxu0 0.0
    %8739 = vmatprep.subr.mxu0 0.0
    %8740 = vmatpush2.msra.mxu0 0.0
    %8741 = vmatprep.subr.mxu0 0.0
    %8742 = vmatpush2.msra.mxu0 0.0
    %8743 = vmatprep.subr.mxu0 0.0
    %8744 = vmatpush2.msra.mxu0 0.0
    %8745 = vmatprep.subr.mxu0 0.0
    %8746 = vmatpush2.msra.mxu0 0.0
    %8747 = vmatprep.mubr.f32.mxu0 0.0
    %v8748 = vand.u32 %v8170, 4294901760
    %8749 = vmatmul.mubr.f32.gmra.mxu0 %v8748
    %v8750 = vpop.f32.mrf.mxu0
    %v8751 = vadd.f32 %v8625, %v8750
    %v8752 = vpop.f32.mrf.mxu0
    %v8753 = vadd.f32 %v8627, %v8752
    %8754 = vdwg.mxu0
    %8755 = vmatprep.subr.mxu0 0.0
    %8756 = vmatpush1.msra.mxu0 0.0
    %8757 = vmatprep.subr.mxu0 0.0
    %8758 = vmatpush1.msra.mxu0 0.0
    %8759 = vmatprep.subr.mxu0 0.0
    %8760 = vmatpush1.msra.mxu0 0.0
    %8761 = vmatprep.subr.mxu0 0.0
    %8762 = vmatpush1.msra.mxu0 0.0
    %8763 = vmatprep.subr.mxu0 0.0
    %8764 = vmatpush1.msra.mxu0 0.0
    %8765 = vmatprep.subr.mxu0 0.0
    %8766 = vmatpush1.msra.mxu0 0.0
    %8767 = vmatprep.subr.mxu0 0.0
    %8768 = vmatpush1.msra.mxu0 0.0
    %v8769 = vand.u32 %v8087, 4294901760
    %8770 = vmatprep.subr.mxu0 %v8769
    %v8771 = vand.u32 %v8086, 4294901760
    %8772 = vmatpush1.msra.mxu0 %v8771
    %v8773 = vand.u32 %v8147, 4294901760
    %8774 = vmatprep.subr.mxu0 %v8773
    %v8775 = vand.u32 %v8146, 4294901760
    %8776 = vmatpush1.msra.mxu0 %v8775
    %v8777 = vand.u32 %v8045, 4294901760
    %8778 = vmatprep.subr.mxu0 %v8777
    %v8779 = vand.u32 %v8044, 4294901760
    %8780 = vmatpush1.msra.mxu0 %v8779
    %v8781 = vand.u32 %v8003, 4294901760
    %8782 = vmatprep.subr.mxu0 %v8781
    %v8783 = vand.u32 %v8002, 4294901760
    %8784 = vmatpush1.msra.mxu0 %v8783
    %v8785 = vand.u32 %v7824, 4294901760
    %8786 = vmatprep.subr.mxu0 %v8785
    %v8787 = vand.u32 %v7823, 4294901760
    %8788 = vmatpush1.msra.mxu0 %v8787
    %v8789 = vand.u32 %v7960, 4294901760
    %8790 = vmatprep.subr.mxu0 %v8789
    %v8791 = vand.u32 %v7959, 4294901760
    %8792 = vmatpush1.msra.mxu0 %v8791
    %v8793 = vand.u32 %v7918, 4294901760
    %8794 = vmatprep.subr.mxu0 %v8793
    %v8795 = vand.u32 %v7917, 4294901760
    %8796 = vmatpush1.msra.mxu0 %v8795
    %v8797 = vand.u32 %v8113, 4294901760
    %8798 = vmatprep.subr.mxu0 %v8797
    %v8799 = vand.u32 %v8112, 4294901760
    %8800 = vmatpush1.msra.mxu0 %v8799
    %v8801 = vand.u32 %v7876, 4294901760
    %8802 = vmatprep.subr.mxu0 %v8801
    %v8803 = vand.u32 %v7875, 4294901760
    %8804 = vmatpush1.msra.mxu0 %v8803
    %8805 = vmatprep.subr.mxu0 0.0
    %8806 = vmatpush2.msra.mxu0 0.0
    %8807 = vmatprep.subr.mxu0 0.0
    %8808 = vmatpush2.msra.mxu0 0.0
    %8809 = vmatprep.subr.mxu0 0.0
    %8810 = vmatpush2.msra.mxu0 0.0
    %8811 = vmatprep.subr.mxu0 0.0
    %8812 = vmatpush2.msra.mxu0 0.0
    %8813 = vmatprep.subr.mxu0 0.0
    %8814 = vmatpush2.msra.mxu0 0.0
    %8815 = vmatprep.subr.mxu0 0.0
    %8816 = vmatpush2.msra.mxu0 0.0
    %8817 = vmatprep.subr.mxu0 0.0
    %8818 = vmatpush2.msra.mxu0 0.0
    %8819 = vmatprep.subr.mxu0 0.0
    %8820 = vmatpush2.msra.mxu0 0.0
    %8821 = vmatprep.subr.mxu0 0.0
    %8822 = vmatpush2.msra.mxu0 0.0
    %8823 = vmatprep.subr.mxu0 0.0
    %8824 = vmatpush2.msra.mxu0 0.0
    %8825 = vmatprep.subr.mxu0 0.0
    %8826 = vmatpush2.msra.mxu0 0.0
    %8827 = vmatprep.subr.mxu0 0.0
    %8828 = vmatpush2.msra.mxu0 0.0
    %8829 = vmatprep.subr.mxu0 0.0
    %8830 = vmatpush2.msra.mxu0 0.0
    %8831 = vmatprep.subr.mxu0 0.0
    %8832 = vmatpush2.msra.mxu0 0.0
    %8833 = vmatprep.subr.mxu0 0.0
    %8834 = vmatpush2.msra.mxu0 0.0
    %8835 = vmatprep.subr.mxu0 0.0
    %8836 = vmatpush2.msra.mxu0 0.0
    %8837 = vmatprep.mubr.f32.mxu0 0.0
    %v8838 = vand.u32 %v8170, 4294901760
    %8839 = vmatmul.mubr.f32.gmra.mxu0 %v8838
    %v8840 = vpop.f32.mrf.mxu0
    %v8841 = vadd.f32 %v8751, %v8840
    %v8842 = vpop.f32.mrf.mxu0
    %v8843 = vadd.f32 %v8753, %v8842
    %8844 = vdwg.mxu0
    %8845 = vmatprep.subr.mxu0 0.0
    %8846 = vmatpush1.msra.mxu0 0.0
    %8847 = vmatprep.subr.mxu0 0.0
    %8848 = vmatpush1.msra.mxu0 0.0
    %8849 = vmatprep.subr.mxu0 0.0
    %8850 = vmatpush1.msra.mxu0 0.0
    %8851 = vmatprep.subr.mxu0 0.0
    %8852 = vmatpush1.msra.mxu0 0.0
    %8853 = vmatprep.subr.mxu0 0.0
    %8854 = vmatpush1.msra.mxu0 0.0
    %8855 = vmatprep.subr.mxu0 0.0
    %8856 = vmatpush1.msra.mxu0 0.0
    %8857 = vmatprep.subr.mxu0 0.0
    %8858 = vmatpush1.msra.mxu0 0.0
    %v8859 = vand.u32 %v8089, 4294901760
    %8860 = vmatprep.subr.mxu0 %v8859
    %v8861 = vand.u32 %v8088, 4294901760
    %8862 = vmatpush1.msra.mxu0 %v8861
    %v8863 = vand.u32 %v8149, 4294901760
    %8864 = vmatprep.subr.mxu0 %v8863
    %v8865 = vand.u32 %v8148, 4294901760
    %8866 = vmatpush1.msra.mxu0 %v8865
    %v8867 = vand.u32 %v8047, 4294901760
    %8868 = vmatprep.subr.mxu0 %v8867
    %v8869 = vand.u32 %v8046, 4294901760
    %8870 = vmatpush1.msra.mxu0 %v8869
    %v8871 = vand.u32 %v8005, 4294901760
    %8872 = vmatprep.subr.mxu0 %v8871
    %v8873 = vand.u32 %v8004, 4294901760
    %8874 = vmatpush1.msra.mxu0 %v8873
    %v8875 = vand.u32 %v7826, 4294901760
    %8876 = vmatprep.subr.mxu0 %v8875
    %v8877 = vand.u32 %v7825, 4294901760
    %8878 = vmatpush1.msra.mxu0 %v8877
    %v8879 = vand.u32 %v7962, 4294901760
    %8880 = vmatprep.subr.mxu0 %v8879
    %v8881 = vand.u32 %v7961, 4294901760
    %8882 = vmatpush1.msra.mxu0 %v8881
    %v8883 = vand.u32 %v7920, 4294901760
    %8884 = vmatprep.subr.mxu0 %v8883
    %v8885 = vand.u32 %v7919, 4294901760
    %8886 = vmatpush1.msra.mxu0 %v8885
    %v8887 = vand.u32 %v8115, 4294901760
    %8888 = vmatprep.subr.mxu0 %v8887
    %v8889 = vand.u32 %v8114, 4294901760
    %8890 = vmatpush1.msra.mxu0 %v8889
    %v8891 = vand.u32 %v7878, 4294901760
    %8892 = vmatprep.subr.mxu0 %v8891
    %v8893 = vand.u32 %v7877, 4294901760
    %8894 = vmatpush1.msra.mxu0 %v8893
    %8895 = vmatprep.subr.mxu0 0.0
    %8896 = vmatpush2.msra.mxu0 0.0
    %8897 = vmatprep.subr.mxu0 0.0
    %8898 = vmatpush2.msra.mxu0 0.0
    %8899 = vmatprep.subr.mxu0 0.0
    %8900 = vmatpush2.msra.mxu0 0.0
    %8901 = vmatprep.subr.mxu0 0.0
    %8902 = vmatpush2.msra.mxu0 0.0
    %8903 = vmatprep.subr.mxu0 0.0
    %8904 = vmatpush2.msra.mxu0 0.0
    %8905 = vmatprep.subr.mxu0 0.0
    %8906 = vmatpush2.msra.mxu0 0.0
    %8907 = vmatprep.subr.mxu0 0.0
    %8908 = vmatpush2.msra.mxu0 0.0
    %8909 = vmatprep.subr.mxu0 0.0
    %8910 = vmatpush2.msra.mxu0 0.0
    %8911 = vmatprep.subr.mxu0 0.0
    %8912 = vmatpush2.msra.mxu0 0.0
    %8913 = vmatprep.subr.mxu0 0.0
    %8914 = vmatpush2.msra.mxu0 0.0
    %8915 = vmatprep.subr.mxu0 0.0
    %8916 = vmatpush2.msra.mxu0 0.0
    %8917 = vmatprep.subr.mxu0 0.0
    %8918 = vmatpush2.msra.mxu0 0.0
    %8919 = vmatprep.subr.mxu0 0.0
    %8920 = vmatpush2.msra.mxu0 0.0
    %8921 = vmatprep.subr.mxu0 0.0
    %8922 = vmatpush2.msra.mxu0 0.0
    %8923 = vmatprep.subr.mxu0 0.0
    %8924 = vmatpush2.msra.mxu0 0.0
    %8925 = vmatprep.subr.mxu0 0.0
    %8926 = vmatpush2.msra.mxu0 0.0
    %8927 = vmatprep.mubr.f32.mxu0 0.0
    %v8928 = vand.u32 %v8170, 4294901760
    %v8929 = vsub.f32 %v8170, %v8928
    %v8930 = vand.u32 %v8929, 4294901760
    %v8931 = vsub.f32 %v8929, %v8930
    %v8932 = vand.u32 %v8931, 4294901760
    %8933 = vmatmul.mubr.f32.gmra.mxu0 %v8932
    %v8934 = vpop.f32.mrf.mxu0
    %v8935 = vadd.f32 %v8167, %v8934
    %v8936 = vpop.f32.mrf.mxu0
    %8937 = vdwg.mxu0
    %8938 = vmatprep.subr.mxu0 0.0
    %8939 = vmatpush1.msra.mxu0 0.0
    %8940 = vmatprep.subr.mxu0 0.0
    %8941 = vmatpush1.msra.mxu0 0.0
    %8942 = vmatprep.subr.mxu0 0.0
    %8943 = vmatpush1.msra.mxu0 0.0
    %8944 = vmatprep.subr.mxu0 0.0
    %8945 = vmatpush1.msra.mxu0 0.0
    %8946 = vmatprep.subr.mxu0 0.0
    %8947 = vmatpush1.msra.mxu0 0.0
    %8948 = vmatprep.subr.mxu0 0.0
    %8949 = vmatpush1.msra.mxu0 0.0
    %8950 = vmatprep.subr.mxu0 0.0
    %8951 = vmatpush1.msra.mxu0 0.0
    %v8952 = vand.u32 %v8089, 4294901760
    %v8953 = vsub.f32 %v8089, %v8952
    %v8954 = vand.u32 %v8953, 4294901760
    %v8955 = vsub.f32 %v8953, %v8954
    %v8956 = vand.u32 %v8955, 4294901760
    %8957 = vmatprep.subr.mxu0 %v8956
    %v8958 = vand.u32 %v8088, 4294901760
    %v8959 = vsub.f32 %v8088, %v8958
    %v8960 = vand.u32 %v8959, 4294901760
    %v8961 = vsub.f32 %v8959, %v8960
    %v8962 = vand.u32 %v8961, 4294901760
    %8963 = vmatpush1.msra.mxu0 %v8962
    %v8964 = vand.u32 %v8149, 4294901760
    %v8965 = vsub.f32 %v8149, %v8964
    %v8966 = vand.u32 %v8965, 4294901760
    %v8967 = vsub.f32 %v8965, %v8966
    %v8968 = vand.u32 %v8967, 4294901760
    %8969 = vmatprep.subr.mxu0 %v8968
    %v8970 = vand.u32 %v8148, 4294901760
    %v8971 = vsub.f32 %v8148, %v8970
    %v8972 = vand.u32 %v8971, 4294901760
    %v8973 = vsub.f32 %v8971, %v8972
    %v8974 = vand.u32 %v8973, 4294901760
    %8975 = vmatpush1.msra.mxu0 %v8974
    %v8976 = vand.u32 %v8047, 4294901760
    %v8977 = vsub.f32 %v8047, %v8976
    %v8978 = vand.u32 %v8977, 4294901760
    %v8979 = vsub.f32 %v8977, %v8978
    %v8980 = vand.u32 %v8979, 4294901760
    %8981 = vmatprep.subr.mxu0 %v8980
    %v8982 = vand.u32 %v8046, 4294901760
    %v8983 = vsub.f32 %v8046, %v8982
    %v8984 = vand.u32 %v8983, 4294901760
    %v8985 = vsub.f32 %v8983, %v8984
    %v8986 = vand.u32 %v8985, 4294901760
    %8987 = vmatpush1.msra.mxu0 %v8986
    %v8988 = vand.u32 %v8005, 4294901760
    %v8989 = vsub.f32 %v8005, %v8988
    %v8990 = vand.u32 %v8989, 4294901760
    %v8991 = vsub.f32 %v8989, %v8990
    %v8992 = vand.u32 %v8991, 4294901760
    %8993 = vmatprep.subr.mxu0 %v8992
    %v8994 = vand.u32 %v8004, 4294901760
    %v8995 = vsub.f32 %v8004, %v8994
    %v8996 = vand.u32 %v8995, 4294901760
    %v8997 = vsub.f32 %v8995, %v8996
    %v8998 = vand.u32 %v8997, 4294901760
    %8999 = vmatpush1.msra.mxu0 %v8998
    %v9000 = vand.u32 %v7826, 4294901760
    %v9001 = vsub.f32 %v7826, %v9000
    %v9002 = vand.u32 %v9001, 4294901760
    %v9003 = vsub.f32 %v9001, %v9002
    %v9004 = vand.u32 %v9003, 4294901760
    %9005 = vmatprep.subr.mxu0 %v9004
    %v9006 = vand.u32 %v7825, 4294901760
    %v9007 = vsub.f32 %v7825, %v9006
    %v9008 = vand.u32 %v9007, 4294901760
    %v9009 = vsub.f32 %v9007, %v9008
    %v9010 = vand.u32 %v9009, 4294901760
    %9011 = vmatpush1.msra.mxu0 %v9010
    %v9012 = vand.u32 %v7962, 4294901760
    %v9013 = vsub.f32 %v7962, %v9012
    %v9014 = vand.u32 %v9013, 4294901760
    %v9015 = vsub.f32 %v9013, %v9014
    %v9016 = vand.u32 %v9015, 4294901760
    %9017 = vmatprep.subr.mxu0 %v9016
    %v9018 = vand.u32 %v7961, 4294901760
    %v9019 = vsub.f32 %v7961, %v9018
    %v9020 = vand.u32 %v9019, 4294901760
    %v9021 = vsub.f32 %v9019, %v9020
    %v9022 = vand.u32 %v9021, 4294901760
    %9023 = vmatpush1.msra.mxu0 %v9022
    %v9024 = vand.u32 %v7920, 4294901760
    %v9025 = vsub.f32 %v7920, %v9024
    %v9026 = vand.u32 %v9025, 4294901760
    %v9027 = vsub.f32 %v9025, %v9026
    %v9028 = vand.u32 %v9027, 4294901760
    %9029 = vmatprep.subr.mxu0 %v9028
    %v9030 = vand.u32 %v7919, 4294901760
    %v9031 = vsub.f32 %v7919, %v9030
    %v9032 = vand.u32 %v9031, 4294901760
    %v9033 = vsub.f32 %v9031, %v9032
    %v9034 = vand.u32 %v9033, 4294901760
    %9035 = vmatpush1.msra.mxu0 %v9034
    %v9036 = vand.u32 %v8115, 4294901760
    %v9037 = vsub.f32 %v8115, %v9036
    %v9038 = vand.u32 %v9037, 4294901760
    %v9039 = vsub.f32 %v9037, %v9038
    %v9040 = vand.u32 %v9039, 4294901760
    %9041 = vmatprep.subr.mxu0 %v9040
    %v9042 = vand.u32 %v8114, 4294901760
    %v9043 = vsub.f32 %v8114, %v9042
    %v9044 = vand.u32 %v9043, 4294901760
    %v9045 = vsub.f32 %v9043, %v9044
    %v9046 = vand.u32 %v9045, 4294901760
    %9047 = vmatpush1.msra.mxu0 %v9046
    %v9048 = vand.u32 %v7878, 4294901760
    %v9049 = vsub.f32 %v7878, %v9048
    %v9050 = vand.u32 %v9049, 4294901760
    %v9051 = vsub.f32 %v9049, %v9050
    %v9052 = vand.u32 %v9051, 4294901760
    %9053 = vmatprep.subr.mxu0 %v9052
    %v9054 = vand.u32 %v7877, 4294901760
    %v9055 = vsub.f32 %v7877, %v9054
    %v9056 = vand.u32 %v9055, 4294901760
    %v9057 = vsub.f32 %v9055, %v9056
    %v9058 = vand.u32 %v9057, 4294901760
    %9059 = vmatpush1.msra.mxu0 %v9058
    %9060 = vmatprep.subr.mxu0 0.0
    %9061 = vmatpush2.msra.mxu0 0.0
    %9062 = vmatprep.subr.mxu0 0.0
    %9063 = vmatpush2.msra.mxu0 0.0
    %9064 = vmatprep.subr.mxu0 0.0
    %9065 = vmatpush2.msra.mxu0 0.0
    %9066 = vmatprep.subr.mxu0 0.0
    %9067 = vmatpush2.msra.mxu0 0.0
    %9068 = vmatprep.subr.mxu0 0.0
    %9069 = vmatpush2.msra.mxu0 0.0
    %9070 = vmatprep.subr.mxu0 0.0
    %9071 = vmatpush2.msra.mxu0 0.0
    %9072 = vmatprep.subr.mxu0 0.0
    %9073 = vmatpush2.msra.mxu0 0.0
    %9074 = vmatprep.subr.mxu0 0.0
    %9075 = vmatpush2.msra.mxu0 0.0
    %9076 = vmatprep.subr.mxu0 0.0
    %9077 = vmatpush2.msra.mxu0 0.0
    %9078 = vmatprep.subr.mxu0 0.0
    %9079 = vmatpush2.msra.mxu0 0.0
    %9080 = vmatprep.subr.mxu0 0.0
    %9081 = vmatpush2.msra.mxu0 0.0
    %9082 = vmatprep.subr.mxu0 0.0
    %9083 = vmatpush2.msra.mxu0 0.0
    %9084 = vmatprep.subr.mxu0 0.0
    %9085 = vmatpush2.msra.mxu0 0.0
    %9086 = vmatprep.subr.mxu0 0.0
    %9087 = vmatpush2.msra.mxu0 0.0
    %9088 = vmatprep.subr.mxu0 0.0
    %9089 = vmatpush2.msra.mxu0 0.0
    %9090 = vmatprep.subr.mxu0 0.0
    %9091 = vmatpush2.msra.mxu0 0.0
    %9092 = vmatprep.mubr.f32.mxu0 0.0
    %v9093 = vand.u32 %v8170, 4294901760
    %9094 = vmatmul.mubr.f32.gmra.mxu0 %v9093
    %v9095 = vpop.f32.mrf.mxu0
    %v9096 = vadd.f32 %v8935, %v9095
    %v9097 = vpop.f32.mrf.mxu0
    %9098 = vdwg.mxu0
    %9099 = vmatprep.subr.mxu0 0.0
    %9100 = vmatpush1.msra.mxu0 0.0
    %9101 = vmatprep.subr.mxu0 0.0
    %9102 = vmatpush1.msra.mxu0 0.0
    %9103 = vmatprep.subr.mxu0 0.0
    %9104 = vmatpush1.msra.mxu0 0.0
    %9105 = vmatprep.subr.mxu0 0.0
    %9106 = vmatpush1.msra.mxu0 0.0
    %9107 = vmatprep.subr.mxu0 0.0
    %9108 = vmatpush1.msra.mxu0 0.0
    %9109 = vmatprep.subr.mxu0 0.0
    %9110 = vmatpush1.msra.mxu0 0.0
    %9111 = vmatprep.subr.mxu0 0.0
    %9112 = vmatpush1.msra.mxu0 0.0
    %v9113 = vand.u32 %v8089, 4294901760
    %v9114 = vsub.f32 %v8089, %v9113
    %9115 = vmatprep.subr.mxu0 %v9114
    %v9116 = vand.u32 %v8088, 4294901760
    %v9117 = vsub.f32 %v8088, %v9116
    %9118 = vmatpush1.msra.mxu0 %v9117
    %v9119 = vand.u32 %v8149, 4294901760
    %v9120 = vsub.f32 %v8149, %v9119
    %9121 = vmatprep.subr.mxu0 %v9120
    %v9122 = vand.u32 %v8148, 4294901760
    %v9123 = vsub.f32 %v8148, %v9122
    %9124 = vmatpush1.msra.mxu0 %v9123
    %v9125 = vand.u32 %v8047, 4294901760
    %v9126 = vsub.f32 %v8047, %v9125
    %9127 = vmatprep.subr.mxu0 %v9126
    %v9128 = vand.u32 %v8046, 4294901760
    %v9129 = vsub.f32 %v8046, %v9128
    %9130 = vmatpush1.msra.mxu0 %v9129
    %v9131 = vand.u32 %v8005, 4294901760
    %v9132 = vsub.f32 %v8005, %v9131
    %9133 = vmatprep.subr.mxu0 %v9132
    %v9134 = vand.u32 %v8004, 4294901760
    %v9135 = vsub.f32 %v8004, %v9134
    %9136 = vmatpush1.msra.mxu0 %v9135
    %v9137 = vand.u32 %v7826, 4294901760
    %v9138 = vsub.f32 %v7826, %v9137
    %9139 = vmatprep.subr.mxu0 %v9138
    %v9140 = vand.u32 %v7825, 4294901760
    %v9141 = vsub.f32 %v7825, %v9140
    %9142 = vmatpush1.msra.mxu0 %v9141
    %v9143 = vand.u32 %v7962, 4294901760
    %v9144 = vsub.f32 %v7962, %v9143
    %9145 = vmatprep.subr.mxu0 %v9144
    %v9146 = vand.u32 %v7961, 4294901760
    %v9147 = vsub.f32 %v7961, %v9146
    %9148 = vmatpush1.msra.mxu0 %v9147
    %v9149 = vand.u32 %v7920, 4294901760
    %v9150 = vsub.f32 %v7920, %v9149
    %9151 = vmatprep.subr.mxu0 %v9150
    %v9152 = vand.u32 %v7919, 4294901760
    %v9153 = vsub.f32 %v7919, %v9152
    %9154 = vmatpush1.msra.mxu0 %v9153
    %v9155 = vand.u32 %v8115, 4294901760
    %v9156 = vsub.f32 %v8115, %v9155
    %9157 = vmatprep.subr.mxu0 %v9156
    %v9158 = vand.u32 %v8114, 4294901760
    %v9159 = vsub.f32 %v8114, %v9158
    %9160 = vmatpush1.msra.mxu0 %v9159
    %v9161 = vand.u32 %v7878, 4294901760
    %v9162 = vsub.f32 %v7878, %v9161
    %9163 = vmatprep.subr.mxu0 %v9162
    %v9164 = vand.u32 %v7877, 4294901760
    %v9165 = vsub.f32 %v7877, %v9164
    %9166 = vmatpush1.msra.mxu0 %v9165
    %9167 = vmatprep.subr.mxu0 0.0
    %9168 = vmatpush2.msra.mxu0 0.0
    %9169 = vmatprep.subr.mxu0 0.0
    %9170 = vmatpush2.msra.mxu0 0.0
    %9171 = vmatprep.subr.mxu0 0.0
    %9172 = vmatpush2.msra.mxu0 0.0
    %9173 = vmatprep.subr.mxu0 0.0
    %9174 = vmatpush2.msra.mxu0 0.0
    %9175 = vmatprep.subr.mxu0 0.0
    %9176 = vmatpush2.msra.mxu0 0.0
    %9177 = vmatprep.subr.mxu0 0.0
    %9178 = vmatpush2.msra.mxu0 0.0
    %9179 = vmatprep.subr.mxu0 0.0
    %9180 = vmatpush2.msra.mxu0 0.0
    %9181 = vmatprep.subr.mxu0 0.0
    %9182 = vmatpush2.msra.mxu0 0.0
    %9183 = vmatprep.subr.mxu0 0.0
    %9184 = vmatpush2.msra.mxu0 0.0
    %9185 = vmatprep.subr.mxu0 0.0
    %9186 = vmatpush2.msra.mxu0 0.0
    %9187 = vmatprep.subr.mxu0 0.0
    %9188 = vmatpush2.msra.mxu0 0.0
    %9189 = vmatprep.subr.mxu0 0.0
    %9190 = vmatpush2.msra.mxu0 0.0
    %9191 = vmatprep.subr.mxu0 0.0
    %9192 = vmatpush2.msra.mxu0 0.0
    %9193 = vmatprep.subr.mxu0 0.0
    %9194 = vmatpush2.msra.mxu0 0.0
    %9195 = vmatprep.subr.mxu0 0.0
    %9196 = vmatpush2.msra.mxu0 0.0
    %9197 = vmatprep.subr.mxu0 0.0
    %9198 = vmatpush2.msra.mxu0 0.0
    %9199 = vmatprep.mubr.f32.mxu0 0.0
    %v9200 = vand.u32 %v8170, 4294901760
    %v9201 = vsub.f32 %v8170, %v9200
    %9202 = vmatmul.mubr.f32.gmra.mxu0 %v9201
    %v9203 = vpop.f32.mrf.mxu0
    %v9204 = vadd.f32 %v9096, %v9203
    %v9205 = vpop.f32.mrf.mxu0
    %9206 = vdwg.mxu0
    %9207 = vmatprep.subr.mxu0 0.0
    %9208 = vmatpush1.msra.mxu0 0.0
    %9209 = vmatprep.subr.mxu0 0.0
    %9210 = vmatpush1.msra.mxu0 0.0
    %9211 = vmatprep.subr.mxu0 0.0
    %9212 = vmatpush1.msra.mxu0 0.0
    %9213 = vmatprep.subr.mxu0 0.0
    %9214 = vmatpush1.msra.mxu0 0.0
    %9215 = vmatprep.subr.mxu0 0.0
    %9216 = vmatpush1.msra.mxu0 0.0
    %9217 = vmatprep.subr.mxu0 0.0
    %9218 = vmatpush1.msra.mxu0 0.0
    %9219 = vmatprep.subr.mxu0 0.0
    %9220 = vmatpush1.msra.mxu0 0.0
    %v9221 = vand.u32 %v8089, 4294901760
    %9222 = vmatprep.subr.mxu0 %v9221
    %v9223 = vand.u32 %v8088, 4294901760
    %9224 = vmatpush1.msra.mxu0 %v9223
    %v9225 = vand.u32 %v8149, 4294901760
    %9226 = vmatprep.subr.mxu0 %v9225
    %v9227 = vand.u32 %v8148, 4294901760
    %9228 = vmatpush1.msra.mxu0 %v9227
    %v9229 = vand.u32 %v8047, 4294901760
    %9230 = vmatprep.subr.mxu0 %v9229
    %v9231 = vand.u32 %v8046, 4294901760
    %9232 = vmatpush1.msra.mxu0 %v9231
    %v9233 = vand.u32 %v8005, 4294901760
    %9234 = vmatprep.subr.mxu0 %v9233
    %v9235 = vand.u32 %v8004, 4294901760
    %9236 = vmatpush1.msra.mxu0 %v9235
    %v9237 = vand.u32 %v7826, 4294901760
    %9238 = vmatprep.subr.mxu0 %v9237
    %v9239 = vand.u32 %v7825, 4294901760
    %9240 = vmatpush1.msra.mxu0 %v9239
    %v9241 = vand.u32 %v7962, 4294901760
    %9242 = vmatprep.subr.mxu0 %v9241
    %v9243 = vand.u32 %v7961, 4294901760
    %9244 = vmatpush1.msra.mxu0 %v9243
    %v9245 = vand.u32 %v7920, 4294901760
    %9246 = vmatprep.subr.mxu0 %v9245
    %v9247 = vand.u32 %v7919, 4294901760
    %9248 = vmatpush1.msra.mxu0 %v9247
    %v9249 = vand.u32 %v8115, 4294901760
    %9250 = vmatprep.subr.mxu0 %v9249
    %v9251 = vand.u32 %v8114, 4294901760
    %9252 = vmatpush1.msra.mxu0 %v9251
    %v9253 = vand.u32 %v7878, 4294901760
    %9254 = vmatprep.subr.mxu0 %v9253
    %v9255 = vand.u32 %v7877, 4294901760
    %9256 = vmatpush1.msra.mxu0 %v9255
    %9257 = vmatprep.subr.mxu0 0.0
    %9258 = vmatpush2.msra.mxu0 0.0
    %9259 = vmatprep.subr.mxu0 0.0
    %9260 = vmatpush2.msra.mxu0 0.0
    %9261 = vmatprep.subr.mxu0 0.0
    %9262 = vmatpush2.msra.mxu0 0.0
    %9263 = vmatprep.subr.mxu0 0.0
    %9264 = vmatpush2.msra.mxu0 0.0
    %9265 = vmatprep.subr.mxu0 0.0
    %9266 = vmatpush2.msra.mxu0 0.0
    %9267 = vmatprep.subr.mxu0 0.0
    %9268 = vmatpush2.msra.mxu0 0.0
    %9269 = vmatprep.subr.mxu0 0.0
    %9270 = vmatpush2.msra.mxu0 0.0
    %9271 = vmatprep.subr.mxu0 0.0
    %9272 = vmatpush2.msra.mxu0 0.0
    %9273 = vmatprep.subr.mxu0 0.0
    %9274 = vmatpush2.msra.mxu0 0.0
    %9275 = vmatprep.subr.mxu0 0.0
    %9276 = vmatpush2.msra.mxu0 0.0
    %9277 = vmatprep.subr.mxu0 0.0
    %9278 = vmatpush2.msra.mxu0 0.0
    %9279 = vmatprep.subr.mxu0 0.0
    %9280 = vmatpush2.msra.mxu0 0.0
    %9281 = vmatprep.subr.mxu0 0.0
    %9282 = vmatpush2.msra.mxu0 0.0
    %9283 = vmatprep.subr.mxu0 0.0
    %9284 = vmatpush2.msra.mxu0 0.0
    %9285 = vmatprep.subr.mxu0 0.0
    %9286 = vmatpush2.msra.mxu0 0.0
    %9287 = vmatprep.subr.mxu0 0.0
    %9288 = vmatpush2.msra.mxu0 0.0
    %9289 = vmatprep.mubr.f32.mxu0 0.0
    %v9290 = vand.u32 %v8170, 4294901760
    %v9291 = vsub.f32 %v8170, %v9290
    %v9292 = vand.u32 %v9291, 4294901760
    %9293 = vmatmul.mubr.f32.gmra.mxu0 %v9292
    %v9294 = vpop.f32.mrf.mxu0
    %v9295 = vadd.f32 %v9204, %v9294
    %v9296 = vpop.f32.mrf.mxu0
    %9297 = vdwg.mxu0
    %9298 = vmatprep.subr.mxu0 0.0
    %9299 = vmatpush1.msra.mxu0 0.0
    %9300 = vmatprep.subr.mxu0 0.0
    %9301 = vmatpush1.msra.mxu0 0.0
    %9302 = vmatprep.subr.mxu0 0.0
    %9303 = vmatpush1.msra.mxu0 0.0
    %9304 = vmatprep.subr.mxu0 0.0
    %9305 = vmatpush1.msra.mxu0 0.0
    %9306 = vmatprep.subr.mxu0 0.0
    %9307 = vmatpush1.msra.mxu0 0.0
    %9308 = vmatprep.subr.mxu0 0.0
    %9309 = vmatpush1.msra.mxu0 0.0
    %9310 = vmatprep.subr.mxu0 0.0
    %9311 = vmatpush1.msra.mxu0 0.0
    %v9312 = vand.u32 %v8089, 4294901760
    %v9313 = vsub.f32 %v8089, %v9312
    %v9314 = vand.u32 %v9313, 4294901760
    %9315 = vmatprep.subr.mxu0 %v9314
    %v9316 = vand.u32 %v8088, 4294901760
    %v9317 = vsub.f32 %v8088, %v9316
    %v9318 = vand.u32 %v9317, 4294901760
    %9319 = vmatpush1.msra.mxu0 %v9318
    %v9320 = vand.u32 %v8149, 4294901760
    %v9321 = vsub.f32 %v8149, %v9320
    %v9322 = vand.u32 %v9321, 4294901760
    %9323 = vmatprep.subr.mxu0 %v9322
    %v9324 = vand.u32 %v8148, 4294901760
    %v9325 = vsub.f32 %v8148, %v9324
    %v9326 = vand.u32 %v9325, 4294901760
    %9327 = vmatpush1.msra.mxu0 %v9326
    %v9328 = vand.u32 %v8047, 4294901760
    %v9329 = vsub.f32 %v8047, %v9328
    %v9330 = vand.u32 %v9329, 4294901760
    %9331 = vmatprep.subr.mxu0 %v9330
    %v9332 = vand.u32 %v8046, 4294901760
    %v9333 = vsub.f32 %v8046, %v9332
    %v9334 = vand.u32 %v9333, 4294901760
    %9335 = vmatpush1.msra.mxu0 %v9334
    %v9336 = vand.u32 %v8005, 4294901760
    %v9337 = vsub.f32 %v8005, %v9336
    %v9338 = vand.u32 %v9337, 4294901760
    %9339 = vmatprep.subr.mxu0 %v9338
    %v9340 = vand.u32 %v8004, 4294901760
    %v9341 = vsub.f32 %v8004, %v9340
    %v9342 = vand.u32 %v9341, 4294901760
    %9343 = vmatpush1.msra.mxu0 %v9342
    %v9344 = vand.u32 %v7826, 4294901760
    %v9345 = vsub.f32 %v7826, %v9344
    %v9346 = vand.u32 %v9345, 4294901760
    %9347 = vmatprep.subr.mxu0 %v9346
    %v9348 = vand.u32 %v7825, 4294901760
    %v9349 = vsub.f32 %v7825, %v9348
    %v9350 = vand.u32 %v9349, 4294901760
    %9351 = vmatpush1.msra.mxu0 %v9350
    %v9352 = vand.u32 %v7962, 4294901760
    %v9353 = vsub.f32 %v7962, %v9352
    %v9354 = vand.u32 %v9353, 4294901760
    %9355 = vmatprep.subr.mxu0 %v9354
    %v9356 = vand.u32 %v7961, 4294901760
    %v9357 = vsub.f32 %v7961, %v9356
    %v9358 = vand.u32 %v9357, 4294901760
    %9359 = vmatpush1.msra.mxu0 %v9358
    %v9360 = vand.u32 %v7920, 4294901760
    %v9361 = vsub.f32 %v7920, %v9360
    %v9362 = vand.u32 %v9361, 4294901760
    %9363 = vmatprep.subr.mxu0 %v9362
    %v9364 = vand.u32 %v7919, 4294901760
    %v9365 = vsub.f32 %v7919, %v9364
    %v9366 = vand.u32 %v9365, 4294901760
    %9367 = vmatpush1.msra.mxu0 %v9366
    %v9368 = vand.u32 %v8115, 4294901760
    %v9369 = vsub.f32 %v8115, %v9368
    %v9370 = vand.u32 %v9369, 4294901760
    %9371 = vmatprep.subr.mxu0 %v9370
    %v9372 = vand.u32 %v8114, 4294901760
    %v9373 = vsub.f32 %v8114, %v9372
    %v9374 = vand.u32 %v9373, 4294901760
    %9375 = vmatpush1.msra.mxu0 %v9374
    %v9376 = vand.u32 %v7878, 4294901760
    %v9377 = vsub.f32 %v7878, %v9376
    %v9378 = vand.u32 %v9377, 4294901760
    %9379 = vmatprep.subr.mxu0 %v9378
    %v9380 = vand.u32 %v7877, 4294901760
    %v9381 = vsub.f32 %v7877, %v9380
    %v9382 = vand.u32 %v9381, 4294901760
    %9383 = vmatpush1.msra.mxu0 %v9382
    %9384 = vmatprep.subr.mxu0 0.0
    %9385 = vmatpush2.msra.mxu0 0.0
    %9386 = vmatprep.subr.mxu0 0.0
    %9387 = vmatpush2.msra.mxu0 0.0
    %9388 = vmatprep.subr.mxu0 0.0
    %9389 = vmatpush2.msra.mxu0 0.0
    %9390 = vmatprep.subr.mxu0 0.0
    %9391 = vmatpush2.msra.mxu0 0.0
    %9392 = vmatprep.subr.mxu0 0.0
    %9393 = vmatpush2.msra.mxu0 0.0
    %9394 = vmatprep.subr.mxu0 0.0
    %9395 = vmatpush2.msra.mxu0 0.0
    %9396 = vmatprep.subr.mxu0 0.0
    %9397 = vmatpush2.msra.mxu0 0.0
    %9398 = vmatprep.subr.mxu0 0.0
    %9399 = vmatpush2.msra.mxu0 0.0
    %9400 = vmatprep.subr.mxu0 0.0
    %9401 = vmatpush2.msra.mxu0 0.0
    %9402 = vmatprep.subr.mxu0 0.0
    %9403 = vmatpush2.msra.mxu0 0.0
    %9404 = vmatprep.subr.mxu0 0.0
    %9405 = vmatpush2.msra.mxu0 0.0
    %9406 = vmatprep.subr.mxu0 0.0
    %9407 = vmatpush2.msra.mxu0 0.0
    %9408 = vmatprep.subr.mxu0 0.0
    %9409 = vmatpush2.msra.mxu0 0.0
    %9410 = vmatprep.subr.mxu0 0.0
    %9411 = vmatpush2.msra.mxu0 0.0
    %9412 = vmatprep.subr.mxu0 0.0
    %9413 = vmatpush2.msra.mxu0 0.0
    %9414 = vmatprep.subr.mxu0 0.0
    %9415 = vmatpush2.msra.mxu0 0.0
    %9416 = vmatprep.mubr.f32.mxu0 0.0
    %v9417 = vand.u32 %v8170, 4294901760
    %9418 = vmatmul.mubr.f32.gmra.mxu0 %v9417
    %v9419 = vpop.f32.mrf.mxu0
    %v9420 = vadd.f32 %v9295, %v9419
    %v9421 = vpop.f32.mrf.mxu0
    %9422 = vdwg.mxu0
    %9423 = vmatprep.subr.mxu0 0.0
    %9424 = vmatpush1.msra.mxu0 0.0
    %9425 = vmatprep.subr.mxu0 0.0
    %9426 = vmatpush1.msra.mxu0 0.0
    %9427 = vmatprep.subr.mxu0 0.0
    %9428 = vmatpush1.msra.mxu0 0.0
    %9429 = vmatprep.subr.mxu0 0.0
    %9430 = vmatpush1.msra.mxu0 0.0
    %9431 = vmatprep.subr.mxu0 0.0
    %9432 = vmatpush1.msra.mxu0 0.0
    %9433 = vmatprep.subr.mxu0 0.0
    %9434 = vmatpush1.msra.mxu0 0.0
    %9435 = vmatprep.subr.mxu0 0.0
    %9436 = vmatpush1.msra.mxu0 0.0
    %v9437 = vand.u32 %v8089, 4294901760
    %9438 = vmatprep.subr.mxu0 %v9437
    %v9439 = vand.u32 %v8088, 4294901760
    %9440 = vmatpush1.msra.mxu0 %v9439
    %v9441 = vand.u32 %v8149, 4294901760
    %9442 = vmatprep.subr.mxu0 %v9441
    %v9443 = vand.u32 %v8148, 4294901760
    %9444 = vmatpush1.msra.mxu0 %v9443
    %v9445 = vand.u32 %v8047, 4294901760
    %9446 = vmatprep.subr.mxu0 %v9445
    %v9447 = vand.u32 %v8046, 4294901760
    %9448 = vmatpush1.msra.mxu0 %v9447
    %v9449 = vand.u32 %v8005, 4294901760
    %9450 = vmatprep.subr.mxu0 %v9449
    %v9451 = vand.u32 %v8004, 4294901760
    %9452 = vmatpush1.msra.mxu0 %v9451
    %v9453 = vand.u32 %v7826, 4294901760
    %9454 = vmatprep.subr.mxu0 %v9453
    %v9455 = vand.u32 %v7825, 4294901760
    %9456 = vmatpush1.msra.mxu0 %v9455
    %v9457 = vand.u32 %v7962, 4294901760
    %9458 = vmatprep.subr.mxu0 %v9457
    %v9459 = vand.u32 %v7961, 4294901760
    %9460 = vmatpush1.msra.mxu0 %v9459
    %v9461 = vand.u32 %v7920, 4294901760
    %9462 = vmatprep.subr.mxu0 %v9461
    %v9463 = vand.u32 %v7919, 4294901760
    %9464 = vmatpush1.msra.mxu0 %v9463
    %v9465 = vand.u32 %v8115, 4294901760
    %9466 = vmatprep.subr.mxu0 %v9465
    %v9467 = vand.u32 %v8114, 4294901760
    %9468 = vmatpush1.msra.mxu0 %v9467
    %v9469 = vand.u32 %v7878, 4294901760
    %9470 = vmatprep.subr.mxu0 %v9469
    %v9471 = vand.u32 %v7877, 4294901760
    %9472 = vmatpush1.msra.mxu0 %v9471
    %9473 = vmatprep.subr.mxu0 0.0
    %9474 = vmatpush2.msra.mxu0 0.0
    %9475 = vmatprep.subr.mxu0 0.0
    %9476 = vmatpush2.msra.mxu0 0.0
    %9477 = vmatprep.subr.mxu0 0.0
    %9478 = vmatpush2.msra.mxu0 0.0
    %9479 = vmatprep.subr.mxu0 0.0
    %9480 = vmatpush2.msra.mxu0 0.0
    %9481 = vmatprep.subr.mxu0 0.0
    %9482 = vmatpush2.msra.mxu0 0.0
    %9483 = vmatprep.subr.mxu0 0.0
    %9484 = vmatpush2.msra.mxu0 0.0
    %9485 = vmatprep.subr.mxu0 0.0
    %9486 = vmatpush2.msra.mxu0 0.0
    %9487 = vmatprep.subr.mxu0 0.0
    %9488 = vmatpush2.msra.mxu0 0.0
    %9489 = vmatprep.subr.mxu0 0.0
    %9490 = vmatpush2.msra.mxu0 0.0
    %9491 = vmatprep.subr.mxu0 0.0
    %9492 = vmatpush2.msra.mxu0 0.0
    %9493 = vmatprep.subr.mxu0 0.0
    %9494 = vmatpush2.msra.mxu0 0.0
    %9495 = vmatprep.subr.mxu0 0.0
    %9496 = vmatpush2.msra.mxu0 0.0
    %9497 = vmatprep.subr.mxu0 0.0
    %9498 = vmatpush2.msra.mxu0 0.0
    %9499 = vmatprep.subr.mxu0 0.0
    %9500 = vmatpush2.msra.mxu0 0.0
    %9501 = vmatprep.subr.mxu0 0.0
    %9502 = vmatpush2.msra.mxu0 0.0
    %9503 = vmatprep.subr.mxu0 0.0
    %9504 = vmatpush2.msra.mxu0 0.0
    %9505 = vmatprep.mubr.f32.mxu0 0.0
    %v9506 = vand.u32 %v8170, 4294901760
    %9507 = vmatmul.mubr.f32.gmra.mxu0 %v9506
    %v9508 = vpop.f32.mrf.mxu0
    %v9509 = vadd.f32 %v9420, %v9508
    %v9510 = vpop.f32.mrf.mxu0
    %9511 = vdwg.mxu0
    %9512 = vmatprep.subr.mxu0 0.0
    %9513 = vmatpush1.msra.mxu0 0.0
    %9514 = vmatprep.subr.mxu0 0.0
    %9515 = vmatpush1.msra.mxu0 0.0
    %9516 = vmatprep.subr.mxu0 0.0
    %9517 = vmatpush1.msra.mxu0 0.0
    %9518 = vmatprep.subr.mxu0 0.0
    %9519 = vmatpush1.msra.mxu0 0.0
    %9520 = vmatprep.subr.mxu0 0.0
    %9521 = vmatpush1.msra.mxu0 0.0
    %9522 = vmatprep.subr.mxu0 0.0
    %9523 = vmatpush1.msra.mxu0 0.0
    %9524 = vmatprep.subr.mxu0 0.0
    %9525 = vmatpush1.msra.mxu0 0.0
    %v9526 = vand.u32 %v8091, 4294901760
    %9527 = vmatprep.subr.mxu0 %v9526
    %v9528 = vand.u32 %v8090, 4294901760
    %9529 = vmatpush1.msra.mxu0 %v9528
    %v9530 = vand.u32 %v8151, 4294901760
    %9531 = vmatprep.subr.mxu0 %v9530
    %v9532 = vand.u32 %v8150, 4294901760
    %9533 = vmatpush1.msra.mxu0 %v9532
    %v9534 = vand.u32 %v8049, 4294901760
    %9535 = vmatprep.subr.mxu0 %v9534
    %v9536 = vand.u32 %v8048, 4294901760
    %9537 = vmatpush1.msra.mxu0 %v9536
    %v9538 = vand.u32 %v8007, 4294901760
    %9539 = vmatprep.subr.mxu0 %v9538
    %v9540 = vand.u32 %v8006, 4294901760
    %9541 = vmatpush1.msra.mxu0 %v9540
    %v9542 = vand.u32 %v7828, 4294901760
    %9543 = vmatprep.subr.mxu0 %v9542
    %v9544 = vand.u32 %v7827, 4294901760
    %9545 = vmatpush1.msra.mxu0 %v9544
    %v9546 = vand.u32 %v7964, 4294901760
    %9547 = vmatprep.subr.mxu0 %v9546
    %v9548 = vand.u32 %v7963, 4294901760
    %9549 = vmatpush1.msra.mxu0 %v9548
    %v9550 = vand.u32 %v7922, 4294901760
    %9551 = vmatprep.subr.mxu0 %v9550
    %v9552 = vand.u32 %v7921, 4294901760
    %9553 = vmatpush1.msra.mxu0 %v9552
    %v9554 = vand.u32 %v8117, 4294901760
    %9555 = vmatprep.subr.mxu0 %v9554
    %v9556 = vand.u32 %v8116, 4294901760
    %9557 = vmatpush1.msra.mxu0 %v9556
    %v9558 = vand.u32 %v7880, 4294901760
    %9559 = vmatprep.subr.mxu0 %v9558
    %v9560 = vand.u32 %v7879, 4294901760
    %9561 = vmatpush1.msra.mxu0 %v9560
    %9562 = vmatprep.subr.mxu0 0.0
    %9563 = vmatpush2.msra.mxu0 0.0
    %9564 = vmatprep.subr.mxu0 0.0
    %9565 = vmatpush2.msra.mxu0 0.0
    %9566 = vmatprep.subr.mxu0 0.0
    %9567 = vmatpush2.msra.mxu0 0.0
    %9568 = vmatprep.subr.mxu0 0.0
    %9569 = vmatpush2.msra.mxu0 0.0
    %9570 = vmatprep.subr.mxu0 0.0
    %9571 = vmatpush2.msra.mxu0 0.0
    %9572 = vmatprep.subr.mxu0 0.0
    %9573 = vmatpush2.msra.mxu0 0.0
    %9574 = vmatprep.subr.mxu0 0.0
    %9575 = vmatpush2.msra.mxu0 0.0
    %9576 = vmatprep.subr.mxu0 0.0
    %9577 = vmatpush2.msra.mxu0 0.0
    %9578 = vmatprep.subr.mxu0 0.0
    %9579 = vmatpush2.msra.mxu0 0.0
    %9580 = vmatprep.subr.mxu0 0.0
    %9581 = vmatpush2.msra.mxu0 0.0
    %9582 = vmatprep.subr.mxu0 0.0
    %9583 = vmatpush2.msra.mxu0 0.0
    %9584 = vmatprep.subr.mxu0 0.0
    %9585 = vmatpush2.msra.mxu0 0.0
    %9586 = vmatprep.subr.mxu0 0.0
    %9587 = vmatpush2.msra.mxu0 0.0
    %9588 = vmatprep.subr.mxu0 0.0
    %9589 = vmatpush2.msra.mxu0 0.0
    %9590 = vmatprep.subr.mxu0 0.0
    %9591 = vmatpush2.msra.mxu0 0.0
    %9592 = vmatprep.subr.mxu0 0.0
    %9593 = vmatpush2.msra.mxu0 0.0
    %9594 = vmatprep.mubr.f32.mxu0 0.0
    %v9595 = vand.u32 %v8170, 4294901760
    %v9596 = vsub.f32 %v8170, %v9595
    %v9597 = vand.u32 %v9596, 4294901760
    %v9598 = vsub.f32 %v9596, %v9597
    %v9599 = vand.u32 %v9598, 4294901760
    %9600 = vmatmul.mubr.f32.gmra.mxu0 %v9599
    %v9601 = vpop.f32.mrf.mxu0
    %v9602 = vadd.f32 %v8167, %v9601
    %v9603 = vpop.f32.mrf.mxu0
    %v9604 = vadd.f32 %v8167, %v9603
    %9605 = vdwg.mxu0
    %9606 = vmatprep.subr.mxu0 0.0
    %9607 = vmatpush1.msra.mxu0 0.0
    %9608 = vmatprep.subr.mxu0 0.0
    %9609 = vmatpush1.msra.mxu0 0.0
    %9610 = vmatprep.subr.mxu0 0.0
    %9611 = vmatpush1.msra.mxu0 0.0
    %9612 = vmatprep.subr.mxu0 0.0
    %9613 = vmatpush1.msra.mxu0 0.0
    %9614 = vmatprep.subr.mxu0 0.0
    %9615 = vmatpush1.msra.mxu0 0.0
    %9616 = vmatprep.subr.mxu0 0.0
    %9617 = vmatpush1.msra.mxu0 0.0
    %9618 = vmatprep.subr.mxu0 0.0
    %9619 = vmatpush1.msra.mxu0 0.0
    %v9620 = vand.u32 %v8091, 4294901760
    %v9621 = vsub.f32 %v8091, %v9620
    %v9622 = vand.u32 %v9621, 4294901760
    %v9623 = vsub.f32 %v9621, %v9622
    %v9624 = vand.u32 %v9623, 4294901760
    %9625 = vmatprep.subr.mxu0 %v9624
    %v9626 = vand.u32 %v8090, 4294901760
    %v9627 = vsub.f32 %v8090, %v9626
    %v9628 = vand.u32 %v9627, 4294901760
    %v9629 = vsub.f32 %v9627, %v9628
    %v9630 = vand.u32 %v9629, 4294901760
    %9631 = vmatpush1.msra.mxu0 %v9630
    %v9632 = vand.u32 %v8151, 4294901760
    %v9633 = vsub.f32 %v8151, %v9632
    %v9634 = vand.u32 %v9633, 4294901760
    %v9635 = vsub.f32 %v9633, %v9634
    %v9636 = vand.u32 %v9635, 4294901760
    %9637 = vmatprep.subr.mxu0 %v9636
    %v9638 = vand.u32 %v8150, 4294901760
    %v9639 = vsub.f32 %v8150, %v9638
    %v9640 = vand.u32 %v9639, 4294901760
    %v9641 = vsub.f32 %v9639, %v9640
    %v9642 = vand.u32 %v9641, 4294901760
    %9643 = vmatpush1.msra.mxu0 %v9642
    %v9644 = vand.u32 %v8049, 4294901760
    %v9645 = vsub.f32 %v8049, %v9644
    %v9646 = vand.u32 %v9645, 4294901760
    %v9647 = vsub.f32 %v9645, %v9646
    %v9648 = vand.u32 %v9647, 4294901760
    %9649 = vmatprep.subr.mxu0 %v9648
    %v9650 = vand.u32 %v8048, 4294901760
    %v9651 = vsub.f32 %v8048, %v9650
    %v9652 = vand.u32 %v9651, 4294901760
    %v9653 = vsub.f32 %v9651, %v9652
    %v9654 = vand.u32 %v9653, 4294901760
    %9655 = vmatpush1.msra.mxu0 %v9654
    %v9656 = vand.u32 %v8007, 4294901760
    %v9657 = vsub.f32 %v8007, %v9656
    %v9658 = vand.u32 %v9657, 4294901760
    %v9659 = vsub.f32 %v9657, %v9658
    %v9660 = vand.u32 %v9659, 4294901760
    %9661 = vmatprep.subr.mxu0 %v9660
    %v9662 = vand.u32 %v8006, 4294901760
    %v9663 = vsub.f32 %v8006, %v9662
    %v9664 = vand.u32 %v9663, 4294901760
    %v9665 = vsub.f32 %v9663, %v9664
    %v9666 = vand.u32 %v9665, 4294901760
    %9667 = vmatpush1.msra.mxu0 %v9666
    %v9668 = vand.u32 %v7828, 4294901760
    %v9669 = vsub.f32 %v7828, %v9668
    %v9670 = vand.u32 %v9669, 4294901760
    %v9671 = vsub.f32 %v9669, %v9670
    %v9672 = vand.u32 %v9671, 4294901760
    %9673 = vmatprep.subr.mxu0 %v9672
    %v9674 = vand.u32 %v7827, 4294901760
    %v9675 = vsub.f32 %v7827, %v9674
    %v9676 = vand.u32 %v9675, 4294901760
    %v9677 = vsub.f32 %v9675, %v9676
    %v9678 = vand.u32 %v9677, 4294901760
    %9679 = vmatpush1.msra.mxu0 %v9678
    %v9680 = vand.u32 %v7964, 4294901760
    %v9681 = vsub.f32 %v7964, %v9680
    %v9682 = vand.u32 %v9681, 4294901760
    %v9683 = vsub.f32 %v9681, %v9682
    %v9684 = vand.u32 %v9683, 4294901760
    %9685 = vmatprep.subr.mxu0 %v9684
    %v9686 = vand.u32 %v7963, 4294901760
    %v9687 = vsub.f32 %v7963, %v9686
    %v9688 = vand.u32 %v9687, 4294901760
    %v9689 = vsub.f32 %v9687, %v9688
    %v9690 = vand.u32 %v9689, 4294901760
    %9691 = vmatpush1.msra.mxu0 %v9690
    %v9692 = vand.u32 %v7922, 4294901760
    %v9693 = vsub.f32 %v7922, %v9692
    %v9694 = vand.u32 %v9693, 4294901760
    %v9695 = vsub.f32 %v9693, %v9694
    %v9696 = vand.u32 %v9695, 4294901760
    %9697 = vmatprep.subr.mxu0 %v9696
    %v9698 = vand.u32 %v7921, 4294901760
    %v9699 = vsub.f32 %v7921, %v9698
    %v9700 = vand.u32 %v9699, 4294901760
    %v9701 = vsub.f32 %v9699, %v9700
    %v9702 = vand.u32 %v9701, 4294901760
    %9703 = vmatpush1.msra.mxu0 %v9702
    %v9704 = vand.u32 %v8117, 4294901760
    %v9705 = vsub.f32 %v8117, %v9704
    %v9706 = vand.u32 %v9705, 4294901760
    %v9707 = vsub.f32 %v9705, %v9706
    %v9708 = vand.u32 %v9707, 4294901760
    %9709 = vmatprep.subr.mxu0 %v9708
    %v9710 = vand.u32 %v8116, 4294901760
    %v9711 = vsub.f32 %v8116, %v9710
    %v9712 = vand.u32 %v9711, 4294901760
    %v9713 = vsub.f32 %v9711, %v9712
    %v9714 = vand.u32 %v9713, 4294901760
    %9715 = vmatpush1.msra.mxu0 %v9714
    %v9716 = vand.u32 %v7880, 4294901760
    %v9717 = vsub.f32 %v7880, %v9716
    %v9718 = vand.u32 %v9717, 4294901760
    %v9719 = vsub.f32 %v9717, %v9718
    %v9720 = vand.u32 %v9719, 4294901760
    %9721 = vmatprep.subr.mxu0 %v9720
    %v9722 = vand.u32 %v7879, 4294901760
    %v9723 = vsub.f32 %v7879, %v9722
    %v9724 = vand.u32 %v9723, 4294901760
    %v9725 = vsub.f32 %v9723, %v9724
    %v9726 = vand.u32 %v9725, 4294901760
    %9727 = vmatpush1.msra.mxu0 %v9726
    %9728 = vmatprep.subr.mxu0 0.0
    %9729 = vmatpush2.msra.mxu0 0.0
    %9730 = vmatprep.subr.mxu0 0.0
    %9731 = vmatpush2.msra.mxu0 0.0
    %9732 = vmatprep.subr.mxu0 0.0
    %9733 = vmatpush2.msra.mxu0 0.0
    %9734 = vmatprep.subr.mxu0 0.0
    %9735 = vmatpush2.msra.mxu0 0.0
    %9736 = vmatprep.subr.mxu0 0.0
    %9737 = vmatpush2.msra.mxu0 0.0
    %9738 = vmatprep.subr.mxu0 0.0
    %9739 = vmatpush2.msra.mxu0 0.0
    %9740 = vmatprep.subr.mxu0 0.0
    %9741 = vmatpush2.msra.mxu0 0.0
    %9742 = vmatprep.subr.mxu0 0.0
    %9743 = vmatpush2.msra.mxu0 0.0
    %9744 = vmatprep.subr.mxu0 0.0
    %9745 = vmatpush2.msra.mxu0 0.0
    %9746 = vmatprep.subr.mxu0 0.0
    %9747 = vmatpush2.msra.mxu0 0.0
    %9748 = vmatprep.subr.mxu0 0.0
    %9749 = vmatpush2.msra.mxu0 0.0
    %9750 = vmatprep.subr.mxu0 0.0
    %9751 = vmatpush2.msra.mxu0 0.0
    %9752 = vmatprep.subr.mxu0 0.0
    %9753 = vmatpush2.msra.mxu0 0.0
    %9754 = vmatprep.subr.mxu0 0.0
    %9755 = vmatpush2.msra.mxu0 0.0
    %9756 = vmatprep.subr.mxu0 0.0
    %9757 = vmatpush2.msra.mxu0 0.0
    %9758 = vmatprep.subr.mxu0 0.0
    %9759 = vmatpush2.msra.mxu0 0.0
    %9760 = vmatprep.mubr.f32.mxu0 0.0
    %v9761 = vand.u32 %v8170, 4294901760
    %9762 = vmatmul.mubr.f32.gmra.mxu0 %v9761
    %v9763 = vpop.f32.mrf.mxu0
    %v9764 = vadd.f32 %v9602, %v9763
    %v9765 = vpop.f32.mrf.mxu0
    %v9766 = vadd.f32 %v9604, %v9765
    %9767 = vdwg.mxu0
    %9768 = vmatprep.subr.mxu0 0.0
    %9769 = vmatpush1.msra.mxu0 0.0
    %9770 = vmatprep.subr.mxu0 0.0
    %9771 = vmatpush1.msra.mxu0 0.0
    %9772 = vmatprep.subr.mxu0 0.0
    %9773 = vmatpush1.msra.mxu0 0.0
    %9774 = vmatprep.subr.mxu0 0.0
    %9775 = vmatpush1.msra.mxu0 0.0
    %9776 = vmatprep.subr.mxu0 0.0
    %9777 = vmatpush1.msra.mxu0 0.0
    %9778 = vmatprep.subr.mxu0 0.0
    %9779 = vmatpush1.msra.mxu0 0.0
    %9780 = vmatprep.subr.mxu0 0.0
    %9781 = vmatpush1.msra.mxu0 0.0
    %v9782 = vand.u32 %v8091, 4294901760
    %v9783 = vsub.f32 %v8091, %v9782
    %9784 = vmatprep.subr.mxu0 %v9783
    %v9785 = vand.u32 %v8090, 4294901760
    %v9786 = vsub.f32 %v8090, %v9785
    %9787 = vmatpush1.msra.mxu0 %v9786
    %v9788 = vand.u32 %v8151, 4294901760
    %v9789 = vsub.f32 %v8151, %v9788
    %9790 = vmatprep.subr.mxu0 %v9789
    %v9791 = vand.u32 %v8150, 4294901760
    %v9792 = vsub.f32 %v8150, %v9791
    %9793 = vmatpush1.msra.mxu0 %v9792
    %v9794 = vand.u32 %v8049, 4294901760
    %v9795 = vsub.f32 %v8049, %v9794
    %9796 = vmatprep.subr.mxu0 %v9795
    %v9797 = vand.u32 %v8048, 4294901760
    %v9798 = vsub.f32 %v8048, %v9797
    %9799 = vmatpush1.msra.mxu0 %v9798
    %v9800 = vand.u32 %v8007, 4294901760
    %v9801 = vsub.f32 %v8007, %v9800
    %9802 = vmatprep.subr.mxu0 %v9801
    %v9803 = vand.u32 %v8006, 4294901760
    %v9804 = vsub.f32 %v8006, %v9803
    %9805 = vmatpush1.msra.mxu0 %v9804
    %v9806 = vand.u32 %v7828, 4294901760
    %v9807 = vsub.f32 %v7828, %v9806
    %9808 = vmatprep.subr.mxu0 %v9807
    %v9809 = vand.u32 %v7827, 4294901760
    %v9810 = vsub.f32 %v7827, %v9809
    %9811 = vmatpush1.msra.mxu0 %v9810
    %v9812 = vand.u32 %v7964, 4294901760
    %v9813 = vsub.f32 %v7964, %v9812
    %9814 = vmatprep.subr.mxu0 %v9813
    %v9815 = vand.u32 %v7963, 4294901760
    %v9816 = vsub.f32 %v7963, %v9815
    %9817 = vmatpush1.msra.mxu0 %v9816
    %v9818 = vand.u32 %v7922, 4294901760
    %v9819 = vsub.f32 %v7922, %v9818
    %9820 = vmatprep.subr.mxu0 %v9819
    %v9821 = vand.u32 %v7921, 4294901760
    %v9822 = vsub.f32 %v7921, %v9821
    %9823 = vmatpush1.msra.mxu0 %v9822
    %v9824 = vand.u32 %v8117, 4294901760
    %v9825 = vsub.f32 %v8117, %v9824
    %9826 = vmatprep.subr.mxu0 %v9825
    %v9827 = vand.u32 %v8116, 4294901760
    %v9828 = vsub.f32 %v8116, %v9827
    %9829 = vmatpush1.msra.mxu0 %v9828
    %v9830 = vand.u32 %v7880, 4294901760
    %v9831 = vsub.f32 %v7880, %v9830
    %9832 = vmatprep.subr.mxu0 %v9831
    %v9833 = vand.u32 %v7879, 4294901760
    %v9834 = vsub.f32 %v7879, %v9833
    %9835 = vmatpush1.msra.mxu0 %v9834
    %9836 = vmatprep.subr.mxu0 0.0
    %9837 = vmatpush2.msra.mxu0 0.0
    %9838 = vmatprep.subr.mxu0 0.0
    %9839 = vmatpush2.msra.mxu0 0.0
    %9840 = vmatprep.subr.mxu0 0.0
    %9841 = vmatpush2.msra.mxu0 0.0
    %9842 = vmatprep.subr.mxu0 0.0
    %9843 = vmatpush2.msra.mxu0 0.0
    %9844 = vmatprep.subr.mxu0 0.0
    %9845 = vmatpush2.msra.mxu0 0.0
    %9846 = vmatprep.subr.mxu0 0.0
    %9847 = vmatpush2.msra.mxu0 0.0
    %9848 = vmatprep.subr.mxu0 0.0
    %9849 = vmatpush2.msra.mxu0 0.0
    %9850 = vmatprep.subr.mxu0 0.0
    %9851 = vmatpush2.msra.mxu0 0.0
    %9852 = vmatprep.subr.mxu0 0.0
    %9853 = vmatpush2.msra.mxu0 0.0
    %9854 = vmatprep.subr.mxu0 0.0
    %9855 = vmatpush2.msra.mxu0 0.0
    %9856 = vmatprep.subr.mxu0 0.0
    %9857 = vmatpush2.msra.mxu0 0.0
    %9858 = vmatprep.subr.mxu0 0.0
    %9859 = vmatpush2.msra.mxu0 0.0
    %9860 = vmatprep.subr.mxu0 0.0
    %9861 = vmatpush2.msra.mxu0 0.0
    %9862 = vmatprep.subr.mxu0 0.0
    %9863 = vmatpush2.msra.mxu0 0.0
    %9864 = vmatprep.subr.mxu0 0.0
    %9865 = vmatpush2.msra.mxu0 0.0
    %9866 = vmatprep.subr.mxu0 0.0
    %9867 = vmatpush2.msra.mxu0 0.0
    %9868 = vmatprep.mubr.f32.mxu0 0.0
    %v9869 = vand.u32 %v8170, 4294901760
    %v9870 = vsub.f32 %v8170, %v9869
    %9871 = vmatmul.mubr.f32.gmra.mxu0 %v9870
    %v9872 = vpop.f32.mrf.mxu0
    %v9873 = vadd.f32 %v9764, %v9872
    %v9874 = vpop.f32.mrf.mxu0
    %v9875 = vadd.f32 %v9766, %v9874
    %9876 = vdwg.mxu0
    %9877 = vmatprep.subr.mxu0 0.0
    %9878 = vmatpush1.msra.mxu0 0.0
    %9879 = vmatprep.subr.mxu0 0.0
    %9880 = vmatpush1.msra.mxu0 0.0
    %9881 = vmatprep.subr.mxu0 0.0
    %9882 = vmatpush1.msra.mxu0 0.0
    %9883 = vmatprep.subr.mxu0 0.0
    %9884 = vmatpush1.msra.mxu0 0.0
    %9885 = vmatprep.subr.mxu0 0.0
    %9886 = vmatpush1.msra.mxu0 0.0
    %9887 = vmatprep.subr.mxu0 0.0
    %9888 = vmatpush1.msra.mxu0 0.0
    %9889 = vmatprep.subr.mxu0 0.0
    %9890 = vmatpush1.msra.mxu0 0.0
    %v9891 = vand.u32 %v8091, 4294901760
    %9892 = vmatprep.subr.mxu0 %v9891
    %v9893 = vand.u32 %v8090, 4294901760
    %9894 = vmatpush1.msra.mxu0 %v9893
    %v9895 = vand.u32 %v8151, 4294901760
    %9896 = vmatprep.subr.mxu0 %v9895
    %v9897 = vand.u32 %v8150, 4294901760
    %9898 = vmatpush1.msra.mxu0 %v9897
    %v9899 = vand.u32 %v8049, 4294901760
    %9900 = vmatprep.subr.mxu0 %v9899
    %v9901 = vand.u32 %v8048, 4294901760
    %9902 = vmatpush1.msra.mxu0 %v9901
    %v9903 = vand.u32 %v8007, 4294901760
    %9904 = vmatprep.subr.mxu0 %v9903
    %v9905 = vand.u32 %v8006, 4294901760
    %9906 = vmatpush1.msra.mxu0 %v9905
    %v9907 = vand.u32 %v7828, 4294901760
    %9908 = vmatprep.subr.mxu0 %v9907
    %v9909 = vand.u32 %v7827, 4294901760
    %9910 = vmatpush1.msra.mxu0 %v9909
    %v9911 = vand.u32 %v7964, 4294901760
    %9912 = vmatprep.subr.mxu0 %v9911
    %v9913 = vand.u32 %v7963, 4294901760
    %9914 = vmatpush1.msra.mxu0 %v9913
    %v9915 = vand.u32 %v7922, 4294901760
    %9916 = vmatprep.subr.mxu0 %v9915
    %v9917 = vand.u32 %v7921, 4294901760
    %9918 = vmatpush1.msra.mxu0 %v9917
    %v9919 = vand.u32 %v8117, 4294901760
    %9920 = vmatprep.subr.mxu0 %v9919
    %v9921 = vand.u32 %v8116, 4294901760
    %9922 = vmatpush1.msra.mxu0 %v9921
    %v9923 = vand.u32 %v7880, 4294901760
    %9924 = vmatprep.subr.mxu0 %v9923
    %v9925 = vand.u32 %v7879, 4294901760
    %9926 = vmatpush1.msra.mxu0 %v9925
    %9927 = vmatprep.subr.mxu0 0.0
    %9928 = vmatpush2.msra.mxu0 0.0
    %9929 = vmatprep.subr.mxu0 0.0
    %9930 = vmatpush2.msra.mxu0 0.0
    %9931 = vmatprep.subr.mxu0 0.0
    %9932 = vmatpush2.msra.mxu0 0.0
    %9933 = vmatprep.subr.mxu0 0.0
    %9934 = vmatpush2.msra.mxu0 0.0
    %9935 = vmatprep.subr.mxu0 0.0
    %9936 = vmatpush2.msra.mxu0 0.0
    %9937 = vmatprep.subr.mxu0 0.0
    %9938 = vmatpush2.msra.mxu0 0.0
    %9939 = vmatprep.subr.mxu0 0.0
    %9940 = vmatpush2.msra.mxu0 0.0
    %9941 = vmatprep.subr.mxu0 0.0
    %9942 = vmatpush2.msra.mxu0 0.0
    %9943 = vmatprep.subr.mxu0 0.0
    %9944 = vmatpush2.msra.mxu0 0.0
    %9945 = vmatprep.subr.mxu0 0.0
    %9946 = vmatpush2.msra.mxu0 0.0
    %9947 = vmatprep.subr.mxu0 0.0
    %9948 = vmatpush2.msra.mxu0 0.0
    %9949 = vmatprep.subr.mxu0 0.0
    %9950 = vmatpush2.msra.mxu0 0.0
    %9951 = vmatprep.subr.mxu0 0.0
    %9952 = vmatpush2.msra.mxu0 0.0
    %9953 = vmatprep.subr.mxu0 0.0
    %9954 = vmatpush2.msra.mxu0 0.0
    %9955 = vmatprep.subr.mxu0 0.0
    %9956 = vmatpush2.msra.mxu0 0.0
    %9957 = vmatprep.subr.mxu0 0.0
    %9958 = vmatpush2.msra.mxu0 0.0
    %9959 = vmatprep.mubr.f32.mxu0 0.0
    %v9960 = vand.u32 %v8170, 4294901760
    %v9961 = vsub.f32 %v8170, %v9960
    %v9962 = vand.u32 %v9961, 4294901760
    %9963 = vmatmul.mubr.f32.gmra.mxu0 %v9962
    %v9964 = vpop.f32.mrf.mxu0
    %v9965 = vadd.f32 %v9873, %v9964
    %v9966 = vpop.f32.mrf.mxu0
    %v9967 = vadd.f32 %v9875, %v9966
    %9968 = vdwg.mxu0
    %9969 = vmatprep.subr.mxu0 0.0
    %9970 = vmatpush1.msra.mxu0 0.0
    %9971 = vmatprep.subr.mxu0 0.0
    %9972 = vmatpush1.msra.mxu0 0.0
    %9973 = vmatprep.subr.mxu0 0.0
    %9974 = vmatpush1.msra.mxu0 0.0
    %9975 = vmatprep.subr.mxu0 0.0
    %9976 = vmatpush1.msra.mxu0 0.0
    %9977 = vmatprep.subr.mxu0 0.0
    %9978 = vmatpush1.msra.mxu0 0.0
    %9979 = vmatprep.subr.mxu0 0.0
    %9980 = vmatpush1.msra.mxu0 0.0
    %9981 = vmatprep.subr.mxu0 0.0
    %9982 = vmatpush1.msra.mxu0 0.0
    %v9983 = vand.u32 %v8091, 4294901760
    %v9984 = vsub.f32 %v8091, %v9983
    %v9985 = vand.u32 %v9984, 4294901760
    %9986 = vmatprep.subr.mxu0 %v9985
    %v9987 = vand.u32 %v8090, 4294901760
    %v9988 = vsub.f32 %v8090, %v9987
    %v9989 = vand.u32 %v9988, 4294901760
    %9990 = vmatpush1.msra.mxu0 %v9989
    %v9991 = vand.u32 %v8151, 4294901760
    %v9992 = vsub.f32 %v8151, %v9991
    %v9993 = vand.u32 %v9992, 4294901760
    %9994 = vmatprep.subr.mxu0 %v9993
    %v9995 = vand.u32 %v8150, 4294901760
    %v9996 = vsub.f32 %v8150, %v9995
    %v9997 = vand.u32 %v9996, 4294901760
    %9998 = vmatpush1.msra.mxu0 %v9997
    %v9999 = vand.u32 %v8049, 4294901760
    %v10000 = vsub.f32 %v8049, %v9999
    %v10001 = vand.u32 %v10000, 4294901760
    %10002 = vmatprep.subr.mxu0 %v10001
    %v10003 = vand.u32 %v8048, 4294901760
    %v10004 = vsub.f32 %v8048, %v10003
    %v10005 = vand.u32 %v10004, 4294901760
    %10006 = vmatpush1.msra.mxu0 %v10005
    %v10007 = vand.u32 %v8007, 4294901760
    %v10008 = vsub.f32 %v8007, %v10007
    %v10009 = vand.u32 %v10008, 4294901760
    %10010 = vmatprep.subr.mxu0 %v10009
    %v10011 = vand.u32 %v8006, 4294901760
    %v10012 = vsub.f32 %v8006, %v10011
    %v10013 = vand.u32 %v10012, 4294901760
    %10014 = vmatpush1.msra.mxu0 %v10013
    %v10015 = vand.u32 %v7828, 4294901760
    %v10016 = vsub.f32 %v7828, %v10015
    %v10017 = vand.u32 %v10016, 4294901760
    %10018 = vmatprep.subr.mxu0 %v10017
    %v10019 = vand.u32 %v7827, 4294901760
    %v10020 = vsub.f32 %v7827, %v10019
    %v10021 = vand.u32 %v10020, 4294901760
    %10022 = vmatpush1.msra.mxu0 %v10021
    %v10023 = vand.u32 %v7964, 4294901760
    %v10024 = vsub.f32 %v7964, %v10023
    %v10025 = vand.u32 %v10024, 4294901760
    %10026 = vmatprep.subr.mxu0 %v10025
    %v10027 = vand.u32 %v7963, 4294901760
    %v10028 = vsub.f32 %v7963, %v10027
    %v10029 = vand.u32 %v10028, 4294901760
    %10030 = vmatpush1.msra.mxu0 %v10029
    %v10031 = vand.u32 %v7922, 4294901760
    %v10032 = vsub.f32 %v7922, %v10031
    %v10033 = vand.u32 %v10032, 4294901760
    %10034 = vmatprep.subr.mxu0 %v10033
    %v10035 = vand.u32 %v7921, 4294901760
    %v10036 = vsub.f32 %v7921, %v10035
    %v10037 = vand.u32 %v10036, 4294901760
    %10038 = vmatpush1.msra.mxu0 %v10037
    %v10039 = vand.u32 %v8117, 4294901760
    %v10040 = vsub.f32 %v8117, %v10039
    %v10041 = vand.u32 %v10040, 4294901760
    %10042 = vmatprep.subr.mxu0 %v10041
    %v10043 = vand.u32 %v8116, 4294901760
    %v10044 = vsub.f32 %v8116, %v10043
    %v10045 = vand.u32 %v10044, 4294901760
    %10046 = vmatpush1.msra.mxu0 %v10045
    %v10047 = vand.u32 %v7880, 4294901760
    %v10048 = vsub.f32 %v7880, %v10047
    %v10049 = vand.u32 %v10048, 4294901760
    %10050 = vmatprep.subr.mxu0 %v10049
    %v10051 = vand.u32 %v7879, 4294901760
    %v10052 = vsub.f32 %v7879, %v10051
    %v10053 = vand.u32 %v10052, 4294901760
    %10054 = vmatpush1.msra.mxu0 %v10053
    %10055 = vmatprep.subr.mxu0 0.0
    %10056 = vmatpush2.msra.mxu0 0.0
    %10057 = vmatprep.subr.mxu0 0.0
    %10058 = vmatpush2.msra.mxu0 0.0
    %10059 = vmatprep.subr.mxu0 0.0
    %10060 = vmatpush2.msra.mxu0 0.0
    %10061 = vmatprep.subr.mxu0 0.0
    %10062 = vmatpush2.msra.mxu0 0.0
    %10063 = vmatprep.subr.mxu0 0.0
    %10064 = vmatpush2.msra.mxu0 0.0
    %10065 = vmatprep.subr.mxu0 0.0
    %10066 = vmatpush2.msra.mxu0 0.0
    %10067 = vmatprep.subr.mxu0 0.0
    %10068 = vmatpush2.msra.mxu0 0.0
    %10069 = vmatprep.subr.mxu0 0.0
    %10070 = vmatpush2.msra.mxu0 0.0
    %10071 = vmatprep.subr.mxu0 0.0
    %10072 = vmatpush2.msra.mxu0 0.0
    %10073 = vmatprep.subr.mxu0 0.0
    %10074 = vmatpush2.msra.mxu0 0.0
    %10075 = vmatprep.subr.mxu0 0.0
    %10076 = vmatpush2.msra.mxu0 0.0
    %10077 = vmatprep.subr.mxu0 0.0
    %10078 = vmatpush2.msra.mxu0 0.0
    %10079 = vmatprep.subr.mxu0 0.0
    %10080 = vmatpush2.msra.mxu0 0.0
    %10081 = vmatprep.subr.mxu0 0.0
    %10082 = vmatpush2.msra.mxu0 0.0
    %10083 = vmatprep.subr.mxu0 0.0
    %10084 = vmatpush2.msra.mxu0 0.0
    %10085 = vmatprep.subr.mxu0 0.0
    %10086 = vmatpush2.msra.mxu0 0.0
    %10087 = vmatprep.mubr.f32.mxu0 0.0
    %v10088 = vand.u32 %v8170, 4294901760
    %10089 = vmatmul.mubr.f32.gmra.mxu0 %v10088
    %v10090 = vpop.f32.mrf.mxu0
    %v10091 = vadd.f32 %v9965, %v10090
    %v10092 = vpop.f32.mrf.mxu0
    %v10093 = vadd.f32 %v9967, %v10092
    %10094 = vdwg.mxu0
    %10095 = vmatprep.subr.mxu0 0.0
    %10096 = vmatpush1.msra.mxu0 0.0
    %10097 = vmatprep.subr.mxu0 0.0
    %10098 = vmatpush1.msra.mxu0 0.0
    %10099 = vmatprep.subr.mxu0 0.0
    %10100 = vmatpush1.msra.mxu0 0.0
    %10101 = vmatprep.subr.mxu0 0.0
    %10102 = vmatpush1.msra.mxu0 0.0
    %10103 = vmatprep.subr.mxu0 0.0
    %10104 = vmatpush1.msra.mxu0 0.0
    %10105 = vmatprep.subr.mxu0 0.0
    %10106 = vmatpush1.msra.mxu0 0.0
    %10107 = vmatprep.subr.mxu0 0.0
    %10108 = vmatpush1.msra.mxu0 0.0
    %v10109 = vand.u32 %v8091, 4294901760
    %10110 = vmatprep.subr.mxu0 %v10109
    %v10111 = vand.u32 %v8090, 4294901760
    %10112 = vmatpush1.msra.mxu0 %v10111
    %v10113 = vand.u32 %v8151, 4294901760
    %10114 = vmatprep.subr.mxu0 %v10113
    %v10115 = vand.u32 %v8150, 4294901760
    %10116 = vmatpush1.msra.mxu0 %v10115
    %v10117 = vand.u32 %v8049, 4294901760
    %10118 = vmatprep.subr.mxu0 %v10117
    %v10119 = vand.u32 %v8048, 4294901760
    %10120 = vmatpush1.msra.mxu0 %v10119
    %v10121 = vand.u32 %v8007, 4294901760
    %10122 = vmatprep.subr.mxu0 %v10121
    %v10123 = vand.u32 %v8006, 4294901760
    %10124 = vmatpush1.msra.mxu0 %v10123
    %v10125 = vand.u32 %v7828, 4294901760
    %10126 = vmatprep.subr.mxu0 %v10125
    %v10127 = vand.u32 %v7827, 4294901760
    %10128 = vmatpush1.msra.mxu0 %v10127
    %v10129 = vand.u32 %v7964, 4294901760
    %10130 = vmatprep.subr.mxu0 %v10129
    %v10131 = vand.u32 %v7963, 4294901760
    %10132 = vmatpush1.msra.mxu0 %v10131
    %v10133 = vand.u32 %v7922, 4294901760
    %10134 = vmatprep.subr.mxu0 %v10133
    %v10135 = vand.u32 %v7921, 4294901760
    %10136 = vmatpush1.msra.mxu0 %v10135
    %v10137 = vand.u32 %v8117, 4294901760
    %10138 = vmatprep.subr.mxu0 %v10137
    %v10139 = vand.u32 %v8116, 4294901760
    %10140 = vmatpush1.msra.mxu0 %v10139
    %v10141 = vand.u32 %v7880, 4294901760
    %10142 = vmatprep.subr.mxu0 %v10141
    %v10143 = vand.u32 %v7879, 4294901760
    %10144 = vmatpush1.msra.mxu0 %v10143
    %10145 = vmatprep.subr.mxu0 0.0
    %10146 = vmatpush2.msra.mxu0 0.0
    %10147 = vmatprep.subr.mxu0 0.0
    %10148 = vmatpush2.msra.mxu0 0.0
    %10149 = vmatprep.subr.mxu0 0.0
    %10150 = vmatpush2.msra.mxu0 0.0
    %10151 = vmatprep.subr.mxu0 0.0
    %10152 = vmatpush2.msra.mxu0 0.0
    %10153 = vmatprep.subr.mxu0 0.0
    %10154 = vmatpush2.msra.mxu0 0.0
    %10155 = vmatprep.subr.mxu0 0.0
    %10156 = vmatpush2.msra.mxu0 0.0
    %10157 = vmatprep.subr.mxu0 0.0
    %10158 = vmatpush2.msra.mxu0 0.0
    %10159 = vmatprep.subr.mxu0 0.0
    %10160 = vmatpush2.msra.mxu0 0.0
    %10161 = vmatprep.subr.mxu0 0.0
    %10162 = vmatpush2.msra.mxu0 0.0
    %10163 = vmatprep.subr.mxu0 0.0
    %10164 = vmatpush2.msra.mxu0 0.0
    %10165 = vmatprep.subr.mxu0 0.0
    %10166 = vmatpush2.msra.mxu0 0.0
    %10167 = vmatprep.subr.mxu0 0.0
    %10168 = vmatpush2.msra.mxu0 0.0
    %10169 = vmatprep.subr.mxu0 0.0
    %10170 = vmatpush2.msra.mxu0 0.0
    %10171 = vmatprep.subr.mxu0 0.0
    %10172 = vmatpush2.msra.mxu0 0.0
    %10173 = vmatprep.subr.mxu0 0.0
    %10174 = vmatpush2.msra.mxu0 0.0
    %10175 = vmatprep.subr.mxu0 0.0
    %10176 = vmatpush2.msra.mxu0 0.0
    %10177 = vmatprep.mubr.f32.mxu0 0.0
    %v10178 = vand.u32 %v8170, 4294901760
    %10179 = vmatmul.mubr.f32.gmra.mxu0 %v10178
    %v10180 = vpop.f32.mrf.mxu0
    %v10181 = vadd.f32 %v10091, %v10180
    %v10182 = vpop.f32.mrf.mxu0
    %v10183 = vadd.f32 %v10093, %v10182
    %10184 = vdwg.mxu0
    %10185 = vmatprep.subr.mxu0 0.0
    %10186 = vmatpush1.msra.mxu0 0.0
    %10187 = vmatprep.subr.mxu0 0.0
    %10188 = vmatpush1.msra.mxu0 0.0
    %10189 = vmatprep.subr.mxu0 0.0
    %10190 = vmatpush1.msra.mxu0 0.0
    %10191 = vmatprep.subr.mxu0 0.0
    %10192 = vmatpush1.msra.mxu0 0.0
    %10193 = vmatprep.subr.mxu0 0.0
    %10194 = vmatpush1.msra.mxu0 0.0
    %10195 = vmatprep.subr.mxu0 0.0
    %10196 = vmatpush1.msra.mxu0 0.0
    %10197 = vmatprep.subr.mxu0 0.0
    %10198 = vmatpush1.msra.mxu0 0.0
    %v10199 = vand.u32 %v8093, 4294901760
    %10200 = vmatprep.subr.mxu0 %v10199
    %v10201 = vand.u32 %v8092, 4294901760
    %10202 = vmatpush1.msra.mxu0 %v10201
    %v10203 = vand.u32 %v8153, 4294901760
    %10204 = vmatprep.subr.mxu0 %v10203
    %v10205 = vand.u32 %v8152, 4294901760
    %10206 = vmatpush1.msra.mxu0 %v10205
    %v10207 = vand.u32 %v8051, 4294901760
    %10208 = vmatprep.subr.mxu0 %v10207
    %v10209 = vand.u32 %v8050, 4294901760
    %10210 = vmatpush1.msra.mxu0 %v10209
    %v10211 = vand.u32 %v8009, 4294901760
    %10212 = vmatprep.subr.mxu0 %v10211
    %v10213 = vand.u32 %v8008, 4294901760
    %10214 = vmatpush1.msra.mxu0 %v10213
    %v10215 = vand.u32 %v7830, 4294901760
    %10216 = vmatprep.subr.mxu0 %v10215
    %v10217 = vand.u32 %v7829, 4294901760
    %10218 = vmatpush1.msra.mxu0 %v10217
    %v10219 = vand.u32 %v7966, 4294901760
    %10220 = vmatprep.subr.mxu0 %v10219
    %v10221 = vand.u32 %v7965, 4294901760
    %10222 = vmatpush1.msra.mxu0 %v10221
    %v10223 = vand.u32 %v7924, 4294901760
    %10224 = vmatprep.subr.mxu0 %v10223
    %v10225 = vand.u32 %v7923, 4294901760
    %10226 = vmatpush1.msra.mxu0 %v10225
    %v10227 = vand.u32 %v8119, 4294901760
    %10228 = vmatprep.subr.mxu0 %v10227
    %v10229 = vand.u32 %v8118, 4294901760
    %10230 = vmatpush1.msra.mxu0 %v10229
    %v10231 = vand.u32 %v7882, 4294901760
    %10232 = vmatprep.subr.mxu0 %v10231
    %v10233 = vand.u32 %v7881, 4294901760
    %10234 = vmatpush1.msra.mxu0 %v10233
    %10235 = vmatprep.subr.mxu0 0.0
    %10236 = vmatpush2.msra.mxu0 0.0
    %10237 = vmatprep.subr.mxu0 0.0
    %10238 = vmatpush2.msra.mxu0 0.0
    %10239 = vmatprep.subr.mxu0 0.0
    %10240 = vmatpush2.msra.mxu0 0.0
    %10241 = vmatprep.subr.mxu0 0.0
    %10242 = vmatpush2.msra.mxu0 0.0
    %10243 = vmatprep.subr.mxu0 0.0
    %10244 = vmatpush2.msra.mxu0 0.0
    %10245 = vmatprep.subr.mxu0 0.0
    %10246 = vmatpush2.msra.mxu0 0.0
    %10247 = vmatprep.subr.mxu0 0.0
    %10248 = vmatpush2.msra.mxu0 0.0
    %10249 = vmatprep.subr.mxu0 0.0
    %10250 = vmatpush2.msra.mxu0 0.0
    %10251 = vmatprep.subr.mxu0 0.0
    %10252 = vmatpush2.msra.mxu0 0.0
    %10253 = vmatprep.subr.mxu0 0.0
    %10254 = vmatpush2.msra.mxu0 0.0
    %10255 = vmatprep.subr.mxu0 0.0
    %10256 = vmatpush2.msra.mxu0 0.0
    %10257 = vmatprep.subr.mxu0 0.0
    %10258 = vmatpush2.msra.mxu0 0.0
    %10259 = vmatprep.subr.mxu0 0.0
    %10260 = vmatpush2.msra.mxu0 0.0
    %10261 = vmatprep.subr.mxu0 0.0
    %10262 = vmatpush2.msra.mxu0 0.0
    %10263 = vmatprep.subr.mxu0 0.0
    %10264 = vmatpush2.msra.mxu0 0.0
    %10265 = vmatprep.subr.mxu0 0.0
    %10266 = vmatpush2.msra.mxu0 0.0
    %10267 = vmatprep.mubr.f32.mxu0 0.0
    %v10268 = vand.u32 %v8170, 4294901760
    %v10269 = vsub.f32 %v8170, %v10268
    %v10270 = vand.u32 %v10269, 4294901760
    %v10271 = vsub.f32 %v10269, %v10270
    %v10272 = vand.u32 %v10271, 4294901760
    %10273 = vmatmul.mubr.f32.gmra.mxu0 %v10272
    %v10274 = vpop.f32.mrf.mxu0
    %v10275 = vadd.f32 %v8167, %v10274
    %v10276 = vpop.f32.mrf.mxu0
    %10277 = vdwg.mxu0
    %10278 = vmatprep.subr.mxu0 0.0
    %10279 = vmatpush1.msra.mxu0 0.0
    %10280 = vmatprep.subr.mxu0 0.0
    %10281 = vmatpush1.msra.mxu0 0.0
    %10282 = vmatprep.subr.mxu0 0.0
    %10283 = vmatpush1.msra.mxu0 0.0
    %10284 = vmatprep.subr.mxu0 0.0
    %10285 = vmatpush1.msra.mxu0 0.0
    %10286 = vmatprep.subr.mxu0 0.0
    %10287 = vmatpush1.msra.mxu0 0.0
    %10288 = vmatprep.subr.mxu0 0.0
    %10289 = vmatpush1.msra.mxu0 0.0
    %10290 = vmatprep.subr.mxu0 0.0
    %10291 = vmatpush1.msra.mxu0 0.0
    %v10292 = vand.u32 %v8093, 4294901760
    %v10293 = vsub.f32 %v8093, %v10292
    %v10294 = vand.u32 %v10293, 4294901760
    %v10295 = vsub.f32 %v10293, %v10294
    %v10296 = vand.u32 %v10295, 4294901760
    %10297 = vmatprep.subr.mxu0 %v10296
    %v10298 = vand.u32 %v8092, 4294901760
    %v10299 = vsub.f32 %v8092, %v10298
    %v10300 = vand.u32 %v10299, 4294901760
    %v10301 = vsub.f32 %v10299, %v10300
    %v10302 = vand.u32 %v10301, 4294901760
    %10303 = vmatpush1.msra.mxu0 %v10302
    %v10304 = vand.u32 %v8153, 4294901760
    %v10305 = vsub.f32 %v8153, %v10304
    %v10306 = vand.u32 %v10305, 4294901760
    %v10307 = vsub.f32 %v10305, %v10306
    %v10308 = vand.u32 %v10307, 4294901760
    %10309 = vmatprep.subr.mxu0 %v10308
    %v10310 = vand.u32 %v8152, 4294901760
    %v10311 = vsub.f32 %v8152, %v10310
    %v10312 = vand.u32 %v10311, 4294901760
    %v10313 = vsub.f32 %v10311, %v10312
    %v10314 = vand.u32 %v10313, 4294901760
    %10315 = vmatpush1.msra.mxu0 %v10314
    %v10316 = vand.u32 %v8051, 4294901760
    %v10317 = vsub.f32 %v8051, %v10316
    %v10318 = vand.u32 %v10317, 4294901760
    %v10319 = vsub.f32 %v10317, %v10318
    %v10320 = vand.u32 %v10319, 4294901760
    %10321 = vmatprep.subr.mxu0 %v10320
    %v10322 = vand.u32 %v8050, 4294901760
    %v10323 = vsub.f32 %v8050, %v10322
    %v10324 = vand.u32 %v10323, 4294901760
    %v10325 = vsub.f32 %v10323, %v10324
    %v10326 = vand.u32 %v10325, 4294901760
    %10327 = vmatpush1.msra.mxu0 %v10326
    %v10328 = vand.u32 %v8009, 4294901760
    %v10329 = vsub.f32 %v8009, %v10328
    %v10330 = vand.u32 %v10329, 4294901760
    %v10331 = vsub.f32 %v10329, %v10330
    %v10332 = vand.u32 %v10331, 4294901760
    %10333 = vmatprep.subr.mxu0 %v10332
    %v10334 = vand.u32 %v8008, 4294901760
    %v10335 = vsub.f32 %v8008, %v10334
    %v10336 = vand.u32 %v10335, 4294901760
    %v10337 = vsub.f32 %v10335, %v10336
    %v10338 = vand.u32 %v10337, 4294901760
    %10339 = vmatpush1.msra.mxu0 %v10338
    %v10340 = vand.u32 %v7830, 4294901760
    %v10341 = vsub.f32 %v7830, %v10340
    %v10342 = vand.u32 %v10341, 4294901760
    %v10343 = vsub.f32 %v10341, %v10342
    %v10344 = vand.u32 %v10343, 4294901760
    %10345 = vmatprep.subr.mxu0 %v10344
    %v10346 = vand.u32 %v7829, 4294901760
    %v10347 = vsub.f32 %v7829, %v10346
    %v10348 = vand.u32 %v10347, 4294901760
    %v10349 = vsub.f32 %v10347, %v10348
    %v10350 = vand.u32 %v10349, 4294901760
    %10351 = vmatpush1.msra.mxu0 %v10350
    %v10352 = vand.u32 %v7966, 4294901760
    %v10353 = vsub.f32 %v7966, %v10352
    %v10354 = vand.u32 %v10353, 4294901760
    %v10355 = vsub.f32 %v10353, %v10354
    %v10356 = vand.u32 %v10355, 4294901760
    %10357 = vmatprep.subr.mxu0 %v10356
    %v10358 = vand.u32 %v7965, 4294901760
    %v10359 = vsub.f32 %v7965, %v10358
    %v10360 = vand.u32 %v10359, 4294901760
    %v10361 = vsub.f32 %v10359, %v10360
    %v10362 = vand.u32 %v10361, 4294901760
    %10363 = vmatpush1.msra.mxu0 %v10362
    %v10364 = vand.u32 %v7924, 4294901760
    %v10365 = vsub.f32 %v7924, %v10364
    %v10366 = vand.u32 %v10365, 4294901760
    %v10367 = vsub.f32 %v10365, %v10366
    %v10368 = vand.u32 %v10367, 4294901760
    %10369 = vmatprep.subr.mxu0 %v10368
    %v10370 = vand.u32 %v7923, 4294901760
    %v10371 = vsub.f32 %v7923, %v10370
    %v10372 = vand.u32 %v10371, 4294901760
    %v10373 = vsub.f32 %v10371, %v10372
    %v10374 = vand.u32 %v10373, 4294901760
    %10375 = vmatpush1.msra.mxu0 %v10374
    %v10376 = vand.u32 %v8119, 4294901760
    %v10377 = vsub.f32 %v8119, %v10376
    %v10378 = vand.u32 %v10377, 4294901760
    %v10379 = vsub.f32 %v10377, %v10378
    %v10380 = vand.u32 %v10379, 4294901760
    %10381 = vmatprep.subr.mxu0 %v10380
    %v10382 = vand.u32 %v8118, 4294901760
    %v10383 = vsub.f32 %v8118, %v10382
    %v10384 = vand.u32 %v10383, 4294901760
    %v10385 = vsub.f32 %v10383, %v10384
    %v10386 = vand.u32 %v10385, 4294901760
    %10387 = vmatpush1.msra.mxu0 %v10386
    %v10388 = vand.u32 %v7882, 4294901760
    %v10389 = vsub.f32 %v7882, %v10388
    %v10390 = vand.u32 %v10389, 4294901760
    %v10391 = vsub.f32 %v10389, %v10390
    %v10392 = vand.u32 %v10391, 4294901760
    %10393 = vmatprep.subr.mxu0 %v10392
    %v10394 = vand.u32 %v7881, 4294901760
    %v10395 = vsub.f32 %v7881, %v10394
    %v10396 = vand.u32 %v10395, 4294901760
    %v10397 = vsub.f32 %v10395, %v10396
    %v10398 = vand.u32 %v10397, 4294901760
    %10399 = vmatpush1.msra.mxu0 %v10398
    %10400 = vmatprep.subr.mxu0 0.0
    %10401 = vmatpush2.msra.mxu0 0.0
    %10402 = vmatprep.subr.mxu0 0.0
    %10403 = vmatpush2.msra.mxu0 0.0
    %10404 = vmatprep.subr.mxu0 0.0
    %10405 = vmatpush2.msra.mxu0 0.0
    %10406 = vmatprep.subr.mxu0 0.0
    %10407 = vmatpush2.msra.mxu0 0.0
    %10408 = vmatprep.subr.mxu0 0.0
    %10409 = vmatpush2.msra.mxu0 0.0
    %10410 = vmatprep.subr.mxu0 0.0
    %10411 = vmatpush2.msra.mxu0 0.0
    %10412 = vmatprep.subr.mxu0 0.0
    %10413 = vmatpush2.msra.mxu0 0.0
    %10414 = vmatprep.subr.mxu0 0.0
    %10415 = vmatpush2.msra.mxu0 0.0
    %10416 = vmatprep.subr.mxu0 0.0
    %10417 = vmatpush2.msra.mxu0 0.0
    %10418 = vmatprep.subr.mxu0 0.0
    %10419 = vmatpush2.msra.mxu0 0.0
    %10420 = vmatprep.subr.mxu0 0.0
    %10421 = vmatpush2.msra.mxu0 0.0
    %10422 = vmatprep.subr.mxu0 0.0
    %10423 = vmatpush2.msra.mxu0 0.0
    %10424 = vmatprep.subr.mxu0 0.0
    %10425 = vmatpush2.msra.mxu0 0.0
    %10426 = vmatprep.subr.mxu0 0.0
    %10427 = vmatpush2.msra.mxu0 0.0
    %10428 = vmatprep.subr.mxu0 0.0
    %10429 = vmatpush2.msra.mxu0 0.0
    %10430 = vmatprep.subr.mxu0 0.0
    %10431 = vmatpush2.msra.mxu0 0.0
    %10432 = vmatprep.mubr.f32.mxu0 0.0
    %v10433 = vand.u32 %v8170, 4294901760
    %10434 = vmatmul.mubr.f32.gmra.mxu0 %v10433
    %v10435 = vpop.f32.mrf.mxu0
    %v10436 = vadd.f32 %v10275, %v10435
    %v10437 = vpop.f32.mrf.mxu0
    %10438 = vdwg.mxu0
    %10439 = vmatprep.subr.mxu0 0.0
    %10440 = vmatpush1.msra.mxu0 0.0
    %10441 = vmatprep.subr.mxu0 0.0
    %10442 = vmatpush1.msra.mxu0 0.0
    %10443 = vmatprep.subr.mxu0 0.0
    %10444 = vmatpush1.msra.mxu0 0.0
    %10445 = vmatprep.subr.mxu0 0.0
    %10446 = vmatpush1.msra.mxu0 0.0
    %10447 = vmatprep.subr.mxu0 0.0
    %10448 = vmatpush1.msra.mxu0 0.0
    %10449 = vmatprep.subr.mxu0 0.0
    %10450 = vmatpush1.msra.mxu0 0.0
    %10451 = vmatprep.subr.mxu0 0.0
    %10452 = vmatpush1.msra.mxu0 0.0
    %v10453 = vand.u32 %v8093, 4294901760
    %v10454 = vsub.f32 %v8093, %v10453
    %10455 = vmatprep.subr.mxu0 %v10454
    %v10456 = vand.u32 %v8092, 4294901760
    %v10457 = vsub.f32 %v8092, %v10456
    %10458 = vmatpush1.msra.mxu0 %v10457
    %v10459 = vand.u32 %v8153, 4294901760
    %v10460 = vsub.f32 %v8153, %v10459
    %10461 = vmatprep.subr.mxu0 %v10460
    %v10462 = vand.u32 %v8152, 4294901760
    %v10463 = vsub.f32 %v8152, %v10462
    %10464 = vmatpush1.msra.mxu0 %v10463
    %v10465 = vand.u32 %v8051, 4294901760
    %v10466 = vsub.f32 %v8051, %v10465
    %10467 = vmatprep.subr.mxu0 %v10466
    %v10468 = vand.u32 %v8050, 4294901760
    %v10469 = vsub.f32 %v8050, %v10468
    %10470 = vmatpush1.msra.mxu0 %v10469
    %v10471 = vand.u32 %v8009, 4294901760
    %v10472 = vsub.f32 %v8009, %v10471
    %10473 = vmatprep.subr.mxu0 %v10472
    %v10474 = vand.u32 %v8008, 4294901760
    %v10475 = vsub.f32 %v8008, %v10474
    %10476 = vmatpush1.msra.mxu0 %v10475
    %v10477 = vand.u32 %v7830, 4294901760
    %v10478 = vsub.f32 %v7830, %v10477
    %10479 = vmatprep.subr.mxu0 %v10478
    %v10480 = vand.u32 %v7829, 4294901760
    %v10481 = vsub.f32 %v7829, %v10480
    %10482 = vmatpush1.msra.mxu0 %v10481
    %v10483 = vand.u32 %v7966, 4294901760
    %v10484 = vsub.f32 %v7966, %v10483
    %10485 = vmatprep.subr.mxu0 %v10484
    %v10486 = vand.u32 %v7965, 4294901760
    %v10487 = vsub.f32 %v7965, %v10486
    %10488 = vmatpush1.msra.mxu0 %v10487
    %v10489 = vand.u32 %v7924, 4294901760
    %v10490 = vsub.f32 %v7924, %v10489
    %10491 = vmatprep.subr.mxu0 %v10490
    %v10492 = vand.u32 %v7923, 4294901760
    %v10493 = vsub.f32 %v7923, %v10492
    %10494 = vmatpush1.msra.mxu0 %v10493
    %v10495 = vand.u32 %v8119, 4294901760
    %v10496 = vsub.f32 %v8119, %v10495
    %10497 = vmatprep.subr.mxu0 %v10496
    %v10498 = vand.u32 %v8118, 4294901760
    %v10499 = vsub.f32 %v8118, %v10498
    %10500 = vmatpush1.msra.mxu0 %v10499
    %v10501 = vand.u32 %v7882, 4294901760
    %v10502 = vsub.f32 %v7882, %v10501
    %10503 = vmatprep.subr.mxu0 %v10502
    %v10504 = vand.u32 %v7881, 4294901760
    %v10505 = vsub.f32 %v7881, %v10504
    %10506 = vmatpush1.msra.mxu0 %v10505
    %10507 = vmatprep.subr.mxu0 0.0
    %10508 = vmatpush2.msra.mxu0 0.0
    %10509 = vmatprep.subr.mxu0 0.0
    %10510 = vmatpush2.msra.mxu0 0.0
    %10511 = vmatprep.subr.mxu0 0.0
    %10512 = vmatpush2.msra.mxu0 0.0
    %10513 = vmatprep.subr.mxu0 0.0
    %10514 = vmatpush2.msra.mxu0 0.0
    %10515 = vmatprep.subr.mxu0 0.0
    %10516 = vmatpush2.msra.mxu0 0.0
    %10517 = vmatprep.subr.mxu0 0.0
    %10518 = vmatpush2.msra.mxu0 0.0
    %10519 = vmatprep.subr.mxu0 0.0
    %10520 = vmatpush2.msra.mxu0 0.0
    %10521 = vmatprep.subr.mxu0 0.0
    %10522 = vmatpush2.msra.mxu0 0.0
    %10523 = vmatprep.subr.mxu0 0.0
    %10524 = vmatpush2.msra.mxu0 0.0
    %10525 = vmatprep.subr.mxu0 0.0
    %10526 = vmatpush2.msra.mxu0 0.0
    %10527 = vmatprep.subr.mxu0 0.0
    %10528 = vmatpush2.msra.mxu0 0.0
    %10529 = vmatprep.subr.mxu0 0.0
    %10530 = vmatpush2.msra.mxu0 0.0
    %10531 = vmatprep.subr.mxu0 0.0
    %10532 = vmatpush2.msra.mxu0 0.0
    %10533 = vmatprep.subr.mxu0 0.0
    %10534 = vmatpush2.msra.mxu0 0.0
    %10535 = vmatprep.subr.mxu0 0.0
    %10536 = vmatpush2.msra.mxu0 0.0
    %10537 = vmatprep.subr.mxu0 0.0
    %10538 = vmatpush2.msra.mxu0 0.0
    %10539 = vmatprep.mubr.f32.mxu0 0.0
    %v10540 = vand.u32 %v8170, 4294901760
    %v10541 = vsub.f32 %v8170, %v10540
    %10542 = vmatmul.mubr.f32.gmra.mxu0 %v10541
    %v10543 = vpop.f32.mrf.mxu0
    %v10544 = vadd.f32 %v10436, %v10543
    %v10545 = vpop.f32.mrf.mxu0
    %10546 = vdwg.mxu0
    %10547 = vmatprep.subr.mxu0 0.0
    %10548 = vmatpush1.msra.mxu0 0.0
    %10549 = vmatprep.subr.mxu0 0.0
    %10550 = vmatpush1.msra.mxu0 0.0
    %10551 = vmatprep.subr.mxu0 0.0
    %10552 = vmatpush1.msra.mxu0 0.0
    %10553 = vmatprep.subr.mxu0 0.0
    %10554 = vmatpush1.msra.mxu0 0.0
    %10555 = vmatprep.subr.mxu0 0.0
    %10556 = vmatpush1.msra.mxu0 0.0
    %10557 = vmatprep.subr.mxu0 0.0
    %10558 = vmatpush1.msra.mxu0 0.0
    %10559 = vmatprep.subr.mxu0 0.0
    %10560 = vmatpush1.msra.mxu0 0.0
    %v10561 = vand.u32 %v8093, 4294901760
    %10562 = vmatprep.subr.mxu0 %v10561
    %v10563 = vand.u32 %v8092, 4294901760
    %10564 = vmatpush1.msra.mxu0 %v10563
    %v10565 = vand.u32 %v8153, 4294901760
    %10566 = vmatprep.subr.mxu0 %v10565
    %v10567 = vand.u32 %v8152, 4294901760
    %10568 = vmatpush1.msra.mxu0 %v10567
    %v10569 = vand.u32 %v8051, 4294901760
    %10570 = vmatprep.subr.mxu0 %v10569
    %v10571 = vand.u32 %v8050, 4294901760
    %10572 = vmatpush1.msra.mxu0 %v10571
    %v10573 = vand.u32 %v8009, 4294901760
    %10574 = vmatprep.subr.mxu0 %v10573
    %v10575 = vand.u32 %v8008, 4294901760
    %10576 = vmatpush1.msra.mxu0 %v10575
    %v10577 = vand.u32 %v7830, 4294901760
    %10578 = vmatprep.subr.mxu0 %v10577
    %v10579 = vand.u32 %v7829, 4294901760
    %10580 = vmatpush1.msra.mxu0 %v10579
    %v10581 = vand.u32 %v7966, 4294901760
    %10582 = vmatprep.subr.mxu0 %v10581
    %v10583 = vand.u32 %v7965, 4294901760
    %10584 = vmatpush1.msra.mxu0 %v10583
    %v10585 = vand.u32 %v7924, 4294901760
    %10586 = vmatprep.subr.mxu0 %v10585
    %v10587 = vand.u32 %v7923, 4294901760
    %10588 = vmatpush1.msra.mxu0 %v10587
    %v10589 = vand.u32 %v8119, 4294901760
    %10590 = vmatprep.subr.mxu0 %v10589
    %v10591 = vand.u32 %v8118, 4294901760
    %10592 = vmatpush1.msra.mxu0 %v10591
    %v10593 = vand.u32 %v7882, 4294901760
    %10594 = vmatprep.subr.mxu0 %v10593
    %v10595 = vand.u32 %v7881, 4294901760
    %10596 = vmatpush1.msra.mxu0 %v10595
    %10597 = vmatprep.subr.mxu0 0.0
    %10598 = vmatpush2.msra.mxu0 0.0
    %10599 = vmatprep.subr.mxu0 0.0
    %10600 = vmatpush2.msra.mxu0 0.0
    %10601 = vmatprep.subr.mxu0 0.0
    %10602 = vmatpush2.msra.mxu0 0.0
    %10603 = vmatprep.subr.mxu0 0.0
    %10604 = vmatpush2.msra.mxu0 0.0
    %10605 = vmatprep.subr.mxu0 0.0
    %10606 = vmatpush2.msra.mxu0 0.0
    %10607 = vmatprep.subr.mxu0 0.0
    %10608 = vmatpush2.msra.mxu0 0.0
    %10609 = vmatprep.subr.mxu0 0.0
    %10610 = vmatpush2.msra.mxu0 0.0
    %10611 = vmatprep.subr.mxu0 0.0
    %10612 = vmatpush2.msra.mxu0 0.0
    %10613 = vmatprep.subr.mxu0 0.0
    %10614 = vmatpush2.msra.mxu0 0.0
    %10615 = vmatprep.subr.mxu0 0.0
    %10616 = vmatpush2.msra.mxu0 0.0
    %10617 = vmatprep.subr.mxu0 0.0
    %10618 = vmatpush2.msra.mxu0 0.0
    %10619 = vmatprep.subr.mxu0 0.0
    %10620 = vmatpush2.msra.mxu0 0.0
    %10621 = vmatprep.subr.mxu0 0.0
    %10622 = vmatpush2.msra.mxu0 0.0
    %10623 = vmatprep.subr.mxu0 0.0
    %10624 = vmatpush2.msra.mxu0 0.0
    %10625 = vmatprep.subr.mxu0 0.0
    %10626 = vmatpush2.msra.mxu0 0.0
    %10627 = vmatprep.subr.mxu0 0.0
    %10628 = vmatpush2.msra.mxu0 0.0
    %10629 = vmatprep.mubr.f32.mxu0 0.0
    %v10630 = vand.u32 %v8170, 4294901760
    %v10631 = vsub.f32 %v8170, %v10630
    %v10632 = vand.u32 %v10631, 4294901760
    %10633 = vmatmul.mubr.f32.gmra.mxu0 %v10632
    %v10634 = vpop.f32.mrf.mxu0
    %v10635 = vadd.f32 %v10544, %v10634
    %v10636 = vpop.f32.mrf.mxu0
    %10637 = vdwg.mxu0
    %10638 = vmatprep.subr.mxu0 0.0
    %10639 = vmatpush1.msra.mxu0 0.0
    %10640 = vmatprep.subr.mxu0 0.0
    %10641 = vmatpush1.msra.mxu0 0.0
    %10642 = vmatprep.subr.mxu0 0.0
    %10643 = vmatpush1.msra.mxu0 0.0
    %10644 = vmatprep.subr.mxu0 0.0
    %10645 = vmatpush1.msra.mxu0 0.0
    %10646 = vmatprep.subr.mxu0 0.0
    %10647 = vmatpush1.msra.mxu0 0.0
    %10648 = vmatprep.subr.mxu0 0.0
    %10649 = vmatpush1.msra.mxu0 0.0
    %10650 = vmatprep.subr.mxu0 0.0
    %10651 = vmatpush1.msra.mxu0 0.0
    %v10652 = vand.u32 %v8093, 4294901760
    %v10653 = vsub.f32 %v8093, %v10652
    %v10654 = vand.u32 %v10653, 4294901760
    %10655 = vmatprep.subr.mxu0 %v10654
    %v10656 = vand.u32 %v8092, 4294901760
    %v10657 = vsub.f32 %v8092, %v10656
    %v10658 = vand.u32 %v10657, 4294901760
    %10659 = vmatpush1.msra.mxu0 %v10658
    %v10660 = vand.u32 %v8153, 4294901760
    %v10661 = vsub.f32 %v8153, %v10660
    %v10662 = vand.u32 %v10661, 4294901760
    %10663 = vmatprep.subr.mxu0 %v10662
    %v10664 = vand.u32 %v8152, 4294901760
    %v10665 = vsub.f32 %v8152, %v10664
    %v10666 = vand.u32 %v10665, 4294901760
    %10667 = vmatpush1.msra.mxu0 %v10666
    %v10668 = vand.u32 %v8051, 4294901760
    %v10669 = vsub.f32 %v8051, %v10668
    %v10670 = vand.u32 %v10669, 4294901760
    %10671 = vmatprep.subr.mxu0 %v10670
    %v10672 = vand.u32 %v8050, 4294901760
    %v10673 = vsub.f32 %v8050, %v10672
    %v10674 = vand.u32 %v10673, 4294901760
    %10675 = vmatpush1.msra.mxu0 %v10674
    %v10676 = vand.u32 %v8009, 4294901760
    %v10677 = vsub.f32 %v8009, %v10676
    %v10678 = vand.u32 %v10677, 4294901760
    %10679 = vmatprep.subr.mxu0 %v10678
    %v10680 = vand.u32 %v8008, 4294901760
    %v10681 = vsub.f32 %v8008, %v10680
    %v10682 = vand.u32 %v10681, 4294901760
    %10683 = vmatpush1.msra.mxu0 %v10682
    %v10684 = vand.u32 %v7830, 4294901760
    %v10685 = vsub.f32 %v7830, %v10684
    %v10686 = vand.u32 %v10685, 4294901760
    %10687 = vmatprep.subr.mxu0 %v10686
    %v10688 = vand.u32 %v7829, 4294901760
    %v10689 = vsub.f32 %v7829, %v10688
    %v10690 = vand.u32 %v10689, 4294901760
    %10691 = vmatpush1.msra.mxu0 %v10690
    %v10692 = vand.u32 %v7966, 4294901760
    %v10693 = vsub.f32 %v7966, %v10692
    %v10694 = vand.u32 %v10693, 4294901760
    %10695 = vmatprep.subr.mxu0 %v10694
    %v10696 = vand.u32 %v7965, 4294901760
    %v10697 = vsub.f32 %v7965, %v10696
    %v10698 = vand.u32 %v10697, 4294901760
    %10699 = vmatpush1.msra.mxu0 %v10698
    %v10700 = vand.u32 %v7924, 4294901760
    %v10701 = vsub.f32 %v7924, %v10700
    %v10702 = vand.u32 %v10701, 4294901760
    %10703 = vmatprep.subr.mxu0 %v10702
    %v10704 = vand.u32 %v7923, 4294901760
    %v10705 = vsub.f32 %v7923, %v10704
    %v10706 = vand.u32 %v10705, 4294901760
    %10707 = vmatpush1.msra.mxu0 %v10706
    %v10708 = vand.u32 %v8119, 4294901760
    %v10709 = vsub.f32 %v8119, %v10708
    %v10710 = vand.u32 %v10709, 4294901760
    %10711 = vmatprep.subr.mxu0 %v10710
    %v10712 = vand.u32 %v8118, 4294901760
    %v10713 = vsub.f32 %v8118, %v10712
    %v10714 = vand.u32 %v10713, 4294901760
    %10715 = vmatpush1.msra.mxu0 %v10714
    %v10716 = vand.u32 %v7882, 4294901760
    %v10717 = vsub.f32 %v7882, %v10716
    %v10718 = vand.u32 %v10717, 4294901760
    %10719 = vmatprep.subr.mxu0 %v10718
    %v10720 = vand.u32 %v7881, 4294901760
    %v10721 = vsub.f32 %v7881, %v10720
    %v10722 = vand.u32 %v10721, 4294901760
    %10723 = vmatpush1.msra.mxu0 %v10722
    %10724 = vmatprep.subr.mxu0 0.0
    %10725 = vmatpush2.msra.mxu0 0.0
    %10726 = vmatprep.subr.mxu0 0.0
    %10727 = vmatpush2.msra.mxu0 0.0
    %10728 = vmatprep.subr.mxu0 0.0
    %10729 = vmatpush2.msra.mxu0 0.0
    %10730 = vmatprep.subr.mxu0 0.0
    %10731 = vmatpush2.msra.mxu0 0.0
    %10732 = vmatprep.subr.mxu0 0.0
    %10733 = vmatpush2.msra.mxu0 0.0
    %10734 = vmatprep.subr.mxu0 0.0
    %10735 = vmatpush2.msra.mxu0 0.0
    %10736 = vmatprep.subr.mxu0 0.0
    %10737 = vmatpush2.msra.mxu0 0.0
    %10738 = vmatprep.subr.mxu0 0.0
    %10739 = vmatpush2.msra.mxu0 0.0
    %10740 = vmatprep.subr.mxu0 0.0
    %10741 = vmatpush2.msra.mxu0 0.0
    %10742 = vmatprep.subr.mxu0 0.0
    %10743 = vmatpush2.msra.mxu0 0.0
    %10744 = vmatprep.subr.mxu0 0.0
    %10745 = vmatpush2.msra.mxu0 0.0
    %10746 = vmatprep.subr.mxu0 0.0
    %10747 = vmatpush2.msra.mxu0 0.0
    %10748 = vmatprep.subr.mxu0 0.0
    %10749 = vmatpush2.msra.mxu0 0.0
    %10750 = vmatprep.subr.mxu0 0.0
    %10751 = vmatpush2.msra.mxu0 0.0
    %10752 = vmatprep.subr.mxu0 0.0
    %10753 = vmatpush2.msra.mxu0 0.0
    %10754 = vmatprep.subr.mxu0 0.0
    %10755 = vmatpush2.msra.mxu0 0.0
    %10756 = vmatprep.mubr.f32.mxu0 0.0
    %v10757 = vand.u32 %v8170, 4294901760
    %10758 = vmatmul.mubr.f32.gmra.mxu0 %v10757
    %v10759 = vpop.f32.mrf.mxu0
    %v10760 = vadd.f32 %v10635, %v10759
    %v10761 = vpop.f32.mrf.mxu0
    %10762 = vdwg.mxu0
    %10763 = vmatprep.subr.mxu0 0.0
    %10764 = vmatpush1.msra.mxu0 0.0
    %10765 = vmatprep.subr.mxu0 0.0
    %10766 = vmatpush1.msra.mxu0 0.0
    %10767 = vmatprep.subr.mxu0 0.0
    %10768 = vmatpush1.msra.mxu0 0.0
    %10769 = vmatprep.subr.mxu0 0.0
    %10770 = vmatpush1.msra.mxu0 0.0
    %10771 = vmatprep.subr.mxu0 0.0
    %10772 = vmatpush1.msra.mxu0 0.0
    %10773 = vmatprep.subr.mxu0 0.0
    %10774 = vmatpush1.msra.mxu0 0.0
    %10775 = vmatprep.subr.mxu0 0.0
    %10776 = vmatpush1.msra.mxu0 0.0
    %v10777 = vand.u32 %v8093, 4294901760
    %10778 = vmatprep.subr.mxu0 %v10777
    %v10779 = vand.u32 %v8092, 4294901760
    %10780 = vmatpush1.msra.mxu0 %v10779
    %v10781 = vand.u32 %v8153, 4294901760
    %10782 = vmatprep.subr.mxu0 %v10781
    %v10783 = vand.u32 %v8152, 4294901760
    %10784 = vmatpush1.msra.mxu0 %v10783
    %v10785 = vand.u32 %v8051, 4294901760
    %10786 = vmatprep.subr.mxu0 %v10785
    %v10787 = vand.u32 %v8050, 4294901760
    %10788 = vmatpush1.msra.mxu0 %v10787
    %v10789 = vand.u32 %v8009, 4294901760
    %10790 = vmatprep.subr.mxu0 %v10789
    %v10791 = vand.u32 %v8008, 4294901760
    %10792 = vmatpush1.msra.mxu0 %v10791
    %v10793 = vand.u32 %v7830, 4294901760
    %10794 = vmatprep.subr.mxu0 %v10793
    %v10795 = vand.u32 %v7829, 4294901760
    %10796 = vmatpush1.msra.mxu0 %v10795
    %v10797 = vand.u32 %v7966, 4294901760
    %10798 = vmatprep.subr.mxu0 %v10797
    %v10799 = vand.u32 %v7965, 4294901760
    %10800 = vmatpush1.msra.mxu0 %v10799
    %v10801 = vand.u32 %v7924, 4294901760
    %10802 = vmatprep.subr.mxu0 %v10801
    %v10803 = vand.u32 %v7923, 4294901760
    %10804 = vmatpush1.msra.mxu0 %v10803
    %v10805 = vand.u32 %v8119, 4294901760
    %10806 = vmatprep.subr.mxu0 %v10805
    %v10807 = vand.u32 %v8118, 4294901760
    %10808 = vmatpush1.msra.mxu0 %v10807
    %v10809 = vand.u32 %v7882, 4294901760
    %10810 = vmatprep.subr.mxu0 %v10809
    %v10811 = vand.u32 %v7881, 4294901760
    %10812 = vmatpush1.msra.mxu0 %v10811
    %10813 = vmatprep.subr.mxu0 0.0
    %10814 = vmatpush2.msra.mxu0 0.0
    %10815 = vmatprep.subr.mxu0 0.0
    %10816 = vmatpush2.msra.mxu0 0.0
    %10817 = vmatprep.subr.mxu0 0.0
    %10818 = vmatpush2.msra.mxu0 0.0
    %10819 = vmatprep.subr.mxu0 0.0
    %10820 = vmatpush2.msra.mxu0 0.0
    %10821 = vmatprep.subr.mxu0 0.0
    %10822 = vmatpush2.msra.mxu0 0.0
    %10823 = vmatprep.subr.mxu0 0.0
    %10824 = vmatpush2.msra.mxu0 0.0
    %10825 = vmatprep.subr.mxu0 0.0
    %10826 = vmatpush2.msra.mxu0 0.0
    %10827 = vmatprep.subr.mxu0 0.0
    %10828 = vmatpush2.msra.mxu0 0.0
    %10829 = vmatprep.subr.mxu0 0.0
    %10830 = vmatpush2.msra.mxu0 0.0
    %10831 = vmatprep.subr.mxu0 0.0
    %10832 = vmatpush2.msra.mxu0 0.0
    %10833 = vmatprep.subr.mxu0 0.0
    %10834 = vmatpush2.msra.mxu0 0.0
    %10835 = vmatprep.subr.mxu0 0.0
    %10836 = vmatpush2.msra.mxu0 0.0
    %10837 = vmatprep.subr.mxu0 0.0
    %10838 = vmatpush2.msra.mxu0 0.0
    %10839 = vmatprep.subr.mxu0 0.0
    %10840 = vmatpush2.msra.mxu0 0.0
    %10841 = vmatprep.subr.mxu0 0.0
    %10842 = vmatpush2.msra.mxu0 0.0
    %10843 = vmatprep.subr.mxu0 0.0
    %10844 = vmatpush2.msra.mxu0 0.0
    %10845 = vmatprep.mubr.f32.mxu0 0.0
    %v10846 = vand.u32 %v8170, 4294901760
    %10847 = vmatmul.mubr.f32.gmra.mxu0 %v10846
    %v10848 = vpop.f32.mrf.mxu0
    %v10849 = vadd.f32 %v10760, %v10848
    %v10850 = vpop.f32.mrf.mxu0
    %10851 = vdwg.mxu0
    %v10852 = vsel %vm3250, %v8841, 0.0
    %v10853 = vsel %vm3251, %v8843, 0.0
    %v10854 = vsel %vm3252, %v9509, 0.0
    %v10855 = vsel %vm3254, %v10181, 0.0
    %v10856 = vsel %vm3255, %v10183, 0.0
    %v10857 = vsel %vm3256, %v10849, 0.0
    %v10858 = vrot.slane %v10852, 4
    %v10859 = vmax.f32 %v10852, %v10858
    %v10860 = vrot.slane %v10859, 2
    %v10861 = vmax.f32 %v10859, %v10860
    %v10862 = vrot.slane %v10861, 1
    %v10863 = vmax.f32 %v10861, %v10862
    %v10864 = vrot.slane %v10853, 4
    %v10865 = vmax.f32 %v10853, %v10864
    %v10866 = vrot.slane %v10865, 2
    %v10867 = vmax.f32 %v10865, %v10866
    %v10868 = vrot.slane %v10867, 1
    %v10869 = vmax.f32 %v10867, %v10868
    %v10870 = vrot.slane %v10854, 4
    %v10871 = vmax.f32 %v10854, %v10870
    %v10872 = vrot.slane %v10871, 2
    %v10873 = vmax.f32 %v10871, %v10872
    %v10874 = vrot.slane %v10873, 1
    %v10875 = vmax.f32 %v10873, %v10874
    %v10876 = vrot.slane %v10855, 4
    %v10877 = vmax.f32 %v10855, %v10876
    %v10878 = vrot.slane %v10877, 2
    %v10879 = vmax.f32 %v10877, %v10878
    %v10880 = vrot.slane %v10879, 1
    %v10881 = vmax.f32 %v10879, %v10880
    %v10882 = vrot.slane %v10856, 4
    %v10883 = vmax.f32 %v10856, %v10882
    %v10884 = vrot.slane %v10883, 2
    %v10885 = vmax.f32 %v10883, %v10884
    %v10886 = vrot.slane %v10885, 1
    %v10887 = vmax.f32 %v10885, %v10886
    %v10888 = vrot.slane %v10857, 4
    %v10889 = vmax.f32 %v10857, %v10888
    %v10890 = vrot.slane %v10889, 2
    %v10891 = vmax.f32 %v10889, %v10890
    %v10892 = vrot.slane %v10891, 1
    %v10893 = vmax.f32 %v10891, %v10892
    %v10894 = vsub.f32 %v10852, %v10863
    %v10895 = vsub.f32 %v10853, %v10869
    %v10896 = vsub.f32 %v10854, %v10875
    %v10897 = vsub.f32 %v10855, %v10881
    %v10898 = vsub.f32 %v10856, %v10887
    %v10899 = vsub.f32 %v10857, %v10893
    %v10900 = vmul.f32 %v10894, 1.442695
    %v10901 = vpow.pop %v10900
    %v10902 = vmul.f32 %v10895, 1.442695
    %v10903 = vpow.pop %v10902
    %v10904 = vmul.f32 %v10896, 1.442695
    %v10905 = vpow.pop %v10904
    %v10906 = vmul.f32 %v10897, 1.442695
    %v10907 = vpow.pop %v10906
    %v10908 = vmul.f32 %v10898, 1.442695
    %v10909 = vpow.pop %v10908
    %v10910 = vmul.f32 %v10899, 1.442695
    %v10911 = vpow.pop %v10910
    %v10912 = vrot.slane %v10901, 4
    %v10913 = vadd.f32 %v10901, %v10912
    %v10914 = vrot.slane %v10913, 2
    %v10915 = vadd.f32 %v10913, %v10914
    %v10916 = vrot.slane %v10915, 1
    %v10917 = vadd.f32 %v10915, %v10916
    %v10918 = vrot.slane %v10903, 4
    %v10919 = vadd.f32 %v10903, %v10918
    %v10920 = vrot.slane %v10919, 2
    %v10921 = vadd.f32 %v10919, %v10920
    %v10922 = vrot.slane %v10921, 1
    %v10923 = vadd.f32 %v10921, %v10922
    %v10924 = vrot.slane %v10905, 4
    %v10925 = vadd.f32 %v10905, %v10924
    %v10926 = vrot.slane %v10925, 2
    %v10927 = vadd.f32 %v10925, %v10926
    %v10928 = vrot.slane %v10927, 1
    %v10929 = vadd.f32 %v10927, %v10928
    %v10930 = vrot.slane %v10907, 4
    %v10931 = vadd.f32 %v10907, %v10930
    %v10932 = vrot.slane %v10931, 2
    %v10933 = vadd.f32 %v10931, %v10932
    %v10934 = vrot.slane %v10933, 1
    %v10935 = vadd.f32 %v10933, %v10934
    %v10936 = vrot.slane %v10909, 4
    %v10937 = vadd.f32 %v10909, %v10936
    %v10938 = vrot.slane %v10937, 2
    %v10939 = vadd.f32 %v10937, %v10938
    %v10940 = vrot.slane %v10939, 1
    %v10941 = vadd.f32 %v10939, %v10940
    %v10942 = vrot.slane %v10911, 4
    %v10943 = vadd.f32 %v10911, %v10942
    %v10944 = vrot.slane %v10943, 2
    %v10945 = vadd.f32 %v10943, %v10944
    %v10946 = vrot.slane %v10945, 1
    %v10947 = vadd.f32 %v10945, %v10946
    %v10948 = vlog2.pop %v10917
    %v10949 = vmul.f32 %v10948, 0.6931472
    %v10950 = vlog2.pop %v10923
    %v10951 = vmul.f32 %v10950, 0.6931472
    %v10952 = vlog2.pop %v10929
    %v10953 = vmul.f32 %v10952, 0.6931472
    %v10954 = vlog2.pop %v10935
    %v10955 = vmul.f32 %v10954, 0.6931472
    %v10956 = vlog2.pop %v10941
    %v10957 = vmul.f32 %v10956, 0.6931472
    %v10958 = vlog2.pop %v10947
    %v10959 = vmul.f32 %v10958, 0.6931472
    %v10960 = vsub.f32 %v10894, %v10949
    %v10961 = vsub.f32 %v10895, %v10951
    %v10962 = vsub.f32 %v10896, %v10953
    %v10963 = vsub.f32 %v10897, %v10955
    %v10964 = vsub.f32 %v10898, %v10957
    %v10965 = vsub.f32 %v10899, %v10959
    %10969 = vrot.lane.b32.xlu0 %v10960, 32
    %v10970 = vpop.permute.xlu0 %10969
    %10971 = vrot.lane.b32.xlu0 %v10961, 32
    %v10972 = vpop.permute.xlu0 %10971
    %10973 = vrot.lane.b32.xlu0 %v10962, 32
    %v10974 = vpop.permute.xlu0 %10973
    %v10975 = vsel %vm3684, %v10970, %v10972
    %v10976 = vsel %vm3684, %v10972, %v10974
    %10979 = vst [vmem:[#allocation5] sm:$0xff] %v10975
    %10980 = vst [vmem:[#allocation5 + $0x8] sm:$0xff] %v10976
    %10984 = vrot.lane.b32.xlu0 %v10963, 32
    %v10985 = vpop.permute.xlu0 %10984
    %10986 = vrot.lane.b32.xlu0 %v10964, 32
    %v10987 = vpop.permute.xlu0 %10986
    %10988 = vrot.lane.b32.xlu0 %v10965, 32
    %v10989 = vpop.permute.xlu0 %10988
    %v10990 = vsel %vm3684, %v10985, %v10987
    %v10991 = vsel %vm3684, %v10987, %v10989
    %s10994 = scalar_lea.vmem [#allocation5], 16
    %10995 = vst [vmem:[%s10994] sm:$0xff] %v10990
    %10996 = vst [vmem:[%s10994 + $0x8] sm:$0xff] %v10991
    // Predicated region
    $region46: #{tpu_custom_call.1} parent=1 // pred_check
      _
    $region47: #{tpu_custom_call.1} parent=1 // pred_check_branch
      %10998 = sbr.rel (0) target = $region49
    $region48: #{tpu_custom_call.1} parent=1 // pred_region
      %s11000 = ssub.s32 512, 512
      %11001 = vsyncadd [#allocation6], %s11000
      %s11002 = sshll.u32 [#allocation5], 4
      %s11003 = int_to_ptr.vmem [resolvable:$true] %s11002
      %11008 = dma.vmem_to_hbm [thread:$0]  %s11003, 512, %s11, [#allocation6], 256, 256, 16
    $region49: #{tpu_custom_call.1} parent=1 // pred_fallthru
      _
    // Predicated region
    $region50: #{tpu_custom_call.1} parent=1 // pred_check
      _
    $region51: #{tpu_custom_call.1} parent=1 // pred_check_branch
      %11010 = sbr.rel (0) target = $region53
    $region52: #{tpu_custom_call.1} parent=1 // pred_region
      %11011 = dma.done [#allocation6], 512
    $region53: #{tpu_custom_call.1} parent=1 // pred_fallthru
      _
    %11012 = vsyncpa [#allocation6], 1

</llo_original>
